<compile_context>
chip_gen: v7x
topology: tpu7x:2x2x1
jax: 0.10.0
libtpu: 0.0.40
codegen_flags: <defaults>
</compile_context>

<pallas_src>
import math
import jax
import jax.numpy as jnp
from jax import lax
from jax.experimental import pallas as pl
from jax.experimental.pallas import tpu as pltpu

# ----------------------------- configuration --------------------------------
B = 2
C1 = 64                       # input channels (c1 != c2 -> Conv branch is active)
C2 = 128                      # embed dim (lane-dense)
NUM_HEADS = 4
HEAD_DIM = C2 // NUM_HEADS    # 32
NUM_LAYERS = 2
H = 8
W = 8
N_TOK = H * W                 # 64 tokens per image
M = B * N_TOK                 # 128 rows: batch folded into the matmul M dim
SCALE = HEAD_DIM ** -0.5
BN_EPS = 1e-5

# --------- packed weight slab: every matrix transposed to (in, C2), rows stacked ---------
OFF_CONV = 0                                   # (C1, C2)  folded conv + BN
OFF_LIN = OFF_CONV + C1                        # (C2, C2)  position "linear"
OFF_LAYERS = OFF_LIN + C2                      # per layer: w_out, w_fc1, w_fc2
LAYER_STRIDE = 3 * C2
W_ROWS = OFF_LAYERS + NUM_LAYERS * LAYER_STRIDE          # 64 + 128 + 2*384 = 960

# fused qkv slab: per layer one (C2, 3*C2) block (q|k|v stacked on lanes)
QKV_ROWS = NUM_LAYERS * C2                               # 256

# bias slabs (f32)
ROW_CONV_B = 0
ROW_LIN_B = 1
ROW_OUT_B0 = 2                                 # + layer index
BIAS_ROWS_PAD = 8                              # sublane-aligned
QKV_BIAS_ROWS_PAD = 8


def _hardswish(x):
    # x * hardtanh(x + 3, 0, 6) / 6
    return x * jnp.clip(x + 3.0, 0.0, 6.0) * (1.0 / 6.0)


# ------------------------------- the kernel ---------------------------------
def transformer_block_kernel(x_ref, w_ref, wqkv_ref, b_ref, bqkv_ref, o_ref):
    def wslab(off, rows):
        return w_ref[pl.ds(off, rows), :]                  # bf16 (rows, C2), static slice

    def bias(row):
        return b_ref[pl.ds(row, 1), :]                     # f32 (1, C2)

    # --- Conv(c1, c2, 1): 1x1 conv + folded BN + Hardswish ---
    h = jnp.dot(x_ref[...], wslab(OFF_CONV, C1),
                preferred_element_type=jnp.float32) + bias(ROW_CONV_B)
    h = _hardswish(h)                                      # (M, C2) f32

    # --- p = p + linear(p)  (learned position term) ---
    p = h + jnp.dot(h.astype(jnp.bfloat16), wslab(OFF_LIN, C2),
                    preferred_element_type=jnp.float32) + bias(ROW_LIN_B)

    # --- TransformerLayer stack (statically unrolled, weights resident) ---
    for layer in range(NUM_LAYERS):
        wbase = OFF_LAYERS + layer * LAYER_STRIDE
        p_b = p.astype(jnp.bfloat16)

        # fused q/k/v projection: one (M,128)x(128,384) matmul; bias add + bf16 cast
        # fused so no f32 qkv intermediate stays live.
        qkv = (jnp.dot(p_b, wqkv_ref[pl.ds(layer * C2, C2), :],
                       preferred_element_type=jnp.float32)
               + bqkv_ref[pl.ds(layer, 1), :]).astype(jnp.bfloat16)   # (M, 3*C2)

        # attention per (batch, head); head outputs re-concatenated on lanes so the
        # out-projection is one K=128 MXU pass.
        att_rows = []
        for b in range(B):
            r0 = b * N_TOK
            heads = []
            for hd in range(NUM_HEADS):
                c0 = hd * HEAD_DIM
                qh = qkv[r0:r0 + N_TOK, c0:c0 + HEAD_DIM]
                kh = qkv[r0:r0 + N_TOK, C2 + c0:C2 + c0 + HEAD_DIM]
                vh = qkv[r0:r0 + N_TOK, 2 * C2 + c0:2 * C2 + c0 + HEAD_DIM]
                # scores = q @ k^T * scale — contract the head dim, no explicit transpose
                s = lax.dot_general(qh, kh, (((1,), (1,)), ((), ())),
                                    preferred_element_type=jnp.float32) * SCALE
                s = s - jnp.max(s, axis=-1, keepdims=True)
                e = jnp.exp(s)
                a = e * pl.reciprocal(jnp.sum(e, axis=-1, keepdims=True), approx=True)
                oh = jnp.dot(a.astype(jnp.bfloat16), vh,
                             preferred_element_type=jnp.float32)      # (N_TOK, HEAD_DIM)
                heads.append(oh.astype(jnp.bfloat16))
            att_rows.append(jnp.concatenate(heads, axis=1))           # (N_TOK, C2) bf16
        att_b = jnp.concatenate(att_rows, axis=0)                     # (M, C2) bf16

        # single K=128 out-projection + bias, residual 1
        p = p + jnp.dot(att_b, wslab(wbase + 0 * C2, C2),
                        preferred_element_type=jnp.float32) + bias(ROW_OUT_B0 + layer)

        # FFN: fc2(fc1(p)) + p  (both bias-free), residual 2
        f = jnp.dot(p.astype(jnp.bfloat16), wslab(wbase + 1 * C2, C2),
                    preferred_element_type=jnp.float32)
        f = jnp.dot(f.astype(jnp.bfloat16), wslab(wbase + 2 * C2, C2),
                    preferred_element_type=jnp.float32)
        p = p + f

    o_ref[...] = p                                         # (M, C2) f32, lane-dense full-width store


# ----------------------------- parameter setup ------------------------------
def make_params(key):
    ks = iter(jax.random.split(key, 64))

    def mat(shape, fan_in):
        return jax.random.normal(next(ks), shape, jnp.float32) / math.sqrt(fan_in)

    params = {}
    # Conv(c1, c2, 1): conv weight (c2, c1) [k=1], bias=False, + BatchNorm2d(c2) (inference stats)
    w_conv = mat((C2, C1), C1)
    gamma = 1.0 + 0.1 * jax.random.normal(next(ks), (C2,), jnp.float32)
    beta = 0.05 * jax.random.normal(next(ks), (C2,), jnp.float32)
    mean = 0.02 * jax.random.normal(next(ks), (C2,), jnp.float32)
    var = jax.random.uniform(next(ks), (C2,), jnp.float32, minval=0.5, maxval=1.5)
    bn_scale = gamma / jnp.sqrt(var + BN_EPS)
    params["conv_w"] = w_conv * bn_scale[:, None]          # folded (C2, C1)
    params["conv_b"] = beta - bn_scale * mean              # (C2,)

    # position linear (bias=True)
    params["lin_w"] = mat((C2, C2), C2)
    params["lin_b"] = 0.02 * jax.random.normal(next(ks), (C2,), jnp.float32)

    layers = []
    for _ in range(NUM_LAYERS):
        lyr = {}
        wq = mat((C2, C2), C2)
        wk = mat((C2, C2), C2)
        wv = mat((C2, C2), C2)
        wiq = mat((C2, C2), C2)
        wik = mat((C2, C2), C2)
        wiv = mat((C2, C2), C2)
        bi = 0.02 * jax.random.normal(next(ks), (3 * C2,), jnp.float32)  # MHA in_proj_bias
        # compose external q/k/v Linear with the MHA in_proj:  Q = x (Wiq @ Wq)^T + biq
        lyr["wq_eff"] = wiq @ wq
        lyr["wk_eff"] = wik @ wk
        lyr["wv_eff"] = wiv @ wv
        lyr["bq"] = bi[:C2]
        lyr["bk"] = bi[C2:2 * C2]
        lyr["bv"] = bi[2 * C2:]
        lyr["w_out"] = mat((C2, C2), C2)                   # MHA out_proj (bias=True)
        lyr["b_out"] = 0.02 * jax.random.normal(next(ks), (C2,), jnp.float32)
        lyr["w_fc1"] = mat((C2, C2), C2)                   # bias-free
        lyr["w_fc2"] = mat((C2, C2), C2)                   # bias-free
        layers.append(lyr)
    params["layers"] = layers
    return params


def pack_params(params):
    """Pack matrices (pre-transposed to (in, out)) into one bf16 main slab plus one bf16
    fused-qkv slab, and all bias rows into two f32 slabs."""
    rows = [params["conv_w"].T, params["lin_w"].T]
    qkv_rows = []
    for lyr in params["layers"]:
        rows += [lyr["w_out"].T, lyr["w_fc1"].T, lyr["w_fc2"].T]
        qkv_rows.append(jnp.concatenate(
            [lyr["wq_eff"].T, lyr["wk_eff"].T, lyr["wv_eff"].T], axis=1))  # (C2, 3*C2)
    w_slab = jnp.concatenate(rows, axis=0).astype(jnp.bfloat16)
    wqkv_slab = jnp.concatenate(qkv_rows, axis=0).astype(jnp.bfloat16)
    assert w_slab.shape == (W_ROWS, C2)
    assert wqkv_slab.shape == (QKV_ROWS, 3 * C2)

    b_slab = jnp.zeros((BIAS_ROWS_PAD, C2), jnp.float32)
    b_slab = b_slab.at[ROW_CONV_B].set(params["conv_b"])
    b_slab = b_slab.at[ROW_LIN_B].set(params["lin_b"])
    bqkv_slab = jnp.zeros((QKV_BIAS_ROWS_PAD, 3 * C2), jnp.float32)
    for i, lyr in enumerate(params["layers"]):
        b_slab = b_slab.at[ROW_OUT_B0 + i].set(lyr["b_out"])
        bqkv_slab = bqkv_slab.at[i].set(
            jnp.concatenate([lyr["bq"], lyr["bk"], lyr["bv"]]))
    return w_slab, wqkv_slab, b_slab, bqkv_slab


# -------------------------------- wrapper -----------------------------------
def transformer_block_forward(x_nchw, w_slab, wqkv_slab, b_slab, bqkv_slab):
    """x_nchw: (B, C1, H, W) f32 -> (B, C2, H, W) f32."""
    # tokens-first, channel-last; batch folded into rows; pre-cast to bf16 (halves input DMA)
    x_tok = x_nchw.reshape(B, C1, N_TOK).transpose(0, 2, 1)       # (B, N_TOK, C1)
    x_2d = x_tok.reshape(M, C1).astype(jnp.bfloat16)              # (M, C1)

    in_specs = [pl.BlockSpec(memory_space=pltpu.MemorySpace.VMEM) for _ in range(5)]
    out = pl.pallas_call(
        transformer_block_kernel,
        out_shape=jax.ShapeDtypeStruct((M, C2), jnp.float32),
        in_specs=in_specs,
        out_specs=pl.BlockSpec(memory_space=pltpu.MemorySpace.VMEM),
    )(x_2d, w_slab, wqkv_slab, b_slab, bqkv_slab)

    # (M, C2) -> (B, N_TOK, C2) -> (B, C2, N_TOK) -> (B, C2, H, W)
    # (matches .permute(1, 2, 0).reshape(b, c2, <dim2>, <dim3>) of the reference)
    return out.reshape(B, N_TOK, C2).transpose(0, 2, 1).reshape(B, C2, H, W)


# --------------------------- pure-JAX f32 reference --------------------------
def reference_forward(x_nchw, w_slab, wqkv_slab, b_slab, bqkv_slab):
    wf = w_slab.astype(jnp.float32)
    qf = wqkv_slab.astype(jnp.float32)
    x = x_nchw.reshape(B, C1, N_TOK).transpose(0, 2, 1)           # (B, N_TOK, C1)
    h = jnp.einsum("bnc,cd->bnd", x, wf[OFF_CONV:OFF_CONV + C1]) + b_slab[ROW_CONV_B]
    h = h * jnp.clip(h + 3.0, 0.0, 6.0) / 6.0
    p = h + jnp.einsum("bnc,cd->bnd", h, wf[OFF_LIN:OFF_LIN + C2]) + b_slab[ROW_LIN_B]
    for layer in range(NUM_LAYERS):
        wbase = OFF_LAYERS + layer * LAYER_STRIDE
        qkv = jnp.einsum("bnc,cd->bnd", p, qf[layer * C2:(layer + 1) * C2]) + bqkv_slab[layer]
        q, k, v = qkv[..., :C2], qkv[..., C2:2 * C2], qkv[..., 2 * C2:]
        qh = q.reshape(B, N_TOK, NUM_HEADS, HEAD_DIM)
        kh = k.reshape(B, N_TOK, NUM_HEADS, HEAD_DIM)
        vh = v.reshape(B, N_TOK, NUM_HEADS, HEAD_DIM)
        s = jnp.einsum("bqhd,bkhd->bhqk", qh, kh) * SCALE
        a = jax.nn.softmax(s, axis=-1)
        o = jnp.einsum("bhqk,bkhd->bqhd", a, vh).reshape(B, N_TOK, C2)
        p = p + jnp.einsum("bnc,cd->bnd", o, wf[wbase:wbase + C2]) + b_slab[ROW_OUT_B0 + layer]
        f = jnp.einsum("bnc,cd->bnd", p, wf[wbase + C2:wbase + 2 * C2])
        f = jnp.einsum("bnc,cd->bnd", f, wf[wbase + 2 * C2:wbase + 3 * C2])
        p = p + f
    return p.transpose(0, 2, 1).reshape(B, C2, H, W)


# --------------------------------- driver -----------------------------------
if __name__ == "__main__":
    key = jax.random.PRNGKey(0)
    k_x, k_p = jax.random.split(key)
    x = jax.random.normal(k_x, (B, C1, H, W), jnp.float32)
    params = make_params(k_p)
    w_slab, wqkv_slab, b_slab, bqkv_slab = pack_params(params)

    fwd = jax.jit(transformer_block_forward)
    y = fwd(x, w_slab, wqkv_slab, b_slab, bqkv_slab)
    jax.block_until_ready(y)

    assert y.shape == (B, C2, H, W)
    assert bool(jnp.all(jnp.isfinite(y)))

    # reference check (weights already bf16-rounded at pack time, so this isolates the
    # kernel's bf16-at-dot-boundary and approximate-reciprocal deviations)
    y_ref = reference_forward(x, w_slab, wqkv_slab, b_slab, bqkv_slab)
    rel_err = float(jnp.max(jnp.abs(y - y_ref)) / (jnp.max(jnp.abs(y_ref)) + 1e-6))
    assert rel_err < 0.08, f"kernel/reference mismatch: rel_err={rel_err}"

    print("KERNEL_OK")
</pallas_src>

<mosaic_0001>
module attributes {stable_mosaic.version = 11 : i64} {
  func.func @transformer_block_kernel(%arg0: memref<128x64xbf16, #tpu.memory_space<vmem>>, %arg1: memref<960x128xbf16, #tpu.memory_space<vmem>>, %arg2: memref<256x384xbf16, #tpu.memory_space<vmem>>, %arg3: memref<8x128xf32, #tpu.memory_space<vmem>>, %arg4: memref<8x384xf32, #tpu.memory_space<vmem>>, %arg5: memref<128x128xf32, #tpu.memory_space<vmem>>) attributes {dimension_semantics = [], scalar_prefetch = 0 : i64, scratch_operands = 0 : i64, tpu.core_type = #tpu.core_type<tc>} {
    %c0 = arith.constant 0 : index
    %c0_0 = arith.constant 0 : index
    %0 = vector.load %arg0[%c0, %c0_0] : memref<128x64xbf16, #tpu.memory_space<vmem>>, vector<128x64xbf16>
    %c0_1 = arith.constant 0 : index
    %c0_2 = arith.constant 0 : index
    %1 = vector.load %arg1[%c0_1, %c0_2] : memref<960x128xbf16, #tpu.memory_space<vmem>>, vector<64x128xbf16>
    %cst = arith.constant dense<0.000000e+00> : vector<128x128xf32>
    %2 = tpu.matmul %0, %1, %cst {dimension_numbers = #tpu.dot_dimension_numbers<[1], [0], [0], [1], [0, 0, 1, 1], [], []>} : vector<128x64xbf16>, vector<64x128xbf16>, vector<128x128xf32> -> vector<128x128xf32>
    %c0_3 = arith.constant 0 : index
    %c0_4 = arith.constant 0 : index
    %3 = vector.load %arg3[%c0_3, %c0_4] : memref<8x128xf32, #tpu.memory_space<vmem>>, vector<1x128xf32>
    %4 = vector.broadcast %3 : vector<1x128xf32> to vector<128x128xf32>
    %5 = arith.addf %2, %4 : vector<128x128xf32>
    %cst_5 = arith.constant 3.000000e+00 : f32
    %6 = vector.broadcast %cst_5 : f32 to vector<128x128xf32>
    %7 = arith.addf %5, %6 : vector<128x128xf32>
    %cst_6 = arith.constant 0.000000e+00 : f32
    %cst_7 = arith.constant 6.000000e+00 : f32
    %8 = vector.broadcast %cst_6 : f32 to vector<128x128xf32>
    %9 = arith.maximumf %8, %7 : vector<128x128xf32>
    %10 = vector.broadcast %cst_7 : f32 to vector<128x128xf32>
    %11 = arith.minimumf %10, %9 : vector<128x128xf32>
    %12 = arith.mulf %5, %11 : vector<128x128xf32>
    %cst_8 = arith.constant 0.166666672 : f32
    %13 = vector.broadcast %cst_8 : f32 to vector<128x128xf32>
    %14 = arith.mulf %12, %13 : vector<128x128xf32>
    %15 = arith.truncf %14 : vector<128x128xf32> to vector<128x128xbf16>
    %c64 = arith.constant 64 : index
    %c0_9 = arith.constant 0 : index
    %16 = vector.load %arg1[%c64, %c0_9] : memref<960x128xbf16, #tpu.memory_space<vmem>>, vector<128x128xbf16>
    %cst_10 = arith.constant dense<0.000000e+00> : vector<128x128xf32>
    %17 = tpu.matmul %15, %16, %cst_10 {dimension_numbers = #tpu.dot_dimension_numbers<[1], [0], [0], [1], [0, 0, 1, 1], [], []>} : vector<128x128xbf16>, vector<128x128xbf16>, vector<128x128xf32> -> vector<128x128xf32>
    %18 = arith.addf %14, %17 : vector<128x128xf32>
    %c1 = arith.constant 1 : index
    %c0_11 = arith.constant 0 : index
    %19 = vector.load %arg3[%c1, %c0_11] : memref<8x128xf32, #tpu.memory_space<vmem>>, vector<1x128xf32>
    %20 = vector.broadcast %19 : vector<1x128xf32> to vector<128x128xf32>
    %21 = arith.addf %18, %20 : vector<128x128xf32>
    %22 = arith.truncf %21 : vector<128x128xf32> to vector<128x128xbf16>
    %c0_12 = arith.constant 0 : index
    %c0_13 = arith.constant 0 : index
    %23 = vector.load %arg2[%c0_12, %c0_13] : memref<256x384xbf16, #tpu.memory_space<vmem>>, vector<128x384xbf16>
    %cst_14 = arith.constant dense<0.000000e+00> : vector<128x384xf32>
    %24 = tpu.matmul %22, %23, %cst_14 {dimension_numbers = #tpu.dot_dimension_numbers<[1], [0], [0], [1], [0, 0, 1, 1], [], []>} : vector<128x128xbf16>, vector<128x384xbf16>, vector<128x384xf32> -> vector<128x384xf32>
    %c0_15 = arith.constant 0 : index
    %c0_16 = arith.constant 0 : index
    %25 = vector.load %arg4[%c0_15, %c0_16] : memref<8x384xf32, #tpu.memory_space<vmem>>, vector<1x384xf32>
    %26 = vector.broadcast %25 : vector<1x384xf32> to vector<128x384xf32>
    %27 = arith.addf %24, %26 : vector<128x384xf32>
    %28 = arith.truncf %27 : vector<128x384xf32> to vector<128x384xbf16>
    %29 = vector.extract_strided_slice %28 {offsets = [0, 0], sizes = [64, 32], strides = [1, 1]} : vector<128x384xbf16> to vector<64x32xbf16>
    %30 = vector.extract_strided_slice %28 {offsets = [0, 128], sizes = [64, 32], strides = [1, 1]} : vector<128x384xbf16> to vector<64x32xbf16>
    %31 = vector.extract_strided_slice %28 {offsets = [0, 256], sizes = [64, 32], strides = [1, 1]} : vector<128x384xbf16> to vector<64x32xbf16>
    %cst_17 = arith.constant dense<0.000000e+00> : vector<64x64xf32>
    %32 = tpu.matmul %29, %30, %cst_17 {dimension_numbers = #tpu.dot_dimension_numbers<[1], [1], [0], [0], [0, 0, 1, 0], [], []>} : vector<64x32xbf16>, vector<64x32xbf16>, vector<64x64xf32> -> vector<64x64xf32>
    %cst_18 = arith.constant 0.176776692 : f32
    %33 = vector.broadcast %cst_18 : f32 to vector<64x64xf32>
    %34 = arith.mulf %32, %33 : vector<64x64xf32>
    %cst_19 = arith.constant dense<0xFF800000> : vector<64xf32>
    %35 = vector.multi_reduction <maximumf>, %34, %cst_19 [1] : vector<64x64xf32> to vector<64xf32>
    %36 = vector.shape_cast %35 : vector<64xf32> to vector<64x1xf32>
    %37 = vector.broadcast %36 : vector<64x1xf32> to vector<64x64xf32>
    %38 = arith.subf %34, %37 : vector<64x64xf32>
    %39 = math.exp %38 : vector<64x64xf32>
    %cst_20 = arith.constant dense<0.000000e+00> : vector<64xf32>
    %40 = vector.multi_reduction <add>, %39, %cst_20 [1] : vector<64x64xf32> to vector<64xf32>
    %41 = vector.shape_cast %40 : vector<64xf32> to vector<64x1xf32>
    %42 = tpu.reciprocal %41 {approx = true} : vector<64x1xf32> -> vector<64x1xf32>
    %43 = vector.broadcast %42 : vector<64x1xf32> to vector<64x64xf32>
    %44 = arith.mulf %39, %43 : vector<64x64xf32>
    %45 = arith.truncf %44 : vector<64x64xf32> to vector<64x64xbf16>
    %cst_21 = arith.constant dense<0.000000e+00> : vector<64x32xf32>
    %46 = tpu.matmul %45, %31, %cst_21 {dimension_numbers = #tpu.dot_dimension_numbers<[1], [0], [0], [1], [0, 0, 1, 1], [], []>} : vector<64x64xbf16>, vector<64x32xbf16>, vector<64x32xf32> -> vector<64x32xf32>
    %47 = arith.truncf %46 : vector<64x32xf32> to vector<64x32xbf16>
    %48 = vector.extract_strided_slice %28 {offsets = [0, 32], sizes = [64, 32], strides = [1, 1]} : vector<128x384xbf16> to vector<64x32xbf16>
    %49 = vector.extract_strided_slice %28 {offsets = [0, 160], sizes = [64, 32], strides = [1, 1]} : vector<128x384xbf16> to vector<64x32xbf16>
    %50 = vector.extract_strided_slice %28 {offsets = [0, 288], sizes = [64, 32], strides = [1, 1]} : vector<128x384xbf16> to vector<64x32xbf16>
    %cst_22 = arith.constant dense<0.000000e+00> : vector<64x64xf32>
    %51 = tpu.matmul %48, %49, %cst_22 {dimension_numbers = #tpu.dot_dimension_numbers<[1], [1], [0], [0], [0, 0, 1, 0], [], []>} : vector<64x32xbf16>, vector<64x32xbf16>, vector<64x64xf32> -> vector<64x64xf32>
    %cst_23 = arith.constant 0.176776692 : f32
    %52 = vector.broadcast %cst_23 : f32 to vector<64x64xf32>
    %53 = arith.mulf %51, %52 : vector<64x64xf32>
    %cst_24 = arith.constant dense<0xFF800000> : vector<64xf32>
    %54 = vector.multi_reduction <maximumf>, %53, %cst_24 [1] : vector<64x64xf32> to vector<64xf32>
    %55 = vector.shape_cast %54 : vector<64xf32> to vector<64x1xf32>
    %56 = vector.broadcast %55 : vector<64x1xf32> to vector<64x64xf32>
    %57 = arith.subf %53, %56 : vector<64x64xf32>
    %58 = math.exp %57 : vector<64x64xf32>
    %cst_25 = arith.constant dense<0.000000e+00> : vector<64xf32>
    %59 = vector.multi_reduction <add>, %58, %cst_25 [1] : vector<64x64xf32> to vector<64xf32>
    %60 = vector.shape_cast %59 : vector<64xf32> to vector<64x1xf32>
    %61 = tpu.reciprocal %60 {approx = true} : vector<64x1xf32> -> vector<64x1xf32>
    %62 = vector.broadcast %61 : vector<64x1xf32> to vector<64x64xf32>
    %63 = arith.mulf %58, %62 : vector<64x64xf32>
    %64 = arith.truncf %63 : vector<64x64xf32> to vector<64x64xbf16>
    %cst_26 = arith.constant dense<0.000000e+00> : vector<64x32xf32>
    %65 = tpu.matmul %64, %50, %cst_26 {dimension_numbers = #tpu.dot_dimension_numbers<[1], [0], [0], [1], [0, 0, 1, 1], [], []>} : vector<64x64xbf16>, vector<64x32xbf16>, vector<64x32xf32> -> vector<64x32xf32>
    %66 = arith.truncf %65 : vector<64x32xf32> to vector<64x32xbf16>
    %67 = vector.extract_strided_slice %28 {offsets = [0, 64], sizes = [64, 32], strides = [1, 1]} : vector<128x384xbf16> to vector<64x32xbf16>
    %68 = vector.extract_strided_slice %28 {offsets = [0, 192], sizes = [64, 32], strides = [1, 1]} : vector<128x384xbf16> to vector<64x32xbf16>
    %69 = vector.extract_strided_slice %28 {offsets = [0, 320], sizes = [64, 32], strides = [1, 1]} : vector<128x384xbf16> to vector<64x32xbf16>
    %cst_27 = arith.constant dense<0.000000e+00> : vector<64x64xf32>
    %70 = tpu.matmul %67, %68, %cst_27 {dimension_numbers = #tpu.dot_dimension_numbers<[1], [1], [0], [0], [0, 0, 1, 0], [], []>} : vector<64x32xbf16>, vector<64x32xbf16>, vector<64x64xf32> -> vector<64x64xf32>
    %cst_28 = arith.constant 0.176776692 : f32
    %71 = vector.broadcast %cst_28 : f32 to vector<64x64xf32>
    %72 = arith.mulf %70, %71 : vector<64x64xf32>
    %cst_29 = arith.constant dense<0xFF800000> : vector<64xf32>
    %73 = vector.multi_reduction <maximumf>, %72, %cst_29 [1] : vector<64x64xf32> to vector<64xf32>
    %74 = vector.shape_cast %73 : vector<64xf32> to vector<64x1xf32>
    %75 = vector.broadcast %74 : vector<64x1xf32> to vector<64x64xf32>
    %76 = arith.subf %72, %75 : vector<64x64xf32>
    %77 = math.exp %76 : vector<64x64xf32>
    %cst_30 = arith.constant dense<0.000000e+00> : vector<64xf32>
    %78 = vector.multi_reduction <add>, %77, %cst_30 [1] : vector<64x64xf32> to vector<64xf32>
    %79 = vector.shape_cast %78 : vector<64xf32> to vector<64x1xf32>
    %80 = tpu.reciprocal %79 {approx = true} : vector<64x1xf32> -> vector<64x1xf32>
    %81 = vector.broadcast %80 : vector<64x1xf32> to vector<64x64xf32>
    %82 = arith.mulf %77, %81 : vector<64x64xf32>
    %83 = arith.truncf %82 : vector<64x64xf32> to vector<64x64xbf16>
    %cst_31 = arith.constant dense<0.000000e+00> : vector<64x32xf32>
    %84 = tpu.matmul %83, %69, %cst_31 {dimension_numbers = #tpu.dot_dimension_numbers<[1], [0], [0], [1], [0, 0, 1, 1], [], []>} : vector<64x64xbf16>, vector<64x32xbf16>, vector<64x32xf32> -> vector<64x32xf32>
    %85 = arith.truncf %84 : vector<64x32xf32> to vector<64x32xbf16>
    %86 = vector.extract_strided_slice %28 {offsets = [0, 96], sizes = [64, 32], strides = [1, 1]} : vector<128x384xbf16> to vector<64x32xbf16>
    %87 = vector.extract_strided_slice %28 {offsets = [0, 224], sizes = [64, 32], strides = [1, 1]} : vector<128x384xbf16> to vector<64x32xbf16>
    %88 = vector.extract_strided_slice %28 {offsets = [0, 352], sizes = [64, 32], strides = [1, 1]} : vector<128x384xbf16> to vector<64x32xbf16>
    %cst_32 = arith.constant dense<0.000000e+00> : vector<64x64xf32>
    %89 = tpu.matmul %86, %87, %cst_32 {dimension_numbers = #tpu.dot_dimension_numbers<[1], [1], [0], [0], [0, 0, 1, 0], [], []>} : vector<64x32xbf16>, vector<64x32xbf16>, vector<64x64xf32> -> vector<64x64xf32>
    %cst_33 = arith.constant 0.176776692 : f32
    %90 = vector.broadcast %cst_33 : f32 to vector<64x64xf32>
    %91 = arith.mulf %89, %90 : vector<64x64xf32>
    %cst_34 = arith.constant dense<0xFF800000> : vector<64xf32>
    %92 = vector.multi_reduction <maximumf>, %91, %cst_34 [1] : vector<64x64xf32> to vector<64xf32>
    %93 = vector.shape_cast %92 : vector<64xf32> to vector<64x1xf32>
    %94 = vector.broadcast %93 : vector<64x1xf32> to vector<64x64xf32>
    %95 = arith.subf %91, %94 : vector<64x64xf32>
    %96 = math.exp %95 : vector<64x64xf32>
    %cst_35 = arith.constant dense<0.000000e+00> : vector<64xf32>
    %97 = vector.multi_reduction <add>, %96, %cst_35 [1] : vector<64x64xf32> to vector<64xf32>
    %98 = vector.shape_cast %97 : vector<64xf32> to vector<64x1xf32>
    %99 = tpu.reciprocal %98 {approx = true} : vector<64x1xf32> -> vector<64x1xf32>
    %100 = vector.broadcast %99 : vector<64x1xf32> to vector<64x64xf32>
    %101 = arith.mulf %96, %100 : vector<64x64xf32>
    %102 = arith.truncf %101 : vector<64x64xf32> to vector<64x64xbf16>
    %cst_36 = arith.constant dense<0.000000e+00> : vector<64x32xf32>
    %103 = tpu.matmul %102, %88, %cst_36 {dimension_numbers = #tpu.dot_dimension_numbers<[1], [0], [0], [1], [0, 0, 1, 1], [], []>} : vector<64x64xbf16>, vector<64x32xbf16>, vector<64x32xf32> -> vector<64x32xf32>
    %104 = arith.truncf %103 : vector<64x32xf32> to vector<64x32xbf16>
    %105 = tpu.concatenate %47, %66, %85, %104 in 1 : vector<64x32xbf16>, vector<64x32xbf16>, vector<64x32xbf16>, vector<64x32xbf16> -> vector<64x128xbf16>
    %106 = vector.extract_strided_slice %28 {offsets = [64, 0], sizes = [64, 32], strides = [1, 1]} : vector<128x384xbf16> to vector<64x32xbf16>
    %107 = vector.extract_strided_slice %28 {offsets = [64, 128], sizes = [64, 32], strides = [1, 1]} : vector<128x384xbf16> to vector<64x32xbf16>
    %108 = vector.extract_strided_slice %28 {offsets = [64, 256], sizes = [64, 32], strides = [1, 1]} : vector<128x384xbf16> to vector<64x32xbf16>
    %cst_37 = arith.constant dense<0.000000e+00> : vector<64x64xf32>
    %109 = tpu.matmul %106, %107, %cst_37 {dimension_numbers = #tpu.dot_dimension_numbers<[1], [1], [0], [0], [0, 0, 1, 0], [], []>} : vector<64x32xbf16>, vector<64x32xbf16>, vector<64x64xf32> -> vector<64x64xf32>
    %cst_38 = arith.constant 0.176776692 : f32
    %110 = vector.broadcast %cst_38 : f32 to vector<64x64xf32>
    %111 = arith.mulf %109, %110 : vector<64x64xf32>
    %cst_39 = arith.constant dense<0xFF800000> : vector<64xf32>
    %112 = vector.multi_reduction <maximumf>, %111, %cst_39 [1] : vector<64x64xf32> to vector<64xf32>
    %113 = vector.shape_cast %112 : vector<64xf32> to vector<64x1xf32>
    %114 = vector.broadcast %113 : vector<64x1xf32> to vector<64x64xf32>
    %115 = arith.subf %111, %114 : vector<64x64xf32>
    %116 = math.exp %115 : vector<64x64xf32>
    %cst_40 = arith.constant dense<0.000000e+00> : vector<64xf32>
    %117 = vector.multi_reduction <add>, %116, %cst_40 [1] : vector<64x64xf32> to vector<64xf32>
    %118 = vector.shape_cast %117 : vector<64xf32> to vector<64x1xf32>
    %119 = tpu.reciprocal %118 {approx = true} : vector<64x1xf32> -> vector<64x1xf32>
    %120 = vector.broadcast %119 : vector<64x1xf32> to vector<64x64xf32>
    %121 = arith.mulf %116, %120 : vector<64x64xf32>
    %122 = arith.truncf %121 : vector<64x64xf32> to vector<64x64xbf16>
    %cst_41 = arith.constant dense<0.000000e+00> : vector<64x32xf32>
    %123 = tpu.matmul %122, %108, %cst_41 {dimension_numbers = #tpu.dot_dimension_numbers<[1], [0], [0], [1], [0, 0, 1, 1], [], []>} : vector<64x64xbf16>, vector<64x32xbf16>, vector<64x32xf32> -> vector<64x32xf32>
    %124 = arith.truncf %123 : vector<64x32xf32> to vector<64x32xbf16>
    %125 = vector.extract_strided_slice %28 {offsets = [64, 32], sizes = [64, 32], strides = [1, 1]} : vector<128x384xbf16> to vector<64x32xbf16>
    %126 = vector.extract_strided_slice %28 {offsets = [64, 160], sizes = [64, 32], strides = [1, 1]} : vector<128x384xbf16> to vector<64x32xbf16>
    %127 = vector.extract_strided_slice %28 {offsets = [64, 288], sizes = [64, 32], strides = [1, 1]} : vector<128x384xbf16> to vector<64x32xbf16>
    %cst_42 = arith.constant dense<0.000000e+00> : vector<64x64xf32>
    %128 = tpu.matmul %125, %126, %cst_42 {dimension_numbers = #tpu.dot_dimension_numbers<[1], [1], [0], [0], [0, 0, 1, 0], [], []>} : vector<64x32xbf16>, vector<64x32xbf16>, vector<64x64xf32> -> vector<64x64xf32>
    %cst_43 = arith.constant 0.176776692 : f32
    %129 = vector.broadcast %cst_43 : f32 to vector<64x64xf32>
    %130 = arith.mulf %128, %129 : vector<64x64xf32>
    %cst_44 = arith.constant dense<0xFF800000> : vector<64xf32>
    %131 = vector.multi_reduction <maximumf>, %130, %cst_44 [1] : vector<64x64xf32> to vector<64xf32>
    %132 = vector.shape_cast %131 : vector<64xf32> to vector<64x1xf32>
    %133 = vector.broadcast %132 : vector<64x1xf32> to vector<64x64xf32>
    %134 = arith.subf %130, %133 : vector<64x64xf32>
    %135 = math.exp %134 : vector<64x64xf32>
    %cst_45 = arith.constant dense<0.000000e+00> : vector<64xf32>
    %136 = vector.multi_reduction <add>, %135, %cst_45 [1] : vector<64x64xf32> to vector<64xf32>
    %137 = vector.shape_cast %136 : vector<64xf32> to vector<64x1xf32>
    %138 = tpu.reciprocal %137 {approx = true} : vector<64x1xf32> -> vector<64x1xf32>
    %139 = vector.broadcast %138 : vector<64x1xf32> to vector<64x64xf32>
    %140 = arith.mulf %135, %139 : vector<64x64xf32>
    %141 = arith.truncf %140 : vector<64x64xf32> to vector<64x64xbf16>
    %cst_46 = arith.constant dense<0.000000e+00> : vector<64x32xf32>
    %142 = tpu.matmul %141, %127, %cst_46 {dimension_numbers = #tpu.dot_dimension_numbers<[1], [0], [0], [1], [0, 0, 1, 1], [], []>} : vector<64x64xbf16>, vector<64x32xbf16>, vector<64x32xf32> -> vector<64x32xf32>
    %143 = arith.truncf %142 : vector<64x32xf32> to vector<64x32xbf16>
    %144 = vector.extract_strided_slice %28 {offsets = [64, 64], sizes = [64, 32], strides = [1, 1]} : vector<128x384xbf16> to vector<64x32xbf16>
    %145 = vector.extract_strided_slice %28 {offsets = [64, 192], sizes = [64, 32], strides = [1, 1]} : vector<128x384xbf16> to vector<64x32xbf16>
    %146 = vector.extract_strided_slice %28 {offsets = [64, 320], sizes = [64, 32], strides = [1, 1]} : vector<128x384xbf16> to vector<64x32xbf16>
    %cst_47 = arith.constant dense<0.000000e+00> : vector<64x64xf32>
    %147 = tpu.matmul %144, %145, %cst_47 {dimension_numbers = #tpu.dot_dimension_numbers<[1], [1], [0], [0], [0, 0, 1, 0], [], []>} : vector<64x32xbf16>, vector<64x32xbf16>, vector<64x64xf32> -> vector<64x64xf32>
    %cst_48 = arith.constant 0.176776692 : f32
    %148 = vector.broadcast %cst_48 : f32 to vector<64x64xf32>
    %149 = arith.mulf %147, %148 : vector<64x64xf32>
    %cst_49 = arith.constant dense<0xFF800000> : vector<64xf32>
    %150 = vector.multi_reduction <maximumf>, %149, %cst_49 [1] : vector<64x64xf32> to vector<64xf32>
    %151 = vector.shape_cast %150 : vector<64xf32> to vector<64x1xf32>
    %152 = vector.broadcast %151 : vector<64x1xf32> to vector<64x64xf32>
    %153 = arith.subf %149, %152 : vector<64x64xf32>
    %154 = math.exp %153 : vector<64x64xf32>
    %cst_50 = arith.constant dense<0.000000e+00> : vector<64xf32>
    %155 = vector.multi_reduction <add>, %154, %cst_50 [1] : vector<64x64xf32> to vector<64xf32>
    %156 = vector.shape_cast %155 : vector<64xf32> to vector<64x1xf32>
    %157 = tpu.reciprocal %156 {approx = true} : vector<64x1xf32> -> vector<64x1xf32>
    %158 = vector.broadcast %157 : vector<64x1xf32> to vector<64x64xf32>
    %159 = arith.mulf %154, %158 : vector<64x64xf32>
    %160 = arith.truncf %159 : vector<64x64xf32> to vector<64x64xbf16>
    %cst_51 = arith.constant dense<0.000000e+00> : vector<64x32xf32>
    %161 = tpu.matmul %160, %146, %cst_51 {dimension_numbers = #tpu.dot_dimension_numbers<[1], [0], [0], [1], [0, 0, 1, 1], [], []>} : vector<64x64xbf16>, vector<64x32xbf16>, vector<64x32xf32> -> vector<64x32xf32>
    %162 = arith.truncf %161 : vector<64x32xf32> to vector<64x32xbf16>
    %163 = vector.extract_strided_slice %28 {offsets = [64, 96], sizes = [64, 32], strides = [1, 1]} : vector<128x384xbf16> to vector<64x32xbf16>
    %164 = vector.extract_strided_slice %28 {offsets = [64, 224], sizes = [64, 32], strides = [1, 1]} : vector<128x384xbf16> to vector<64x32xbf16>
    %165 = vector.extract_strided_slice %28 {offsets = [64, 352], sizes = [64, 32], strides = [1, 1]} : vector<128x384xbf16> to vector<64x32xbf16>
    %cst_52 = arith.constant dense<0.000000e+00> : vector<64x64xf32>
    %166 = tpu.matmul %163, %164, %cst_52 {dimension_numbers = #tpu.dot_dimension_numbers<[1], [1], [0], [0], [0, 0, 1, 0], [], []>} : vector<64x32xbf16>, vector<64x32xbf16>, vector<64x64xf32> -> vector<64x64xf32>
    %cst_53 = arith.constant 0.176776692 : f32
    %167 = vector.broadcast %cst_53 : f32 to vector<64x64xf32>
    %168 = arith.mulf %166, %167 : vector<64x64xf32>
    %cst_54 = arith.constant dense<0xFF800000> : vector<64xf32>
    %169 = vector.multi_reduction <maximumf>, %168, %cst_54 [1] : vector<64x64xf32> to vector<64xf32>
    %170 = vector.shape_cast %169 : vector<64xf32> to vector<64x1xf32>
    %171 = vector.broadcast %170 : vector<64x1xf32> to vector<64x64xf32>
    %172 = arith.subf %168, %171 : vector<64x64xf32>
    %173 = math.exp %172 : vector<64x64xf32>
    %cst_55 = arith.constant dense<0.000000e+00> : vector<64xf32>
    %174 = vector.multi_reduction <add>, %173, %cst_55 [1] : vector<64x64xf32> to vector<64xf32>
    %175 = vector.shape_cast %174 : vector<64xf32> to vector<64x1xf32>
    %176 = tpu.reciprocal %175 {approx = true} : vector<64x1xf32> -> vector<64x1xf32>
    %177 = vector.broadcast %176 : vector<64x1xf32> to vector<64x64xf32>
    %178 = arith.mulf %173, %177 : vector<64x64xf32>
    %179 = arith.truncf %178 : vector<64x64xf32> to vector<64x64xbf16>
    %cst_56 = arith.constant dense<0.000000e+00> : vector<64x32xf32>
    %180 = tpu.matmul %179, %165, %cst_56 {dimension_numbers = #tpu.dot_dimension_numbers<[1], [0], [0], [1], [0, 0, 1, 1], [], []>} : vector<64x64xbf16>, vector<64x32xbf16>, vector<64x32xf32> -> vector<64x32xf32>
    %181 = arith.truncf %180 : vector<64x32xf32> to vector<64x32xbf16>
    %182 = tpu.concatenate %124, %143, %162, %181 in 1 : vector<64x32xbf16>, vector<64x32xbf16>, vector<64x32xbf16>, vector<64x32xbf16> -> vector<64x128xbf16>
    %183 = tpu.concatenate %105, %182 in 0 : vector<64x128xbf16>, vector<64x128xbf16> -> vector<128x128xbf16>
    %c192 = arith.constant 192 : index
    %c0_57 = arith.constant 0 : index
    %184 = vector.load %arg1[%c192, %c0_57] : memref<960x128xbf16, #tpu.memory_space<vmem>>, vector<128x128xbf16>
    %cst_58 = arith.constant dense<0.000000e+00> : vector<128x128xf32>
    %185 = tpu.matmul %183, %184, %cst_58 {dimension_numbers = #tpu.dot_dimension_numbers<[1], [0], [0], [1], [0, 0, 1, 1], [], []>} : vector<128x128xbf16>, vector<128x128xbf16>, vector<128x128xf32> -> vector<128x128xf32>
    %186 = arith.addf %21, %185 : vector<128x128xf32>
    %c2 = arith.constant 2 : index
    %c0_59 = arith.constant 0 : index
    %187 = vector.load %arg3[%c2, %c0_59] : memref<8x128xf32, #tpu.memory_space<vmem>>, vector<1x128xf32>
    %188 = vector.broadcast %187 : vector<1x128xf32> to vector<128x128xf32>
    %189 = arith.addf %186, %188 : vector<128x128xf32>
    %190 = arith.truncf %189 : vector<128x128xf32> to vector<128x128xbf16>
    %c320 = arith.constant 320 : index
    %c0_60 = arith.constant 0 : index
    %191 = vector.load %arg1[%c320, %c0_60] : memref<960x128xbf16, #tpu.memory_space<vmem>>, vector<128x128xbf16>
    %cst_61 = arith.constant dense<0.000000e+00> : vector<128x128xf32>
    %192 = tpu.matmul %190, %191, %cst_61 {dimension_numbers = #tpu.dot_dimension_numbers<[1], [0], [0], [1], [0, 0, 1, 1], [], []>} : vector<128x128xbf16>, vector<128x128xbf16>, vector<128x128xf32> -> vector<128x128xf32>
    %193 = arith.truncf %192 : vector<128x128xf32> to vector<128x128xbf16>
    %c448 = arith.constant 448 : index
    %c0_62 = arith.constant 0 : index
    %194 = vector.load %arg1[%c448, %c0_62] : memref<960x128xbf16, #tpu.memory_space<vmem>>, vector<128x128xbf16>
    %cst_63 = arith.constant dense<0.000000e+00> : vector<128x128xf32>
    %195 = tpu.matmul %193, %194, %cst_63 {dimension_numbers = #tpu.dot_dimension_numbers<[1], [0], [0], [1], [0, 0, 1, 1], [], []>} : vector<128x128xbf16>, vector<128x128xbf16>, vector<128x128xf32> -> vector<128x128xf32>
    %196 = arith.addf %189, %195 : vector<128x128xf32>
    %197 = arith.truncf %196 : vector<128x128xf32> to vector<128x128xbf16>
    %c128 = arith.constant 128 : index
    %c0_64 = arith.constant 0 : index
    %198 = vector.load %arg2[%c128, %c0_64] : memref<256x384xbf16, #tpu.memory_space<vmem>>, vector<128x384xbf16>
    %cst_65 = arith.constant dense<0.000000e+00> : vector<128x384xf32>
    %199 = tpu.matmul %197, %198, %cst_65 {dimension_numbers = #tpu.dot_dimension_numbers<[1], [0], [0], [1], [0, 0, 1, 1], [], []>} : vector<128x128xbf16>, vector<128x384xbf16>, vector<128x384xf32> -> vector<128x384xf32>
    %c1_66 = arith.constant 1 : index
    %c0_67 = arith.constant 0 : index
    %200 = vector.load %arg4[%c1_66, %c0_67] : memref<8x384xf32, #tpu.memory_space<vmem>>, vector<1x384xf32>
    %201 = vector.broadcast %200 : vector<1x384xf32> to vector<128x384xf32>
    %202 = arith.addf %199, %201 : vector<128x384xf32>
    %203 = arith.truncf %202 : vector<128x384xf32> to vector<128x384xbf16>
    %204 = vector.extract_strided_slice %203 {offsets = [0, 0], sizes = [64, 32], strides = [1, 1]} : vector<128x384xbf16> to vector<64x32xbf16>
    %205 = vector.extract_strided_slice %203 {offsets = [0, 128], sizes = [64, 32], strides = [1, 1]} : vector<128x384xbf16> to vector<64x32xbf16>
    %206 = vector.extract_strided_slice %203 {offsets = [0, 256], sizes = [64, 32], strides = [1, 1]} : vector<128x384xbf16> to vector<64x32xbf16>
    %cst_68 = arith.constant dense<0.000000e+00> : vector<64x64xf32>
    %207 = tpu.matmul %204, %205, %cst_68 {dimension_numbers = #tpu.dot_dimension_numbers<[1], [1], [0], [0], [0, 0, 1, 0], [], []>} : vector<64x32xbf16>, vector<64x32xbf16>, vector<64x64xf32> -> vector<64x64xf32>
    %cst_69 = arith.constant 0.176776692 : f32
    %208 = vector.broadcast %cst_69 : f32 to vector<64x64xf32>
    %209 = arith.mulf %207, %208 : vector<64x64xf32>
    %cst_70 = arith.constant dense<0xFF800000> : vector<64xf32>
    %210 = vector.multi_reduction <maximumf>, %209, %cst_70 [1] : vector<64x64xf32> to vector<64xf32>
    %211 = vector.shape_cast %210 : vector<64xf32> to vector<64x1xf32>
    %212 = vector.broadcast %211 : vector<64x1xf32> to vector<64x64xf32>
    %213 = arith.subf %209, %212 : vector<64x64xf32>
    %214 = math.exp %213 : vector<64x64xf32>
    %cst_71 = arith.constant dense<0.000000e+00> : vector<64xf32>
    %215 = vector.multi_reduction <add>, %214, %cst_71 [1] : vector<64x64xf32> to vector<64xf32>
    %216 = vector.shape_cast %215 : vector<64xf32> to vector<64x1xf32>
    %217 = tpu.reciprocal %216 {approx = true} : vector<64x1xf32> -> vector<64x1xf32>
    %218 = vector.broadcast %217 : vector<64x1xf32> to vector<64x64xf32>
    %219 = arith.mulf %214, %218 : vector<64x64xf32>
    %220 = arith.truncf %219 : vector<64x64xf32> to vector<64x64xbf16>
    %cst_72 = arith.constant dense<0.000000e+00> : vector<64x32xf32>
    %221 = tpu.matmul %220, %206, %cst_72 {dimension_numbers = #tpu.dot_dimension_numbers<[1], [0], [0], [1], [0, 0, 1, 1], [], []>} : vector<64x64xbf16>, vector<64x32xbf16>, vector<64x32xf32> -> vector<64x32xf32>
    %222 = arith.truncf %221 : vector<64x32xf32> to vector<64x32xbf16>
    %223 = vector.extract_strided_slice %203 {offsets = [0, 32], sizes = [64, 32], strides = [1, 1]} : vector<128x384xbf16> to vector<64x32xbf16>
    %224 = vector.extract_strided_slice %203 {offsets = [0, 160], sizes = [64, 32], strides = [1, 1]} : vector<128x384xbf16> to vector<64x32xbf16>
    %225 = vector.extract_strided_slice %203 {offsets = [0, 288], sizes = [64, 32], strides = [1, 1]} : vector<128x384xbf16> to vector<64x32xbf16>
    %cst_73 = arith.constant dense<0.000000e+00> : vector<64x64xf32>
    %226 = tpu.matmul %223, %224, %cst_73 {dimension_numbers = #tpu.dot_dimension_numbers<[1], [1], [0], [0], [0, 0, 1, 0], [], []>} : vector<64x32xbf16>, vector<64x32xbf16>, vector<64x64xf32> -> vector<64x64xf32>
    %cst_74 = arith.constant 0.176776692 : f32
    %227 = vector.broadcast %cst_74 : f32 to vector<64x64xf32>
    %228 = arith.mulf %226, %227 : vector<64x64xf32>
    %cst_75 = arith.constant dense<0xFF800000> : vector<64xf32>
    %229 = vector.multi_reduction <maximumf>, %228, %cst_75 [1] : vector<64x64xf32> to vector<64xf32>
    %230 = vector.shape_cast %229 : vector<64xf32> to vector<64x1xf32>
    %231 = vector.broadcast %230 : vector<64x1xf32> to vector<64x64xf32>
    %232 = arith.subf %228, %231 : vector<64x64xf32>
    %233 = math.exp %232 : vector<64x64xf32>
    %cst_76 = arith.constant dense<0.000000e+00> : vector<64xf32>
    %234 = vector.multi_reduction <add>, %233, %cst_76 [1] : vector<64x64xf32> to vector<64xf32>
    %235 = vector.shape_cast %234 : vector<64xf32> to vector<64x1xf32>
    %236 = tpu.reciprocal %235 {approx = true} : vector<64x1xf32> -> vector<64x1xf32>
    %237 = vector.broadcast %236 : vector<64x1xf32> to vector<64x64xf32>
    %238 = arith.mulf %233, %237 : vector<64x64xf32>
    %239 = arith.truncf %238 : vector<64x64xf32> to vector<64x64xbf16>
    %cst_77 = arith.constant dense<0.000000e+00> : vector<64x32xf32>
    %240 = tpu.matmul %239, %225, %cst_77 {dimension_numbers = #tpu.dot_dimension_numbers<[1], [0], [0], [1], [0, 0, 1, 1], [], []>} : vector<64x64xbf16>, vector<64x32xbf16>, vector<64x32xf32> -> vector<64x32xf32>
    %241 = arith.truncf %240 : vector<64x32xf32> to vector<64x32xbf16>
    %242 = vector.extract_strided_slice %203 {offsets = [0, 64], sizes = [64, 32], strides = [1, 1]} : vector<128x384xbf16> to vector<64x32xbf16>
    %243 = vector.extract_strided_slice %203 {offsets = [0, 192], sizes = [64, 32], strides = [1, 1]} : vector<128x384xbf16> to vector<64x32xbf16>
    %244 = vector.extract_strided_slice %203 {offsets = [0, 320], sizes = [64, 32], strides = [1, 1]} : vector<128x384xbf16> to vector<64x32xbf16>
    %cst_78 = arith.constant dense<0.000000e+00> : vector<64x64xf32>
    %245 = tpu.matmul %242, %243, %cst_78 {dimension_numbers = #tpu.dot_dimension_numbers<[1], [1], [0], [0], [0, 0, 1, 0], [], []>} : vector<64x32xbf16>, vector<64x32xbf16>, vector<64x64xf32> -> vector<64x64xf32>
    %cst_79 = arith.constant 0.176776692 : f32
    %246 = vector.broadcast %cst_79 : f32 to vector<64x64xf32>
    %247 = arith.mulf %245, %246 : vector<64x64xf32>
    %cst_80 = arith.constant dense<0xFF800000> : vector<64xf32>
    %248 = vector.multi_reduction <maximumf>, %247, %cst_80 [1] : vector<64x64xf32> to vector<64xf32>
    %249 = vector.shape_cast %248 : vector<64xf32> to vector<64x1xf32>
    %250 = vector.broadcast %249 : vector<64x1xf32> to vector<64x64xf32>
    %251 = arith.subf %247, %250 : vector<64x64xf32>
    %252 = math.exp %251 : vector<64x64xf32>
    %cst_81 = arith.constant dense<0.000000e+00> : vector<64xf32>
    %253 = vector.multi_reduction <add>, %252, %cst_81 [1] : vector<64x64xf32> to vector<64xf32>
    %254 = vector.shape_cast %253 : vector<64xf32> to vector<64x1xf32>
    %255 = tpu.reciprocal %254 {approx = true} : vector<64x1xf32> -> vector<64x1xf32>
    %256 = vector.broadcast %255 : vector<64x1xf32> to vector<64x64xf32>
    %257 = arith.mulf %252, %256 : vector<64x64xf32>
    %258 = arith.truncf %257 : vector<64x64xf32> to vector<64x64xbf16>
    %cst_82 = arith.constant dense<0.000000e+00> : vector<64x32xf32>
    %259 = tpu.matmul %258, %244, %cst_82 {dimension_numbers = #tpu.dot_dimension_numbers<[1], [0], [0], [1], [0, 0, 1, 1], [], []>} : vector<64x64xbf16>, vector<64x32xbf16>, vector<64x32xf32> -> vector<64x32xf32>
    %260 = arith.truncf %259 : vector<64x32xf32> to vector<64x32xbf16>
    %261 = vector.extract_strided_slice %203 {offsets = [0, 96], sizes = [64, 32], strides = [1, 1]} : vector<128x384xbf16> to vector<64x32xbf16>
    %262 = vector.extract_strided_slice %203 {offsets = [0, 224], sizes = [64, 32], strides = [1, 1]} : vector<128x384xbf16> to vector<64x32xbf16>
    %263 = vector.extract_strided_slice %203 {offsets = [0, 352], sizes = [64, 32], strides = [1, 1]} : vector<128x384xbf16> to vector<64x32xbf16>
    %cst_83 = arith.constant dense<0.000000e+00> : vector<64x64xf32>
    %264 = tpu.matmul %261, %262, %cst_83 {dimension_numbers = #tpu.dot_dimension_numbers<[1], [1], [0], [0], [0, 0, 1, 0], [], []>} : vector<64x32xbf16>, vector<64x32xbf16>, vector<64x64xf32> -> vector<64x64xf32>
    %cst_84 = arith.constant 0.176776692 : f32
    %265 = vector.broadcast %cst_84 : f32 to vector<64x64xf32>
    %266 = arith.mulf %264, %265 : vector<64x64xf32>
    %cst_85 = arith.constant dense<0xFF800000> : vector<64xf32>
    %267 = vector.multi_reduction <maximumf>, %266, %cst_85 [1] : vector<64x64xf32> to vector<64xf32>
    %268 = vector.shape_cast %267 : vector<64xf32> to vector<64x1xf32>
    %269 = vector.broadcast %268 : vector<64x1xf32> to vector<64x64xf32>
    %270 = arith.subf %266, %269 : vector<64x64xf32>
    %271 = math.exp %270 : vector<64x64xf32>
    %cst_86 = arith.constant dense<0.000000e+00> : vector<64xf32>
    %272 = vector.multi_reduction <add>, %271, %cst_86 [1] : vector<64x64xf32> to vector<64xf32>
    %273 = vector.shape_cast %272 : vector<64xf32> to vector<64x1xf32>
    %274 = tpu.reciprocal %273 {approx = true} : vector<64x1xf32> -> vector<64x1xf32>
    %275 = vector.broadcast %274 : vector<64x1xf32> to vector<64x64xf32>
    %276 = arith.mulf %271, %275 : vector<64x64xf32>
    %277 = arith.truncf %276 : vector<64x64xf32> to vector<64x64xbf16>
    %cst_87 = arith.constant dense<0.000000e+00> : vector<64x32xf32>
    %278 = tpu.matmul %277, %263, %cst_87 {dimension_numbers = #tpu.dot_dimension_numbers<[1], [0], [0], [1], [0, 0, 1, 1], [], []>} : vector<64x64xbf16>, vector<64x32xbf16>, vector<64x32xf32> -> vector<64x32xf32>
    %279 = arith.truncf %278 : vector<64x32xf32> to vector<64x32xbf16>
    %280 = tpu.concatenate %222, %241, %260, %279 in 1 : vector<64x32xbf16>, vector<64x32xbf16>, vector<64x32xbf16>, vector<64x32xbf16> -> vector<64x128xbf16>
    %281 = vector.extract_strided_slice %203 {offsets = [64, 0], sizes = [64, 32], strides = [1, 1]} : vector<128x384xbf16> to vector<64x32xbf16>
    %282 = vector.extract_strided_slice %203 {offsets = [64, 128], sizes = [64, 32], strides = [1, 1]} : vector<128x384xbf16> to vector<64x32xbf16>
    %283 = vector.extract_strided_slice %203 {offsets = [64, 256], sizes = [64, 32], strides = [1, 1]} : vector<128x384xbf16> to vector<64x32xbf16>
    %cst_88 = arith.constant dense<0.000000e+00> : vector<64x64xf32>
    %284 = tpu.matmul %281, %282, %cst_88 {dimension_numbers = #tpu.dot_dimension_numbers<[1], [1], [0], [0], [0, 0, 1, 0], [], []>} : vector<64x32xbf16>, vector<64x32xbf16>, vector<64x64xf32> -> vector<64x64xf32>
    %cst_89 = arith.constant 0.176776692 : f32
    %285 = vector.broadcast %cst_89 : f32 to vector<64x64xf32>
    %286 = arith.mulf %284, %285 : vector<64x64xf32>
    %cst_90 = arith.constant dense<0xFF800000> : vector<64xf32>
    %287 = vector.multi_reduction <maximumf>, %286, %cst_90 [1] : vector<64x64xf32> to vector<64xf32>
    %288 = vector.shape_cast %287 : vector<64xf32> to vector<64x1xf32>
    %289 = vector.broadcast %288 : vector<64x1xf32> to vector<64x64xf32>
    %290 = arith.subf %286, %289 : vector<64x64xf32>
    %291 = math.exp %290 : vector<64x64xf32>
    %cst_91 = arith.constant dense<0.000000e+00> : vector<64xf32>
    %292 = vector.multi_reduction <add>, %291, %cst_91 [1] : vector<64x64xf32> to vector<64xf32>
    %293 = vector.shape_cast %292 : vector<64xf32> to vector<64x1xf32>
    %294 = tpu.reciprocal %293 {approx = true} : vector<64x1xf32> -> vector<64x1xf32>
    %295 = vector.broadcast %294 : vector<64x1xf32> to vector<64x64xf32>
    %296 = arith.mulf %291, %295 : vector<64x64xf32>
    %297 = arith.truncf %296 : vector<64x64xf32> to vector<64x64xbf16>
    %cst_92 = arith.constant dense<0.000000e+00> : vector<64x32xf32>
    %298 = tpu.matmul %297, %283, %cst_92 {dimension_numbers = #tpu.dot_dimension_numbers<[1], [0], [0], [1], [0, 0, 1, 1], [], []>} : vector<64x64xbf16>, vector<64x32xbf16>, vector<64x32xf32> -> vector<64x32xf32>
    %299 = arith.truncf %298 : vector<64x32xf32> to vector<64x32xbf16>
    %300 = vector.extract_strided_slice %203 {offsets = [64, 32], sizes = [64, 32], strides = [1, 1]} : vector<128x384xbf16> to vector<64x32xbf16>
    %301 = vector.extract_strided_slice %203 {offsets = [64, 160], sizes = [64, 32], strides = [1, 1]} : vector<128x384xbf16> to vector<64x32xbf16>
    %302 = vector.extract_strided_slice %203 {offsets = [64, 288], sizes = [64, 32], strides = [1, 1]} : vector<128x384xbf16> to vector<64x32xbf16>
    %cst_93 = arith.constant dense<0.000000e+00> : vector<64x64xf32>
    %303 = tpu.matmul %300, %301, %cst_93 {dimension_numbers = #tpu.dot_dimension_numbers<[1], [1], [0], [0], [0, 0, 1, 0], [], []>} : vector<64x32xbf16>, vector<64x32xbf16>, vector<64x64xf32> -> vector<64x64xf32>
    %cst_94 = arith.constant 0.176776692 : f32
    %304 = vector.broadcast %cst_94 : f32 to vector<64x64xf32>
    %305 = arith.mulf %303, %304 : vector<64x64xf32>
    %cst_95 = arith.constant dense<0xFF800000> : vector<64xf32>
    %306 = vector.multi_reduction <maximumf>, %305, %cst_95 [1] : vector<64x64xf32> to vector<64xf32>
    %307 = vector.shape_cast %306 : vector<64xf32> to vector<64x1xf32>
    %308 = vector.broadcast %307 : vector<64x1xf32> to vector<64x64xf32>
    %309 = arith.subf %305, %308 : vector<64x64xf32>
    %310 = math.exp %309 : vector<64x64xf32>
    %cst_96 = arith.constant dense<0.000000e+00> : vector<64xf32>
    %311 = vector.multi_reduction <add>, %310, %cst_96 [1] : vector<64x64xf32> to vector<64xf32>
    %312 = vector.shape_cast %311 : vector<64xf32> to vector<64x1xf32>
    %313 = tpu.reciprocal %312 {approx = true} : vector<64x1xf32> -> vector<64x1xf32>
    %314 = vector.broadcast %313 : vector<64x1xf32> to vector<64x64xf32>
    %315 = arith.mulf %310, %314 : vector<64x64xf32>
    %316 = arith.truncf %315 : vector<64x64xf32> to vector<64x64xbf16>
    %cst_97 = arith.constant dense<0.000000e+00> : vector<64x32xf32>
    %317 = tpu.matmul %316, %302, %cst_97 {dimension_numbers = #tpu.dot_dimension_numbers<[1], [0], [0], [1], [0, 0, 1, 1], [], []>} : vector<64x64xbf16>, vector<64x32xbf16>, vector<64x32xf32> -> vector<64x32xf32>
    %318 = arith.truncf %317 : vector<64x32xf32> to vector<64x32xbf16>
    %319 = vector.extract_strided_slice %203 {offsets = [64, 64], sizes = [64, 32], strides = [1, 1]} : vector<128x384xbf16> to vector<64x32xbf16>
    %320 = vector.extract_strided_slice %203 {offsets = [64, 192], sizes = [64, 32], strides = [1, 1]} : vector<128x384xbf16> to vector<64x32xbf16>
    %321 = vector.extract_strided_slice %203 {offsets = [64, 320], sizes = [64, 32], strides = [1, 1]} : vector<128x384xbf16> to vector<64x32xbf16>
    %cst_98 = arith.constant dense<0.000000e+00> : vector<64x64xf32>
    %322 = tpu.matmul %319, %320, %cst_98 {dimension_numbers = #tpu.dot_dimension_numbers<[1], [1], [0], [0], [0, 0, 1, 0], [], []>} : vector<64x32xbf16>, vector<64x32xbf16>, vector<64x64xf32> -> vector<64x64xf32>
    %cst_99 = arith.constant 0.176776692 : f32
    %323 = vector.broadcast %cst_99 : f32 to vector<64x64xf32>
    %324 = arith.mulf %322, %323 : vector<64x64xf32>
    %cst_100 = arith.constant dense<0xFF800000> : vector<64xf32>
    %325 = vector.multi_reduction <maximumf>, %324, %cst_100 [1] : vector<64x64xf32> to vector<64xf32>
    %326 = vector.shape_cast %325 : vector<64xf32> to vector<64x1xf32>
    %327 = vector.broadcast %326 : vector<64x1xf32> to vector<64x64xf32>
    %328 = arith.subf %324, %327 : vector<64x64xf32>
    %329 = math.exp %328 : vector<64x64xf32>
    %cst_101 = arith.constant dense<0.000000e+00> : vector<64xf32>
    %330 = vector.multi_reduction <add>, %329, %cst_101 [1] : vector<64x64xf32> to vector<64xf32>
    %331 = vector.shape_cast %330 : vector<64xf32> to vector<64x1xf32>
    %332 = tpu.reciprocal %331 {approx = true} : vector<64x1xf32> -> vector<64x1xf32>
    %333 = vector.broadcast %332 : vector<64x1xf32> to vector<64x64xf32>
    %334 = arith.mulf %329, %333 : vector<64x64xf32>
    %335 = arith.truncf %334 : vector<64x64xf32> to vector<64x64xbf16>
    %cst_102 = arith.constant dense<0.000000e+00> : vector<64x32xf32>
    %336 = tpu.matmul %335, %321, %cst_102 {dimension_numbers = #tpu.dot_dimension_numbers<[1], [0], [0], [1], [0, 0, 1, 1], [], []>} : vector<64x64xbf16>, vector<64x32xbf16>, vector<64x32xf32> -> vector<64x32xf32>
    %337 = arith.truncf %336 : vector<64x32xf32> to vector<64x32xbf16>
    %338 = vector.extract_strided_slice %203 {offsets = [64, 96], sizes = [64, 32], strides = [1, 1]} : vector<128x384xbf16> to vector<64x32xbf16>
    %339 = vector.extract_strided_slice %203 {offsets = [64, 224], sizes = [64, 32], strides = [1, 1]} : vector<128x384xbf16> to vector<64x32xbf16>
    %340 = vector.extract_strided_slice %203 {offsets = [64, 352], sizes = [64, 32], strides = [1, 1]} : vector<128x384xbf16> to vector<64x32xbf16>
    %cst_103 = arith.constant dense<0.000000e+00> : vector<64x64xf32>
    %341 = tpu.matmul %338, %339, %cst_103 {dimension_numbers = #tpu.dot_dimension_numbers<[1], [1], [0], [0], [0, 0, 1, 0], [], []>} : vector<64x32xbf16>, vector<64x32xbf16>, vector<64x64xf32> -> vector<64x64xf32>
    %cst_104 = arith.constant 0.176776692 : f32
    %342 = vector.broadcast %cst_104 : f32 to vector<64x64xf32>
    %343 = arith.mulf %341, %342 : vector<64x64xf32>
    %cst_105 = arith.constant dense<0xFF800000> : vector<64xf32>
    %344 = vector.multi_reduction <maximumf>, %343, %cst_105 [1] : vector<64x64xf32> to vector<64xf32>
    %345 = vector.shape_cast %344 : vector<64xf32> to vector<64x1xf32>
    %346 = vector.broadcast %345 : vector<64x1xf32> to vector<64x64xf32>
    %347 = arith.subf %343, %346 : vector<64x64xf32>
    %348 = math.exp %347 : vector<64x64xf32>
    %cst_106 = arith.constant dense<0.000000e+00> : vector<64xf32>
    %349 = vector.multi_reduction <add>, %348, %cst_106 [1] : vector<64x64xf32> to vector<64xf32>
    %350 = vector.shape_cast %349 : vector<64xf32> to vector<64x1xf32>
    %351 = tpu.reciprocal %350 {approx = true} : vector<64x1xf32> -> vector<64x1xf32>
    %352 = vector.broadcast %351 : vector<64x1xf32> to vector<64x64xf32>
    %353 = arith.mulf %348, %352 : vector<64x64xf32>
    %354 = arith.truncf %353 : vector<64x64xf32> to vector<64x64xbf16>
    %cst_107 = arith.constant dense<0.000000e+00> : vector<64x32xf32>
    %355 = tpu.matmul %354, %340, %cst_107 {dimension_numbers = #tpu.dot_dimension_numbers<[1], [0], [0], [1], [0, 0, 1, 1], [], []>} : vector<64x64xbf16>, vector<64x32xbf16>, vector<64x32xf32> -> vector<64x32xf32>
    %356 = arith.truncf %355 : vector<64x32xf32> to vector<64x32xbf16>
    %357 = tpu.concatenate %299, %318, %337, %356 in 1 : vector<64x32xbf16>, vector<64x32xbf16>, vector<64x32xbf16>, vector<64x32xbf16> -> vector<64x128xbf16>
    %358 = tpu.concatenate %280, %357 in 0 : vector<64x128xbf16>, vector<64x128xbf16> -> vector<128x128xbf16>
    %c576 = arith.constant 576 : index
    %c0_108 = arith.constant 0 : index
    %359 = vector.load %arg1[%c576, %c0_108] : memref<960x128xbf16, #tpu.memory_space<vmem>>, vector<128x128xbf16>
    %cst_109 = arith.constant dense<0.000000e+00> : vector<128x128xf32>
    %360 = tpu.matmul %358, %359, %cst_109 {dimension_numbers = #tpu.dot_dimension_numbers<[1], [0], [0], [1], [0, 0, 1, 1], [], []>} : vector<128x128xbf16>, vector<128x128xbf16>, vector<128x128xf32> -> vector<128x128xf32>
    %361 = arith.addf %196, %360 : vector<128x128xf32>
    %c3 = arith.constant 3 : index
    %c0_110 = arith.constant 0 : index
    %362 = vector.load %arg3[%c3, %c0_110] : memref<8x128xf32, #tpu.memory_space<vmem>>, vector<1x128xf32>
    %363 = vector.broadcast %362 : vector<1x128xf32> to vector<128x128xf32>
    %364 = arith.addf %361, %363 : vector<128x128xf32>
    %365 = arith.truncf %364 : vector<128x128xf32> to vector<128x128xbf16>
    %c704 = arith.constant 704 : index
    %c0_111 = arith.constant 0 : index
    %366 = vector.load %arg1[%c704, %c0_111] : memref<960x128xbf16, #tpu.memory_space<vmem>>, vector<128x128xbf16>
    %cst_112 = arith.constant dense<0.000000e+00> : vector<128x128xf32>
    %367 = tpu.matmul %365, %366, %cst_112 {dimension_numbers = #tpu.dot_dimension_numbers<[1], [0], [0], [1], [0, 0, 1, 1], [], []>} : vector<128x128xbf16>, vector<128x128xbf16>, vector<128x128xf32> -> vector<128x128xf32>
    %368 = arith.truncf %367 : vector<128x128xf32> to vector<128x128xbf16>
    %c832 = arith.constant 832 : index
    %c0_113 = arith.constant 0 : index
    %369 = vector.load %arg1[%c832, %c0_113] : memref<960x128xbf16, #tpu.memory_space<vmem>>, vector<128x128xbf16>
    %cst_114 = arith.constant dense<0.000000e+00> : vector<128x128xf32>
    %370 = tpu.matmul %368, %369, %cst_114 {dimension_numbers = #tpu.dot_dimension_numbers<[1], [0], [0], [1], [0, 0, 1, 1], [], []>} : vector<128x128xbf16>, vector<128x128xbf16>, vector<128x128xf32> -> vector<128x128xf32>
    %371 = arith.addf %364, %370 : vector<128x128xf32>
    %c0_115 = arith.constant 0 : index
    %c0_116 = arith.constant 0 : index
    %372 = vector.load %arg5[%c0_115, %c0_116] : memref<128x128xf32, #tpu.memory_space<vmem>>, vector<128x128xf32>
    tpu.vector_store %arg5[%c0_115, %c0_116], %371 {strides = array<i32>} : memref<128x128xf32, #tpu.memory_space<vmem>>, vector<128x128xf32>,
    return
  }
}

</mosaic_0001>

<llo_original>
// kernel: transformer_block_forward.1
$region0: #{transformer_block_forward.1}
  #allocation0 [shape = 'u32[]', space=smem, size = 0x4, offset = 0x4, fixed_abs, tag = 'smem constant byte address 0x4 - core index']
  #allocation1 [shape = 'u32[144,128]{1,0:T(1,128)}', space=vmem, size = 0x12000, scoped, tag = 'internal scratch']
  %s0 = inlined_call_operand.vmem [shape: bf16[128,64], index: 0, kind: input, shape index: {}]
  %s1 = inlined_call_operand.hbm [shape: bf16[960,128], index: 1, kind: input, shape index: {}]
  %s2 = inlined_call_operand.hbm [shape: bf16[256,384], index: 2, kind: input, shape index: {}]
  %s3 = inlined_call_operand.vmem [shape: f32[8,128], index: 3, kind: input, shape index: {}]
  %s4 = inlined_call_operand.vmem [shape: f32[8,384], index: 4, kind: input, shape index: {}]
  %s5 = inlined_call_operand.hbm [shape: f32[128,128], index: 5, kind: output, shape index: {}]
  %s6 = sld [smem:[#allocation0]]
  $region38: #{transformer_block_forward.1} parent=0
    _
  %s8 = ssub.s32 1, %s6
  %s9 = scalar_select 0, %s8, %s6
  $region1: #{transformer_block_forward.1} parent=0
    #allocation2 [shape = 'u8[245760]{0}', space=vmem, size = 0x3c000, scoped, tag = 'input window, operand 1, single buffered']
    #allocation3 [shape = 's32[1]{0}', space=sflag, size = 0x4, scoped, tag = 'scoped memory for transformer_block_forward.1']
    #allocation4 [shape = 's32[1]{0}', space=sflag, size = 0x4, scoped, tag = 'scoped memory for transformer_block_forward.1']
    #allocation5 [shape = 'u8[196608]{0}', space=vmem, size = 0x30000, scoped, tag = 'input window, operand 2, single buffered']
    #allocation6 [shape = 's32[1]{0}', space=sflag, size = 0x4, scoped, tag = 'scoped memory for transformer_block_forward.1']
    #allocation7 [shape = 'u8[65536]{0}', space=vmem, size = 0x10000, scoped, tag = 'output window, operand 0, single buffered']
    %10 = vsyncpa [#allocation3], 0
    %11 = vsyncpa [#allocation6], 0
    %12 = vsyncpa [#allocation4], 0
    // Predicated region
    $region2: #{transformer_block_forward.1} parent=1 // pred_check
      _
    $region3: #{transformer_block_forward.1} parent=1 // pred_check_branch
      %14 = sbr.rel (0) target = $region5
    $region4: #{transformer_block_forward.1} parent=1 // pred_region
      _
    $region5: #{transformer_block_forward.1} parent=1 // pred_fallthru
      _
    // Predicated region
    $region6: #{transformer_block_forward.1} parent=1 // pred_check
      _
    $region7: #{transformer_block_forward.1} parent=1 // pred_check_branch
      %16 = sbr.rel (0) target = $region9
    $region8: #{transformer_block_forward.1} parent=1 // pred_region
      %s18 = ssub.s32 7680, 7680
      %19 = vsyncadd [#allocation3], %s18
      %s20 = sshll.u32 [#allocation2], 4
      %s21 = int_to_ptr.vmem [resolvable:$true] %s20
      %26 = dma.hbm_to_vmem [thread:$0]  %s1, 7680, %s21, [#allocation3], 64, 64, 4
    $region9: #{transformer_block_forward.1} parent=1 // pred_fallthru
      _
    // Predicated region
    $region10: #{transformer_block_forward.1} parent=1 // pred_check
      _
    $region11: #{transformer_block_forward.1} parent=1 // pred_check_branch
      %28 = sbr.rel (0) target = $region13
    $region12: #{transformer_block_forward.1} parent=1 // pred_region
      %s30 = ssub.s32 6144, 6144
      %31 = vsyncadd [#allocation6], %s30
      %s32 = sshll.u32 [#allocation5], 4
      %s33 = int_to_ptr.vmem [resolvable:$true] %s32
      %38 = dma.hbm_to_vmem [thread:$0]  %s2, 6144, %s33, [#allocation6], 192, 192, 12
    $region13: #{transformer_block_forward.1} parent=1 // pred_fallthru
      _
    // Predicated region
    $region14: #{transformer_block_forward.1} parent=1 // pred_check
      _
    $region15: #{transformer_block_forward.1} parent=1 // pred_check_branch
      %40 = sbr.rel (0) target = $region17
    $region16: #{transformer_block_forward.1} parent=1 // pred_region
      _
    $region17: #{transformer_block_forward.1} parent=1 // pred_fallthru
      _
    // Predicated region
    $region18: #{transformer_block_forward.1} parent=1 // pred_check
      _
    $region19: #{transformer_block_forward.1} parent=1 // pred_check_branch
      %42 = sbr.rel (0) target = $region21
    $region20: #{transformer_block_forward.1} parent=1 // pred_region
      _
    $region21: #{transformer_block_forward.1} parent=1 // pred_fallthru
      _
    // Predicated region
    $region22: #{transformer_block_forward.1} parent=1 // pred_check
      _
    $region23: #{transformer_block_forward.1} parent=1 // pred_check_branch
      %44 = sbr.rel (0) target = $region25
    $region24: #{transformer_block_forward.1} parent=1 // pred_region
      %45 = dma.done [#allocation3], 7680
    $region25: #{transformer_block_forward.1} parent=1 // pred_fallthru
      _
    // Predicated region
    $region26: #{transformer_block_forward.1} parent=1 // pred_check
      _
    $region27: #{transformer_block_forward.1} parent=1 // pred_check_branch
      %47 = sbr.rel (0) target = $region29
    $region28: #{transformer_block_forward.1} parent=1 // pred_region
      %48 = dma.done [#allocation6], 6144
    $region29: #{transformer_block_forward.1} parent=1 // pred_fallthru
      _
    %v50 = vld [vmem:[%s0] sm:$0xf]
    %v51 = vld [vmem:[%s0 + $0x4] sm:$0xf]
    %v52 = vld [vmem:[%s0 + $0x8] sm:$0xf]
    %v53 = vld [vmem:[%s0 + $0xc] sm:$0xf]
    %v54 = vld [vmem:[%s0 + $0x10] sm:$0xf]
    %v55 = vld [vmem:[%s0 + $0x14] sm:$0xf]
    %v56 = vld [vmem:[%s0 + $0x18] sm:$0xf]
    %v57 = vld [vmem:[%s0 + $0x1c] sm:$0xf]
    %v58 = vld [vmem:[%s0 + $0x20] sm:$0xf]
    %v59 = vld [vmem:[%s0 + $0x24] sm:$0xf]
    %v60 = vld [vmem:[%s0 + $0x28] sm:$0xf]
    %v61 = vld [vmem:[%s0 + $0x2c] sm:$0xf]
    %v62 = vld [vmem:[%s0 + $0x30] sm:$0xf]
    %v63 = vld [vmem:[%s0 + $0x34] sm:$0xf]
    %v64 = vld [vmem:[%s0 + $0x38] sm:$0xf]
    %v65 = vld [vmem:[%s0 + $0x3c] sm:$0xf]
    %v66 = vld [vmem:[#allocation2] sm:$0xf]
    %v67 = vld [vmem:[#allocation2 + $0x4] sm:$0xf]
    %v68 = vld [vmem:[#allocation2 + $0x8] sm:$0xf]
    %v69 = vld [vmem:[#allocation2 + $0xc] sm:$0xf]
    %v70 = vld [vmem:[#allocation2 + $0x10] sm:$0xf]
    %v71 = vld [vmem:[#allocation2 + $0x14] sm:$0xf]
    %v72 = vld [vmem:[#allocation2 + $0x18] sm:$0xf]
    %v73 = vld [vmem:[#allocation2 + $0x1c] sm:$0xf]
    %v74 = vld [vmem:[%s3] sm:$0x1]
    %v75 = vlaneseq
    %v76 = vshrl.u32 %v75, 7
    %v77 = vsub.s32 0, %v76
    %v78 = vrot.slane %v74, %v77
    %v95 = vunpack.c.l.b16 %v50
    %v96 = vunpack.c.l.b16 %v51
    %v97 = vunpack.c.l.b16 %v52
    %v98 = vunpack.c.l.b16 %v53
    %v99 = vunpack.c.l.b16 %v54
    %v100 = vunpack.c.l.b16 %v55
    %v101 = vunpack.c.l.b16 %v56
    %v102 = vunpack.c.l.b16 %v57
    %v103 = vunpack.c.l.b16 %v58
    %v104 = vunpack.c.l.b16 %v59
    %v105 = vunpack.c.l.b16 %v60
    %v106 = vunpack.c.l.b16 %v61
    %v107 = vunpack.c.l.b16 %v62
    %v108 = vunpack.c.l.b16 %v63
    %v109 = vunpack.c.l.b16 %v64
    %v110 = vunpack.c.l.b16 %v65
    %v111 = vpack.c.b16 %v96, %v95
    %v112 = vpack.c.b16 %v98, %v97
    %v113 = vpack.c.b16 %v100, %v99
    %v114 = vpack.c.b16 %v102, %v101
    %v115 = vpack.c.b16 %v104, %v103
    %v116 = vpack.c.b16 %v106, %v105
    %v117 = vpack.c.b16 %v108, %v107
    %v118 = vpack.c.b16 %v110, %v109
    %v127 = vunpack.c.l.b16 %v66
    %v128 = vunpack.c.l.b16 %v67
    %v129 = vunpack.c.l.b16 %v68
    %v130 = vunpack.c.l.b16 %v69
    %v131 = vunpack.c.l.b16 %v70
    %v132 = vunpack.c.l.b16 %v71
    %v133 = vunpack.c.l.b16 %v72
    %v134 = vunpack.c.l.b16 %v73
    %v135 = vpack.c.b16 %v128, %v127
    %v136 = vpack.c.b16 %v130, %v129
    %v137 = vpack.c.b16 %v132, %v131
    %v138 = vpack.c.b16 %v134, %v133
    %vm143 = vcmask 523264
    %v145 = vsel %vm143, %v111, 0
    %v148 = vsel %vm143, %v112, 0
    %v151 = vsel %vm143, %v113, 0
    %v154 = vsel %vm143, %v114, 0
    %v157 = vsel %vm143, %v115, 0
    %v160 = vsel %vm143, %v116, 0
    %v163 = vsel %vm143, %v117, 0
    %v166 = vsel %vm143, %v118, 0
    %168 = vmatprep.subr.bf16.mxu0 0
    %169 = vmatpush1.bf16.msra.mxu0 %v135
    %170 = vmatprep.subr.bf16.mxu0 0
    %171 = vmatpush1.bf16.msra.mxu0 %v136
    %172 = vmatprep.subr.bf16.mxu0 0
    %173 = vmatpush1.bf16.msra.mxu0 %v137
    %174 = vmatprep.subr.bf16.mxu0 0
    %175 = vmatpush1.bf16.msra.mxu0 %v138
    %176 = vmatprep.subr.bf16.mxu0 0
    %177 = vmatpush1.bf16.msra.mxu0 0
    %178 = vmatprep.subr.bf16.mxu0 0
    %179 = vmatpush1.bf16.msra.mxu0 0
    %180 = vmatprep.subr.bf16.mxu0 0
    %181 = vmatpush1.bf16.msra.mxu0 0
    %182 = vmatprep.subr.bf16.mxu0 0
    %183 = vmatpush1.bf16.msra.mxu0 0
    %184 = vmatprep.subr.bf16.mxu0 0
    %185 = vmatpush1.bf16.msra.mxu0 0
    %186 = vmatprep.subr.bf16.mxu0 0
    %187 = vmatpush1.bf16.msra.mxu0 0
    %188 = vmatprep.subr.bf16.mxu0 0
    %189 = vmatpush1.bf16.msra.mxu0 0
    %190 = vmatprep.subr.bf16.mxu0 0
    %191 = vmatpush1.bf16.msra.mxu0 0
    %192 = vmatprep.subr.bf16.mxu0 0
    %193 = vmatpush1.bf16.msra.mxu0 0
    %194 = vmatprep.subr.bf16.mxu0 0
    %195 = vmatpush1.bf16.msra.mxu0 0
    %196 = vmatprep.subr.bf16.mxu0 0
    %197 = vmatpush1.bf16.msra.mxu0 0
    %198 = vmatprep.subr.bf16.mxu0 0
    %199 = vmatpush1.bf16.msra.mxu0 0
    %200 = vmatprep.mubr.bf16.mxu0 0
    %201 = vmatmul.mubr.bf16.gmra.mrb[0].mxu0 %v145
    %v202 = vpop.f32.mrb[0].mxu0
    %v203 = vadd.f32 %v78, %v202
    %v204 = vpop.f32.mrb[0].mxu0
    %v205 = vpop.f32.mrb[0].mxu0
    %v206 = vadd.f32 %v78, %v205
    %v207 = vpop.f32.mrb[0].mxu0
    %208 = vmatprep.mubr.bf16.mxu0 0
    %209 = vmatmul.mubr.bf16.gmra.mrb[0].mxu0 %v148
    %v210 = vpop.f32.mrb[0].mxu0
    %v211 = vadd.f32 %v78, %v210
    %v212 = vpop.f32.mrb[0].mxu0
    %v213 = vpop.f32.mrb[0].mxu0
    %v214 = vadd.f32 %v78, %v213
    %v215 = vpop.f32.mrb[0].mxu0
    %216 = vmatprep.mubr.bf16.mxu0 0
    %217 = vmatmul.mubr.bf16.gmra.mrb[0].mxu0 %v151
    %v218 = vpop.f32.mrb[0].mxu0
    %v219 = vadd.f32 %v78, %v218
    %v220 = vpop.f32.mrb[0].mxu0
    %v221 = vpop.f32.mrb[0].mxu0
    %v222 = vadd.f32 %v78, %v221
    %v223 = vpop.f32.mrb[0].mxu0
    %224 = vmatprep.mubr.bf16.mxu0 0
    %225 = vmatmul.mubr.bf16.gmra.mrb[0].mxu0 %v154
    %v226 = vpop.f32.mrb[0].mxu0
    %v227 = vadd.f32 %v78, %v226
    %v228 = vpop.f32.mrb[0].mxu0
    %v229 = vpop.f32.mrb[0].mxu0
    %v230 = vadd.f32 %v78, %v229
    %v231 = vpop.f32.mrb[0].mxu0
    %232 = vmatprep.mubr.bf16.mxu0 0
    %233 = vmatmul.mubr.bf16.gmra.mrb[0].mxu0 %v157
    %v234 = vpop.f32.mrb[0].mxu0
    %v235 = vadd.f32 %v78, %v234
    %v236 = vpop.f32.mrb[0].mxu0
    %v237 = vpop.f32.mrb[0].mxu0
    %v238 = vadd.f32 %v78, %v237
    %v239 = vpop.f32.mrb[0].mxu0
    %240 = vmatprep.mubr.bf16.mxu0 0
    %241 = vmatmul.mubr.bf16.gmra.mrb[0].mxu0 %v160
    %v242 = vpop.f32.mrb[0].mxu0
    %v243 = vadd.f32 %v78, %v242
    %v244 = vpop.f32.mrb[0].mxu0
    %v245 = vpop.f32.mrb[0].mxu0
    %v246 = vadd.f32 %v78, %v245
    %v247 = vpop.f32.mrb[0].mxu0
    %248 = vmatprep.mubr.bf16.mxu0 0
    %249 = vmatmul.mubr.bf16.gmra.mrb[0].mxu0 %v163
    %v250 = vpop.f32.mrb[0].mxu0
    %v251 = vadd.f32 %v78, %v250
    %v252 = vpop.f32.mrb[0].mxu0
    %v253 = vpop.f32.mrb[0].mxu0
    %v254 = vadd.f32 %v78, %v253
    %v255 = vpop.f32.mrb[0].mxu0
    %256 = vmatprep.mubr.bf16.mxu0 0
    %257 = vmatmul.mubr.bf16.gmra.mrb[0].mxu0 %v166
    %v258 = vpop.f32.mrb[0].mxu0
    %v259 = vadd.f32 %v78, %v258
    %v260 = vpop.f32.mrb[0].mxu0
    %v261 = vpop.f32.mrb[0].mxu0
    %v262 = vadd.f32 %v78, %v261
    %v263 = vpop.f32.mrb[0].mxu0
    %264 = vdwg.mxu0
    %v265 = vadd.f32 %v203, 3.0
    %v266 = vadd.f32 %v206, 3.0
    %v267 = vadd.f32 %v211, 3.0
    %v268 = vadd.f32 %v214, 3.0
    %v269 = vadd.f32 %v219, 3.0
    %v270 = vadd.f32 %v222, 3.0
    %v271 = vadd.f32 %v227, 3.0
    %v272 = vadd.f32 %v230, 3.0
    %v273 = vadd.f32 %v235, 3.0
    %v274 = vadd.f32 %v238, 3.0
    %v275 = vadd.f32 %v243, 3.0
    %v276 = vadd.f32 %v246, 3.0
    %v277 = vadd.f32 %v251, 3.0
    %v278 = vadd.f32 %v254, 3.0
    %v279 = vadd.f32 %v259, 3.0
    %v280 = vadd.f32 %v262, 3.0
    %v281 = vmax.f32 %v265, 0.0
    %v282 = vmax.f32 %v266, 0.0
    %v283 = vmax.f32 %v267, 0.0
    %v284 = vmax.f32 %v268, 0.0
    %v285 = vmax.f32 %v269, 0.0
    %v286 = vmax.f32 %v270, 0.0
    %v287 = vmax.f32 %v271, 0.0
    %v288 = vmax.f32 %v272, 0.0
    %v289 = vmax.f32 %v273, 0.0
    %v290 = vmax.f32 %v274, 0.0
    %v291 = vmax.f32 %v275, 0.0
    %v292 = vmax.f32 %v276, 0.0
    %v293 = vmax.f32 %v277, 0.0
    %v294 = vmax.f32 %v278, 0.0
    %v295 = vmax.f32 %v279, 0.0
    %v296 = vmax.f32 %v280, 0.0
    %v297 = vmin.f32 %v281, 6.0
    %v298 = vmin.f32 %v282, 6.0
    %v299 = vmin.f32 %v283, 6.0
    %v300 = vmin.f32 %v284, 6.0
    %v301 = vmin.f32 %v285, 6.0
    %v302 = vmin.f32 %v286, 6.0
    %v303 = vmin.f32 %v287, 6.0
    %v304 = vmin.f32 %v288, 6.0
    %v305 = vmin.f32 %v289, 6.0
    %v306 = vmin.f32 %v290, 6.0
    %v307 = vmin.f32 %v291, 6.0
    %v308 = vmin.f32 %v292, 6.0
    %v309 = vmin.f32 %v293, 6.0
    %v310 = vmin.f32 %v294, 6.0
    %v311 = vmin.f32 %v295, 6.0
    %v312 = vmin.f32 %v296, 6.0
    %v313 = vmul.f32 %v203, %v297
    %v314 = vmul.f32 %v206, %v298
    %v315 = vmul.f32 %v211, %v299
    %v316 = vmul.f32 %v214, %v300
    %v317 = vmul.f32 %v219, %v301
    %v318 = vmul.f32 %v222, %v302
    %v319 = vmul.f32 %v227, %v303
    %v320 = vmul.f32 %v230, %v304
    %v321 = vmul.f32 %v235, %v305
    %v322 = vmul.f32 %v238, %v306
    %v323 = vmul.f32 %v243, %v307
    %v324 = vmul.f32 %v246, %v308
    %v325 = vmul.f32 %v251, %v309
    %v326 = vmul.f32 %v254, %v310
    %v327 = vmul.f32 %v259, %v311
    %v328 = vmul.f32 %v262, %v312
    %v329 = vmul.f32 %v313, 0.16666667
    %v330 = vmul.f32 %v314, 0.16666667
    %v331 = vmul.f32 %v315, 0.16666667
    %v332 = vmul.f32 %v316, 0.16666667
    %v333 = vmul.f32 %v317, 0.16666667
    %v334 = vmul.f32 %v318, 0.16666667
    %v335 = vmul.f32 %v319, 0.16666667
    %v336 = vmul.f32 %v320, 0.16666667
    %v337 = vmul.f32 %v321, 0.16666667
    %v338 = vmul.f32 %v322, 0.16666667
    %v339 = vmul.f32 %v323, 0.16666667
    %v340 = vmul.f32 %v324, 0.16666667
    %v341 = vmul.f32 %v325, 0.16666667
    %v342 = vmul.f32 %v326, 0.16666667
    %v343 = vmul.f32 %v327, 0.16666667
    %v344 = vmul.f32 %v328, 0.16666667
    %v345 = vpack.c.bf16 %v330, %v329
    %v346 = vpack.c.bf16 %v332, %v331
    %v347 = vpack.c.bf16 %v334, %v333
    %v348 = vpack.c.bf16 %v336, %v335
    %v349 = vpack.c.bf16 %v338, %v337
    %v350 = vpack.c.bf16 %v340, %v339
    %v351 = vpack.c.bf16 %v342, %v341
    %v352 = vpack.c.bf16 %v344, %v343
    %v353 = vld [vmem:[#allocation2 + $0x20] sm:$0xf]
    %v354 = vld [vmem:[#allocation2 + $0x24] sm:$0xf]
    %v355 = vld [vmem:[#allocation2 + $0x28] sm:$0xf]
    %v356 = vld [vmem:[#allocation2 + $0x2c] sm:$0xf]
    %v357 = vld [vmem:[#allocation2 + $0x30] sm:$0xf]
    %v358 = vld [vmem:[#allocation2 + $0x34] sm:$0xf]
    %v359 = vld [vmem:[#allocation2 + $0x38] sm:$0xf]
    %v360 = vld [vmem:[#allocation2 + $0x3c] sm:$0xf]
    %v361 = vld [vmem:[#allocation2 + $0x40] sm:$0xf]
    %v362 = vld [vmem:[#allocation2 + $0x44] sm:$0xf]
    %v363 = vld [vmem:[#allocation2 + $0x48] sm:$0xf]
    %v364 = vld [vmem:[#allocation2 + $0x4c] sm:$0xf]
    %v365 = vld [vmem:[#allocation2 + $0x50] sm:$0xf]
    %v366 = vld [vmem:[#allocation2 + $0x54] sm:$0xf]
    %v367 = vld [vmem:[#allocation2 + $0x58] sm:$0xf]
    %v368 = vld [vmem:[#allocation2 + $0x5c] sm:$0xf]
    %v385 = vunpack.c.l.b16 %v353
    %v386 = vunpack.c.l.b16 %v354
    %v387 = vunpack.c.l.b16 %v355
    %v388 = vunpack.c.l.b16 %v356
    %v389 = vunpack.c.l.b16 %v357
    %v390 = vunpack.c.l.b16 %v358
    %v391 = vunpack.c.l.b16 %v359
    %v392 = vunpack.c.l.b16 %v360
    %v393 = vunpack.c.l.b16 %v361
    %v394 = vunpack.c.l.b16 %v362
    %v395 = vunpack.c.l.b16 %v363
    %v396 = vunpack.c.l.b16 %v364
    %v397 = vunpack.c.l.b16 %v365
    %v398 = vunpack.c.l.b16 %v366
    %v399 = vunpack.c.l.b16 %v367
    %v400 = vunpack.c.l.b16 %v368
    %v401 = vpack.c.b16 %v386, %v385
    %v402 = vpack.c.b16 %v388, %v387
    %v403 = vpack.c.b16 %v390, %v389
    %v404 = vpack.c.b16 %v392, %v391
    %v405 = vpack.c.b16 %v394, %v393
    %v406 = vpack.c.b16 %v396, %v395
    %v407 = vpack.c.b16 %v398, %v397
    %v408 = vpack.c.b16 %v400, %v399
    %417 = vmatprep.subr.bf16.mxu0 0
    %418 = vmatpush1.bf16.msra.mxu0 %v401
    %419 = vmatprep.subr.bf16.mxu0 0
    %420 = vmatpush1.bf16.msra.mxu0 %v402
    %421 = vmatprep.subr.bf16.mxu0 0
    %422 = vmatpush1.bf16.msra.mxu0 %v403
    %423 = vmatprep.subr.bf16.mxu0 0
    %424 = vmatpush1.bf16.msra.mxu0 %v404
    %425 = vmatprep.subr.bf16.mxu0 0
    %426 = vmatpush1.bf16.msra.mxu0 %v405
    %427 = vmatprep.subr.bf16.mxu0 0
    %428 = vmatpush1.bf16.msra.mxu0 %v406
    %429 = vmatprep.subr.bf16.mxu0 0
    %430 = vmatpush1.bf16.msra.mxu0 %v407
    %431 = vmatprep.subr.bf16.mxu0 0
    %432 = vmatpush1.bf16.msra.mxu0 %v408
    %433 = vmatprep.subr.bf16.mxu0 0
    %434 = vmatpush1.bf16.msra.mxu0 0
    %435 = vmatprep.subr.bf16.mxu0 0
    %436 = vmatpush1.bf16.msra.mxu0 0
    %437 = vmatprep.subr.bf16.mxu0 0
    %438 = vmatpush1.bf16.msra.mxu0 0
    %439 = vmatprep.subr.bf16.mxu0 0
    %440 = vmatpush1.bf16.msra.mxu0 0
    %441 = vmatprep.subr.bf16.mxu0 0
    %442 = vmatpush1.bf16.msra.mxu0 0
    %443 = vmatprep.subr.bf16.mxu0 0
    %444 = vmatpush1.bf16.msra.mxu0 0
    %445 = vmatprep.subr.bf16.mxu0 0
    %446 = vmatpush1.bf16.msra.mxu0 0
    %447 = vmatprep.subr.bf16.mxu0 0
    %448 = vmatpush1.bf16.msra.mxu0 0
    %449 = vmatprep.mubr.bf16.mxu0 0
    %450 = vmatmul.mubr.bf16.gmra.mrb[0].mxu0 %v345
    %v451 = vpop.f32.mrb[0].mxu0
    %v452 = vadd.f32 0.0, %v451
    %v453 = vpop.f32.mrb[0].mxu0
    %v454 = vpop.f32.mrb[0].mxu0
    %v455 = vadd.f32 0.0, %v454
    %v456 = vpop.f32.mrb[0].mxu0
    %457 = vmatprep.mubr.bf16.mxu0 0
    %458 = vmatmul.mubr.bf16.gmra.mrb[0].mxu0 %v346
    %v459 = vpop.f32.mrb[0].mxu0
    %v460 = vadd.f32 0.0, %v459
    %v461 = vpop.f32.mrb[0].mxu0
    %v462 = vpop.f32.mrb[0].mxu0
    %v463 = vadd.f32 0.0, %v462
    %v464 = vpop.f32.mrb[0].mxu0
    %465 = vmatprep.mubr.bf16.mxu0 0
    %466 = vmatmul.mubr.bf16.gmra.mrb[0].mxu0 %v347
    %v467 = vpop.f32.mrb[0].mxu0
    %v468 = vadd.f32 0.0, %v467
    %v469 = vpop.f32.mrb[0].mxu0
    %v470 = vpop.f32.mrb[0].mxu0
    %v471 = vadd.f32 0.0, %v470
    %v472 = vpop.f32.mrb[0].mxu0
    %473 = vmatprep.mubr.bf16.mxu0 0
    %474 = vmatmul.mubr.bf16.gmra.mrb[0].mxu0 %v348
    %v475 = vpop.f32.mrb[0].mxu0
    %v476 = vadd.f32 0.0, %v475
    %v477 = vpop.f32.mrb[0].mxu0
    %v478 = vpop.f32.mrb[0].mxu0
    %v479 = vadd.f32 0.0, %v478
    %v480 = vpop.f32.mrb[0].mxu0
    %481 = vmatprep.mubr.bf16.mxu0 0
    %482 = vmatmul.mubr.bf16.gmra.mrb[0].mxu0 %v349
    %v483 = vpop.f32.mrb[0].mxu0
    %v484 = vadd.f32 0.0, %v483
    %v485 = vpop.f32.mrb[0].mxu0
    %v486 = vpop.f32.mrb[0].mxu0
    %v487 = vadd.f32 0.0, %v486
    %v488 = vpop.f32.mrb[0].mxu0
    %489 = vmatprep.mubr.bf16.mxu0 0
    %490 = vmatmul.mubr.bf16.gmra.mrb[0].mxu0 %v350
    %v491 = vpop.f32.mrb[0].mxu0
    %v492 = vadd.f32 0.0, %v491
    %v493 = vpop.f32.mrb[0].mxu0
    %v494 = vpop.f32.mrb[0].mxu0
    %v495 = vadd.f32 0.0, %v494
    %v496 = vpop.f32.mrb[0].mxu0
    %497 = vmatprep.mubr.bf16.mxu0 0
    %498 = vmatmul.mubr.bf16.gmra.mrb[0].mxu0 %v351
    %v499 = vpop.f32.mrb[0].mxu0
    %v500 = vadd.f32 0.0, %v499
    %v501 = vpop.f32.mrb[0].mxu0
    %v502 = vpop.f32.mrb[0].mxu0
    %v503 = vadd.f32 0.0, %v502
    %v504 = vpop.f32.mrb[0].mxu0
    %505 = vmatprep.mubr.bf16.mxu0 0
    %506 = vmatmul.mubr.bf16.gmra.mrb[0].mxu0 %v352
    %v507 = vpop.f32.mrb[0].mxu0
    %v508 = vadd.f32 0.0, %v507
    %v509 = vpop.f32.mrb[0].mxu0
    %v510 = vpop.f32.mrb[0].mxu0
    %v511 = vadd.f32 0.0, %v510
    %v512 = vpop.f32.mrb[0].mxu0
    %513 = vdwg.mxu0
    %v514 = vadd.f32 %v329, %v452
    %v515 = vadd.f32 %v330, %v455
    %v516 = vadd.f32 %v331, %v460
    %v517 = vadd.f32 %v332, %v463
    %v518 = vadd.f32 %v333, %v468
    %v519 = vadd.f32 %v334, %v471
    %v520 = vadd.f32 %v335, %v476
    %v521 = vadd.f32 %v336, %v479
    %v522 = vadd.f32 %v337, %v484
    %v523 = vadd.f32 %v338, %v487
    %v524 = vadd.f32 %v339, %v492
    %v525 = vadd.f32 %v340, %v495
    %v526 = vadd.f32 %v341, %v500
    %v527 = vadd.f32 %v342, %v503
    %v528 = vadd.f32 %v343, %v508
    %v529 = vadd.f32 %v344, %v511
    %v530 = vld [vmem:[%s3 + $0x1] sm:$0x1]
    %v531 = vlaneseq
    %v532 = vshrl.u32 %v531, 7
    %v533 = vsub.s32 0, %v532
    %v534 = vrot.slane %v530, %v533
    %v535 = vadd.f32 %v514, %v534
    %v536 = vadd.f32 %v515, %v534
    %v537 = vadd.f32 %v516, %v534
    %v538 = vadd.f32 %v517, %v534
    %v539 = vadd.f32 %v518, %v534
    %v540 = vadd.f32 %v519, %v534
    %v541 = vadd.f32 %v520, %v534
    %v542 = vadd.f32 %v521, %v534
    %v543 = vadd.f32 %v522, %v534
    %v544 = vadd.f32 %v523, %v534
    %v545 = vadd.f32 %v524, %v534
    %v546 = vadd.f32 %v525, %v534
    %v547 = vadd.f32 %v526, %v534
    %v548 = vadd.f32 %v527, %v534
    %v549 = vadd.f32 %v528, %v534
    %v550 = vadd.f32 %v529, %v534
    %v551 = vpack.c.bf16 %v536, %v535
    %v552 = vpack.c.bf16 %v538, %v537
    %v553 = vpack.c.bf16 %v540, %v539
    %v554 = vpack.c.bf16 %v542, %v541
    %v555 = vpack.c.bf16 %v544, %v543
    %v556 = vpack.c.bf16 %v546, %v545
    %v557 = vpack.c.bf16 %v548, %v547
    %v558 = vpack.c.bf16 %v550, %v549
    %v559 = vld [vmem:[#allocation5] sm:$0xff]
    %v560 = vld [vmem:[#allocation5 + $0x8] sm:$0xf]
    %v561 = vld [vmem:[#allocation5 + $0xc] sm:$0xff]
    %v562 = vld [vmem:[#allocation5 + $0x14] sm:$0xf]
    %v563 = vld [vmem:[#allocation5 + $0x18] sm:$0xff]
    %v564 = vld [vmem:[#allocation5 + $0x20] sm:$0xf]
    %v565 = vld [vmem:[#allocation5 + $0x24] sm:$0xff]
    %v566 = vld [vmem:[#allocation5 + $0x2c] sm:$0xf]
    %v567 = vld [vmem:[#allocation5 + $0x30] sm:$0xff]
    %v568 = vld [vmem:[#allocation5 + $0x38] sm:$0xf]
    %v569 = vld [vmem:[#allocation5 + $0x3c] sm:$0xff]
    %v570 = vld [vmem:[#allocation5 + $0x44] sm:$0xf]
    %v571 = vld [vmem:[#allocation5 + $0x48] sm:$0xff]
    %v572 = vld [vmem:[#allocation5 + $0x50] sm:$0xf]
    %v573 = vld [vmem:[#allocation5 + $0x54] sm:$0xff]
    %v574 = vld [vmem:[#allocation5 + $0x5c] sm:$0xf]
    %v575 = vld [vmem:[#allocation5 + $0x60] sm:$0xff]
    %v576 = vld [vmem:[#allocation5 + $0x68] sm:$0xf]
    %v577 = vld [vmem:[#allocation5 + $0x6c] sm:$0xff]
    %v578 = vld [vmem:[#allocation5 + $0x74] sm:$0xf]
    %v579 = vld [vmem:[#allocation5 + $0x78] sm:$0xff]
    %v580 = vld [vmem:[#allocation5 + $0x80] sm:$0xf]
    %v581 = vld [vmem:[#allocation5 + $0x84] sm:$0xff]
    %v582 = vld [vmem:[#allocation5 + $0x8c] sm:$0xf]
    %v583 = vld [vmem:[#allocation5 + $0x90] sm:$0xff]
    %v584 = vld [vmem:[#allocation5 + $0x98] sm:$0xf]
    %v585 = vld [vmem:[#allocation5 + $0x9c] sm:$0xff]
    %v586 = vld [vmem:[#allocation5 + $0xa4] sm:$0xf]
    %v587 = vld [vmem:[#allocation5 + $0xa8] sm:$0xff]
    %v588 = vld [vmem:[#allocation5 + $0xb0] sm:$0xf]
    %v589 = vld [vmem:[#allocation5 + $0xb4] sm:$0xff]
    %v590 = vld [vmem:[#allocation5 + $0xbc] sm:$0xf]
    %v591 = vld [vmem:[%s4] ss:$8 sm:$0x7]
    %v593 = vlaneseq
    %v594 = vshrl.u32 %v593, 7
    %v595 = vsub.s32 0, %v594
    %v596 = vrot.slane %v591, %v595
    %v597 = vlaneseq
    %v598 = vshrl.u32 %v597, 7
    %v599 = vsub.s32 1, %v598
    %v600 = vrot.slane %v591, %v599
    %v601 = vlaneseq
    %v602 = vshrl.u32 %v601, 7
    %v603 = vsub.s32 2, %v602
    %v604 = vrot.slane %v591, %v603
    %v640 = vunpack.c.l.b16 %v559
    %v641 = vunpack.c.h.b16 %v559
    %v642 = vunpack.c.l.b16 %v560
    %v643 = vunpack.c.l.b16 %v561
    %v644 = vunpack.c.h.b16 %v561
    %v645 = vunpack.c.l.b16 %v562
    %v646 = vunpack.c.l.b16 %v563
    %v647 = vunpack.c.h.b16 %v563
    %v648 = vunpack.c.l.b16 %v564
    %v649 = vunpack.c.l.b16 %v565
    %v650 = vunpack.c.h.b16 %v565
    %v651 = vunpack.c.l.b16 %v566
    %v652 = vunpack.c.l.b16 %v567
    %v653 = vunpack.c.h.b16 %v567
    %v654 = vunpack.c.l.b16 %v568
    %v655 = vunpack.c.l.b16 %v569
    %v656 = vunpack.c.h.b16 %v569
    %v657 = vunpack.c.l.b16 %v570
    %v658 = vunpack.c.l.b16 %v571
    %v659 = vunpack.c.h.b16 %v571
    %v660 = vunpack.c.l.b16 %v572
    %v661 = vunpack.c.l.b16 %v573
    %v662 = vunpack.c.h.b16 %v573
    %v663 = vunpack.c.l.b16 %v574
    %v664 = vunpack.c.l.b16 %v575
    %v665 = vunpack.c.h.b16 %v575
    %v666 = vunpack.c.l.b16 %v576
    %v667 = vunpack.c.l.b16 %v577
    %v668 = vunpack.c.h.b16 %v577
    %v669 = vunpack.c.l.b16 %v578
    %v670 = vunpack.c.l.b16 %v579
    %v671 = vunpack.c.h.b16 %v579
    %v672 = vunpack.c.l.b16 %v580
    %v673 = vunpack.c.l.b16 %v581
    %v674 = vunpack.c.h.b16 %v581
    %v675 = vunpack.c.l.b16 %v582
    %v676 = vunpack.c.l.b16 %v583
    %v677 = vunpack.c.h.b16 %v583
    %v678 = vunpack.c.l.b16 %v584
    %v679 = vunpack.c.l.b16 %v585
    %v680 = vunpack.c.h.b16 %v585
    %v681 = vunpack.c.l.b16 %v586
    %v682 = vunpack.c.l.b16 %v587
    %v683 = vunpack.c.h.b16 %v587
    %v684 = vunpack.c.l.b16 %v588
    %v685 = vunpack.c.l.b16 %v589
    %v686 = vunpack.c.h.b16 %v589
    %v687 = vunpack.c.l.b16 %v590
    %v688 = vpack.c.b16 %v643, %v640
    %v689 = vpack.c.b16 %v644, %v641
    %v690 = vpack.c.b16 %v645, %v642
    %v691 = vpack.c.b16 %v649, %v646
    %v692 = vpack.c.b16 %v650, %v647
    %v693 = vpack.c.b16 %v651, %v648
    %v694 = vpack.c.b16 %v655, %v652
    %v695 = vpack.c.b16 %v656, %v653
    %v696 = vpack.c.b16 %v657, %v654
    %v697 = vpack.c.b16 %v661, %v658
    %v698 = vpack.c.b16 %v662, %v659
    %v699 = vpack.c.b16 %v663, %v660
    %v700 = vpack.c.b16 %v667, %v664
    %v701 = vpack.c.b16 %v668, %v665
    %v702 = vpack.c.b16 %v669, %v666
    %v703 = vpack.c.b16 %v673, %v670
    %v704 = vpack.c.b16 %v674, %v671
    %v705 = vpack.c.b16 %v675, %v672
    %v706 = vpack.c.b16 %v679, %v676
    %v707 = vpack.c.b16 %v680, %v677
    %v708 = vpack.c.b16 %v681, %v678
    %v709 = vpack.c.b16 %v685, %v682
    %v710 = vpack.c.b16 %v686, %v683
    %v711 = vpack.c.b16 %v687, %v684
    %736 = vmatprep.subr.bf16.mxu0 %v689
    %737 = vmatpush1.bf16.msra.mxu0 %v688
    %738 = vmatprep.subr.bf16.mxu0 %v692
    %739 = vmatpush1.bf16.msra.mxu0 %v691
    %740 = vmatprep.subr.bf16.mxu0 %v695
    %741 = vmatpush1.bf16.msra.mxu0 %v694
    %742 = vmatprep.subr.bf16.mxu0 %v698
    %743 = vmatpush1.bf16.msra.mxu0 %v697
    %744 = vmatprep.subr.bf16.mxu0 %v701
    %745 = vmatpush1.bf16.msra.mxu0 %v700
    %746 = vmatprep.subr.bf16.mxu0 %v704
    %747 = vmatpush1.bf16.msra.mxu0 %v703
    %748 = vmatprep.subr.bf16.mxu0 %v707
    %749 = vmatpush1.bf16.msra.mxu0 %v706
    %750 = vmatprep.subr.bf16.mxu0 %v710
    %751 = vmatpush1.bf16.msra.mxu0 %v709
    %752 = vmatprep.subr.bf16.mxu0 0
    %753 = vmatpush1.bf16.msra.mxu0 0
    %754 = vmatprep.subr.bf16.mxu0 0
    %755 = vmatpush1.bf16.msra.mxu0 0
    %756 = vmatprep.subr.bf16.mxu0 0
    %757 = vmatpush1.bf16.msra.mxu0 0
    %758 = vmatprep.subr.bf16.mxu0 0
    %759 = vmatpush1.bf16.msra.mxu0 0
    %760 = vmatprep.subr.bf16.mxu0 0
    %761 = vmatpush1.bf16.msra.mxu0 0
    %762 = vmatprep.subr.bf16.mxu0 0
    %763 = vmatpush1.bf16.msra.mxu0 0
    %764 = vmatprep.subr.bf16.mxu0 0
    %765 = vmatpush1.bf16.msra.mxu0 0
    %766 = vmatprep.subr.bf16.mxu0 0
    %767 = vmatpush1.bf16.msra.mxu0 0
    %768 = vmatprep.mubr.bf16.mxu0 0
    %769 = vmatmul.mubr.bf16.gmra.mrb[0].mxu0 %v551
    %v770 = vpop.f32.mrb[0].mxu0
    %v771 = vadd.f32 %v596, %v770
    %v772 = vpop.f32.mrb[0].mxu0
    %v773 = vadd.f32 %v600, %v772
    %v774 = vpop.f32.mrb[0].mxu0
    %v775 = vadd.f32 %v596, %v774
    %v776 = vpop.f32.mrb[0].mxu0
    %v777 = vadd.f32 %v600, %v776
    %778 = vmatprep.mubr.bf16.mxu0 0
    %779 = vmatmul.mubr.bf16.gmra.mrb[0].mxu0 %v552
    %v780 = vpop.f32.mrb[0].mxu0
    %v781 = vadd.f32 %v596, %v780
    %v782 = vpop.f32.mrb[0].mxu0
    %v783 = vadd.f32 %v600, %v782
    %v784 = vpop.f32.mrb[0].mxu0
    %v785 = vadd.f32 %v596, %v784
    %v786 = vpop.f32.mrb[0].mxu0
    %v787 = vadd.f32 %v600, %v786
    %788 = vmatprep.mubr.bf16.mxu0 0
    %789 = vmatmul.mubr.bf16.gmra.mrb[0].mxu0 %v553
    %v790 = vpop.f32.mrb[0].mxu0
    %v791 = vadd.f32 %v596, %v790
    %v792 = vpop.f32.mrb[0].mxu0
    %v793 = vadd.f32 %v600, %v792
    %v794 = vpop.f32.mrb[0].mxu0
    %v795 = vadd.f32 %v596, %v794
    %v796 = vpop.f32.mrb[0].mxu0
    %v797 = vadd.f32 %v600, %v796
    %798 = vmatprep.mubr.bf16.mxu0 0
    %799 = vmatmul.mubr.bf16.gmra.mrb[0].mxu0 %v554
    %v800 = vpop.f32.mrb[0].mxu0
    %v801 = vadd.f32 %v596, %v800
    %v802 = vpop.f32.mrb[0].mxu0
    %v803 = vadd.f32 %v600, %v802
    %v804 = vpop.f32.mrb[0].mxu0
    %v805 = vadd.f32 %v596, %v804
    %v806 = vpop.f32.mrb[0].mxu0
    %v807 = vadd.f32 %v600, %v806
    %808 = vmatprep.mubr.bf16.mxu0 0
    %809 = vmatmul.mubr.bf16.gmra.mrb[0].mxu0 %v555
    %v810 = vpop.f32.mrb[0].mxu0
    %v811 = vadd.f32 %v596, %v810
    %v812 = vpop.f32.mrb[0].mxu0
    %v813 = vadd.f32 %v600, %v812
    %v814 = vpop.f32.mrb[0].mxu0
    %v815 = vadd.f32 %v596, %v814
    %v816 = vpop.f32.mrb[0].mxu0
    %v817 = vadd.f32 %v600, %v816
    %818 = vmatprep.mubr.bf16.mxu0 0
    %819 = vmatmul.mubr.bf16.gmra.mrb[0].mxu0 %v556
    %v820 = vpop.f32.mrb[0].mxu0
    %v821 = vadd.f32 %v596, %v820
    %v822 = vpop.f32.mrb[0].mxu0
    %v823 = vadd.f32 %v600, %v822
    %v824 = vpop.f32.mrb[0].mxu0
    %v825 = vadd.f32 %v596, %v824
    %v826 = vpop.f32.mrb[0].mxu0
    %v827 = vadd.f32 %v600, %v826
    %828 = vmatprep.mubr.bf16.mxu0 0
    %829 = vmatmul.mubr.bf16.gmra.mrb[0].mxu0 %v557
    %v830 = vpop.f32.mrb[0].mxu0
    %v831 = vadd.f32 %v596, %v830
    %v832 = vpop.f32.mrb[0].mxu0
    %v833 = vadd.f32 %v600, %v832
    %v834 = vpop.f32.mrb[0].mxu0
    %v835 = vadd.f32 %v596, %v834
    %v836 = vpop.f32.mrb[0].mxu0
    %v837 = vadd.f32 %v600, %v836
    %838 = vmatprep.mubr.bf16.mxu0 0
    %839 = vmatmul.mubr.bf16.gmra.mrb[0].mxu0 %v558
    %v840 = vpop.f32.mrb[0].mxu0
    %v841 = vadd.f32 %v596, %v840
    %v842 = vpop.f32.mrb[0].mxu0
    %v843 = vadd.f32 %v600, %v842
    %v844 = vpop.f32.mrb[0].mxu0
    %v845 = vadd.f32 %v596, %v844
    %v846 = vpop.f32.mrb[0].mxu0
    %v847 = vadd.f32 %v600, %v846
    %848 = vdwg.mxu0
    %849 = vmatprep.subr.bf16.mxu0 0
    %850 = vmatpush1.bf16.msra.mxu0 %v690
    %851 = vmatprep.subr.bf16.mxu0 0
    %852 = vmatpush1.bf16.msra.mxu0 %v693
    %853 = vmatprep.subr.bf16.mxu0 0
    %854 = vmatpush1.bf16.msra.mxu0 %v696
    %855 = vmatprep.subr.bf16.mxu0 0
    %856 = vmatpush1.bf16.msra.mxu0 %v699
    %857 = vmatprep.subr.bf16.mxu0 0
    %858 = vmatpush1.bf16.msra.mxu0 %v702
    %859 = vmatprep.subr.bf16.mxu0 0
    %860 = vmatpush1.bf16.msra.mxu0 %v705
    %861 = vmatprep.subr.bf16.mxu0 0
    %862 = vmatpush1.bf16.msra.mxu0 %v708
    %863 = vmatprep.subr.bf16.mxu0 0
    %864 = vmatpush1.bf16.msra.mxu0 %v711
    %865 = vmatprep.subr.bf16.mxu0 0
    %866 = vmatpush1.bf16.msra.mxu0 0
    %867 = vmatprep.subr.bf16.mxu0 0
    %868 = vmatpush1.bf16.msra.mxu0 0
    %869 = vmatprep.subr.bf16.mxu0 0
    %870 = vmatpush1.bf16.msra.mxu0 0
    %871 = vmatprep.subr.bf16.mxu0 0
    %872 = vmatpush1.bf16.msra.mxu0 0
    %873 = vmatprep.subr.bf16.mxu0 0
    %874 = vmatpush1.bf16.msra.mxu0 0
    %875 = vmatprep.subr.bf16.mxu0 0
    %876 = vmatpush1.bf16.msra.mxu0 0
    %877 = vmatprep.subr.bf16.mxu0 0
    %878 = vmatpush1.bf16.msra.mxu0 0
    %879 = vmatprep.subr.bf16.mxu0 0
    %880 = vmatpush1.bf16.msra.mxu0 0
    %881 = vmatprep.mubr.bf16.mxu0 0
    %882 = vmatmul.mubr.bf16.gmra.mrb[0].mxu0 %v551
    %v883 = vpop.f32.mrb[0].mxu0
    %v884 = vadd.f32 %v604, %v883
    %v885 = vpop.f32.mrb[0].mxu0
    %v886 = vpop.f32.mrb[0].mxu0
    %v887 = vadd.f32 %v604, %v886
    %v888 = vpop.f32.mrb[0].mxu0
    %889 = vmatprep.mubr.bf16.mxu0 0
    %890 = vmatmul.mubr.bf16.gmra.mrb[0].mxu0 %v552
    %v891 = vpop.f32.mrb[0].mxu0
    %v892 = vadd.f32 %v604, %v891
    %v893 = vpop.f32.mrb[0].mxu0
    %v894 = vpop.f32.mrb[0].mxu0
    %v895 = vadd.f32 %v604, %v894
    %v896 = vpop.f32.mrb[0].mxu0
    %897 = vmatprep.mubr.bf16.mxu0 0
    %898 = vmatmul.mubr.bf16.gmra.mrb[0].mxu0 %v553
    %v899 = vpop.f32.mrb[0].mxu0
    %v900 = vadd.f32 %v604, %v899
    %v901 = vpop.f32.mrb[0].mxu0
    %v902 = vpop.f32.mrb[0].mxu0
    %v903 = vadd.f32 %v604, %v902
    %v904 = vpop.f32.mrb[0].mxu0
    %905 = vmatprep.mubr.bf16.mxu0 0
    %906 = vmatmul.mubr.bf16.gmra.mrb[0].mxu0 %v554
    %v907 = vpop.f32.mrb[0].mxu0
    %v908 = vadd.f32 %v604, %v907
    %v909 = vpop.f32.mrb[0].mxu0
    %v910 = vpop.f32.mrb[0].mxu0
    %v911 = vadd.f32 %v604, %v910
    %v912 = vpop.f32.mrb[0].mxu0
    %913 = vmatprep.mubr.bf16.mxu0 0
    %914 = vmatmul.mubr.bf16.gmra.mrb[0].mxu0 %v555
    %v915 = vpop.f32.mrb[0].mxu0
    %v916 = vadd.f32 %v604, %v915
    %v917 = vpop.f32.mrb[0].mxu0
    %v918 = vpop.f32.mrb[0].mxu0
    %v919 = vadd.f32 %v604, %v918
    %v920 = vpop.f32.mrb[0].mxu0
    %921 = vmatprep.mubr.bf16.mxu0 0
    %922 = vmatmul.mubr.bf16.gmra.mrb[0].mxu0 %v556
    %v923 = vpop.f32.mrb[0].mxu0
    %v924 = vadd.f32 %v604, %v923
    %v925 = vpop.f32.mrb[0].mxu0
    %v926 = vpop.f32.mrb[0].mxu0
    %v927 = vadd.f32 %v604, %v926
    %v928 = vpop.f32.mrb[0].mxu0
    %929 = vmatprep.mubr.bf16.mxu0 0
    %930 = vmatmul.mubr.bf16.gmra.mrb[0].mxu0 %v557
    %v931 = vpop.f32.mrb[0].mxu0
    %v932 = vadd.f32 %v604, %v931
    %v933 = vpop.f32.mrb[0].mxu0
    %v934 = vpop.f32.mrb[0].mxu0
    %v935 = vadd.f32 %v604, %v934
    %v936 = vpop.f32.mrb[0].mxu0
    %937 = vmatprep.mubr.bf16.mxu0 0
    %938 = vmatmul.mubr.bf16.gmra.mrb[0].mxu0 %v558
    %v939 = vpop.f32.mrb[0].mxu0
    %v940 = vadd.f32 %v604, %v939
    %v941 = vpop.f32.mrb[0].mxu0
    %v942 = vpop.f32.mrb[0].mxu0
    %v943 = vadd.f32 %v604, %v942
    %v944 = vpop.f32.mrb[0].mxu0
    %945 = vdwg.mxu0
    %v946 = vpack.c.bf16 %v775, %v771
    %v947 = vpack.c.bf16 %v777, %v773
    %v948 = vpack.c.bf16 %v887, %v884
    %v949 = vpack.c.bf16 %v785, %v781
    %v950 = vpack.c.bf16 %v787, %v783
    %v951 = vpack.c.bf16 %v895, %v892
    %v952 = vpack.c.bf16 %v795, %v791
    %v953 = vpack.c.bf16 %v797, %v793
    %v954 = vpack.c.bf16 %v903, %v900
    %v955 = vpack.c.bf16 %v805, %v801
    %v956 = vpack.c.bf16 %v807, %v803
    %v957 = vpack.c.bf16 %v911, %v908
    %v958 = vpack.c.bf16 %v815, %v811
    %v959 = vpack.c.bf16 %v817, %v813
    %v960 = vpack.c.bf16 %v919, %v916
    %v961 = vpack.c.bf16 %v825, %v821
    %v962 = vpack.c.bf16 %v827, %v823
    %v963 = vpack.c.bf16 %v927, %v924
    %v964 = vpack.c.bf16 %v835, %v831
    %v965 = vpack.c.bf16 %v837, %v833
    %v966 = vpack.c.bf16 %v935, %v932
    %v967 = vpack.c.bf16 %v845, %v841
    %v968 = vpack.c.bf16 %v847, %v843
    %v969 = vpack.c.bf16 %v943, %v940
    %vm970 = vcmask 261120
    %v972 = vsel %vm970, %v946, 0
    %v975 = vsel %vm970, %v949, 0
    %v978 = vsel %vm970, %v952, 0
    %v981 = vsel %vm970, %v955, 0
    %v984 = vsel %vm970, %v947, 0
    %v987 = vsel %vm970, %v950, 0
    %v990 = vsel %vm970, %v953, 0
    %v993 = vsel %vm970, %v956, 0
    %995 = vmatprep.subr.bf16.mxu0 0
    %996 = vmatpush1.bf16.xpose.msra.mxu0 %v984
    %997 = vmatprep.subr.bf16.mxu0 0
    %998 = vmatpush1.bf16.xpose.msra.mxu0 %v987
    %999 = vmatprep.subr.bf16.mxu0 0
    %1000 = vmatpush1.bf16.xpose.msra.mxu0 %v990
    %1001 = vmatprep.subr.bf16.mxu0 0
    %1002 = vmatpush1.bf16.xpose.msra.mxu0 %v993
    %1003 = vmatprep.subr.bf16.mxu0 0
    %1004 = vmatpush1.bf16.xpose.msra.mxu0 0
    %1005 = vmatprep.subr.bf16.mxu0 0
    %1006 = vmatpush1.bf16.xpose.msra.mxu0 0
    %1007 = vmatprep.subr.bf16.mxu0 0
    %1008 = vmatpush1.bf16.xpose.msra.mxu0 0
    %1009 = vmatprep.subr.bf16.mxu0 0
    %1010 = vmatpush1.bf16.xpose.msra.mxu0 0
    %1011 = vmatprep.subr.bf16.mxu0 0
    %1012 = vmatpush1.bf16.xpose.msra.mxu0 0
    %1013 = vmatprep.subr.bf16.mxu0 0
    %1014 = vmatpush1.bf16.xpose.msra.mxu0 0
    %1015 = vmatprep.subr.bf16.mxu0 0
    %1016 = vmatpush1.bf16.xpose.msra.mxu0 0
    %1017 = vmatprep.subr.bf16.mxu0 0
    %1018 = vmatpush1.bf16.xpose.msra.mxu0 0
    %1019 = vmatprep.subr.bf16.mxu0 0
    %1020 = vmatpush1.bf16.xpose.msra.mxu0 0
    %1021 = vmatprep.subr.bf16.mxu0 0
    %1022 = vmatpush1.bf16.xpose.msra.mxu0 0
    %1023 = vmatprep.subr.bf16.mxu0 0
    %1024 = vmatpush1.bf16.xpose.msra.mxu0 0
    %1025 = vmatprep.subr.bf16.mxu0 0
    %1026 = vmatpush1.bf16.xpose.msra.mxu0 0
    %1027 = vmatprep.mubr.bf16.mxu0 0
    %1028 = vmatmul.mubr.bf16.gmra.mrb[0].mxu0 %v972
    %v1029 = vpop.f32.mrb[0].mxu0
    %v1030 = vadd.f32 0.0, %v1029
    %v1031 = vpop.f32.mrb[0].mxu0
    %v1032 = vpop.f32.mrb[0].mxu0
    %v1033 = vadd.f32 0.0, %v1032
    %v1034 = vpop.f32.mrb[0].mxu0
    %1035 = vmatprep.mubr.bf16.mxu0 0
    %1036 = vmatmul.mubr.bf16.gmra.mrb[0].mxu0 %v975
    %v1037 = vpop.f32.mrb[0].mxu0
    %v1038 = vadd.f32 0.0, %v1037
    %v1039 = vpop.f32.mrb[0].mxu0
    %v1040 = vpop.f32.mrb[0].mxu0
    %v1041 = vadd.f32 0.0, %v1040
    %v1042 = vpop.f32.mrb[0].mxu0
    %1043 = vmatprep.mubr.bf16.mxu0 0
    %1044 = vmatmul.mubr.bf16.gmra.mrb[0].mxu0 %v978
    %v1045 = vpop.f32.mrb[0].mxu0
    %v1046 = vadd.f32 0.0, %v1045
    %v1047 = vpop.f32.mrb[0].mxu0
    %v1048 = vpop.f32.mrb[0].mxu0
    %v1049 = vadd.f32 0.0, %v1048
    %v1050 = vpop.f32.mrb[0].mxu0
    %1051 = vmatprep.mubr.bf16.mxu0 0
    %1052 = vmatmul.mubr.bf16.gmra.mrb[0].mxu0 %v981
    %v1053 = vpop.f32.mrb[0].mxu0
    %v1054 = vadd.f32 0.0, %v1053
    %v1055 = vpop.f32.mrb[0].mxu0
    %v1056 = vpop.f32.mrb[0].mxu0
    %v1057 = vadd.f32 0.0, %v1056
    %v1058 = vpop.f32.mrb[0].mxu0
    %1059 = vdwg.mxu0
    %v1060 = vmul.f32 %v1030, 0.17677669
    %v1061 = vmul.f32 %v1033, 0.17677669
    %v1062 = vmul.f32 %v1038, 0.17677669
    %v1063 = vmul.f32 %v1041, 0.17677669
    %v1064 = vmul.f32 %v1046, 0.17677669
    %v1065 = vmul.f32 %v1049, 0.17677669
    %v1066 = vmul.f32 %v1054, 0.17677669
    %v1067 = vmul.f32 %v1057, 0.17677669
    %v1068 = vsel %vm143, %v1060, -inf
    %1069 = vmax.xlane.f32.xlu0 %v1068
    %v1070 = vpop.xlane.xlu0 %1069
    %v1071 = vsel %vm143, %v1061, -inf
    %1072 = vmax.xlane.f32.xlu0 %v1071
    %v1073 = vpop.xlane.xlu0 %1072
    %v1074 = vsel %vm143, %v1062, -inf
    %1075 = vmax.xlane.f32.xlu0 %v1074
    %v1076 = vpop.xlane.xlu0 %1075
    %v1077 = vsel %vm143, %v1063, -inf
    %1078 = vmax.xlane.f32.xlu0 %v1077
    %v1079 = vpop.xlane.xlu0 %1078
    %v1080 = vsel %vm143, %v1064, -inf
    %1081 = vmax.xlane.f32.xlu0 %v1080
    %v1082 = vpop.xlane.xlu0 %1081
    %v1083 = vsel %vm143, %v1065, -inf
    %1084 = vmax.xlane.f32.xlu0 %v1083
    %v1085 = vpop.xlane.xlu0 %1084
    %v1086 = vsel %vm143, %v1066, -inf
    %1087 = vmax.xlane.f32.xlu0 %v1086
    %v1088 = vpop.xlane.xlu0 %1087
    %v1089 = vsel %vm143, %v1067, -inf
    %1090 = vmax.xlane.f32.xlu0 %v1089
    %v1091 = vpop.xlane.xlu0 %1090
    %v1092 = vsub.f32 %v1060, %v1070
    %v1093 = vsub.f32 %v1061, %v1073
    %v1094 = vsub.f32 %v1062, %v1076
    %v1095 = vsub.f32 %v1063, %v1079
    %v1096 = vsub.f32 %v1064, %v1082
    %v1097 = vsub.f32 %v1065, %v1085
    %v1098 = vsub.f32 %v1066, %v1088
    %v1099 = vsub.f32 %v1067, %v1091
    %v1100 = vmul.f32 %v1092, 1.442695
    %v1101 = vpow.pop %v1100
    %v1102 = vmul.f32 %v1093, 1.442695
    %v1103 = vpow.pop %v1102
    %v1104 = vmul.f32 %v1094, 1.442695
    %v1105 = vpow.pop %v1104
    %v1106 = vmul.f32 %v1095, 1.442695
    %v1107 = vpow.pop %v1106
    %v1108 = vmul.f32 %v1096, 1.442695
    %v1109 = vpow.pop %v1108
    %v1110 = vmul.f32 %v1097, 1.442695
    %v1111 = vpow.pop %v1110
    %v1112 = vmul.f32 %v1098, 1.442695
    %v1113 = vpow.pop %v1112
    %v1114 = vmul.f32 %v1099, 1.442695
    %v1115 = vpow.pop %v1114
    %v1116 = vsel %vm143, %v1101, 0.0
    %1117 = vadd.xlane.f32.xlu0 %v1116
    %v1118 = vpop.xlane.xlu0 %1117
    %v1119 = vsel %vm143, %v1103, 0.0
    %1120 = vadd.xlane.f32.xlu0 %v1119
    %v1121 = vpop.xlane.xlu0 %1120
    %v1122 = vsel %vm143, %v1105, 0.0
    %1123 = vadd.xlane.f32.xlu0 %v1122
    %v1124 = vpop.xlane.xlu0 %1123
    %v1125 = vsel %vm143, %v1107, 0.0
    %1126 = vadd.xlane.f32.xlu0 %v1125
    %v1127 = vpop.xlane.xlu0 %1126
    %v1128 = vsel %vm143, %v1109, 0.0
    %1129 = vadd.xlane.f32.xlu0 %v1128
    %v1130 = vpop.xlane.xlu0 %1129
    %v1131 = vsel %vm143, %v1111, 0.0
    %1132 = vadd.xlane.f32.xlu0 %v1131
    %v1133 = vpop.xlane.xlu0 %1132
    %v1134 = vsel %vm143, %v1113, 0.0
    %1135 = vadd.xlane.f32.xlu0 %v1134
    %v1136 = vpop.xlane.xlu0 %1135
    %v1137 = vsel %vm143, %v1115, 0.0
    %1138 = vadd.xlane.f32.xlu0 %v1137
    %v1139 = vpop.xlane.xlu0 %1138
    %v1140 = vrcp.pop %v1118
    %v1141 = vrcp.pop %v1121
    %v1142 = vrcp.pop %v1124
    %v1143 = vrcp.pop %v1127
    %v1144 = vrcp.pop %v1130
    %v1145 = vrcp.pop %v1133
    %v1146 = vrcp.pop %v1136
    %v1147 = vrcp.pop %v1139
    %v1148 = vmul.f32 %v1101, %v1140
    %v1149 = vmul.f32 %v1103, %v1141
    %v1150 = vmul.f32 %v1105, %v1142
    %v1151 = vmul.f32 %v1107, %v1143
    %v1152 = vmul.f32 %v1109, %v1144
    %v1153 = vmul.f32 %v1111, %v1145
    %v1154 = vmul.f32 %v1113, %v1146
    %v1155 = vmul.f32 %v1115, %v1147
    %v1156 = vpack.c.bf16 %v1149, %v1148
    %v1157 = vpack.c.bf16 %v1151, %v1150
    %v1158 = vpack.c.bf16 %v1153, %v1152
    %v1159 = vpack.c.bf16 %v1155, %v1154
    %v1161 = vsel %vm143, %v1156, 0
    %v1164 = vsel %vm143, %v1157, 0
    %v1167 = vsel %vm143, %v1158, 0
    %v1170 = vsel %vm143, %v1159, 0
    %1172 = vmatprep.subr.bf16.mxu0 0
    %1173 = vmatpush1.bf16.msra.mxu0 %v948
    %1174 = vmatprep.subr.bf16.mxu0 0
    %1175 = vmatpush1.bf16.msra.mxu0 %v951
    %1176 = vmatprep.subr.bf16.mxu0 0
    %1177 = vmatpush1.bf16.msra.mxu0 %v954
    %1178 = vmatprep.subr.bf16.mxu0 0
    %1179 = vmatpush1.bf16.msra.mxu0 %v957
    %1180 = vmatprep.subr.bf16.mxu0 0
    %1181 = vmatpush1.bf16.msra.mxu0 0
    %1182 = vmatprep.subr.bf16.mxu0 0
    %1183 = vmatpush1.bf16.msra.mxu0 0
    %1184 = vmatprep.subr.bf16.mxu0 0
    %1185 = vmatpush1.bf16.msra.mxu0 0
    %1186 = vmatprep.subr.bf16.mxu0 0
    %1187 = vmatpush1.bf16.msra.mxu0 0
    %1188 = vmatprep.subr.bf16.mxu0 0
    %1189 = vmatpush1.bf16.msra.mxu0 0
    %1190 = vmatprep.subr.bf16.mxu0 0
    %1191 = vmatpush1.bf16.msra.mxu0 0
    %1192 = vmatprep.subr.bf16.mxu0 0
    %1193 = vmatpush1.bf16.msra.mxu0 0
    %1194 = vmatprep.subr.bf16.mxu0 0
    %1195 = vmatpush1.bf16.msra.mxu0 0
    %1196 = vmatprep.subr.bf16.mxu0 0
    %1197 = vmatpush1.bf16.msra.mxu0 0
    %1198 = vmatprep.subr.bf16.mxu0 0
    %1199 = vmatpush1.bf16.msra.mxu0 0
    %1200 = vmatprep.subr.bf16.mxu0 0
    %1201 = vmatpush1.bf16.msra.mxu0 0
    %1202 = vmatprep.subr.bf16.mxu0 0
    %1203 = vmatpush1.bf16.msra.mxu0 0
    %1204 = vmatprep.mubr.bf16.mxu0 0
    %1205 = vmatmul.mubr.bf16.gmra.mrb[0].mxu0 %v1161
    %v1206 = vpop.f32.mrb[0].mxu0
    %v1207 = vadd.f32 0.0, %v1206
    %v1208 = vpop.f32.mrb[0].mxu0
    %v1209 = vpop.f32.mrb[0].mxu0
    %v1210 = vadd.f32 0.0, %v1209
    %v1211 = vpop.f32.mrb[0].mxu0
    %1212 = vmatprep.mubr.bf16.mxu0 0
    %1213 = vmatmul.mubr.bf16.gmra.mrb[0].mxu0 %v1164
    %v1214 = vpop.f32.mrb[0].mxu0
    %v1215 = vadd.f32 0.0, %v1214
    %v1216 = vpop.f32.mrb[0].mxu0
    %v1217 = vpop.f32.mrb[0].mxu0
    %v1218 = vadd.f32 0.0, %v1217
    %v1219 = vpop.f32.mrb[0].mxu0
    %1220 = vmatprep.mubr.bf16.mxu0 0
    %1221 = vmatmul.mubr.bf16.gmra.mrb[0].mxu0 %v1167
    %v1222 = vpop.f32.mrb[0].mxu0
    %v1223 = vadd.f32 0.0, %v1222
    %v1224 = vpop.f32.mrb[0].mxu0
    %v1225 = vpop.f32.mrb[0].mxu0
    %v1226 = vadd.f32 0.0, %v1225
    %v1227 = vpop.f32.mrb[0].mxu0
    %1228 = vmatprep.mubr.bf16.mxu0 0
    %1229 = vmatmul.mubr.bf16.gmra.mrb[0].mxu0 %v1170
    %v1230 = vpop.f32.mrb[0].mxu0
    %v1231 = vadd.f32 0.0, %v1230
    %v1232 = vpop.f32.mrb[0].mxu0
    %v1233 = vpop.f32.mrb[0].mxu0
    %v1234 = vadd.f32 0.0, %v1233
    %v1235 = vpop.f32.mrb[0].mxu0
    %1236 = vdwg.mxu0
    %v1237 = vpack.c.bf16 %v1210, %v1207
    %v1238 = vpack.c.bf16 %v1218, %v1215
    %v1239 = vpack.c.bf16 %v1226, %v1223
    %v1240 = vpack.c.bf16 %v1234, %v1231
    %1245 = vrot.lane.b32.xlu0 %v946, 96
    %v1246 = vpop.permute.xlu0 %1245
    %1247 = vrot.lane.b32.xlu0 %v949, 96
    %v1248 = vpop.permute.xlu0 %1247
    %1249 = vrot.lane.b32.xlu0 %v952, 96
    %v1250 = vpop.permute.xlu0 %1249
    %1251 = vrot.lane.b32.xlu0 %v955, 96
    %v1252 = vpop.permute.xlu0 %1251
    %1257 = vrot.lane.b32.xlu0 %v947, 96
    %v1258 = vpop.permute.xlu0 %1257
    %1259 = vrot.lane.b32.xlu0 %v950, 96
    %v1260 = vpop.permute.xlu0 %1259
    %1261 = vrot.lane.b32.xlu0 %v953, 96
    %v1262 = vpop.permute.xlu0 %1261
    %1263 = vrot.lane.b32.xlu0 %v956, 96
    %v1264 = vpop.permute.xlu0 %1263
    %v1266 = vsel %vm970, %v1246, 0
    %v1269 = vsel %vm970, %v1248, 0
    %v1272 = vsel %vm970, %v1250, 0
    %v1275 = vsel %vm970, %v1252, 0
    %v1278 = vsel %vm970, %v1258, 0
    %v1281 = vsel %vm970, %v1260, 0
    %v1284 = vsel %vm970, %v1262, 0
    %v1287 = vsel %vm970, %v1264, 0
    %1289 = vmatprep.subr.bf16.mxu0 0
    %1290 = vmatpush1.bf16.xpose.msra.mxu0 %v1278
    %1291 = vmatprep.subr.bf16.mxu0 0
    %1292 = vmatpush1.bf16.xpose.msra.mxu0 %v1281
    %1293 = vmatprep.subr.bf16.mxu0 0
    %1294 = vmatpush1.bf16.xpose.msra.mxu0 %v1284
    %1295 = vmatprep.subr.bf16.mxu0 0
    %1296 = vmatpush1.bf16.xpose.msra.mxu0 %v1287
    %1297 = vmatprep.subr.bf16.mxu0 0
    %1298 = vmatpush1.bf16.xpose.msra.mxu0 0
    %1299 = vmatprep.subr.bf16.mxu0 0
    %1300 = vmatpush1.bf16.xpose.msra.mxu0 0
    %1301 = vmatprep.subr.bf16.mxu0 0
    %1302 = vmatpush1.bf16.xpose.msra.mxu0 0
    %1303 = vmatprep.subr.bf16.mxu0 0
    %1304 = vmatpush1.bf16.xpose.msra.mxu0 0
    %1305 = vmatprep.subr.bf16.mxu0 0
    %1306 = vmatpush1.bf16.xpose.msra.mxu0 0
    %1307 = vmatprep.subr.bf16.mxu0 0
    %1308 = vmatpush1.bf16.xpose.msra.mxu0 0
    %1309 = vmatprep.subr.bf16.mxu0 0
    %1310 = vmatpush1.bf16.xpose.msra.mxu0 0
    %1311 = vmatprep.subr.bf16.mxu0 0
    %1312 = vmatpush1.bf16.xpose.msra.mxu0 0
    %1313 = vmatprep.subr.bf16.mxu0 0
    %1314 = vmatpush1.bf16.xpose.msra.mxu0 0
    %1315 = vmatprep.subr.bf16.mxu0 0
    %1316 = vmatpush1.bf16.xpose.msra.mxu0 0
    %1317 = vmatprep.subr.bf16.mxu0 0
    %1318 = vmatpush1.bf16.xpose.msra.mxu0 0
    %1319 = vmatprep.subr.bf16.mxu0 0
    %1320 = vmatpush1.bf16.xpose.msra.mxu0 0
    %1321 = vmatprep.mubr.bf16.mxu0 0
    %1322 = vmatmul.mubr.bf16.gmra.mrb[0].mxu0 %v1266
    %v1323 = vpop.f32.mrb[0].mxu0
    %v1324 = vadd.f32 0.0, %v1323
    %v1325 = vpop.f32.mrb[0].mxu0
    %v1326 = vpop.f32.mrb[0].mxu0
    %v1327 = vadd.f32 0.0, %v1326
    %v1328 = vpop.f32.mrb[0].mxu0
    %1329 = vmatprep.mubr.bf16.mxu0 0
    %1330 = vmatmul.mubr.bf16.gmra.mrb[0].mxu0 %v1269
    %v1331 = vpop.f32.mrb[0].mxu0
    %v1332 = vadd.f32 0.0, %v1331
    %v1333 = vpop.f32.mrb[0].mxu0
    %v1334 = vpop.f32.mrb[0].mxu0
    %v1335 = vadd.f32 0.0, %v1334
    %v1336 = vpop.f32.mrb[0].mxu0
    %1337 = vmatprep.mubr.bf16.mxu0 0
    %1338 = vmatmul.mubr.bf16.gmra.mrb[0].mxu0 %v1272
    %v1339 = vpop.f32.mrb[0].mxu0
    %v1340 = vadd.f32 0.0, %v1339
    %v1341 = vpop.f32.mrb[0].mxu0
    %v1342 = vpop.f32.mrb[0].mxu0
    %v1343 = vadd.f32 0.0, %v1342
    %v1344 = vpop.f32.mrb[0].mxu0
    %1345 = vmatprep.mubr.bf16.mxu0 0
    %1346 = vmatmul.mubr.bf16.gmra.mrb[0].mxu0 %v1275
    %v1347 = vpop.f32.mrb[0].mxu0
    %v1348 = vadd.f32 0.0, %v1347
    %v1349 = vpop.f32.mrb[0].mxu0
    %v1350 = vpop.f32.mrb[0].mxu0
    %v1351 = vadd.f32 0.0, %v1350
    %v1352 = vpop.f32.mrb[0].mxu0
    %1353 = vdwg.mxu0
    %v1354 = vmul.f32 %v1324, 0.17677669
    %v1355 = vmul.f32 %v1327, 0.17677669
    %v1356 = vmul.f32 %v1332, 0.17677669
    %v1357 = vmul.f32 %v1335, 0.17677669
    %v1358 = vmul.f32 %v1340, 0.17677669
    %v1359 = vmul.f32 %v1343, 0.17677669
    %v1360 = vmul.f32 %v1348, 0.17677669
    %v1361 = vmul.f32 %v1351, 0.17677669
    %v1362 = vsel %vm143, %v1354, -inf
    %1363 = vmax.xlane.f32.xlu0 %v1362
    %v1364 = vpop.xlane.xlu0 %1363
    %v1365 = vsel %vm143, %v1355, -inf
    %1366 = vmax.xlane.f32.xlu0 %v1365
    %v1367 = vpop.xlane.xlu0 %1366
    %v1368 = vsel %vm143, %v1356, -inf
    %1369 = vmax.xlane.f32.xlu0 %v1368
    %v1370 = vpop.xlane.xlu0 %1369
    %v1371 = vsel %vm143, %v1357, -inf
    %1372 = vmax.xlane.f32.xlu0 %v1371
    %v1373 = vpop.xlane.xlu0 %1372
    %v1374 = vsel %vm143, %v1358, -inf
    %1375 = vmax.xlane.f32.xlu0 %v1374
    %v1376 = vpop.xlane.xlu0 %1375
    %v1377 = vsel %vm143, %v1359, -inf
    %1378 = vmax.xlane.f32.xlu0 %v1377
    %v1379 = vpop.xlane.xlu0 %1378
    %v1380 = vsel %vm143, %v1360, -inf
    %1381 = vmax.xlane.f32.xlu0 %v1380
    %v1382 = vpop.xlane.xlu0 %1381
    %v1383 = vsel %vm143, %v1361, -inf
    %1384 = vmax.xlane.f32.xlu0 %v1383
    %v1385 = vpop.xlane.xlu0 %1384
    %v1386 = vsub.f32 %v1354, %v1364
    %v1387 = vsub.f32 %v1355, %v1367
    %v1388 = vsub.f32 %v1356, %v1370
    %v1389 = vsub.f32 %v1357, %v1373
    %v1390 = vsub.f32 %v1358, %v1376
    %v1391 = vsub.f32 %v1359, %v1379
    %v1392 = vsub.f32 %v1360, %v1382
    %v1393 = vsub.f32 %v1361, %v1385
    %v1394 = vmul.f32 %v1386, 1.442695
    %v1395 = vpow.pop %v1394
    %v1396 = vmul.f32 %v1387, 1.442695
    %v1397 = vpow.pop %v1396
    %v1398 = vmul.f32 %v1388, 1.442695
    %v1399 = vpow.pop %v1398
    %v1400 = vmul.f32 %v1389, 1.442695
    %v1401 = vpow.pop %v1400
    %v1402 = vmul.f32 %v1390, 1.442695
    %v1403 = vpow.pop %v1402
    %v1404 = vmul.f32 %v1391, 1.442695
    %v1405 = vpow.pop %v1404
    %v1406 = vmul.f32 %v1392, 1.442695
    %v1407 = vpow.pop %v1406
    %v1408 = vmul.f32 %v1393, 1.442695
    %v1409 = vpow.pop %v1408
    %v1410 = vsel %vm143, %v1395, 0.0
    %1411 = vadd.xlane.f32.xlu0 %v1410
    %v1412 = vpop.xlane.xlu0 %1411
    %v1413 = vsel %vm143, %v1397, 0.0
    %1414 = vadd.xlane.f32.xlu0 %v1413
    %v1415 = vpop.xlane.xlu0 %1414
    %v1416 = vsel %vm143, %v1399, 0.0
    %1417 = vadd.xlane.f32.xlu0 %v1416
    %v1418 = vpop.xlane.xlu0 %1417
    %v1419 = vsel %vm143, %v1401, 0.0
    %1420 = vadd.xlane.f32.xlu0 %v1419
    %v1421 = vpop.xlane.xlu0 %1420
    %v1422 = vsel %vm143, %v1403, 0.0
    %1423 = vadd.xlane.f32.xlu0 %v1422
    %v1424 = vpop.xlane.xlu0 %1423
    %v1425 = vsel %vm143, %v1405, 0.0
    %1426 = vadd.xlane.f32.xlu0 %v1425
    %v1427 = vpop.xlane.xlu0 %1426
    %v1428 = vsel %vm143, %v1407, 0.0
    %1429 = vadd.xlane.f32.xlu0 %v1428
    %v1430 = vpop.xlane.xlu0 %1429
    %v1431 = vsel %vm143, %v1409, 0.0
    %1432 = vadd.xlane.f32.xlu0 %v1431
    %v1433 = vpop.xlane.xlu0 %1432
    %v1434 = vrcp.pop %v1412
    %v1435 = vrcp.pop %v1415
    %v1436 = vrcp.pop %v1418
    %v1437 = vrcp.pop %v1421
    %v1438 = vrcp.pop %v1424
    %v1439 = vrcp.pop %v1427
    %v1440 = vrcp.pop %v1430
    %v1441 = vrcp.pop %v1433
    %v1442 = vmul.f32 %v1395, %v1434
    %v1443 = vmul.f32 %v1397, %v1435
    %v1444 = vmul.f32 %v1399, %v1436
    %v1445 = vmul.f32 %v1401, %v1437
    %v1446 = vmul.f32 %v1403, %v1438
    %v1447 = vmul.f32 %v1405, %v1439
    %v1448 = vmul.f32 %v1407, %v1440
    %v1449 = vmul.f32 %v1409, %v1441
    %v1450 = vpack.c.bf16 %v1443, %v1442
    %v1451 = vpack.c.bf16 %v1445, %v1444
    %v1452 = vpack.c.bf16 %v1447, %v1446
    %v1453 = vpack.c.bf16 %v1449, %v1448
    %1458 = vrot.lane.b32.xlu0 %v948, 96
    %v1459 = vpop.permute.xlu0 %1458
    %1460 = vrot.lane.b32.xlu0 %v951, 96
    %v1461 = vpop.permute.xlu0 %1460
    %1462 = vrot.lane.b32.xlu0 %v954, 96
    %v1463 = vpop.permute.xlu0 %1462
    %1464 = vrot.lane.b32.xlu0 %v957, 96
    %v1465 = vpop.permute.xlu0 %1464
    %v1471 = vsel %vm143, %v1450, 0
    %v1474 = vsel %vm143, %v1451, 0
    %v1477 = vsel %vm143, %v1452, 0
    %v1480 = vsel %vm143, %v1453, 0
    %1482 = vmatprep.subr.bf16.mxu0 0
    %1483 = vmatpush1.bf16.msra.mxu0 %v1459
    %1484 = vmatprep.subr.bf16.mxu0 0
    %1485 = vmatpush1.bf16.msra.mxu0 %v1461
    %1486 = vmatprep.subr.bf16.mxu0 0
    %1487 = vmatpush1.bf16.msra.mxu0 %v1463
    %1488 = vmatprep.subr.bf16.mxu0 0
    %1489 = vmatpush1.bf16.msra.mxu0 %v1465
    %1490 = vmatprep.subr.bf16.mxu0 0
    %1491 = vmatpush1.bf16.msra.mxu0 0
    %1492 = vmatprep.subr.bf16.mxu0 0
    %1493 = vmatpush1.bf16.msra.mxu0 0
    %1494 = vmatprep.subr.bf16.mxu0 0
    %1495 = vmatpush1.bf16.msra.mxu0 0
    %1496 = vmatprep.subr.bf16.mxu0 0
    %1497 = vmatpush1.bf16.msra.mxu0 0
    %1498 = vmatprep.subr.bf16.mxu0 0
    %1499 = vmatpush1.bf16.msra.mxu0 0
    %1500 = vmatprep.subr.bf16.mxu0 0
    %1501 = vmatpush1.bf16.msra.mxu0 0
    %1502 = vmatprep.subr.bf16.mxu0 0
    %1503 = vmatpush1.bf16.msra.mxu0 0
    %1504 = vmatprep.subr.bf16.mxu0 0
    %1505 = vmatpush1.bf16.msra.mxu0 0
    %1506 = vmatprep.subr.bf16.mxu0 0
    %1507 = vmatpush1.bf16.msra.mxu0 0
    %1508 = vmatprep.subr.bf16.mxu0 0
    %1509 = vmatpush1.bf16.msra.mxu0 0
    %1510 = vmatprep.subr.bf16.mxu0 0
    %1511 = vmatpush1.bf16.msra.mxu0 0
    %1512 = vmatprep.subr.bf16.mxu0 0
    %1513 = vmatpush1.bf16.msra.mxu0 0
    %1514 = vmatprep.mubr.bf16.mxu0 0
    %1515 = vmatmul.mubr.bf16.gmra.mrb[0].mxu0 %v1471
    %v1516 = vpop.f32.mrb[0].mxu0
    %v1517 = vadd.f32 0.0, %v1516
    %v1518 = vpop.f32.mrb[0].mxu0
    %v1519 = vpop.f32.mrb[0].mxu0
    %v1520 = vadd.f32 0.0, %v1519
    %v1521 = vpop.f32.mrb[0].mxu0
    %1522 = vmatprep.mubr.bf16.mxu0 0
    %1523 = vmatmul.mubr.bf16.gmra.mrb[0].mxu0 %v1474
    %v1524 = vpop.f32.mrb[0].mxu0
    %v1525 = vadd.f32 0.0, %v1524
    %v1526 = vpop.f32.mrb[0].mxu0
    %v1527 = vpop.f32.mrb[0].mxu0
    %v1528 = vadd.f32 0.0, %v1527
    %v1529 = vpop.f32.mrb[0].mxu0
    %1530 = vmatprep.mubr.bf16.mxu0 0
    %1531 = vmatmul.mubr.bf16.gmra.mrb[0].mxu0 %v1477
    %v1532 = vpop.f32.mrb[0].mxu0
    %v1533 = vadd.f32 0.0, %v1532
    %v1534 = vpop.f32.mrb[0].mxu0
    %v1535 = vpop.f32.mrb[0].mxu0
    %v1536 = vadd.f32 0.0, %v1535
    %v1537 = vpop.f32.mrb[0].mxu0
    %1538 = vmatprep.mubr.bf16.mxu0 0
    %1539 = vmatmul.mubr.bf16.gmra.mrb[0].mxu0 %v1480
    %v1540 = vpop.f32.mrb[0].mxu0
    %v1541 = vadd.f32 0.0, %v1540
    %v1542 = vpop.f32.mrb[0].mxu0
    %v1543 = vpop.f32.mrb[0].mxu0
    %v1544 = vadd.f32 0.0, %v1543
    %v1545 = vpop.f32.mrb[0].mxu0
    %1546 = vdwg.mxu0
    %v1547 = vpack.c.bf16 %v1520, %v1517
    %v1548 = vpack.c.bf16 %v1528, %v1525
    %v1549 = vpack.c.bf16 %v1536, %v1533
    %v1550 = vpack.c.bf16 %v1544, %v1541
    %1551 = vrot.lane.b32.xlu0 %v946, 64
    %v1552 = vpop.permute.xlu0 %1551
    %1553 = vrot.lane.b32.xlu0 %v949, 64
    %v1554 = vpop.permute.xlu0 %1553
    %1555 = vrot.lane.b32.xlu0 %v952, 64
    %v1556 = vpop.permute.xlu0 %1555
    %1557 = vrot.lane.b32.xlu0 %v955, 64
    %v1558 = vpop.permute.xlu0 %1557
    %1559 = vrot.lane.b32.xlu0 %v947, 64
    %v1560 = vpop.permute.xlu0 %1559
    %1561 = vrot.lane.b32.xlu0 %v950, 64
    %v1562 = vpop.permute.xlu0 %1561
    %1563 = vrot.lane.b32.xlu0 %v953, 64
    %v1564 = vpop.permute.xlu0 %1563
    %1565 = vrot.lane.b32.xlu0 %v956, 64
    %v1566 = vpop.permute.xlu0 %1565
    %v1568 = vsel %vm970, %v1552, 0
    %v1571 = vsel %vm970, %v1554, 0
    %v1574 = vsel %vm970, %v1556, 0
    %v1577 = vsel %vm970, %v1558, 0
    %v1580 = vsel %vm970, %v1560, 0
    %v1583 = vsel %vm970, %v1562, 0
    %v1586 = vsel %vm970, %v1564, 0
    %v1589 = vsel %vm970, %v1566, 0
    %1591 = vmatprep.subr.bf16.mxu0 0
    %1592 = vmatpush1.bf16.xpose.msra.mxu0 %v1580
    %1593 = vmatprep.subr.bf16.mxu0 0
    %1594 = vmatpush1.bf16.xpose.msra.mxu0 %v1583
    %1595 = vmatprep.subr.bf16.mxu0 0
    %1596 = vmatpush1.bf16.xpose.msra.mxu0 %v1586
    %1597 = vmatprep.subr.bf16.mxu0 0
    %1598 = vmatpush1.bf16.xpose.msra.mxu0 %v1589
    %1599 = vmatprep.subr.bf16.mxu0 0
    %1600 = vmatpush1.bf16.xpose.msra.mxu0 0
    %1601 = vmatprep.subr.bf16.mxu0 0
    %1602 = vmatpush1.bf16.xpose.msra.mxu0 0
    %1603 = vmatprep.subr.bf16.mxu0 0
    %1604 = vmatpush1.bf16.xpose.msra.mxu0 0
    %1605 = vmatprep.subr.bf16.mxu0 0
    %1606 = vmatpush1.bf16.xpose.msra.mxu0 0
    %1607 = vmatprep.subr.bf16.mxu0 0
    %1608 = vmatpush1.bf16.xpose.msra.mxu0 0
    %1609 = vmatprep.subr.bf16.mxu0 0
    %1610 = vmatpush1.bf16.xpose.msra.mxu0 0
    %1611 = vmatprep.subr.bf16.mxu0 0
    %1612 = vmatpush1.bf16.xpose.msra.mxu0 0
    %1613 = vmatprep.subr.bf16.mxu0 0
    %1614 = vmatpush1.bf16.xpose.msra.mxu0 0
    %1615 = vmatprep.subr.bf16.mxu0 0
    %1616 = vmatpush1.bf16.xpose.msra.mxu0 0
    %1617 = vmatprep.subr.bf16.mxu0 0
    %1618 = vmatpush1.bf16.xpose.msra.mxu0 0
    %1619 = vmatprep.subr.bf16.mxu0 0
    %1620 = vmatpush1.bf16.xpose.msra.mxu0 0
    %1621 = vmatprep.subr.bf16.mxu0 0
    %1622 = vmatpush1.bf16.xpose.msra.mxu0 0
    %1623 = vmatprep.mubr.bf16.mxu0 0
    %1624 = vmatmul.mubr.bf16.gmra.mrb[0].mxu0 %v1568
    %v1625 = vpop.f32.mrb[0].mxu0
    %v1626 = vadd.f32 0.0, %v1625
    %v1627 = vpop.f32.mrb[0].mxu0
    %v1628 = vpop.f32.mrb[0].mxu0
    %v1629 = vadd.f32 0.0, %v1628
    %v1630 = vpop.f32.mrb[0].mxu0
    %1631 = vmatprep.mubr.bf16.mxu0 0
    %1632 = vmatmul.mubr.bf16.gmra.mrb[0].mxu0 %v1571
    %v1633 = vpop.f32.mrb[0].mxu0
    %v1634 = vadd.f32 0.0, %v1633
    %v1635 = vpop.f32.mrb[0].mxu0
    %v1636 = vpop.f32.mrb[0].mxu0
    %v1637 = vadd.f32 0.0, %v1636
    %v1638 = vpop.f32.mrb[0].mxu0
    %1639 = vmatprep.mubr.bf16.mxu0 0
    %1640 = vmatmul.mubr.bf16.gmra.mrb[0].mxu0 %v1574
    %v1641 = vpop.f32.mrb[0].mxu0
    %v1642 = vadd.f32 0.0, %v1641
    %v1643 = vpop.f32.mrb[0].mxu0
    %v1644 = vpop.f32.mrb[0].mxu0
    %v1645 = vadd.f32 0.0, %v1644
    %v1646 = vpop.f32.mrb[0].mxu0
    %1647 = vmatprep.mubr.bf16.mxu0 0
    %1648 = vmatmul.mubr.bf16.gmra.mrb[0].mxu0 %v1577
    %v1649 = vpop.f32.mrb[0].mxu0
    %v1650 = vadd.f32 0.0, %v1649
    %v1651 = vpop.f32.mrb[0].mxu0
    %v1652 = vpop.f32.mrb[0].mxu0
    %v1653 = vadd.f32 0.0, %v1652
    %v1654 = vpop.f32.mrb[0].mxu0
    %1655 = vdwg.mxu0
    %v1656 = vmul.f32 %v1626, 0.17677669
    %v1657 = vmul.f32 %v1629, 0.17677669
    %v1658 = vmul.f32 %v1634, 0.17677669
    %v1659 = vmul.f32 %v1637, 0.17677669
    %v1660 = vmul.f32 %v1642, 0.17677669
    %v1661 = vmul.f32 %v1645, 0.17677669
    %v1662 = vmul.f32 %v1650, 0.17677669
    %v1663 = vmul.f32 %v1653, 0.17677669
    %v1664 = vsel %vm143, %v1656, -inf
    %1665 = vmax.xlane.f32.xlu0 %v1664
    %v1666 = vpop.xlane.xlu0 %1665
    %v1667 = vsel %vm143, %v1657, -inf
    %1668 = vmax.xlane.f32.xlu0 %v1667
    %v1669 = vpop.xlane.xlu0 %1668
    %v1670 = vsel %vm143, %v1658, -inf
    %1671 = vmax.xlane.f32.xlu0 %v1670
    %v1672 = vpop.xlane.xlu0 %1671
    %v1673 = vsel %vm143, %v1659, -inf
    %1674 = vmax.xlane.f32.xlu0 %v1673
    %v1675 = vpop.xlane.xlu0 %1674
    %v1676 = vsel %vm143, %v1660, -inf
    %1677 = vmax.xlane.f32.xlu0 %v1676
    %v1678 = vpop.xlane.xlu0 %1677
    %v1679 = vsel %vm143, %v1661, -inf
    %1680 = vmax.xlane.f32.xlu0 %v1679
    %v1681 = vpop.xlane.xlu0 %1680
    %v1682 = vsel %vm143, %v1662, -inf
    %1683 = vmax.xlane.f32.xlu0 %v1682
    %v1684 = vpop.xlane.xlu0 %1683
    %v1685 = vsel %vm143, %v1663, -inf
    %1686 = vmax.xlane.f32.xlu0 %v1685
    %v1687 = vpop.xlane.xlu0 %1686
    %v1688 = vsub.f32 %v1656, %v1666
    %v1689 = vsub.f32 %v1657, %v1669
    %v1690 = vsub.f32 %v1658, %v1672
    %v1691 = vsub.f32 %v1659, %v1675
    %v1692 = vsub.f32 %v1660, %v1678
    %v1693 = vsub.f32 %v1661, %v1681
    %v1694 = vsub.f32 %v1662, %v1684
    %v1695 = vsub.f32 %v1663, %v1687
    %v1696 = vmul.f32 %v1688, 1.442695
    %v1697 = vpow.pop %v1696
    %v1698 = vmul.f32 %v1689, 1.442695
    %v1699 = vpow.pop %v1698
    %v1700 = vmul.f32 %v1690, 1.442695
    %v1701 = vpow.pop %v1700
    %v1702 = vmul.f32 %v1691, 1.442695
    %v1703 = vpow.pop %v1702
    %v1704 = vmul.f32 %v1692, 1.442695
    %v1705 = vpow.pop %v1704
    %v1706 = vmul.f32 %v1693, 1.442695
    %v1707 = vpow.pop %v1706
    %v1708 = vmul.f32 %v1694, 1.442695
    %v1709 = vpow.pop %v1708
    %v1710 = vmul.f32 %v1695, 1.442695
    %v1711 = vpow.pop %v1710
    %v1712 = vsel %vm143, %v1697, 0.0
    %1713 = vadd.xlane.f32.xlu0 %v1712
    %v1714 = vpop.xlane.xlu0 %1713
    %v1715 = vsel %vm143, %v1699, 0.0
    %1716 = vadd.xlane.f32.xlu0 %v1715
    %v1717 = vpop.xlane.xlu0 %1716
    %v1718 = vsel %vm143, %v1701, 0.0
    %1719 = vadd.xlane.f32.xlu0 %v1718
    %v1720 = vpop.xlane.xlu0 %1719
    %v1721 = vsel %vm143, %v1703, 0.0
    %1722 = vadd.xlane.f32.xlu0 %v1721
    %v1723 = vpop.xlane.xlu0 %1722
    %v1724 = vsel %vm143, %v1705, 0.0
    %1725 = vadd.xlane.f32.xlu0 %v1724
    %v1726 = vpop.xlane.xlu0 %1725
    %v1727 = vsel %vm143, %v1707, 0.0
    %1728 = vadd.xlane.f32.xlu0 %v1727
    %v1729 = vpop.xlane.xlu0 %1728
    %v1730 = vsel %vm143, %v1709, 0.0
    %1731 = vadd.xlane.f32.xlu0 %v1730
    %v1732 = vpop.xlane.xlu0 %1731
    %v1733 = vsel %vm143, %v1711, 0.0
    %1734 = vadd.xlane.f32.xlu0 %v1733
    %v1735 = vpop.xlane.xlu0 %1734
    %v1736 = vrcp.pop %v1714
    %v1737 = vrcp.pop %v1717
    %v1738 = vrcp.pop %v1720
    %v1739 = vrcp.pop %v1723
    %v1740 = vrcp.pop %v1726
    %v1741 = vrcp.pop %v1729
    %v1742 = vrcp.pop %v1732
    %v1743 = vrcp.pop %v1735
    %v1744 = vmul.f32 %v1697, %v1736
    %v1745 = vmul.f32 %v1699, %v1737
    %v1746 = vmul.f32 %v1701, %v1738
    %v1747 = vmul.f32 %v1703, %v1739
    %v1748 = vmul.f32 %v1705, %v1740
    %v1749 = vmul.f32 %v1707, %v1741
    %v1750 = vmul.f32 %v1709, %v1742
    %v1751 = vmul.f32 %v1711, %v1743
    %v1752 = vpack.c.bf16 %v1745, %v1744
    %v1753 = vpack.c.bf16 %v1747, %v1746
    %v1754 = vpack.c.bf16 %v1749, %v1748
    %v1755 = vpack.c.bf16 %v1751, %v1750
    %1756 = vrot.lane.b32.xlu0 %v948, 64
    %v1757 = vpop.permute.xlu0 %1756
    %1758 = vrot.lane.b32.xlu0 %v951, 64
    %v1759 = vpop.permute.xlu0 %1758
    %1760 = vrot.lane.b32.xlu0 %v954, 64
    %v1761 = vpop.permute.xlu0 %1760
    %1762 = vrot.lane.b32.xlu0 %v957, 64
    %v1763 = vpop.permute.xlu0 %1762
    %v1769 = vsel %vm143, %v1752, 0
    %v1772 = vsel %vm143, %v1753, 0
    %v1775 = vsel %vm143, %v1754, 0
    %v1778 = vsel %vm143, %v1755, 0
    %1780 = vmatprep.subr.bf16.mxu0 0
    %1781 = vmatpush1.bf16.msra.mxu0 %v1757
    %1782 = vmatprep.subr.bf16.mxu0 0
    %1783 = vmatpush1.bf16.msra.mxu0 %v1759
    %1784 = vmatprep.subr.bf16.mxu0 0
    %1785 = vmatpush1.bf16.msra.mxu0 %v1761
    %1786 = vmatprep.subr.bf16.mxu0 0
    %1787 = vmatpush1.bf16.msra.mxu0 %v1763
    %1788 = vmatprep.subr.bf16.mxu0 0
    %1789 = vmatpush1.bf16.msra.mxu0 0
    %1790 = vmatprep.subr.bf16.mxu0 0
    %1791 = vmatpush1.bf16.msra.mxu0 0
    %1792 = vmatprep.subr.bf16.mxu0 0
    %1793 = vmatpush1.bf16.msra.mxu0 0
    %1794 = vmatprep.subr.bf16.mxu0 0
    %1795 = vmatpush1.bf16.msra.mxu0 0
    %1796 = vmatprep.subr.bf16.mxu0 0
    %1797 = vmatpush1.bf16.msra.mxu0 0
    %1798 = vmatprep.subr.bf16.mxu0 0
    %1799 = vmatpush1.bf16.msra.mxu0 0
    %1800 = vmatprep.subr.bf16.mxu0 0
    %1801 = vmatpush1.bf16.msra.mxu0 0
    %1802 = vmatprep.subr.bf16.mxu0 0
    %1803 = vmatpush1.bf16.msra.mxu0 0
    %1804 = vmatprep.subr.bf16.mxu0 0
    %1805 = vmatpush1.bf16.msra.mxu0 0
    %1806 = vmatprep.subr.bf16.mxu0 0
    %1807 = vmatpush1.bf16.msra.mxu0 0
    %1808 = vmatprep.subr.bf16.mxu0 0
    %1809 = vmatpush1.bf16.msra.mxu0 0
    %1810 = vmatprep.subr.bf16.mxu0 0
    %1811 = vmatpush1.bf16.msra.mxu0 0
    %1812 = vmatprep.mubr.bf16.mxu0 0
    %1813 = vmatmul.mubr.bf16.gmra.mrb[0].mxu0 %v1769
    %v1814 = vpop.f32.mrb[0].mxu0
    %v1815 = vadd.f32 0.0, %v1814
    %v1816 = vpop.f32.mrb[0].mxu0
    %v1817 = vpop.f32.mrb[0].mxu0
    %v1818 = vadd.f32 0.0, %v1817
    %v1819 = vpop.f32.mrb[0].mxu0
    %1820 = vmatprep.mubr.bf16.mxu0 0
    %1821 = vmatmul.mubr.bf16.gmra.mrb[0].mxu0 %v1772
    %v1822 = vpop.f32.mrb[0].mxu0
    %v1823 = vadd.f32 0.0, %v1822
    %v1824 = vpop.f32.mrb[0].mxu0
    %v1825 = vpop.f32.mrb[0].mxu0
    %v1826 = vadd.f32 0.0, %v1825
    %v1827 = vpop.f32.mrb[0].mxu0
    %1828 = vmatprep.mubr.bf16.mxu0 0
    %1829 = vmatmul.mubr.bf16.gmra.mrb[0].mxu0 %v1775
    %v1830 = vpop.f32.mrb[0].mxu0
    %v1831 = vadd.f32 0.0, %v1830
    %v1832 = vpop.f32.mrb[0].mxu0
    %v1833 = vpop.f32.mrb[0].mxu0
    %v1834 = vadd.f32 0.0, %v1833
    %v1835 = vpop.f32.mrb[0].mxu0
    %1836 = vmatprep.mubr.bf16.mxu0 0
    %1837 = vmatmul.mubr.bf16.gmra.mrb[0].mxu0 %v1778
    %v1838 = vpop.f32.mrb[0].mxu0
    %v1839 = vadd.f32 0.0, %v1838
    %v1840 = vpop.f32.mrb[0].mxu0
    %v1841 = vpop.f32.mrb[0].mxu0
    %v1842 = vadd.f32 0.0, %v1841
    %v1843 = vpop.f32.mrb[0].mxu0
    %1844 = vdwg.mxu0
    %v1845 = vpack.c.bf16 %v1818, %v1815
    %v1846 = vpack.c.bf16 %v1826, %v1823
    %v1847 = vpack.c.bf16 %v1834, %v1831
    %v1848 = vpack.c.bf16 %v1842, %v1839
    %1849 = vrot.lane.b32.xlu0 %v946, 32
    %v1850 = vpop.permute.xlu0 %1849
    %1851 = vrot.lane.b32.xlu0 %v949, 32
    %v1852 = vpop.permute.xlu0 %1851
    %1853 = vrot.lane.b32.xlu0 %v952, 32
    %v1854 = vpop.permute.xlu0 %1853
    %1855 = vrot.lane.b32.xlu0 %v955, 32
    %v1856 = vpop.permute.xlu0 %1855
    %1857 = vrot.lane.b32.xlu0 %v947, 32
    %v1858 = vpop.permute.xlu0 %1857
    %1859 = vrot.lane.b32.xlu0 %v950, 32
    %v1860 = vpop.permute.xlu0 %1859
    %1861 = vrot.lane.b32.xlu0 %v953, 32
    %v1862 = vpop.permute.xlu0 %1861
    %1863 = vrot.lane.b32.xlu0 %v956, 32
    %v1864 = vpop.permute.xlu0 %1863
    %v1866 = vsel %vm970, %v1850, 0
    %v1869 = vsel %vm970, %v1852, 0
    %v1872 = vsel %vm970, %v1854, 0
    %v1875 = vsel %vm970, %v1856, 0
    %v1878 = vsel %vm970, %v1858, 0
    %v1881 = vsel %vm970, %v1860, 0
    %v1884 = vsel %vm970, %v1862, 0
    %v1887 = vsel %vm970, %v1864, 0
    %1889 = vmatprep.subr.bf16.mxu0 0
    %1890 = vmatpush1.bf16.xpose.msra.mxu0 %v1878
    %1891 = vmatprep.subr.bf16.mxu0 0
    %1892 = vmatpush1.bf16.xpose.msra.mxu0 %v1881
    %1893 = vmatprep.subr.bf16.mxu0 0
    %1894 = vmatpush1.bf16.xpose.msra.mxu0 %v1884
    %1895 = vmatprep.subr.bf16.mxu0 0
    %1896 = vmatpush1.bf16.xpose.msra.mxu0 %v1887
    %1897 = vmatprep.subr.bf16.mxu0 0
    %1898 = vmatpush1.bf16.xpose.msra.mxu0 0
    %1899 = vmatprep.subr.bf16.mxu0 0
    %1900 = vmatpush1.bf16.xpose.msra.mxu0 0
    %1901 = vmatprep.subr.bf16.mxu0 0
    %1902 = vmatpush1.bf16.xpose.msra.mxu0 0
    %1903 = vmatprep.subr.bf16.mxu0 0
    %1904 = vmatpush1.bf16.xpose.msra.mxu0 0
    %1905 = vmatprep.subr.bf16.mxu0 0
    %1906 = vmatpush1.bf16.xpose.msra.mxu0 0
    %1907 = vmatprep.subr.bf16.mxu0 0
    %1908 = vmatpush1.bf16.xpose.msra.mxu0 0
    %1909 = vmatprep.subr.bf16.mxu0 0
    %1910 = vmatpush1.bf16.xpose.msra.mxu0 0
    %1911 = vmatprep.subr.bf16.mxu0 0
    %1912 = vmatpush1.bf16.xpose.msra.mxu0 0
    %1913 = vmatprep.subr.bf16.mxu0 0
    %1914 = vmatpush1.bf16.xpose.msra.mxu0 0
    %1915 = vmatprep.subr.bf16.mxu0 0
    %1916 = vmatpush1.bf16.xpose.msra.mxu0 0
    %1917 = vmatprep.subr.bf16.mxu0 0
    %1918 = vmatpush1.bf16.xpose.msra.mxu0 0
    %1919 = vmatprep.subr.bf16.mxu0 0
    %1920 = vmatpush1.bf16.xpose.msra.mxu0 0
    %1921 = vmatprep.mubr.bf16.mxu0 0
    %1922 = vmatmul.mubr.bf16.gmra.mrb[0].mxu0 %v1866
    %v1923 = vpop.f32.mrb[0].mxu0
    %v1924 = vadd.f32 0.0, %v1923
    %v1925 = vpop.f32.mrb[0].mxu0
    %v1926 = vpop.f32.mrb[0].mxu0
    %v1927 = vadd.f32 0.0, %v1926
    %v1928 = vpop.f32.mrb[0].mxu0
    %1929 = vmatprep.mubr.bf16.mxu0 0
    %1930 = vmatmul.mubr.bf16.gmra.mrb[0].mxu0 %v1869
    %v1931 = vpop.f32.mrb[0].mxu0
    %v1932 = vadd.f32 0.0, %v1931
    %v1933 = vpop.f32.mrb[0].mxu0
    %v1934 = vpop.f32.mrb[0].mxu0
    %v1935 = vadd.f32 0.0, %v1934
    %v1936 = vpop.f32.mrb[0].mxu0
    %1937 = vmatprep.mubr.bf16.mxu0 0
    %1938 = vmatmul.mubr.bf16.gmra.mrb[0].mxu0 %v1872
    %v1939 = vpop.f32.mrb[0].mxu0
    %v1940 = vadd.f32 0.0, %v1939
    %v1941 = vpop.f32.mrb[0].mxu0
    %v1942 = vpop.f32.mrb[0].mxu0
    %v1943 = vadd.f32 0.0, %v1942
    %v1944 = vpop.f32.mrb[0].mxu0
    %1945 = vmatprep.mubr.bf16.mxu0 0
    %1946 = vmatmul.mubr.bf16.gmra.mrb[0].mxu0 %v1875
    %v1947 = vpop.f32.mrb[0].mxu0
    %v1948 = vadd.f32 0.0, %v1947
    %v1949 = vpop.f32.mrb[0].mxu0
    %v1950 = vpop.f32.mrb[0].mxu0
    %v1951 = vadd.f32 0.0, %v1950
    %v1952 = vpop.f32.mrb[0].mxu0
    %1953 = vdwg.mxu0
    %v1954 = vmul.f32 %v1924, 0.17677669
    %v1955 = vmul.f32 %v1927, 0.17677669
    %v1956 = vmul.f32 %v1932, 0.17677669
    %v1957 = vmul.f32 %v1935, 0.17677669
    %v1958 = vmul.f32 %v1940, 0.17677669
    %v1959 = vmul.f32 %v1943, 0.17677669
    %v1960 = vmul.f32 %v1948, 0.17677669
    %v1961 = vmul.f32 %v1951, 0.17677669
    %v1962 = vsel %vm143, %v1954, -inf
    %1963 = vmax.xlane.f32.xlu0 %v1962
    %v1964 = vpop.xlane.xlu0 %1963
    %v1965 = vsel %vm143, %v1955, -inf
    %1966 = vmax.xlane.f32.xlu0 %v1965
    %v1967 = vpop.xlane.xlu0 %1966
    %v1968 = vsel %vm143, %v1956, -inf
    %1969 = vmax.xlane.f32.xlu0 %v1968
    %v1970 = vpop.xlane.xlu0 %1969
    %v1971 = vsel %vm143, %v1957, -inf
    %1972 = vmax.xlane.f32.xlu0 %v1971
    %v1973 = vpop.xlane.xlu0 %1972
    %v1974 = vsel %vm143, %v1958, -inf
    %1975 = vmax.xlane.f32.xlu0 %v1974
    %v1976 = vpop.xlane.xlu0 %1975
    %v1977 = vsel %vm143, %v1959, -inf
    %1978 = vmax.xlane.f32.xlu0 %v1977
    %v1979 = vpop.xlane.xlu0 %1978
    %v1980 = vsel %vm143, %v1960, -inf
    %1981 = vmax.xlane.f32.xlu0 %v1980
    %v1982 = vpop.xlane.xlu0 %1981
    %v1983 = vsel %vm143, %v1961, -inf
    %1984 = vmax.xlane.f32.xlu0 %v1983
    %v1985 = vpop.xlane.xlu0 %1984
    %v1986 = vsub.f32 %v1954, %v1964
    %v1987 = vsub.f32 %v1955, %v1967
    %v1988 = vsub.f32 %v1956, %v1970
    %v1989 = vsub.f32 %v1957, %v1973
    %v1990 = vsub.f32 %v1958, %v1976
    %v1991 = vsub.f32 %v1959, %v1979
    %v1992 = vsub.f32 %v1960, %v1982
    %v1993 = vsub.f32 %v1961, %v1985
    %v1994 = vmul.f32 %v1986, 1.442695
    %v1995 = vpow.pop %v1994
    %v1996 = vmul.f32 %v1987, 1.442695
    %v1997 = vpow.pop %v1996
    %v1998 = vmul.f32 %v1988, 1.442695
    %v1999 = vpow.pop %v1998
    %v2000 = vmul.f32 %v1989, 1.442695
    %v2001 = vpow.pop %v2000
    %v2002 = vmul.f32 %v1990, 1.442695
    %v2003 = vpow.pop %v2002
    %v2004 = vmul.f32 %v1991, 1.442695
    %v2005 = vpow.pop %v2004
    %v2006 = vmul.f32 %v1992, 1.442695
    %v2007 = vpow.pop %v2006
    %v2008 = vmul.f32 %v1993, 1.442695
    %v2009 = vpow.pop %v2008
    %v2010 = vsel %vm143, %v1995, 0.0
    %2011 = vadd.xlane.f32.xlu0 %v2010
    %v2012 = vpop.xlane.xlu0 %2011
    %v2013 = vsel %vm143, %v1997, 0.0
    %2014 = vadd.xlane.f32.xlu0 %v2013
    %v2015 = vpop.xlane.xlu0 %2014
    %v2016 = vsel %vm143, %v1999, 0.0
    %2017 = vadd.xlane.f32.xlu0 %v2016
    %v2018 = vpop.xlane.xlu0 %2017
    %v2019 = vsel %vm143, %v2001, 0.0
    %2020 = vadd.xlane.f32.xlu0 %v2019
    %v2021 = vpop.xlane.xlu0 %2020
    %v2022 = vsel %vm143, %v2003, 0.0
    %2023 = vadd.xlane.f32.xlu0 %v2022
    %v2024 = vpop.xlane.xlu0 %2023
    %v2025 = vsel %vm143, %v2005, 0.0
    %2026 = vadd.xlane.f32.xlu0 %v2025
    %v2027 = vpop.xlane.xlu0 %2026
    %v2028 = vsel %vm143, %v2007, 0.0
    %2029 = vadd.xlane.f32.xlu0 %v2028
    %v2030 = vpop.xlane.xlu0 %2029
    %v2031 = vsel %vm143, %v2009, 0.0
    %2032 = vadd.xlane.f32.xlu0 %v2031
    %v2033 = vpop.xlane.xlu0 %2032
    %v2034 = vrcp.pop %v2012
    %v2035 = vrcp.pop %v2015
    %v2036 = vrcp.pop %v2018
    %v2037 = vrcp.pop %v2021
    %v2038 = vrcp.pop %v2024
    %v2039 = vrcp.pop %v2027
    %v2040 = vrcp.pop %v2030
    %v2041 = vrcp.pop %v2033
    %v2042 = vmul.f32 %v1995, %v2034
    %v2043 = vmul.f32 %v1997, %v2035
    %v2044 = vmul.f32 %v1999, %v2036
    %v2045 = vmul.f32 %v2001, %v2037
    %v2046 = vmul.f32 %v2003, %v2038
    %v2047 = vmul.f32 %v2005, %v2039
    %v2048 = vmul.f32 %v2007, %v2040
    %v2049 = vmul.f32 %v2009, %v2041
    %v2050 = vpack.c.bf16 %v2043, %v2042
    %v2051 = vpack.c.bf16 %v2045, %v2044
    %v2052 = vpack.c.bf16 %v2047, %v2046
    %v2053 = vpack.c.bf16 %v2049, %v2048
    %2054 = vrot.lane.b32.xlu0 %v948, 32
    %v2055 = vpop.permute.xlu0 %2054
    %2056 = vrot.lane.b32.xlu0 %v951, 32
    %v2057 = vpop.permute.xlu0 %2056
    %2058 = vrot.lane.b32.xlu0 %v954, 32
    %v2059 = vpop.permute.xlu0 %2058
    %2060 = vrot.lane.b32.xlu0 %v957, 32
    %v2061 = vpop.permute.xlu0 %2060
    %v2067 = vsel %vm143, %v2050, 0
    %v2070 = vsel %vm143, %v2051, 0
    %v2073 = vsel %vm143, %v2052, 0
    %v2076 = vsel %vm143, %v2053, 0
    %2078 = vmatprep.subr.bf16.mxu0 0
    %2079 = vmatpush1.bf16.msra.mxu0 %v2055
    %2080 = vmatprep.subr.bf16.mxu0 0
    %2081 = vmatpush1.bf16.msra.mxu0 %v2057
    %2082 = vmatprep.subr.bf16.mxu0 0
    %2083 = vmatpush1.bf16.msra.mxu0 %v2059
    %2084 = vmatprep.subr.bf16.mxu0 0
    %2085 = vmatpush1.bf16.msra.mxu0 %v2061
    %2086 = vmatprep.subr.bf16.mxu0 0
    %2087 = vmatpush1.bf16.msra.mxu0 0
    %2088 = vmatprep.subr.bf16.mxu0 0
    %2089 = vmatpush1.bf16.msra.mxu0 0
    %2090 = vmatprep.subr.bf16.mxu0 0
    %2091 = vmatpush1.bf16.msra.mxu0 0
    %2092 = vmatprep.subr.bf16.mxu0 0
    %2093 = vmatpush1.bf16.msra.mxu0 0
    %2094 = vmatprep.subr.bf16.mxu0 0
    %2095 = vmatpush1.bf16.msra.mxu0 0
    %2096 = vmatprep.subr.bf16.mxu0 0
    %2097 = vmatpush1.bf16.msra.mxu0 0
    %2098 = vmatprep.subr.bf16.mxu0 0
    %2099 = vmatpush1.bf16.msra.mxu0 0
    %2100 = vmatprep.subr.bf16.mxu0 0
    %2101 = vmatpush1.bf16.msra.mxu0 0
    %2102 = vmatprep.subr.bf16.mxu0 0
    %2103 = vmatpush1.bf16.msra.mxu0 0
    %2104 = vmatprep.subr.bf16.mxu0 0
    %2105 = vmatpush1.bf16.msra.mxu0 0
    %2106 = vmatprep.subr.bf16.mxu0 0
    %2107 = vmatpush1.bf16.msra.mxu0 0
    %2108 = vmatprep.subr.bf16.mxu0 0
    %2109 = vmatpush1.bf16.msra.mxu0 0
    %2110 = vmatprep.mubr.bf16.mxu0 0
    %2111 = vmatmul.mubr.bf16.gmra.mrb[0].mxu0 %v2067
    %v2112 = vpop.f32.mrb[0].mxu0
    %v2113 = vadd.f32 0.0, %v2112
    %v2114 = vpop.f32.mrb[0].mxu0
    %v2115 = vpop.f32.mrb[0].mxu0
    %v2116 = vadd.f32 0.0, %v2115
    %v2117 = vpop.f32.mrb[0].mxu0
    %2118 = vmatprep.mubr.bf16.mxu0 0
    %2119 = vmatmul.mubr.bf16.gmra.mrb[0].mxu0 %v2070
    %v2120 = vpop.f32.mrb[0].mxu0
    %v2121 = vadd.f32 0.0, %v2120
    %v2122 = vpop.f32.mrb[0].mxu0
    %v2123 = vpop.f32.mrb[0].mxu0
    %v2124 = vadd.f32 0.0, %v2123
    %v2125 = vpop.f32.mrb[0].mxu0
    %2126 = vmatprep.mubr.bf16.mxu0 0
    %2127 = vmatmul.mubr.bf16.gmra.mrb[0].mxu0 %v2073
    %v2128 = vpop.f32.mrb[0].mxu0
    %v2129 = vadd.f32 0.0, %v2128
    %v2130 = vpop.f32.mrb[0].mxu0
    %v2131 = vpop.f32.mrb[0].mxu0
    %v2132 = vadd.f32 0.0, %v2131
    %v2133 = vpop.f32.mrb[0].mxu0
    %2134 = vmatprep.mubr.bf16.mxu0 0
    %2135 = vmatmul.mubr.bf16.gmra.mrb[0].mxu0 %v2076
    %v2136 = vpop.f32.mrb[0].mxu0
    %v2137 = vadd.f32 0.0, %v2136
    %v2138 = vpop.f32.mrb[0].mxu0
    %v2139 = vpop.f32.mrb[0].mxu0
    %v2140 = vadd.f32 0.0, %v2139
    %v2141 = vpop.f32.mrb[0].mxu0
    %2142 = vdwg.mxu0
    %v2143 = vpack.c.bf16 %v2116, %v2113
    %v2144 = vpack.c.bf16 %v2124, %v2121
    %v2145 = vpack.c.bf16 %v2132, %v2129
    %v2146 = vpack.c.bf16 %v2140, %v2137
    %2151 = vrot.lane.b32.xlu0 %v1547, 32
    %v2152 = vpop.permute.xlu0 %2151
    %2153 = vrot.lane.b32.xlu0 %v1548, 32
    %v2154 = vpop.permute.xlu0 %2153
    %2155 = vrot.lane.b32.xlu0 %v1549, 32
    %v2156 = vpop.permute.xlu0 %2155
    %2157 = vrot.lane.b32.xlu0 %v1550, 32
    %v2158 = vpop.permute.xlu0 %2157
    %2163 = vrot.lane.b32.xlu0 %v1845, 64
    %v2164 = vpop.permute.xlu0 %2163
    %2165 = vrot.lane.b32.xlu0 %v1846, 64
    %v2166 = vpop.permute.xlu0 %2165
    %2167 = vrot.lane.b32.xlu0 %v1847, 64
    %v2168 = vpop.permute.xlu0 %2167
    %2169 = vrot.lane.b32.xlu0 %v1848, 64
    %v2170 = vpop.permute.xlu0 %2169
    %2175 = vrot.lane.b32.xlu0 %v2143, 96
    %v2176 = vpop.permute.xlu0 %2175
    %2177 = vrot.lane.b32.xlu0 %v2144, 96
    %v2178 = vpop.permute.xlu0 %2177
    %2179 = vrot.lane.b32.xlu0 %v2145, 96
    %v2180 = vpop.permute.xlu0 %2179
    %2181 = vrot.lane.b32.xlu0 %v2146, 96
    %v2182 = vpop.permute.xlu0 %2181
    %v2185 = vsel %vm970, %v1237, %v2152
    %v2188 = vsel %vm970, %v1238, %v2154
    %v2191 = vsel %vm970, %v1239, %v2156
    %v2194 = vsel %vm970, %v1240, %v2158
    %v2196 = vsel %vm143, %v2185, %v2164
    %v2198 = vsel %vm143, %v2188, %v2166
    %v2200 = vsel %vm143, %v2191, %v2168
    %v2202 = vsel %vm143, %v2194, %v2170
    %vm2203 = vcmask 785408
    %v2205 = vsel %vm2203, %v2196, %v2176
    %v2208 = vsel %vm2203, %v2198, %v2178
    %v2211 = vsel %vm2203, %v2200, %v2180
    %v2214 = vsel %vm2203, %v2202, %v2182
    %v2217 = vsel %vm970, %v958, 0
    %v2220 = vsel %vm970, %v961, 0
    %v2223 = vsel %vm970, %v964, 0
    %v2226 = vsel %vm970, %v967, 0
    %v2229 = vsel %vm970, %v959, 0
    %v2232 = vsel %vm970, %v962, 0
    %v2235 = vsel %vm970, %v965, 0
    %v2238 = vsel %vm970, %v968, 0
    %2240 = vmatprep.subr.bf16.mxu0 0
    %2241 = vmatpush1.bf16.xpose.msra.mxu0 %v2229
    %2242 = vmatprep.subr.bf16.mxu0 0
    %2243 = vmatpush1.bf16.xpose.msra.mxu0 %v2232
    %2244 = vmatprep.subr.bf16.mxu0 0
    %2245 = vmatpush1.bf16.xpose.msra.mxu0 %v2235
    %2246 = vmatprep.subr.bf16.mxu0 0
    %2247 = vmatpush1.bf16.xpose.msra.mxu0 %v2238
    %2248 = vmatprep.subr.bf16.mxu0 0
    %2249 = vmatpush1.bf16.xpose.msra.mxu0 0
    %2250 = vmatprep.subr.bf16.mxu0 0
    %2251 = vmatpush1.bf16.xpose.msra.mxu0 0
    %2252 = vmatprep.subr.bf16.mxu0 0
    %2253 = vmatpush1.bf16.xpose.msra.mxu0 0
    %2254 = vmatprep.subr.bf16.mxu0 0
    %2255 = vmatpush1.bf16.xpose.msra.mxu0 0
    %2256 = vmatprep.subr.bf16.mxu0 0
    %2257 = vmatpush1.bf16.xpose.msra.mxu0 0
    %2258 = vmatprep.subr.bf16.mxu0 0
    %2259 = vmatpush1.bf16.xpose.msra.mxu0 0
    %2260 = vmatprep.subr.bf16.mxu0 0
    %2261 = vmatpush1.bf16.xpose.msra.mxu0 0
    %2262 = vmatprep.subr.bf16.mxu0 0
    %2263 = vmatpush1.bf16.xpose.msra.mxu0 0
    %2264 = vmatprep.subr.bf16.mxu0 0
    %2265 = vmatpush1.bf16.xpose.msra.mxu0 0
    %2266 = vmatprep.subr.bf16.mxu0 0
    %2267 = vmatpush1.bf16.xpose.msra.mxu0 0
    %2268 = vmatprep.subr.bf16.mxu0 0
    %2269 = vmatpush1.bf16.xpose.msra.mxu0 0
    %2270 = vmatprep.subr.bf16.mxu0 0
    %2271 = vmatpush1.bf16.xpose.msra.mxu0 0
    %2272 = vmatprep.mubr.bf16.mxu0 0
    %2273 = vmatmul.mubr.bf16.gmra.mrb[0].mxu0 %v2217
    %v2274 = vpop.f32.mrb[0].mxu0
    %v2275 = vadd.f32 0.0, %v2274
    %v2276 = vpop.f32.mrb[0].mxu0
    %v2277 = vpop.f32.mrb[0].mxu0
    %v2278 = vadd.f32 0.0, %v2277
    %v2279 = vpop.f32.mrb[0].mxu0
    %2280 = vmatprep.mubr.bf16.mxu0 0
    %2281 = vmatmul.mubr.bf16.gmra.mrb[0].mxu0 %v2220
    %v2282 = vpop.f32.mrb[0].mxu0
    %v2283 = vadd.f32 0.0, %v2282
    %v2284 = vpop.f32.mrb[0].mxu0
    %v2285 = vpop.f32.mrb[0].mxu0
    %v2286 = vadd.f32 0.0, %v2285
    %v2287 = vpop.f32.mrb[0].mxu0
    %2288 = vmatprep.mubr.bf16.mxu0 0
    %2289 = vmatmul.mubr.bf16.gmra.mrb[0].mxu0 %v2223
    %v2290 = vpop.f32.mrb[0].mxu0
    %v2291 = vadd.f32 0.0, %v2290
    %v2292 = vpop.f32.mrb[0].mxu0
    %v2293 = vpop.f32.mrb[0].mxu0
    %v2294 = vadd.f32 0.0, %v2293
    %v2295 = vpop.f32.mrb[0].mxu0
    %2296 = vmatprep.mubr.bf16.mxu0 0
    %2297 = vmatmul.mubr.bf16.gmra.mrb[0].mxu0 %v2226
    %v2298 = vpop.f32.mrb[0].mxu0
    %v2299 = vadd.f32 0.0, %v2298
    %v2300 = vpop.f32.mrb[0].mxu0
    %v2301 = vpop.f32.mrb[0].mxu0
    %v2302 = vadd.f32 0.0, %v2301
    %v2303 = vpop.f32.mrb[0].mxu0
    %2304 = vdwg.mxu0
    %v2305 = vmul.f32 %v2275, 0.17677669
    %v2306 = vmul.f32 %v2278, 0.17677669
    %v2307 = vmul.f32 %v2283, 0.17677669
    %v2308 = vmul.f32 %v2286, 0.17677669
    %v2309 = vmul.f32 %v2291, 0.17677669
    %v2310 = vmul.f32 %v2294, 0.17677669
    %v2311 = vmul.f32 %v2299, 0.17677669
    %v2312 = vmul.f32 %v2302, 0.17677669
    %v2313 = vsel %vm143, %v2305, -inf
    %2314 = vmax.xlane.f32.xlu0 %v2313
    %v2315 = vpop.xlane.xlu0 %2314
    %v2316 = vsel %vm143, %v2306, -inf
    %2317 = vmax.xlane.f32.xlu0 %v2316
    %v2318 = vpop.xlane.xlu0 %2317
    %v2319 = vsel %vm143, %v2307, -inf
    %2320 = vmax.xlane.f32.xlu0 %v2319
    %v2321 = vpop.xlane.xlu0 %2320
    %v2322 = vsel %vm143, %v2308, -inf
    %2323 = vmax.xlane.f32.xlu0 %v2322
    %v2324 = vpop.xlane.xlu0 %2323
    %v2325 = vsel %vm143, %v2309, -inf
    %2326 = vmax.xlane.f32.xlu0 %v2325
    %v2327 = vpop.xlane.xlu0 %2326
    %v2328 = vsel %vm143, %v2310, -inf
    %2329 = vmax.xlane.f32.xlu0 %v2328
    %v2330 = vpop.xlane.xlu0 %2329
    %v2331 = vsel %vm143, %v2311, -inf
    %2332 = vmax.xlane.f32.xlu0 %v2331
    %v2333 = vpop.xlane.xlu0 %2332
    %v2334 = vsel %vm143, %v2312, -inf
    %2335 = vmax.xlane.f32.xlu0 %v2334
    %v2336 = vpop.xlane.xlu0 %2335
    %v2337 = vsub.f32 %v2305, %v2315
    %v2338 = vsub.f32 %v2306, %v2318
    %v2339 = vsub.f32 %v2307, %v2321
    %v2340 = vsub.f32 %v2308, %v2324
    %v2341 = vsub.f32 %v2309, %v2327
    %v2342 = vsub.f32 %v2310, %v2330
    %v2343 = vsub.f32 %v2311, %v2333
    %v2344 = vsub.f32 %v2312, %v2336
    %v2345 = vmul.f32 %v2337, 1.442695
    %v2346 = vpow.pop %v2345
    %v2347 = vmul.f32 %v2338, 1.442695
    %v2348 = vpow.pop %v2347
    %v2349 = vmul.f32 %v2339, 1.442695
    %v2350 = vpow.pop %v2349
    %v2351 = vmul.f32 %v2340, 1.442695
    %v2352 = vpow.pop %v2351
    %v2353 = vmul.f32 %v2341, 1.442695
    %v2354 = vpow.pop %v2353
    %v2355 = vmul.f32 %v2342, 1.442695
    %v2356 = vpow.pop %v2355
    %v2357 = vmul.f32 %v2343, 1.442695
    %v2358 = vpow.pop %v2357
    %v2359 = vmul.f32 %v2344, 1.442695
    %v2360 = vpow.pop %v2359
    %v2361 = vsel %vm143, %v2346, 0.0
    %2362 = vadd.xlane.f32.xlu0 %v2361
    %v2363 = vpop.xlane.xlu0 %2362
    %v2364 = vsel %vm143, %v2348, 0.0
    %2365 = vadd.xlane.f32.xlu0 %v2364
    %v2366 = vpop.xlane.xlu0 %2365
    %v2367 = vsel %vm143, %v2350, 0.0
    %2368 = vadd.xlane.f32.xlu0 %v2367
    %v2369 = vpop.xlane.xlu0 %2368
    %v2370 = vsel %vm143, %v2352, 0.0
    %2371 = vadd.xlane.f32.xlu0 %v2370
    %v2372 = vpop.xlane.xlu0 %2371
    %v2373 = vsel %vm143, %v2354, 0.0
    %2374 = vadd.xlane.f32.xlu0 %v2373
    %v2375 = vpop.xlane.xlu0 %2374
    %v2376 = vsel %vm143, %v2356, 0.0
    %2377 = vadd.xlane.f32.xlu0 %v2376
    %v2378 = vpop.xlane.xlu0 %2377
    %v2379 = vsel %vm143, %v2358, 0.0
    %2380 = vadd.xlane.f32.xlu0 %v2379
    %v2381 = vpop.xlane.xlu0 %2380
    %v2382 = vsel %vm143, %v2360, 0.0
    %2383 = vadd.xlane.f32.xlu0 %v2382
    %v2384 = vpop.xlane.xlu0 %2383
    %v2385 = vrcp.pop %v2363
    %v2386 = vrcp.pop %v2366
    %v2387 = vrcp.pop %v2369
    %v2388 = vrcp.pop %v2372
    %v2389 = vrcp.pop %v2375
    %v2390 = vrcp.pop %v2378
    %v2391 = vrcp.pop %v2381
    %v2392 = vrcp.pop %v2384
    %v2393 = vmul.f32 %v2346, %v2385
    %v2394 = vmul.f32 %v2348, %v2386
    %v2395 = vmul.f32 %v2350, %v2387
    %v2396 = vmul.f32 %v2352, %v2388
    %v2397 = vmul.f32 %v2354, %v2389
    %v2398 = vmul.f32 %v2356, %v2390
    %v2399 = vmul.f32 %v2358, %v2391
    %v2400 = vmul.f32 %v2360, %v2392
    %v2401 = vpack.c.bf16 %v2394, %v2393
    %v2402 = vpack.c.bf16 %v2396, %v2395
    %v2403 = vpack.c.bf16 %v2398, %v2397
    %v2404 = vpack.c.bf16 %v2400, %v2399
    %v2406 = vsel %vm143, %v2401, 0
    %v2409 = vsel %vm143, %v2402, 0
    %v2412 = vsel %vm143, %v2403, 0
    %v2415 = vsel %vm143, %v2404, 0
    %2417 = vmatprep.subr.bf16.mxu0 0
    %2418 = vmatpush1.bf16.msra.mxu0 %v960
    %2419 = vmatprep.subr.bf16.mxu0 0
    %2420 = vmatpush1.bf16.msra.mxu0 %v963
    %2421 = vmatprep.subr.bf16.mxu0 0
    %2422 = vmatpush1.bf16.msra.mxu0 %v966
    %2423 = vmatprep.subr.bf16.mxu0 0
    %2424 = vmatpush1.bf16.msra.mxu0 %v969
    %2425 = vmatprep.subr.bf16.mxu0 0
    %2426 = vmatpush1.bf16.msra.mxu0 0
    %2427 = vmatprep.subr.bf16.mxu0 0
    %2428 = vmatpush1.bf16.msra.mxu0 0
    %2429 = vmatprep.subr.bf16.mxu0 0
    %2430 = vmatpush1.bf16.msra.mxu0 0
    %2431 = vmatprep.subr.bf16.mxu0 0
    %2432 = vmatpush1.bf16.msra.mxu0 0
    %2433 = vmatprep.subr.bf16.mxu0 0
    %2434 = vmatpush1.bf16.msra.mxu0 0
    %2435 = vmatprep.subr.bf16.mxu0 0
    %2436 = vmatpush1.bf16.msra.mxu0 0
    %2437 = vmatprep.subr.bf16.mxu0 0
    %2438 = vmatpush1.bf16.msra.mxu0 0
    %2439 = vmatprep.subr.bf16.mxu0 0
    %2440 = vmatpush1.bf16.msra.mxu0 0
    %2441 = vmatprep.subr.bf16.mxu0 0
    %2442 = vmatpush1.bf16.msra.mxu0 0
    %2443 = vmatprep.subr.bf16.mxu0 0
    %2444 = vmatpush1.bf16.msra.mxu0 0
    %2445 = vmatprep.subr.bf16.mxu0 0
    %2446 = vmatpush1.bf16.msra.mxu0 0
    %2447 = vmatprep.subr.bf16.mxu0 0
    %2448 = vmatpush1.bf16.msra.mxu0 0
    %2449 = vmatprep.mubr.bf16.mxu0 0
    %2450 = vmatmul.mubr.bf16.gmra.mrb[0].mxu0 %v2406
    %v2451 = vpop.f32.mrb[0].mxu0
    %v2452 = vadd.f32 0.0, %v2451
    %v2453 = vpop.f32.mrb[0].mxu0
    %v2454 = vpop.f32.mrb[0].mxu0
    %v2455 = vadd.f32 0.0, %v2454
    %v2456 = vpop.f32.mrb[0].mxu0
    %2457 = vmatprep.mubr.bf16.mxu0 0
    %2458 = vmatmul.mubr.bf16.gmra.mrb[0].mxu0 %v2409
    %v2459 = vpop.f32.mrb[0].mxu0
    %v2460 = vadd.f32 0.0, %v2459
    %v2461 = vpop.f32.mrb[0].mxu0
    %v2462 = vpop.f32.mrb[0].mxu0
    %v2463 = vadd.f32 0.0, %v2462
    %v2464 = vpop.f32.mrb[0].mxu0
    %2465 = vmatprep.mubr.bf16.mxu0 0
    %2466 = vmatmul.mubr.bf16.gmra.mrb[0].mxu0 %v2412
    %v2467 = vpop.f32.mrb[0].mxu0
    %v2468 = vadd.f32 0.0, %v2467
    %v2469 = vpop.f32.mrb[0].mxu0
    %v2470 = vpop.f32.mrb[0].mxu0
    %v2471 = vadd.f32 0.0, %v2470
    %v2472 = vpop.f32.mrb[0].mxu0
    %2473 = vmatprep.mubr.bf16.mxu0 0
    %2474 = vmatmul.mubr.bf16.gmra.mrb[0].mxu0 %v2415
    %v2475 = vpop.f32.mrb[0].mxu0
    %v2476 = vadd.f32 0.0, %v2475
    %v2477 = vpop.f32.mrb[0].mxu0
    %v2478 = vpop.f32.mrb[0].mxu0
    %v2479 = vadd.f32 0.0, %v2478
    %v2480 = vpop.f32.mrb[0].mxu0
    %2481 = vdwg.mxu0
    %v2482 = vpack.c.bf16 %v2455, %v2452
    %v2483 = vpack.c.bf16 %v2463, %v2460
    %v2484 = vpack.c.bf16 %v2471, %v2468
    %v2485 = vpack.c.bf16 %v2479, %v2476
    %2490 = vrot.lane.b32.xlu0 %v958, 96
    %v2491 = vpop.permute.xlu0 %2490
    %2492 = vrot.lane.b32.xlu0 %v961, 96
    %v2493 = vpop.permute.xlu0 %2492
    %2494 = vrot.lane.b32.xlu0 %v964, 96
    %v2495 = vpop.permute.xlu0 %2494
    %2496 = vrot.lane.b32.xlu0 %v967, 96
    %v2497 = vpop.permute.xlu0 %2496
    %2502 = vrot.lane.b32.xlu0 %v959, 96
    %v2503 = vpop.permute.xlu0 %2502
    %2504 = vrot.lane.b32.xlu0 %v962, 96
    %v2505 = vpop.permute.xlu0 %2504
    %2506 = vrot.lane.b32.xlu0 %v965, 96
    %v2507 = vpop.permute.xlu0 %2506
    %2508 = vrot.lane.b32.xlu0 %v968, 96
    %v2509 = vpop.permute.xlu0 %2508
    %v2511 = vsel %vm970, %v2491, 0
    %v2514 = vsel %vm970, %v2493, 0
    %v2517 = vsel %vm970, %v2495, 0
    %v2520 = vsel %vm970, %v2497, 0
    %v2523 = vsel %vm970, %v2503, 0
    %v2526 = vsel %vm970, %v2505, 0
    %v2529 = vsel %vm970, %v2507, 0
    %v2532 = vsel %vm970, %v2509, 0
    %2534 = vmatprep.subr.bf16.mxu0 0
    %2535 = vmatpush1.bf16.xpose.msra.mxu0 %v2523
    %2536 = vmatprep.subr.bf16.mxu0 0
    %2537 = vmatpush1.bf16.xpose.msra.mxu0 %v2526
    %2538 = vmatprep.subr.bf16.mxu0 0
    %2539 = vmatpush1.bf16.xpose.msra.mxu0 %v2529
    %2540 = vmatprep.subr.bf16.mxu0 0
    %2541 = vmatpush1.bf16.xpose.msra.mxu0 %v2532
    %2542 = vmatprep.subr.bf16.mxu0 0
    %2543 = vmatpush1.bf16.xpose.msra.mxu0 0
    %2544 = vmatprep.subr.bf16.mxu0 0
    %2545 = vmatpush1.bf16.xpose.msra.mxu0 0
    %2546 = vmatprep.subr.bf16.mxu0 0
    %2547 = vmatpush1.bf16.xpose.msra.mxu0 0
    %2548 = vmatprep.subr.bf16.mxu0 0
    %2549 = vmatpush1.bf16.xpose.msra.mxu0 0
    %2550 = vmatprep.subr.bf16.mxu0 0
    %2551 = vmatpush1.bf16.xpose.msra.mxu0 0
    %2552 = vmatprep.subr.bf16.mxu0 0
    %2553 = vmatpush1.bf16.xpose.msra.mxu0 0
    %2554 = vmatprep.subr.bf16.mxu0 0
    %2555 = vmatpush1.bf16.xpose.msra.mxu0 0
    %2556 = vmatprep.subr.bf16.mxu0 0
    %2557 = vmatpush1.bf16.xpose.msra.mxu0 0
    %2558 = vmatprep.subr.bf16.mxu0 0
    %2559 = vmatpush1.bf16.xpose.msra.mxu0 0
    %2560 = vmatprep.subr.bf16.mxu0 0
    %2561 = vmatpush1.bf16.xpose.msra.mxu0 0
    %2562 = vmatprep.subr.bf16.mxu0 0
    %2563 = vmatpush1.bf16.xpose.msra.mxu0 0
    %2564 = vmatprep.subr.bf16.mxu0 0
    %2565 = vmatpush1.bf16.xpose.msra.mxu0 0
    %2566 = vmatprep.mubr.bf16.mxu0 0
    %2567 = vmatmul.mubr.bf16.gmra.mrb[0].mxu0 %v2511
    %v2568 = vpop.f32.mrb[0].mxu0
    %v2569 = vadd.f32 0.0, %v2568
    %v2570 = vpop.f32.mrb[0].mxu0
    %v2571 = vpop.f32.mrb[0].mxu0
    %v2572 = vadd.f32 0.0, %v2571
    %v2573 = vpop.f32.mrb[0].mxu0
    %2574 = vmatprep.mubr.bf16.mxu0 0
    %2575 = vmatmul.mubr.bf16.gmra.mrb[0].mxu0 %v2514
    %v2576 = vpop.f32.mrb[0].mxu0
    %v2577 = vadd.f32 0.0, %v2576
    %v2578 = vpop.f32.mrb[0].mxu0
    %v2579 = vpop.f32.mrb[0].mxu0
    %v2580 = vadd.f32 0.0, %v2579
    %v2581 = vpop.f32.mrb[0].mxu0
    %2582 = vmatprep.mubr.bf16.mxu0 0
    %2583 = vmatmul.mubr.bf16.gmra.mrb[0].mxu0 %v2517
    %v2584 = vpop.f32.mrb[0].mxu0
    %v2585 = vadd.f32 0.0, %v2584
    %v2586 = vpop.f32.mrb[0].mxu0
    %v2587 = vpop.f32.mrb[0].mxu0
    %v2588 = vadd.f32 0.0, %v2587
    %v2589 = vpop.f32.mrb[0].mxu0
    %2590 = vmatprep.mubr.bf16.mxu0 0
    %2591 = vmatmul.mubr.bf16.gmra.mrb[0].mxu0 %v2520
    %v2592 = vpop.f32.mrb[0].mxu0
    %v2593 = vadd.f32 0.0, %v2592
    %v2594 = vpop.f32.mrb[0].mxu0
    %v2595 = vpop.f32.mrb[0].mxu0
    %v2596 = vadd.f32 0.0, %v2595
    %v2597 = vpop.f32.mrb[0].mxu0
    %2598 = vdwg.mxu0
    %v2599 = vmul.f32 %v2569, 0.17677669
    %v2600 = vmul.f32 %v2572, 0.17677669
    %v2601 = vmul.f32 %v2577, 0.17677669
    %v2602 = vmul.f32 %v2580, 0.17677669
    %v2603 = vmul.f32 %v2585, 0.17677669
    %v2604 = vmul.f32 %v2588, 0.17677669
    %v2605 = vmul.f32 %v2593, 0.17677669
    %v2606 = vmul.f32 %v2596, 0.17677669
    %v2607 = vsel %vm143, %v2599, -inf
    %2608 = vmax.xlane.f32.xlu0 %v2607
    %v2609 = vpop.xlane.xlu0 %2608
    %v2610 = vsel %vm143, %v2600, -inf
    %2611 = vmax.xlane.f32.xlu0 %v2610
    %v2612 = vpop.xlane.xlu0 %2611
    %v2613 = vsel %vm143, %v2601, -inf
    %2614 = vmax.xlane.f32.xlu0 %v2613
    %v2615 = vpop.xlane.xlu0 %2614
    %v2616 = vsel %vm143, %v2602, -inf
    %2617 = vmax.xlane.f32.xlu0 %v2616
    %v2618 = vpop.xlane.xlu0 %2617
    %v2619 = vsel %vm143, %v2603, -inf
    %2620 = vmax.xlane.f32.xlu0 %v2619
    %v2621 = vpop.xlane.xlu0 %2620
    %v2622 = vsel %vm143, %v2604, -inf
    %2623 = vmax.xlane.f32.xlu0 %v2622
    %v2624 = vpop.xlane.xlu0 %2623
    %v2625 = vsel %vm143, %v2605, -inf
    %2626 = vmax.xlane.f32.xlu0 %v2625
    %v2627 = vpop.xlane.xlu0 %2626
    %v2628 = vsel %vm143, %v2606, -inf
    %2629 = vmax.xlane.f32.xlu0 %v2628
    %v2630 = vpop.xlane.xlu0 %2629
    %v2631 = vsub.f32 %v2599, %v2609
    %v2632 = vsub.f32 %v2600, %v2612
    %v2633 = vsub.f32 %v2601, %v2615
    %v2634 = vsub.f32 %v2602, %v2618
    %v2635 = vsub.f32 %v2603, %v2621
    %v2636 = vsub.f32 %v2604, %v2624
    %v2637 = vsub.f32 %v2605, %v2627
    %v2638 = vsub.f32 %v2606, %v2630
    %v2639 = vmul.f32 %v2631, 1.442695
    %v2640 = vpow.pop %v2639
    %v2641 = vmul.f32 %v2632, 1.442695
    %v2642 = vpow.pop %v2641
    %v2643 = vmul.f32 %v2633, 1.442695
    %v2644 = vpow.pop %v2643
    %v2645 = vmul.f32 %v2634, 1.442695
    %v2646 = vpow.pop %v2645
    %v2647 = vmul.f32 %v2635, 1.442695
    %v2648 = vpow.pop %v2647
    %v2649 = vmul.f32 %v2636, 1.442695
    %v2650 = vpow.pop %v2649
    %v2651 = vmul.f32 %v2637, 1.442695
    %v2652 = vpow.pop %v2651
    %v2653 = vmul.f32 %v2638, 1.442695
    %v2654 = vpow.pop %v2653
    %v2655 = vsel %vm143, %v2640, 0.0
    %2656 = vadd.xlane.f32.xlu0 %v2655
    %v2657 = vpop.xlane.xlu0 %2656
    %v2658 = vsel %vm143, %v2642, 0.0
    %2659 = vadd.xlane.f32.xlu0 %v2658
    %v2660 = vpop.xlane.xlu0 %2659
    %v2661 = vsel %vm143, %v2644, 0.0
    %2662 = vadd.xlane.f32.xlu0 %v2661
    %v2663 = vpop.xlane.xlu0 %2662
    %v2664 = vsel %vm143, %v2646, 0.0
    %2665 = vadd.xlane.f32.xlu0 %v2664
    %v2666 = vpop.xlane.xlu0 %2665
    %v2667 = vsel %vm143, %v2648, 0.0
    %2668 = vadd.xlane.f32.xlu0 %v2667
    %v2669 = vpop.xlane.xlu0 %2668
    %v2670 = vsel %vm143, %v2650, 0.0
    %2671 = vadd.xlane.f32.xlu0 %v2670
    %v2672 = vpop.xlane.xlu0 %2671
    %v2673 = vsel %vm143, %v2652, 0.0
    %2674 = vadd.xlane.f32.xlu0 %v2673
    %v2675 = vpop.xlane.xlu0 %2674
    %v2676 = vsel %vm143, %v2654, 0.0
    %2677 = vadd.xlane.f32.xlu0 %v2676
    %v2678 = vpop.xlane.xlu0 %2677
    %v2679 = vrcp.pop %v2657
    %v2680 = vrcp.pop %v2660
    %v2681 = vrcp.pop %v2663
    %v2682 = vrcp.pop %v2666
    %v2683 = vrcp.pop %v2669
    %v2684 = vrcp.pop %v2672
    %v2685 = vrcp.pop %v2675
    %v2686 = vrcp.pop %v2678
    %v2687 = vmul.f32 %v2640, %v2679
    %v2688 = vmul.f32 %v2642, %v2680
    %v2689 = vmul.f32 %v2644, %v2681
    %v2690 = vmul.f32 %v2646, %v2682
    %v2691 = vmul.f32 %v2648, %v2683
    %v2692 = vmul.f32 %v2650, %v2684
    %v2693 = vmul.f32 %v2652, %v2685
    %v2694 = vmul.f32 %v2654, %v2686
    %v2695 = vpack.c.bf16 %v2688, %v2687
    %v2696 = vpack.c.bf16 %v2690, %v2689
    %v2697 = vpack.c.bf16 %v2692, %v2691
    %v2698 = vpack.c.bf16 %v2694, %v2693
    %2703 = vrot.lane.b32.xlu0 %v960, 96
    %v2704 = vpop.permute.xlu0 %2703
    %2705 = vrot.lane.b32.xlu0 %v963, 96
    %v2706 = vpop.permute.xlu0 %2705
    %2707 = vrot.lane.b32.xlu0 %v966, 96
    %v2708 = vpop.permute.xlu0 %2707
    %2709 = vrot.lane.b32.xlu0 %v969, 96
    %v2710 = vpop.permute.xlu0 %2709
    %v2716 = vsel %vm143, %v2695, 0
    %v2719 = vsel %vm143, %v2696, 0
    %v2722 = vsel %vm143, %v2697, 0
    %v2725 = vsel %vm143, %v2698, 0
    %2727 = vmatprep.subr.bf16.mxu0 0
    %2728 = vmatpush1.bf16.msra.mxu0 %v2704
    %2729 = vmatprep.subr.bf16.mxu0 0
    %2730 = vmatpush1.bf16.msra.mxu0 %v2706
    %2731 = vmatprep.subr.bf16.mxu0 0
    %2732 = vmatpush1.bf16.msra.mxu0 %v2708
    %2733 = vmatprep.subr.bf16.mxu0 0
    %2734 = vmatpush1.bf16.msra.mxu0 %v2710
    %2735 = vmatprep.subr.bf16.mxu0 0
    %2736 = vmatpush1.bf16.msra.mxu0 0
    %2737 = vmatprep.subr.bf16.mxu0 0
    %2738 = vmatpush1.bf16.msra.mxu0 0
    %2739 = vmatprep.subr.bf16.mxu0 0
    %2740 = vmatpush1.bf16.msra.mxu0 0
    %2741 = vmatprep.subr.bf16.mxu0 0
    %2742 = vmatpush1.bf16.msra.mxu0 0
    %2743 = vmatprep.subr.bf16.mxu0 0
    %2744 = vmatpush1.bf16.msra.mxu0 0
    %2745 = vmatprep.subr.bf16.mxu0 0
    %2746 = vmatpush1.bf16.msra.mxu0 0
    %2747 = vmatprep.subr.bf16.mxu0 0
    %2748 = vmatpush1.bf16.msra.mxu0 0
    %2749 = vmatprep.subr.bf16.mxu0 0
    %2750 = vmatpush1.bf16.msra.mxu0 0
    %2751 = vmatprep.subr.bf16.mxu0 0
    %2752 = vmatpush1.bf16.msra.mxu0 0
    %2753 = vmatprep.subr.bf16.mxu0 0
    %2754 = vmatpush1.bf16.msra.mxu0 0
    %2755 = vmatprep.subr.bf16.mxu0 0
    %2756 = vmatpush1.bf16.msra.mxu0 0
    %2757 = vmatprep.subr.bf16.mxu0 0
    %2758 = vmatpush1.bf16.msra.mxu0 0
    %2759 = vmatprep.mubr.bf16.mxu0 0
    %2760 = vmatmul.mubr.bf16.gmra.mrb[0].mxu0 %v2716
    %v2761 = vpop.f32.mrb[0].mxu0
    %v2762 = vadd.f32 0.0, %v2761
    %v2763 = vpop.f32.mrb[0].mxu0
    %v2764 = vpop.f32.mrb[0].mxu0
    %v2765 = vadd.f32 0.0, %v2764
    %v2766 = vpop.f32.mrb[0].mxu0
    %2767 = vmatprep.mubr.bf16.mxu0 0
    %2768 = vmatmul.mubr.bf16.gmra.mrb[0].mxu0 %v2719
    %v2769 = vpop.f32.mrb[0].mxu0
    %v2770 = vadd.f32 0.0, %v2769
    %v2771 = vpop.f32.mrb[0].mxu0
    %v2772 = vpop.f32.mrb[0].mxu0
    %v2773 = vadd.f32 0.0, %v2772
    %v2774 = vpop.f32.mrb[0].mxu0
    %2775 = vmatprep.mubr.bf16.mxu0 0
    %2776 = vmatmul.mubr.bf16.gmra.mrb[0].mxu0 %v2722
    %v2777 = vpop.f32.mrb[0].mxu0
    %v2778 = vadd.f32 0.0, %v2777
    %v2779 = vpop.f32.mrb[0].mxu0
    %v2780 = vpop.f32.mrb[0].mxu0
    %v2781 = vadd.f32 0.0, %v2780
    %v2782 = vpop.f32.mrb[0].mxu0
    %2783 = vmatprep.mubr.bf16.mxu0 0
    %2784 = vmatmul.mubr.bf16.gmra.mrb[0].mxu0 %v2725
    %v2785 = vpop.f32.mrb[0].mxu0
    %v2786 = vadd.f32 0.0, %v2785
    %v2787 = vpop.f32.mrb[0].mxu0
    %v2788 = vpop.f32.mrb[0].mxu0
    %v2789 = vadd.f32 0.0, %v2788
    %v2790 = vpop.f32.mrb[0].mxu0
    %2791 = vdwg.mxu0
    %v2792 = vpack.c.bf16 %v2765, %v2762
    %v2793 = vpack.c.bf16 %v2773, %v2770
    %v2794 = vpack.c.bf16 %v2781, %v2778
    %v2795 = vpack.c.bf16 %v2789, %v2786
    %2796 = vrot.lane.b32.xlu0 %v958, 64
    %v2797 = vpop.permute.xlu0 %2796
    %2798 = vrot.lane.b32.xlu0 %v961, 64
    %v2799 = vpop.permute.xlu0 %2798
    %2800 = vrot.lane.b32.xlu0 %v964, 64
    %v2801 = vpop.permute.xlu0 %2800
    %2802 = vrot.lane.b32.xlu0 %v967, 64
    %v2803 = vpop.permute.xlu0 %2802
    %2804 = vrot.lane.b32.xlu0 %v959, 64
    %v2805 = vpop.permute.xlu0 %2804
    %2806 = vrot.lane.b32.xlu0 %v962, 64
    %v2807 = vpop.permute.xlu0 %2806
    %2808 = vrot.lane.b32.xlu0 %v965, 64
    %v2809 = vpop.permute.xlu0 %2808
    %2810 = vrot.lane.b32.xlu0 %v968, 64
    %v2811 = vpop.permute.xlu0 %2810
    %v2813 = vsel %vm970, %v2797, 0
    %v2816 = vsel %vm970, %v2799, 0
    %v2819 = vsel %vm970, %v2801, 0
    %v2822 = vsel %vm970, %v2803, 0
    %v2825 = vsel %vm970, %v2805, 0
    %v2828 = vsel %vm970, %v2807, 0
    %v2831 = vsel %vm970, %v2809, 0
    %v2834 = vsel %vm970, %v2811, 0
    %2836 = vmatprep.subr.bf16.mxu0 0
    %2837 = vmatpush1.bf16.xpose.msra.mxu0 %v2825
    %2838 = vmatprep.subr.bf16.mxu0 0
    %2839 = vmatpush1.bf16.xpose.msra.mxu0 %v2828
    %2840 = vmatprep.subr.bf16.mxu0 0
    %2841 = vmatpush1.bf16.xpose.msra.mxu0 %v2831
    %2842 = vmatprep.subr.bf16.mxu0 0
    %2843 = vmatpush1.bf16.xpose.msra.mxu0 %v2834
    %2844 = vmatprep.subr.bf16.mxu0 0
    %2845 = vmatpush1.bf16.xpose.msra.mxu0 0
    %2846 = vmatprep.subr.bf16.mxu0 0
    %2847 = vmatpush1.bf16.xpose.msra.mxu0 0
    %2848 = vmatprep.subr.bf16.mxu0 0
    %2849 = vmatpush1.bf16.xpose.msra.mxu0 0
    %2850 = vmatprep.subr.bf16.mxu0 0
    %2851 = vmatpush1.bf16.xpose.msra.mxu0 0
    %2852 = vmatprep.subr.bf16.mxu0 0
    %2853 = vmatpush1.bf16.xpose.msra.mxu0 0
    %2854 = vmatprep.subr.bf16.mxu0 0
    %2855 = vmatpush1.bf16.xpose.msra.mxu0 0
    %2856 = vmatprep.subr.bf16.mxu0 0
    %2857 = vmatpush1.bf16.xpose.msra.mxu0 0
    %2858 = vmatprep.subr.bf16.mxu0 0
    %2859 = vmatpush1.bf16.xpose.msra.mxu0 0
    %2860 = vmatprep.subr.bf16.mxu0 0
    %2861 = vmatpush1.bf16.xpose.msra.mxu0 0
    %2862 = vmatprep.subr.bf16.mxu0 0
    %2863 = vmatpush1.bf16.xpose.msra.mxu0 0
    %2864 = vmatprep.subr.bf16.mxu0 0
    %2865 = vmatpush1.bf16.xpose.msra.mxu0 0
    %2866 = vmatprep.subr.bf16.mxu0 0
    %2867 = vmatpush1.bf16.xpose.msra.mxu0 0
    %2868 = vmatprep.mubr.bf16.mxu0 0
    %2869 = vmatmul.mubr.bf16.gmra.mrb[0].mxu0 %v2813
    %v2870 = vpop.f32.mrb[0].mxu0
    %v2871 = vadd.f32 0.0, %v2870
    %v2872 = vpop.f32.mrb[0].mxu0
    %v2873 = vpop.f32.mrb[0].mxu0
    %v2874 = vadd.f32 0.0, %v2873
    %v2875 = vpop.f32.mrb[0].mxu0
    %2876 = vmatprep.mubr.bf16.mxu0 0
    %2877 = vmatmul.mubr.bf16.gmra.mrb[0].mxu0 %v2816
    %v2878 = vpop.f32.mrb[0].mxu0
    %v2879 = vadd.f32 0.0, %v2878
    %v2880 = vpop.f32.mrb[0].mxu0
    %v2881 = vpop.f32.mrb[0].mxu0
    %v2882 = vadd.f32 0.0, %v2881
    %v2883 = vpop.f32.mrb[0].mxu0
    %2884 = vmatprep.mubr.bf16.mxu0 0
    %2885 = vmatmul.mubr.bf16.gmra.mrb[0].mxu0 %v2819
    %v2886 = vpop.f32.mrb[0].mxu0
    %v2887 = vadd.f32 0.0, %v2886
    %v2888 = vpop.f32.mrb[0].mxu0
    %v2889 = vpop.f32.mrb[0].mxu0
    %v2890 = vadd.f32 0.0, %v2889
    %v2891 = vpop.f32.mrb[0].mxu0
    %2892 = vmatprep.mubr.bf16.mxu0 0
    %2893 = vmatmul.mubr.bf16.gmra.mrb[0].mxu0 %v2822
    %v2894 = vpop.f32.mrb[0].mxu0
    %v2895 = vadd.f32 0.0, %v2894
    %v2896 = vpop.f32.mrb[0].mxu0
    %v2897 = vpop.f32.mrb[0].mxu0
    %v2898 = vadd.f32 0.0, %v2897
    %v2899 = vpop.f32.mrb[0].mxu0
    %2900 = vdwg.mxu0
    %v2901 = vmul.f32 %v2871, 0.17677669
    %v2902 = vmul.f32 %v2874, 0.17677669
    %v2903 = vmul.f32 %v2879, 0.17677669
    %v2904 = vmul.f32 %v2882, 0.17677669
    %v2905 = vmul.f32 %v2887, 0.17677669
    %v2906 = vmul.f32 %v2890, 0.17677669
    %v2907 = vmul.f32 %v2895, 0.17677669
    %v2908 = vmul.f32 %v2898, 0.17677669
    %v2909 = vsel %vm143, %v2901, -inf
    %2910 = vmax.xlane.f32.xlu0 %v2909
    %v2911 = vpop.xlane.xlu0 %2910
    %v2912 = vsel %vm143, %v2902, -inf
    %2913 = vmax.xlane.f32.xlu0 %v2912
    %v2914 = vpop.xlane.xlu0 %2913
    %v2915 = vsel %vm143, %v2903, -inf
    %2916 = vmax.xlane.f32.xlu0 %v2915
    %v2917 = vpop.xlane.xlu0 %2916
    %v2918 = vsel %vm143, %v2904, -inf
    %2919 = vmax.xlane.f32.xlu0 %v2918
    %v2920 = vpop.xlane.xlu0 %2919
    %v2921 = vsel %vm143, %v2905, -inf
    %2922 = vmax.xlane.f32.xlu0 %v2921
    %v2923 = vpop.xlane.xlu0 %2922
    %v2924 = vsel %vm143, %v2906, -inf
    %2925 = vmax.xlane.f32.xlu0 %v2924
    %v2926 = vpop.xlane.xlu0 %2925
    %v2927 = vsel %vm143, %v2907, -inf
    %2928 = vmax.xlane.f32.xlu0 %v2927
    %v2929 = vpop.xlane.xlu0 %2928
    %v2930 = vsel %vm143, %v2908, -inf
    %2931 = vmax.xlane.f32.xlu0 %v2930
    %v2932 = vpop.xlane.xlu0 %2931
    %v2933 = vsub.f32 %v2901, %v2911
    %v2934 = vsub.f32 %v2902, %v2914
    %v2935 = vsub.f32 %v2903, %v2917
    %v2936 = vsub.f32 %v2904, %v2920
    %v2937 = vsub.f32 %v2905, %v2923
    %v2938 = vsub.f32 %v2906, %v2926
    %v2939 = vsub.f32 %v2907, %v2929
    %v2940 = vsub.f32 %v2908, %v2932
    %v2941 = vmul.f32 %v2933, 1.442695
    %v2942 = vpow.pop %v2941
    %v2943 = vmul.f32 %v2934, 1.442695
    %v2944 = vpow.pop %v2943
    %v2945 = vmul.f32 %v2935, 1.442695
    %v2946 = vpow.pop %v2945
    %v2947 = vmul.f32 %v2936, 1.442695
    %v2948 = vpow.pop %v2947
    %v2949 = vmul.f32 %v2937, 1.442695
    %v2950 = vpow.pop %v2949
    %v2951 = vmul.f32 %v2938, 1.442695
    %v2952 = vpow.pop %v2951
    %v2953 = vmul.f32 %v2939, 1.442695
    %v2954 = vpow.pop %v2953
    %v2955 = vmul.f32 %v2940, 1.442695
    %v2956 = vpow.pop %v2955
    %v2957 = vsel %vm143, %v2942, 0.0
    %2958 = vadd.xlane.f32.xlu0 %v2957
    %v2959 = vpop.xlane.xlu0 %2958
    %v2960 = vsel %vm143, %v2944, 0.0
    %2961 = vadd.xlane.f32.xlu0 %v2960
    %v2962 = vpop.xlane.xlu0 %2961
    %v2963 = vsel %vm143, %v2946, 0.0
    %2964 = vadd.xlane.f32.xlu0 %v2963
    %v2965 = vpop.xlane.xlu0 %2964
    %v2966 = vsel %vm143, %v2948, 0.0
    %2967 = vadd.xlane.f32.xlu0 %v2966
    %v2968 = vpop.xlane.xlu0 %2967
    %v2969 = vsel %vm143, %v2950, 0.0
    %2970 = vadd.xlane.f32.xlu0 %v2969
    %v2971 = vpop.xlane.xlu0 %2970
    %v2972 = vsel %vm143, %v2952, 0.0
    %2973 = vadd.xlane.f32.xlu0 %v2972
    %v2974 = vpop.xlane.xlu0 %2973
    %v2975 = vsel %vm143, %v2954, 0.0
    %2976 = vadd.xlane.f32.xlu0 %v2975
    %v2977 = vpop.xlane.xlu0 %2976
    %v2978 = vsel %vm143, %v2956, 0.0
    %2979 = vadd.xlane.f32.xlu0 %v2978
    %v2980 = vpop.xlane.xlu0 %2979
    %v2981 = vrcp.pop %v2959
    %v2982 = vrcp.pop %v2962
    %v2983 = vrcp.pop %v2965
    %v2984 = vrcp.pop %v2968
    %v2985 = vrcp.pop %v2971
    %v2986 = vrcp.pop %v2974
    %v2987 = vrcp.pop %v2977
    %v2988 = vrcp.pop %v2980
    %v2989 = vmul.f32 %v2942, %v2981
    %v2990 = vmul.f32 %v2944, %v2982
    %v2991 = vmul.f32 %v2946, %v2983
    %v2992 = vmul.f32 %v2948, %v2984
    %v2993 = vmul.f32 %v2950, %v2985
    %v2994 = vmul.f32 %v2952, %v2986
    %v2995 = vmul.f32 %v2954, %v2987
    %v2996 = vmul.f32 %v2956, %v2988
    %v2997 = vpack.c.bf16 %v2990, %v2989
    %v2998 = vpack.c.bf16 %v2992, %v2991
    %v2999 = vpack.c.bf16 %v2994, %v2993
    %v3000 = vpack.c.bf16 %v2996, %v2995
    %3001 = vrot.lane.b32.xlu0 %v960, 64
    %v3002 = vpop.permute.xlu0 %3001
    %3003 = vrot.lane.b32.xlu0 %v963, 64
    %v3004 = vpop.permute.xlu0 %3003
    %3005 = vrot.lane.b32.xlu0 %v966, 64
    %v3006 = vpop.permute.xlu0 %3005
    %3007 = vrot.lane.b32.xlu0 %v969, 64
    %v3008 = vpop.permute.xlu0 %3007
    %v3014 = vsel %vm143, %v2997, 0
    %v3017 = vsel %vm143, %v2998, 0
    %v3020 = vsel %vm143, %v2999, 0
    %v3023 = vsel %vm143, %v3000, 0
    %3025 = vmatprep.subr.bf16.mxu0 0
    %3026 = vmatpush1.bf16.msra.mxu0 %v3002
    %3027 = vmatprep.subr.bf16.mxu0 0
    %3028 = vmatpush1.bf16.msra.mxu0 %v3004
    %3029 = vmatprep.subr.bf16.mxu0 0
    %3030 = vmatpush1.bf16.msra.mxu0 %v3006
    %3031 = vmatprep.subr.bf16.mxu0 0
    %3032 = vmatpush1.bf16.msra.mxu0 %v3008
    %3033 = vmatprep.subr.bf16.mxu0 0
    %3034 = vmatpush1.bf16.msra.mxu0 0
    %3035 = vmatprep.subr.bf16.mxu0 0
    %3036 = vmatpush1.bf16.msra.mxu0 0
    %3037 = vmatprep.subr.bf16.mxu0 0
    %3038 = vmatpush1.bf16.msra.mxu0 0
    %3039 = vmatprep.subr.bf16.mxu0 0
    %3040 = vmatpush1.bf16.msra.mxu0 0
    %3041 = vmatprep.subr.bf16.mxu0 0
    %3042 = vmatpush1.bf16.msra.mxu0 0
    %3043 = vmatprep.subr.bf16.mxu0 0
    %3044 = vmatpush1.bf16.msra.mxu0 0
    %3045 = vmatprep.subr.bf16.mxu0 0
    %3046 = vmatpush1.bf16.msra.mxu0 0
    %3047 = vmatprep.subr.bf16.mxu0 0
    %3048 = vmatpush1.bf16.msra.mxu0 0
    %3049 = vmatprep.subr.bf16.mxu0 0
    %3050 = vmatpush1.bf16.msra.mxu0 0
    %3051 = vmatprep.subr.bf16.mxu0 0
    %3052 = vmatpush1.bf16.msra.mxu0 0
    %3053 = vmatprep.subr.bf16.mxu0 0
    %3054 = vmatpush1.bf16.msra.mxu0 0
    %3055 = vmatprep.subr.bf16.mxu0 0
    %3056 = vmatpush1.bf16.msra.mxu0 0
    %3057 = vmatprep.mubr.bf16.mxu0 0
    %3058 = vmatmul.mubr.bf16.gmra.mrb[0].mxu0 %v3014
    %v3059 = vpop.f32.mrb[0].mxu0
    %v3060 = vadd.f32 0.0, %v3059
    %v3061 = vpop.f32.mrb[0].mxu0
    %v3062 = vpop.f32.mrb[0].mxu0
    %v3063 = vadd.f32 0.0, %v3062
    %v3064 = vpop.f32.mrb[0].mxu0
    %3065 = vmatprep.mubr.bf16.mxu0 0
    %3066 = vmatmul.mubr.bf16.gmra.mrb[0].mxu0 %v3017
    %v3067 = vpop.f32.mrb[0].mxu0
    %v3068 = vadd.f32 0.0, %v3067
    %v3069 = vpop.f32.mrb[0].mxu0
    %v3070 = vpop.f32.mrb[0].mxu0
    %v3071 = vadd.f32 0.0, %v3070
    %v3072 = vpop.f32.mrb[0].mxu0
    %3073 = vmatprep.mubr.bf16.mxu0 0
    %3074 = vmatmul.mubr.bf16.gmra.mrb[0].mxu0 %v3020
    %v3075 = vpop.f32.mrb[0].mxu0
    %v3076 = vadd.f32 0.0, %v3075
    %v3077 = vpop.f32.mrb[0].mxu0
    %v3078 = vpop.f32.mrb[0].mxu0
    %v3079 = vadd.f32 0.0, %v3078
    %v3080 = vpop.f32.mrb[0].mxu0
    %3081 = vmatprep.mubr.bf16.mxu0 0
    %3082 = vmatmul.mubr.bf16.gmra.mrb[0].mxu0 %v3023
    %v3083 = vpop.f32.mrb[0].mxu0
    %v3084 = vadd.f32 0.0, %v3083
    %v3085 = vpop.f32.mrb[0].mxu0
    %v3086 = vpop.f32.mrb[0].mxu0
    %v3087 = vadd.f32 0.0, %v3086
    %v3088 = vpop.f32.mrb[0].mxu0
    %3089 = vdwg.mxu0
    %v3090 = vpack.c.bf16 %v3063, %v3060
    %v3091 = vpack.c.bf16 %v3071, %v3068
    %v3092 = vpack.c.bf16 %v3079, %v3076
    %v3093 = vpack.c.bf16 %v3087, %v3084
    %3094 = vrot.lane.b32.xlu0 %v958, 32
    %v3095 = vpop.permute.xlu0 %3094
    %3096 = vrot.lane.b32.xlu0 %v961, 32
    %v3097 = vpop.permute.xlu0 %3096
    %3098 = vrot.lane.b32.xlu0 %v964, 32
    %v3099 = vpop.permute.xlu0 %3098
    %3100 = vrot.lane.b32.xlu0 %v967, 32
    %v3101 = vpop.permute.xlu0 %3100
    %3102 = vrot.lane.b32.xlu0 %v959, 32
    %v3103 = vpop.permute.xlu0 %3102
    %3104 = vrot.lane.b32.xlu0 %v962, 32
    %v3105 = vpop.permute.xlu0 %3104
    %3106 = vrot.lane.b32.xlu0 %v965, 32
    %v3107 = vpop.permute.xlu0 %3106
    %3108 = vrot.lane.b32.xlu0 %v968, 32
    %v3109 = vpop.permute.xlu0 %3108
    %v3111 = vsel %vm970, %v3095, 0
    %v3114 = vsel %vm970, %v3097, 0
    %v3117 = vsel %vm970, %v3099, 0
    %v3120 = vsel %vm970, %v3101, 0
    %v3123 = vsel %vm970, %v3103, 0
    %v3126 = vsel %vm970, %v3105, 0
    %v3129 = vsel %vm970, %v3107, 0
    %v3132 = vsel %vm970, %v3109, 0
    %3134 = vmatprep.subr.bf16.mxu0 0
    %3135 = vmatpush1.bf16.xpose.msra.mxu0 %v3123
    %3136 = vmatprep.subr.bf16.mxu0 0
    %3137 = vmatpush1.bf16.xpose.msra.mxu0 %v3126
    %3138 = vmatprep.subr.bf16.mxu0 0
    %3139 = vmatpush1.bf16.xpose.msra.mxu0 %v3129
    %3140 = vmatprep.subr.bf16.mxu0 0
    %3141 = vmatpush1.bf16.xpose.msra.mxu0 %v3132
    %3142 = vmatprep.subr.bf16.mxu0 0
    %3143 = vmatpush1.bf16.xpose.msra.mxu0 0
    %3144 = vmatprep.subr.bf16.mxu0 0
    %3145 = vmatpush1.bf16.xpose.msra.mxu0 0
    %3146 = vmatprep.subr.bf16.mxu0 0
    %3147 = vmatpush1.bf16.xpose.msra.mxu0 0
    %3148 = vmatprep.subr.bf16.mxu0 0
    %3149 = vmatpush1.bf16.xpose.msra.mxu0 0
    %3150 = vmatprep.subr.bf16.mxu0 0
    %3151 = vmatpush1.bf16.xpose.msra.mxu0 0
    %3152 = vmatprep.subr.bf16.mxu0 0
    %3153 = vmatpush1.bf16.xpose.msra.mxu0 0
    %3154 = vmatprep.subr.bf16.mxu0 0
    %3155 = vmatpush1.bf16.xpose.msra.mxu0 0
    %3156 = vmatprep.subr.bf16.mxu0 0
    %3157 = vmatpush1.bf16.xpose.msra.mxu0 0
    %3158 = vmatprep.subr.bf16.mxu0 0
    %3159 = vmatpush1.bf16.xpose.msra.mxu0 0
    %3160 = vmatprep.subr.bf16.mxu0 0
    %3161 = vmatpush1.bf16.xpose.msra.mxu0 0
    %3162 = vmatprep.subr.bf16.mxu0 0
    %3163 = vmatpush1.bf16.xpose.msra.mxu0 0
    %3164 = vmatprep.subr.bf16.mxu0 0
    %3165 = vmatpush1.bf16.xpose.msra.mxu0 0
    %3166 = vmatprep.mubr.bf16.mxu0 0
    %3167 = vmatmul.mubr.bf16.gmra.mrb[0].mxu0 %v3111
    %v3168 = vpop.f32.mrb[0].mxu0
    %v3169 = vadd.f32 0.0, %v3168
    %v3170 = vpop.f32.mrb[0].mxu0
    %v3171 = vpop.f32.mrb[0].mxu0
    %v3172 = vadd.f32 0.0, %v3171
    %v3173 = vpop.f32.mrb[0].mxu0
    %3174 = vmatprep.mubr.bf16.mxu0 0
    %3175 = vmatmul.mubr.bf16.gmra.mrb[0].mxu0 %v3114
    %v3176 = vpop.f32.mrb[0].mxu0
    %v3177 = vadd.f32 0.0, %v3176
    %v3178 = vpop.f32.mrb[0].mxu0
    %v3179 = vpop.f32.mrb[0].mxu0
    %v3180 = vadd.f32 0.0, %v3179
    %v3181 = vpop.f32.mrb[0].mxu0
    %3182 = vmatprep.mubr.bf16.mxu0 0
    %3183 = vmatmul.mubr.bf16.gmra.mrb[0].mxu0 %v3117
    %v3184 = vpop.f32.mrb[0].mxu0
    %v3185 = vadd.f32 0.0, %v3184
    %v3186 = vpop.f32.mrb[0].mxu0
    %v3187 = vpop.f32.mrb[0].mxu0
    %v3188 = vadd.f32 0.0, %v3187
    %v3189 = vpop.f32.mrb[0].mxu0
    %3190 = vmatprep.mubr.bf16.mxu0 0
    %3191 = vmatmul.mubr.bf16.gmra.mrb[0].mxu0 %v3120
    %v3192 = vpop.f32.mrb[0].mxu0
    %v3193 = vadd.f32 0.0, %v3192
    %v3194 = vpop.f32.mrb[0].mxu0
    %v3195 = vpop.f32.mrb[0].mxu0
    %v3196 = vadd.f32 0.0, %v3195
    %v3197 = vpop.f32.mrb[0].mxu0
    %3198 = vdwg.mxu0
    %v3199 = vmul.f32 %v3169, 0.17677669
    %v3200 = vmul.f32 %v3172, 0.17677669
    %v3201 = vmul.f32 %v3177, 0.17677669
    %v3202 = vmul.f32 %v3180, 0.17677669
    %v3203 = vmul.f32 %v3185, 0.17677669
    %v3204 = vmul.f32 %v3188, 0.17677669
    %v3205 = vmul.f32 %v3193, 0.17677669
    %v3206 = vmul.f32 %v3196, 0.17677669
    %v3207 = vsel %vm143, %v3199, -inf
    %3208 = vmax.xlane.f32.xlu0 %v3207
    %v3209 = vpop.xlane.xlu0 %3208
    %v3210 = vsel %vm143, %v3200, -inf
    %3211 = vmax.xlane.f32.xlu0 %v3210
    %v3212 = vpop.xlane.xlu0 %3211
    %v3213 = vsel %vm143, %v3201, -inf
    %3214 = vmax.xlane.f32.xlu0 %v3213
    %v3215 = vpop.xlane.xlu0 %3214
    %v3216 = vsel %vm143, %v3202, -inf
    %3217 = vmax.xlane.f32.xlu0 %v3216
    %v3218 = vpop.xlane.xlu0 %3217
    %v3219 = vsel %vm143, %v3203, -inf
    %3220 = vmax.xlane.f32.xlu0 %v3219
    %v3221 = vpop.xlane.xlu0 %3220
    %v3222 = vsel %vm143, %v3204, -inf
    %3223 = vmax.xlane.f32.xlu0 %v3222
    %v3224 = vpop.xlane.xlu0 %3223
    %v3225 = vsel %vm143, %v3205, -inf
    %3226 = vmax.xlane.f32.xlu0 %v3225
    %v3227 = vpop.xlane.xlu0 %3226
    %v3228 = vsel %vm143, %v3206, -inf
    %3229 = vmax.xlane.f32.xlu0 %v3228
    %v3230 = vpop.xlane.xlu0 %3229
    %v3231 = vsub.f32 %v3199, %v3209
    %v3232 = vsub.f32 %v3200, %v3212
    %v3233 = vsub.f32 %v3201, %v3215
    %v3234 = vsub.f32 %v3202, %v3218
    %v3235 = vsub.f32 %v3203, %v3221
    %v3236 = vsub.f32 %v3204, %v3224
    %v3237 = vsub.f32 %v3205, %v3227
    %v3238 = vsub.f32 %v3206, %v3230
    %v3239 = vmul.f32 %v3231, 1.442695
    %v3240 = vpow.pop %v3239
    %v3241 = vmul.f32 %v3232, 1.442695
    %v3242 = vpow.pop %v3241
    %v3243 = vmul.f32 %v3233, 1.442695
    %v3244 = vpow.pop %v3243
    %v3245 = vmul.f32 %v3234, 1.442695
    %v3246 = vpow.pop %v3245
    %v3247 = vmul.f32 %v3235, 1.442695
    %v3248 = vpow.pop %v3247
    %v3249 = vmul.f32 %v3236, 1.442695
    %v3250 = vpow.pop %v3249
    %v3251 = vmul.f32 %v3237, 1.442695
    %v3252 = vpow.pop %v3251
    %v3253 = vmul.f32 %v3238, 1.442695
    %v3254 = vpow.pop %v3253
    %v3255 = vsel %vm143, %v3240, 0.0
    %3256 = vadd.xlane.f32.xlu0 %v3255
    %v3257 = vpop.xlane.xlu0 %3256
    %v3258 = vsel %vm143, %v3242, 0.0
    %3259 = vadd.xlane.f32.xlu0 %v3258
    %v3260 = vpop.xlane.xlu0 %3259
    %v3261 = vsel %vm143, %v3244, 0.0
    %3262 = vadd.xlane.f32.xlu0 %v3261
    %v3263 = vpop.xlane.xlu0 %3262
    %v3264 = vsel %vm143, %v3246, 0.0
    %3265 = vadd.xlane.f32.xlu0 %v3264
    %v3266 = vpop.xlane.xlu0 %3265
    %v3267 = vsel %vm143, %v3248, 0.0
    %3268 = vadd.xlane.f32.xlu0 %v3267
    %v3269 = vpop.xlane.xlu0 %3268
    %v3270 = vsel %vm143, %v3250, 0.0
    %3271 = vadd.xlane.f32.xlu0 %v3270
    %v3272 = vpop.xlane.xlu0 %3271
    %v3273 = vsel %vm143, %v3252, 0.0
    %3274 = vadd.xlane.f32.xlu0 %v3273
    %v3275 = vpop.xlane.xlu0 %3274
    %v3276 = vsel %vm143, %v3254, 0.0
    %3277 = vadd.xlane.f32.xlu0 %v3276
    %v3278 = vpop.xlane.xlu0 %3277
    %v3279 = vrcp.pop %v3257
    %v3280 = vrcp.pop %v3260
    %v3281 = vrcp.pop %v3263
    %v3282 = vrcp.pop %v3266
    %v3283 = vrcp.pop %v3269
    %v3284 = vrcp.pop %v3272
    %v3285 = vrcp.pop %v3275
    %v3286 = vrcp.pop %v3278
    %v3287 = vmul.f32 %v3240, %v3279
    %v3288 = vmul.f32 %v3242, %v3280
    %v3289 = vmul.f32 %v3244, %v3281
    %v3290 = vmul.f32 %v3246, %v3282
    %v3291 = vmul.f32 %v3248, %v3283
    %v3292 = vmul.f32 %v3250, %v3284
    %v3293 = vmul.f32 %v3252, %v3285
    %v3294 = vmul.f32 %v3254, %v3286
    %v3295 = vpack.c.bf16 %v3288, %v3287
    %v3296 = vpack.c.bf16 %v3290, %v3289
    %v3297 = vpack.c.bf16 %v3292, %v3291
    %v3298 = vpack.c.bf16 %v3294, %v3293
    %3299 = vrot.lane.b32.xlu0 %v960, 32
    %v3300 = vpop.permute.xlu0 %3299
    %3301 = vrot.lane.b32.xlu0 %v963, 32
    %v3302 = vpop.permute.xlu0 %3301
    %3303 = vrot.lane.b32.xlu0 %v966, 32
    %v3304 = vpop.permute.xlu0 %3303
    %3305 = vrot.lane.b32.xlu0 %v969, 32
    %v3306 = vpop.permute.xlu0 %3305
    %v3312 = vsel %vm143, %v3295, 0
    %v3315 = vsel %vm143, %v3296, 0
    %v3318 = vsel %vm143, %v3297, 0
    %v3321 = vsel %vm143, %v3298, 0
    %3323 = vmatprep.subr.bf16.mxu0 0
    %3324 = vmatpush1.bf16.msra.mxu0 %v3300
    %3325 = vmatprep.subr.bf16.mxu0 0
    %3326 = vmatpush1.bf16.msra.mxu0 %v3302
    %3327 = vmatprep.subr.bf16.mxu0 0
    %3328 = vmatpush1.bf16.msra.mxu0 %v3304
    %3329 = vmatprep.subr.bf16.mxu0 0
    %3330 = vmatpush1.bf16.msra.mxu0 %v3306
    %3331 = vmatprep.subr.bf16.mxu0 0
    %3332 = vmatpush1.bf16.msra.mxu0 0
    %3333 = vmatprep.subr.bf16.mxu0 0
    %3334 = vmatpush1.bf16.msra.mxu0 0
    %3335 = vmatprep.subr.bf16.mxu0 0
    %3336 = vmatpush1.bf16.msra.mxu0 0
    %3337 = vmatprep.subr.bf16.mxu0 0
    %3338 = vmatpush1.bf16.msra.mxu0 0
    %3339 = vmatprep.subr.bf16.mxu0 0
    %3340 = vmatpush1.bf16.msra.mxu0 0
    %3341 = vmatprep.subr.bf16.mxu0 0
    %3342 = vmatpush1.bf16.msra.mxu0 0
    %3343 = vmatprep.subr.bf16.mxu0 0
    %3344 = vmatpush1.bf16.msra.mxu0 0
    %3345 = vmatprep.subr.bf16.mxu0 0
    %3346 = vmatpush1.bf16.msra.mxu0 0
    %3347 = vmatprep.subr.bf16.mxu0 0
    %3348 = vmatpush1.bf16.msra.mxu0 0
    %3349 = vmatprep.subr.bf16.mxu0 0
    %3350 = vmatpush1.bf16.msra.mxu0 0
    %3351 = vmatprep.subr.bf16.mxu0 0
    %3352 = vmatpush1.bf16.msra.mxu0 0
    %3353 = vmatprep.subr.bf16.mxu0 0
    %3354 = vmatpush1.bf16.msra.mxu0 0
    %3355 = vmatprep.mubr.bf16.mxu0 0
    %3356 = vmatmul.mubr.bf16.gmra.mrb[0].mxu0 %v3312
    %v3357 = vpop.f32.mrb[0].mxu0
    %v3358 = vadd.f32 0.0, %v3357
    %v3359 = vpop.f32.mrb[0].mxu0
    %v3360 = vpop.f32.mrb[0].mxu0
    %v3361 = vadd.f32 0.0, %v3360
    %v3362 = vpop.f32.mrb[0].mxu0
    %3363 = vmatprep.mubr.bf16.mxu0 0
    %3364 = vmatmul.mubr.bf16.gmra.mrb[0].mxu0 %v3315
    %v3365 = vpop.f32.mrb[0].mxu0
    %v3366 = vadd.f32 0.0, %v3365
    %v3367 = vpop.f32.mrb[0].mxu0
    %v3368 = vpop.f32.mrb[0].mxu0
    %v3369 = vadd.f32 0.0, %v3368
    %v3370 = vpop.f32.mrb[0].mxu0
    %3371 = vmatprep.mubr.bf16.mxu0 0
    %3372 = vmatmul.mubr.bf16.gmra.mrb[0].mxu0 %v3318
    %v3373 = vpop.f32.mrb[0].mxu0
    %v3374 = vadd.f32 0.0, %v3373
    %v3375 = vpop.f32.mrb[0].mxu0
    %v3376 = vpop.f32.mrb[0].mxu0
    %v3377 = vadd.f32 0.0, %v3376
    %v3378 = vpop.f32.mrb[0].mxu0
    %3379 = vmatprep.mubr.bf16.mxu0 0
    %3380 = vmatmul.mubr.bf16.gmra.mrb[0].mxu0 %v3321
    %v3381 = vpop.f32.mrb[0].mxu0
    %v3382 = vadd.f32 0.0, %v3381
    %v3383 = vpop.f32.mrb[0].mxu0
    %v3384 = vpop.f32.mrb[0].mxu0
    %v3385 = vadd.f32 0.0, %v3384
    %v3386 = vpop.f32.mrb[0].mxu0
    %3387 = vdwg.mxu0
    %v3388 = vpack.c.bf16 %v3361, %v3358
    %v3389 = vpack.c.bf16 %v3369, %v3366
    %v3390 = vpack.c.bf16 %v3377, %v3374
    %v3391 = vpack.c.bf16 %v3385, %v3382
    %3396 = vrot.lane.b32.xlu0 %v2792, 32
    %v3397 = vpop.permute.xlu0 %3396
    %3398 = vrot.lane.b32.xlu0 %v2793, 32
    %v3399 = vpop.permute.xlu0 %3398
    %3400 = vrot.lane.b32.xlu0 %v2794, 32
    %v3401 = vpop.permute.xlu0 %3400
    %3402 = vrot.lane.b32.xlu0 %v2795, 32
    %v3403 = vpop.permute.xlu0 %3402
    %3408 = vrot.lane.b32.xlu0 %v3090, 64
    %v3409 = vpop.permute.xlu0 %3408
    %3410 = vrot.lane.b32.xlu0 %v3091, 64
    %v3411 = vpop.permute.xlu0 %3410
    %3412 = vrot.lane.b32.xlu0 %v3092, 64
    %v3413 = vpop.permute.xlu0 %3412
    %3414 = vrot.lane.b32.xlu0 %v3093, 64
    %v3415 = vpop.permute.xlu0 %3414
    %3420 = vrot.lane.b32.xlu0 %v3388, 96
    %v3421 = vpop.permute.xlu0 %3420
    %3422 = vrot.lane.b32.xlu0 %v3389, 96
    %v3423 = vpop.permute.xlu0 %3422
    %3424 = vrot.lane.b32.xlu0 %v3390, 96
    %v3425 = vpop.permute.xlu0 %3424
    %3426 = vrot.lane.b32.xlu0 %v3391, 96
    %v3427 = vpop.permute.xlu0 %3426
    %v3430 = vsel %vm970, %v2482, %v3397
    %v3433 = vsel %vm970, %v2483, %v3399
    %v3436 = vsel %vm970, %v2484, %v3401
    %v3439 = vsel %vm970, %v2485, %v3403
    %v3441 = vsel %vm143, %v3430, %v3409
    %v3443 = vsel %vm143, %v3433, %v3411
    %v3445 = vsel %vm143, %v3436, %v3413
    %v3447 = vsel %vm143, %v3439, %v3415
    %v3449 = vsel %vm2203, %v3441, %v3421
    %v3452 = vsel %vm2203, %v3443, %v3423
    %v3455 = vsel %vm2203, %v3445, %v3425
    %v3458 = vsel %vm2203, %v3447, %v3427
    %v3460 = vld [vmem:[#allocation2 + $0x60] sm:$0xf]
    %v3461 = vld [vmem:[#allocation2 + $0x64] sm:$0xf]
    %v3462 = vld [vmem:[#allocation2 + $0x68] sm:$0xf]
    %v3463 = vld [vmem:[#allocation2 + $0x6c] sm:$0xf]
    %v3464 = vld [vmem:[#allocation2 + $0x70] sm:$0xf]
    %v3465 = vld [vmem:[#allocation2 + $0x74] sm:$0xf]
    %v3466 = vld [vmem:[#allocation2 + $0x78] sm:$0xf]
    %v3467 = vld [vmem:[#allocation2 + $0x7c] sm:$0xf]
    %v3468 = vld [vmem:[#allocation2 + $0x80] sm:$0xf]
    %v3469 = vld [vmem:[#allocation2 + $0x84] sm:$0xf]
    %v3470 = vld [vmem:[#allocation2 + $0x88] sm:$0xf]
    %v3471 = vld [vmem:[#allocation2 + $0x8c] sm:$0xf]
    %v3472 = vld [vmem:[#allocation2 + $0x90] sm:$0xf]
    %v3473 = vld [vmem:[#allocation2 + $0x94] sm:$0xf]
    %v3474 = vld [vmem:[#allocation2 + $0x98] sm:$0xf]
    %v3475 = vld [vmem:[#allocation2 + $0x9c] sm:$0xf]
    %v3492 = vunpack.c.l.b16 %v3460
    %v3493 = vunpack.c.l.b16 %v3461
    %v3494 = vunpack.c.l.b16 %v3462
    %v3495 = vunpack.c.l.b16 %v3463
    %v3496 = vunpack.c.l.b16 %v3464
    %v3497 = vunpack.c.l.b16 %v3465
    %v3498 = vunpack.c.l.b16 %v3466
    %v3499 = vunpack.c.l.b16 %v3467
    %v3500 = vunpack.c.l.b16 %v3468
    %v3501 = vunpack.c.l.b16 %v3469
    %v3502 = vunpack.c.l.b16 %v3470
    %v3503 = vunpack.c.l.b16 %v3471
    %v3504 = vunpack.c.l.b16 %v3472
    %v3505 = vunpack.c.l.b16 %v3473
    %v3506 = vunpack.c.l.b16 %v3474
    %v3507 = vunpack.c.l.b16 %v3475
    %v3508 = vpack.c.b16 %v3493, %v3492
    %v3509 = vpack.c.b16 %v3495, %v3494
    %v3510 = vpack.c.b16 %v3497, %v3496
    %v3511 = vpack.c.b16 %v3499, %v3498
    %v3512 = vpack.c.b16 %v3501, %v3500
    %v3513 = vpack.c.b16 %v3503, %v3502
    %v3514 = vpack.c.b16 %v3505, %v3504
    %v3515 = vpack.c.b16 %v3507, %v3506
    %3524 = vmatprep.subr.bf16.mxu0 0
    %3525 = vmatpush1.bf16.msra.mxu0 %v3508
    %3526 = vmatprep.subr.bf16.mxu0 0
    %3527 = vmatpush1.bf16.msra.mxu0 %v3509
    %3528 = vmatprep.subr.bf16.mxu0 0
    %3529 = vmatpush1.bf16.msra.mxu0 %v3510
    %3530 = vmatprep.subr.bf16.mxu0 0
    %3531 = vmatpush1.bf16.msra.mxu0 %v3511
    %3532 = vmatprep.subr.bf16.mxu0 0
    %3533 = vmatpush1.bf16.msra.mxu0 %v3512
    %3534 = vmatprep.subr.bf16.mxu0 0
    %3535 = vmatpush1.bf16.msra.mxu0 %v3513
    %3536 = vmatprep.subr.bf16.mxu0 0
    %3537 = vmatpush1.bf16.msra.mxu0 %v3514
    %3538 = vmatprep.subr.bf16.mxu0 0
    %3539 = vmatpush1.bf16.msra.mxu0 %v3515
    %3540 = vmatprep.subr.bf16.mxu0 0
    %3541 = vmatpush1.bf16.msra.mxu0 0
    %3542 = vmatprep.subr.bf16.mxu0 0
    %3543 = vmatpush1.bf16.msra.mxu0 0
    %3544 = vmatprep.subr.bf16.mxu0 0
    %3545 = vmatpush1.bf16.msra.mxu0 0
    %3546 = vmatprep.subr.bf16.mxu0 0
    %3547 = vmatpush1.bf16.msra.mxu0 0
    %3548 = vmatprep.subr.bf16.mxu0 0
    %3549 = vmatpush1.bf16.msra.mxu0 0
    %3550 = vmatprep.subr.bf16.mxu0 0
    %3551 = vmatpush1.bf16.msra.mxu0 0
    %3552 = vmatprep.subr.bf16.mxu0 0
    %3553 = vmatpush1.bf16.msra.mxu0 0
    %3554 = vmatprep.subr.bf16.mxu0 0
    %3555 = vmatpush1.bf16.msra.mxu0 0
    %3556 = vmatprep.mubr.bf16.mxu0 0
    %3557 = vmatmul.mubr.bf16.gmra.mrb[0].mxu0 %v2205
    %v3558 = vpop.f32.mrb[0].mxu0
    %v3559 = vadd.f32 0.0, %v3558
    %v3560 = vpop.f32.mrb[0].mxu0
    %v3561 = vpop.f32.mrb[0].mxu0
    %v3562 = vadd.f32 0.0, %v3561
    %v3563 = vpop.f32.mrb[0].mxu0
    %3564 = vmatprep.mubr.bf16.mxu0 0
    %3565 = vmatmul.mubr.bf16.gmra.mrb[0].mxu0 %v2208
    %v3566 = vpop.f32.mrb[0].mxu0
    %v3567 = vadd.f32 0.0, %v3566
    %v3568 = vpop.f32.mrb[0].mxu0
    %v3569 = vpop.f32.mrb[0].mxu0
    %v3570 = vadd.f32 0.0, %v3569
    %v3571 = vpop.f32.mrb[0].mxu0
    %3572 = vmatprep.mubr.bf16.mxu0 0
    %3573 = vmatmul.mubr.bf16.gmra.mrb[0].mxu0 %v2211
    %v3574 = vpop.f32.mrb[0].mxu0
    %v3575 = vadd.f32 0.0, %v3574
    %v3576 = vpop.f32.mrb[0].mxu0
    %v3577 = vpop.f32.mrb[0].mxu0
    %v3578 = vadd.f32 0.0, %v3577
    %v3579 = vpop.f32.mrb[0].mxu0
    %3580 = vmatprep.mubr.bf16.mxu0 0
    %3581 = vmatmul.mubr.bf16.gmra.mrb[0].mxu0 %v2214
    %v3582 = vpop.f32.mrb[0].mxu0
    %v3583 = vadd.f32 0.0, %v3582
    %v3584 = vpop.f32.mrb[0].mxu0
    %v3585 = vpop.f32.mrb[0].mxu0
    %v3586 = vadd.f32 0.0, %v3585
    %v3587 = vpop.f32.mrb[0].mxu0
    %3588 = vmatprep.mubr.bf16.mxu0 0
    %3589 = vmatmul.mubr.bf16.gmra.mrb[0].mxu0 %v3449
    %v3590 = vpop.f32.mrb[0].mxu0
    %v3591 = vadd.f32 0.0, %v3590
    %v3592 = vpop.f32.mrb[0].mxu0
    %v3593 = vpop.f32.mrb[0].mxu0
    %v3594 = vadd.f32 0.0, %v3593
    %v3595 = vpop.f32.mrb[0].mxu0
    %3596 = vmatprep.mubr.bf16.mxu0 0
    %3597 = vmatmul.mubr.bf16.gmra.mrb[0].mxu0 %v3452
    %v3598 = vpop.f32.mrb[0].mxu0
    %v3599 = vadd.f32 0.0, %v3598
    %v3600 = vpop.f32.mrb[0].mxu0
    %v3601 = vpop.f32.mrb[0].mxu0
    %v3602 = vadd.f32 0.0, %v3601
    %v3603 = vpop.f32.mrb[0].mxu0
    %3604 = vmatprep.mubr.bf16.mxu0 0
    %3605 = vmatmul.mubr.bf16.gmra.mrb[0].mxu0 %v3455
    %v3606 = vpop.f32.mrb[0].mxu0
    %v3607 = vadd.f32 0.0, %v3606
    %v3608 = vpop.f32.mrb[0].mxu0
    %v3609 = vpop.f32.mrb[0].mxu0
    %v3610 = vadd.f32 0.0, %v3609
    %v3611 = vpop.f32.mrb[0].mxu0
    %3612 = vmatprep.mubr.bf16.mxu0 0
    %3613 = vmatmul.mubr.bf16.gmra.mrb[0].mxu0 %v3458
    %v3614 = vpop.f32.mrb[0].mxu0
    %v3615 = vadd.f32 0.0, %v3614
    %v3616 = vpop.f32.mrb[0].mxu0
    %v3617 = vpop.f32.mrb[0].mxu0
    %v3618 = vadd.f32 0.0, %v3617
    %v3619 = vpop.f32.mrb[0].mxu0
    %3620 = vdwg.mxu0
    %v3621 = vadd.f32 %v535, %v3559
    %v3622 = vadd.f32 %v536, %v3562
    %v3623 = vadd.f32 %v537, %v3567
    %v3624 = vadd.f32 %v538, %v3570
    %v3625 = vadd.f32 %v539, %v3575
    %v3626 = vadd.f32 %v540, %v3578
    %v3627 = vadd.f32 %v541, %v3583
    %v3628 = vadd.f32 %v542, %v3586
    %v3629 = vadd.f32 %v543, %v3591
    %v3630 = vadd.f32 %v544, %v3594
    %v3631 = vadd.f32 %v545, %v3599
    %v3632 = vadd.f32 %v546, %v3602
    %v3633 = vadd.f32 %v547, %v3607
    %v3634 = vadd.f32 %v548, %v3610
    %v3635 = vadd.f32 %v549, %v3615
    %v3636 = vadd.f32 %v550, %v3618
    %v3637 = vld [vmem:[%s3 + $0x2] sm:$0x1]
    %v3638 = vlaneseq
    %v3639 = vshrl.u32 %v3638, 7
    %v3640 = vsub.s32 0, %v3639
    %v3641 = vrot.slane %v3637, %v3640
    %v3642 = vadd.f32 %v3621, %v3641
    %v3643 = vadd.f32 %v3622, %v3641
    %v3644 = vadd.f32 %v3623, %v3641
    %v3645 = vadd.f32 %v3624, %v3641
    %v3646 = vadd.f32 %v3625, %v3641
    %v3647 = vadd.f32 %v3626, %v3641
    %v3648 = vadd.f32 %v3627, %v3641
    %v3649 = vadd.f32 %v3628, %v3641
    %v3650 = vadd.f32 %v3629, %v3641
    %v3651 = vadd.f32 %v3630, %v3641
    %v3652 = vadd.f32 %v3631, %v3641
    %v3653 = vadd.f32 %v3632, %v3641
    %v3654 = vadd.f32 %v3633, %v3641
    %v3655 = vadd.f32 %v3634, %v3641
    %v3656 = vadd.f32 %v3635, %v3641
    %v3657 = vadd.f32 %v3636, %v3641
    %v3658 = vpack.c.bf16 %v3643, %v3642
    %v3659 = vpack.c.bf16 %v3645, %v3644
    %v3660 = vpack.c.bf16 %v3647, %v3646
    %v3661 = vpack.c.bf16 %v3649, %v3648
    %v3662 = vpack.c.bf16 %v3651, %v3650
    %v3663 = vpack.c.bf16 %v3653, %v3652
    %v3664 = vpack.c.bf16 %v3655, %v3654
    %v3665 = vpack.c.bf16 %v3657, %v3656
    %v3666 = vld [vmem:[#allocation2 + $0xa0] sm:$0xf]
    %v3667 = vld [vmem:[#allocation2 + $0xa4] sm:$0xf]
    %v3668 = vld [vmem:[#allocation2 + $0xa8] sm:$0xf]
    %v3669 = vld [vmem:[#allocation2 + $0xac] sm:$0xf]
    %v3670 = vld [vmem:[#allocation2 + $0xb0] sm:$0xf]
    %v3671 = vld [vmem:[#allocation2 + $0xb4] sm:$0xf]
    %v3672 = vld [vmem:[#allocation2 + $0xb8] sm:$0xf]
    %v3673 = vld [vmem:[#allocation2 + $0xbc] sm:$0xf]
    %v3674 = vld [vmem:[#allocation2 + $0xc0] sm:$0xf]
    %v3675 = vld [vmem:[#allocation2 + $0xc4] sm:$0xf]
    %v3676 = vld [vmem:[#allocation2 + $0xc8] sm:$0xf]
    %v3677 = vld [vmem:[#allocation2 + $0xcc] sm:$0xf]
    %v3678 = vld [vmem:[#allocation2 + $0xd0] sm:$0xf]
    %v3679 = vld [vmem:[#allocation2 + $0xd4] sm:$0xf]
    %v3680 = vld [vmem:[#allocation2 + $0xd8] sm:$0xf]
    %v3681 = vld [vmem:[#allocation2 + $0xdc] sm:$0xf]
    %v3698 = vunpack.c.l.b16 %v3666
    %v3699 = vunpack.c.l.b16 %v3667
    %v3700 = vunpack.c.l.b16 %v3668
    %v3701 = vunpack.c.l.b16 %v3669
    %v3702 = vunpack.c.l.b16 %v3670
    %v3703 = vunpack.c.l.b16 %v3671
    %v3704 = vunpack.c.l.b16 %v3672
    %v3705 = vunpack.c.l.b16 %v3673
    %v3706 = vunpack.c.l.b16 %v3674
    %v3707 = vunpack.c.l.b16 %v3675
    %v3708 = vunpack.c.l.b16 %v3676
    %v3709 = vunpack.c.l.b16 %v3677
    %v3710 = vunpack.c.l.b16 %v3678
    %v3711 = vunpack.c.l.b16 %v3679
    %v3712 = vunpack.c.l.b16 %v3680
    %v3713 = vunpack.c.l.b16 %v3681
    %v3714 = vpack.c.b16 %v3699, %v3698
    %v3715 = vpack.c.b16 %v3701, %v3700
    %v3716 = vpack.c.b16 %v3703, %v3702
    %v3717 = vpack.c.b16 %v3705, %v3704
    %v3718 = vpack.c.b16 %v3707, %v3706
    %v3719 = vpack.c.b16 %v3709, %v3708
    %v3720 = vpack.c.b16 %v3711, %v3710
    %v3721 = vpack.c.b16 %v3713, %v3712
    %3730 = vmatprep.subr.bf16.mxu0 0
    %3731 = vmatpush1.bf16.msra.mxu0 %v3714
    %3732 = vmatprep.subr.bf16.mxu0 0
    %3733 = vmatpush1.bf16.msra.mxu0 %v3715
    %3734 = vmatprep.subr.bf16.mxu0 0
    %3735 = vmatpush1.bf16.msra.mxu0 %v3716
    %3736 = vmatprep.subr.bf16.mxu0 0
    %3737 = vmatpush1.bf16.msra.mxu0 %v3717
    %3738 = vmatprep.subr.bf16.mxu0 0
    %3739 = vmatpush1.bf16.msra.mxu0 %v3718
    %3740 = vmatprep.subr.bf16.mxu0 0
    %3741 = vmatpush1.bf16.msra.mxu0 %v3719
    %3742 = vmatprep.subr.bf16.mxu0 0
    %3743 = vmatpush1.bf16.msra.mxu0 %v3720
    %3744 = vmatprep.subr.bf16.mxu0 0
    %3745 = vmatpush1.bf16.msra.mxu0 %v3721
    %3746 = vmatprep.subr.bf16.mxu0 0
    %3747 = vmatpush1.bf16.msra.mxu0 0
    %3748 = vmatprep.subr.bf16.mxu0 0
    %3749 = vmatpush1.bf16.msra.mxu0 0
    %3750 = vmatprep.subr.bf16.mxu0 0
    %3751 = vmatpush1.bf16.msra.mxu0 0
    %3752 = vmatprep.subr.bf16.mxu0 0
    %3753 = vmatpush1.bf16.msra.mxu0 0
    %3754 = vmatprep.subr.bf16.mxu0 0
    %3755 = vmatpush1.bf16.msra.mxu0 0
    %3756 = vmatprep.subr.bf16.mxu0 0
    %3757 = vmatpush1.bf16.msra.mxu0 0
    %3758 = vmatprep.subr.bf16.mxu0 0
    %3759 = vmatpush1.bf16.msra.mxu0 0
    %3760 = vmatprep.subr.bf16.mxu0 0
    %3761 = vmatpush1.bf16.msra.mxu0 0
    %3762 = vmatprep.mubr.bf16.mxu0 0
    %3763 = vmatmul.mubr.bf16.gmra.mrb[0].mxu0 %v3658
    %v3764 = vpop.f32.mrb[0].mxu0
    %v3765 = vadd.f32 0.0, %v3764
    %v3766 = vpop.f32.mrb[0].mxu0
    %v3767 = vpop.f32.mrb[0].mxu0
    %v3768 = vadd.f32 0.0, %v3767
    %v3769 = vpop.f32.mrb[0].mxu0
    %3770 = vmatprep.mubr.bf16.mxu0 0
    %3771 = vmatmul.mubr.bf16.gmra.mrb[0].mxu0 %v3659
    %v3772 = vpop.f32.mrb[0].mxu0
    %v3773 = vadd.f32 0.0, %v3772
    %v3774 = vpop.f32.mrb[0].mxu0
    %v3775 = vpop.f32.mrb[0].mxu0
    %v3776 = vadd.f32 0.0, %v3775
    %v3777 = vpop.f32.mrb[0].mxu0
    %3778 = vmatprep.mubr.bf16.mxu0 0
    %3779 = vmatmul.mubr.bf16.gmra.mrb[0].mxu0 %v3660
    %v3780 = vpop.f32.mrb[0].mxu0
    %v3781 = vadd.f32 0.0, %v3780
    %v3782 = vpop.f32.mrb[0].mxu0
    %v3783 = vpop.f32.mrb[0].mxu0
    %v3784 = vadd.f32 0.0, %v3783
    %v3785 = vpop.f32.mrb[0].mxu0
    %3786 = vmatprep.mubr.bf16.mxu0 0
    %3787 = vmatmul.mubr.bf16.gmra.mrb[0].mxu0 %v3661
    %v3788 = vpop.f32.mrb[0].mxu0
    %v3789 = vadd.f32 0.0, %v3788
    %v3790 = vpop.f32.mrb[0].mxu0
    %v3791 = vpop.f32.mrb[0].mxu0
    %v3792 = vadd.f32 0.0, %v3791
    %v3793 = vpop.f32.mrb[0].mxu0
    %3794 = vmatprep.mubr.bf16.mxu0 0
    %3795 = vmatmul.mubr.bf16.gmra.mrb[0].mxu0 %v3662
    %v3796 = vpop.f32.mrb[0].mxu0
    %v3797 = vadd.f32 0.0, %v3796
    %v3798 = vpop.f32.mrb[0].mxu0
    %v3799 = vpop.f32.mrb[0].mxu0
    %v3800 = vadd.f32 0.0, %v3799
    %v3801 = vpop.f32.mrb[0].mxu0
    %3802 = vmatprep.mubr.bf16.mxu0 0
    %3803 = vmatmul.mubr.bf16.gmra.mrb[0].mxu0 %v3663
    %v3804 = vpop.f32.mrb[0].mxu0
    %v3805 = vadd.f32 0.0, %v3804
    %v3806 = vpop.f32.mrb[0].mxu0
    %v3807 = vpop.f32.mrb[0].mxu0
    %v3808 = vadd.f32 0.0, %v3807
    %v3809 = vpop.f32.mrb[0].mxu0
    %3810 = vmatprep.mubr.bf16.mxu0 0
    %3811 = vmatmul.mubr.bf16.gmra.mrb[0].mxu0 %v3664
    %v3812 = vpop.f32.mrb[0].mxu0
    %v3813 = vadd.f32 0.0, %v3812
    %v3814 = vpop.f32.mrb[0].mxu0
    %v3815 = vpop.f32.mrb[0].mxu0
    %v3816 = vadd.f32 0.0, %v3815
    %v3817 = vpop.f32.mrb[0].mxu0
    %3818 = vmatprep.mubr.bf16.mxu0 0
    %3819 = vmatmul.mubr.bf16.gmra.mrb[0].mxu0 %v3665
    %v3820 = vpop.f32.mrb[0].mxu0
    %v3821 = vadd.f32 0.0, %v3820
    %v3822 = vpop.f32.mrb[0].mxu0
    %v3823 = vpop.f32.mrb[0].mxu0
    %v3824 = vadd.f32 0.0, %v3823
    %v3825 = vpop.f32.mrb[0].mxu0
    %3826 = vdwg.mxu0
    %v3827 = vpack.c.bf16 %v3768, %v3765
    %v3828 = vpack.c.bf16 %v3776, %v3773
    %v3829 = vpack.c.bf16 %v3784, %v3781
    %v3830 = vpack.c.bf16 %v3792, %v3789
    %v3831 = vpack.c.bf16 %v3800, %v3797
    %v3832 = vpack.c.bf16 %v3808, %v3805
    %v3833 = vpack.c.bf16 %v3816, %v3813
    %v3834 = vpack.c.bf16 %v3824, %v3821
    %v3835 = vld [vmem:[#allocation2 + $0xe0] sm:$0xf]
    %v3836 = vld [vmem:[#allocation2 + $0xe4] sm:$0xf]
    %v3837 = vld [vmem:[#allocation2 + $0xe8] sm:$0xf]
    %v3838 = vld [vmem:[#allocation2 + $0xec] sm:$0xf]
    %v3839 = vld [vmem:[#allocation2 + $0xf0] sm:$0xf]
    %v3840 = vld [vmem:[#allocation2 + $0xf4] sm:$0xf]
    %v3841 = vld [vmem:[#allocation2 + $0xf8] sm:$0xf]
    %v3842 = vld [vmem:[#allocation2 + $0xfc] sm:$0xf]
    %v3843 = vld [vmem:[#allocation2 + $0x100] sm:$0xf]
    %v3844 = vld [vmem:[#allocation2 + $0x104] sm:$0xf]
    %v3845 = vld [vmem:[#allocation2 + $0x108] sm:$0xf]
    %v3846 = vld [vmem:[#allocation2 + $0x10c] sm:$0xf]
    %v3847 = vld [vmem:[#allocation2 + $0x110] sm:$0xf]
    %v3848 = vld [vmem:[#allocation2 + $0x114] sm:$0xf]
    %v3849 = vld [vmem:[#allocation2 + $0x118] sm:$0xf]
    %v3850 = vld [vmem:[#allocation2 + $0x11c] sm:$0xf]
    %v3867 = vunpack.c.l.b16 %v3835
    %v3868 = vunpack.c.l.b16 %v3836
    %v3869 = vunpack.c.l.b16 %v3837
    %v3870 = vunpack.c.l.b16 %v3838
    %v3871 = vunpack.c.l.b16 %v3839
    %v3872 = vunpack.c.l.b16 %v3840
    %v3873 = vunpack.c.l.b16 %v3841
    %v3874 = vunpack.c.l.b16 %v3842
    %v3875 = vunpack.c.l.b16 %v3843
    %v3876 = vunpack.c.l.b16 %v3844
    %v3877 = vunpack.c.l.b16 %v3845
    %v3878 = vunpack.c.l.b16 %v3846
    %v3879 = vunpack.c.l.b16 %v3847
    %v3880 = vunpack.c.l.b16 %v3848
    %v3881 = vunpack.c.l.b16 %v3849
    %v3882 = vunpack.c.l.b16 %v3850
    %v3883 = vpack.c.b16 %v3868, %v3867
    %v3884 = vpack.c.b16 %v3870, %v3869
    %v3885 = vpack.c.b16 %v3872, %v3871
    %v3886 = vpack.c.b16 %v3874, %v3873
    %v3887 = vpack.c.b16 %v3876, %v3875
    %v3888 = vpack.c.b16 %v3878, %v3877
    %v3889 = vpack.c.b16 %v3880, %v3879
    %v3890 = vpack.c.b16 %v3882, %v3881
    %3899 = vmatprep.subr.bf16.mxu0 0
    %3900 = vmatpush1.bf16.msra.mxu0 %v3883
    %3901 = vmatprep.subr.bf16.mxu0 0
    %3902 = vmatpush1.bf16.msra.mxu0 %v3884
    %3903 = vmatprep.subr.bf16.mxu0 0
    %3904 = vmatpush1.bf16.msra.mxu0 %v3885
    %3905 = vmatprep.subr.bf16.mxu0 0
    %3906 = vmatpush1.bf16.msra.mxu0 %v3886
    %3907 = vmatprep.subr.bf16.mxu0 0
    %3908 = vmatpush1.bf16.msra.mxu0 %v3887
    %3909 = vmatprep.subr.bf16.mxu0 0
    %3910 = vmatpush1.bf16.msra.mxu0 %v3888
    %3911 = vmatprep.subr.bf16.mxu0 0
    %3912 = vmatpush1.bf16.msra.mxu0 %v3889
    %3913 = vmatprep.subr.bf16.mxu0 0
    %3914 = vmatpush1.bf16.msra.mxu0 %v3890
    %3915 = vmatprep.subr.bf16.mxu0 0
    %3916 = vmatpush1.bf16.msra.mxu0 0
    %3917 = vmatprep.subr.bf16.mxu0 0
    %3918 = vmatpush1.bf16.msra.mxu0 0
    %3919 = vmatprep.subr.bf16.mxu0 0
    %3920 = vmatpush1.bf16.msra.mxu0 0
    %3921 = vmatprep.subr.bf16.mxu0 0
    %3922 = vmatpush1.bf16.msra.mxu0 0
    %3923 = vmatprep.subr.bf16.mxu0 0
    %3924 = vmatpush1.bf16.msra.mxu0 0
    %3925 = vmatprep.subr.bf16.mxu0 0
    %3926 = vmatpush1.bf16.msra.mxu0 0
    %3927 = vmatprep.subr.bf16.mxu0 0
    %3928 = vmatpush1.bf16.msra.mxu0 0
    %3929 = vmatprep.subr.bf16.mxu0 0
    %3930 = vmatpush1.bf16.msra.mxu0 0
    %3931 = vmatprep.mubr.bf16.mxu0 0
    %3932 = vmatmul.mubr.bf16.gmra.mrb[0].mxu0 %v3827
    %v3933 = vpop.f32.mrb[0].mxu0
    %v3934 = vadd.f32 0.0, %v3933
    %v3935 = vpop.f32.mrb[0].mxu0
    %v3936 = vpop.f32.mrb[0].mxu0
    %v3937 = vadd.f32 0.0, %v3936
    %v3938 = vpop.f32.mrb[0].mxu0
    %3939 = vmatprep.mubr.bf16.mxu0 0
    %3940 = vmatmul.mubr.bf16.gmra.mrb[0].mxu0 %v3828
    %v3941 = vpop.f32.mrb[0].mxu0
    %v3942 = vadd.f32 0.0, %v3941
    %v3943 = vpop.f32.mrb[0].mxu0
    %v3944 = vpop.f32.mrb[0].mxu0
    %v3945 = vadd.f32 0.0, %v3944
    %v3946 = vpop.f32.mrb[0].mxu0
    %3947 = vmatprep.mubr.bf16.mxu0 0
    %3948 = vmatmul.mubr.bf16.gmra.mrb[0].mxu0 %v3829
    %v3949 = vpop.f32.mrb[0].mxu0
    %v3950 = vadd.f32 0.0, %v3949
    %v3951 = vpop.f32.mrb[0].mxu0
    %v3952 = vpop.f32.mrb[0].mxu0
    %v3953 = vadd.f32 0.0, %v3952
    %v3954 = vpop.f32.mrb[0].mxu0
    %3955 = vmatprep.mubr.bf16.mxu0 0
    %3956 = vmatmul.mubr.bf16.gmra.mrb[0].mxu0 %v3830
    %v3957 = vpop.f32.mrb[0].mxu0
    %v3958 = vadd.f32 0.0, %v3957
    %v3959 = vpop.f32.mrb[0].mxu0
    %v3960 = vpop.f32.mrb[0].mxu0
    %v3961 = vadd.f32 0.0, %v3960
    %v3962 = vpop.f32.mrb[0].mxu0
    %3963 = vmatprep.mubr.bf16.mxu0 0
    %3964 = vmatmul.mubr.bf16.gmra.mrb[0].mxu0 %v3831
    %v3965 = vpop.f32.mrb[0].mxu0
    %v3966 = vadd.f32 0.0, %v3965
    %v3967 = vpop.f32.mrb[0].mxu0
    %v3968 = vpop.f32.mrb[0].mxu0
    %v3969 = vadd.f32 0.0, %v3968
    %v3970 = vpop.f32.mrb[0].mxu0
    %3971 = vmatprep.mubr.bf16.mxu0 0
    %3972 = vmatmul.mubr.bf16.gmra.mrb[0].mxu0 %v3832
    %v3973 = vpop.f32.mrb[0].mxu0
    %v3974 = vadd.f32 0.0, %v3973
    %v3975 = vpop.f32.mrb[0].mxu0
    %v3976 = vpop.f32.mrb[0].mxu0
    %v3977 = vadd.f32 0.0, %v3976
    %v3978 = vpop.f32.mrb[0].mxu0
    %3979 = vmatprep.mubr.bf16.mxu0 0
    %3980 = vmatmul.mubr.bf16.gmra.mrb[0].mxu0 %v3833
    %v3981 = vpop.f32.mrb[0].mxu0
    %v3982 = vadd.f32 0.0, %v3981
    %v3983 = vpop.f32.mrb[0].mxu0
    %v3984 = vpop.f32.mrb[0].mxu0
    %v3985 = vadd.f32 0.0, %v3984
    %v3986 = vpop.f32.mrb[0].mxu0
    %3987 = vmatprep.mubr.bf16.mxu0 0
    %3988 = vmatmul.mubr.bf16.gmra.mrb[0].mxu0 %v3834
    %v3989 = vpop.f32.mrb[0].mxu0
    %v3990 = vadd.f32 0.0, %v3989
    %v3991 = vpop.f32.mrb[0].mxu0
    %v3992 = vpop.f32.mrb[0].mxu0
    %v3993 = vadd.f32 0.0, %v3992
    %v3994 = vpop.f32.mrb[0].mxu0
    %3995 = vdwg.mxu0
    %v3996 = vadd.f32 %v3642, %v3934
    %v3997 = vadd.f32 %v3643, %v3937
    %v3998 = vadd.f32 %v3644, %v3942
    %v3999 = vadd.f32 %v3645, %v3945
    %v4000 = vadd.f32 %v3646, %v3950
    %v4001 = vadd.f32 %v3647, %v3953
    %v4002 = vadd.f32 %v3648, %v3958
    %v4003 = vadd.f32 %v3649, %v3961
    %v4004 = vadd.f32 %v3650, %v3966
    %v4005 = vadd.f32 %v3651, %v3969
    %v4006 = vadd.f32 %v3652, %v3974
    %v4007 = vadd.f32 %v3653, %v3977
    %v4008 = vadd.f32 %v3654, %v3982
    %v4009 = vadd.f32 %v3655, %v3985
    %v4010 = vadd.f32 %v3656, %v3990
    %v4011 = vadd.f32 %v3657, %v3993
    %v4012 = vpack.c.bf16 %v3997, %v3996
    %v4013 = vpack.c.bf16 %v3999, %v3998
    %v4014 = vpack.c.bf16 %v4001, %v4000
    %v4015 = vpack.c.bf16 %v4003, %v4002
    %v4016 = vpack.c.bf16 %v4005, %v4004
    %v4017 = vpack.c.bf16 %v4007, %v4006
    %v4018 = vpack.c.bf16 %v4009, %v4008
    %v4019 = vpack.c.bf16 %v4011, %v4010
    %v4020 = vld [vmem:[#allocation5 + $0xc0] sm:$0xff]
    %v4021 = vld [vmem:[#allocation5 + $0xc8] sm:$0xf]
    %v4022 = vld [vmem:[#allocation5 + $0xcc] sm:$0xff]
    %v4023 = vld [vmem:[#allocation5 + $0xd4] sm:$0xf]
    %v4024 = vld [vmem:[#allocation5 + $0xd8] sm:$0xff]
    %v4025 = vld [vmem:[#allocation5 + $0xe0] sm:$0xf]
    %v4026 = vld [vmem:[#allocation5 + $0xe4] sm:$0xff]
    %v4027 = vld [vmem:[#allocation5 + $0xec] sm:$0xf]
    %v4028 = vld [vmem:[#allocation5 + $0xf0] sm:$0xff]
    %v4029 = vld [vmem:[#allocation5 + $0xf8] sm:$0xf]
    %v4030 = vld [vmem:[#allocation5 + $0xfc] sm:$0xff]
    %v4031 = vld [vmem:[#allocation5 + $0x104] sm:$0xf]
    %v4032 = vld [vmem:[#allocation5 + $0x108] sm:$0xff]
    %v4033 = vld [vmem:[#allocation5 + $0x110] sm:$0xf]
    %v4034 = vld [vmem:[#allocation5 + $0x114] sm:$0xff]
    %v4035 = vld [vmem:[#allocation5 + $0x11c] sm:$0xf]
    %v4036 = vld [vmem:[#allocation5 + $0x120] sm:$0xff]
    %v4037 = vld [vmem:[#allocation5 + $0x128] sm:$0xf]
    %v4038 = vld [vmem:[#allocation5 + $0x12c] sm:$0xff]
    %v4039 = vld [vmem:[#allocation5 + $0x134] sm:$0xf]
    %v4040 = vld [vmem:[#allocation5 + $0x138] sm:$0xff]
    %v4041 = vld [vmem:[#allocation5 + $0x140] sm:$0xf]
    %v4042 = vld [vmem:[#allocation5 + $0x144] sm:$0xff]
    %v4043 = vld [vmem:[#allocation5 + $0x14c] sm:$0xf]
    %v4044 = vld [vmem:[#allocation5 + $0x150] sm:$0xff]
    %v4045 = vld [vmem:[#allocation5 + $0x158] sm:$0xf]
    %v4046 = vld [vmem:[#allocation5 + $0x15c] sm:$0xff]
    %v4047 = vld [vmem:[#allocation5 + $0x164] sm:$0xf]
    %v4048 = vld [vmem:[#allocation5 + $0x168] sm:$0xff]
    %v4049 = vld [vmem:[#allocation5 + $0x170] sm:$0xf]
    %v4050 = vld [vmem:[#allocation5 + $0x174] sm:$0xff]
    %v4051 = vld [vmem:[#allocation5 + $0x17c] sm:$0xf]
    %s4052 = scalar_lea.vmem %s4, 1
    %v4053 = vld [vmem:[%s4052] ss:$8 sm:$0x7]
    %v4055 = vlaneseq
    %v4056 = vshrl.u32 %v4055, 7
    %v4057 = vsub.s32 0, %v4056
    %v4058 = vrot.slane %v4053, %v4057
    %v4059 = vlaneseq
    %v4060 = vshrl.u32 %v4059, 7
    %v4061 = vsub.s32 1, %v4060
    %v4062 = vrot.slane %v4053, %v4061
    %v4063 = vlaneseq
    %v4064 = vshrl.u32 %v4063, 7
    %v4065 = vsub.s32 2, %v4064
    %v4066 = vrot.slane %v4053, %v4065
    %v4102 = vunpack.c.l.b16 %v4020
    %v4103 = vunpack.c.h.b16 %v4020
    %v4104 = vunpack.c.l.b16 %v4021
    %v4105 = vunpack.c.l.b16 %v4022
    %v4106 = vunpack.c.h.b16 %v4022
    %v4107 = vunpack.c.l.b16 %v4023
    %v4108 = vunpack.c.l.b16 %v4024
    %v4109 = vunpack.c.h.b16 %v4024
    %v4110 = vunpack.c.l.b16 %v4025
    %v4111 = vunpack.c.l.b16 %v4026
    %v4112 = vunpack.c.h.b16 %v4026
    %v4113 = vunpack.c.l.b16 %v4027
    %v4114 = vunpack.c.l.b16 %v4028
    %v4115 = vunpack.c.h.b16 %v4028
    %v4116 = vunpack.c.l.b16 %v4029
    %v4117 = vunpack.c.l.b16 %v4030
    %v4118 = vunpack.c.h.b16 %v4030
    %v4119 = vunpack.c.l.b16 %v4031
    %v4120 = vunpack.c.l.b16 %v4032
    %v4121 = vunpack.c.h.b16 %v4032
    %v4122 = vunpack.c.l.b16 %v4033
    %v4123 = vunpack.c.l.b16 %v4034
    %v4124 = vunpack.c.h.b16 %v4034
    %v4125 = vunpack.c.l.b16 %v4035
    %v4126 = vunpack.c.l.b16 %v4036
    %v4127 = vunpack.c.h.b16 %v4036
    %v4128 = vunpack.c.l.b16 %v4037
    %v4129 = vunpack.c.l.b16 %v4038
    %v4130 = vunpack.c.h.b16 %v4038
    %v4131 = vunpack.c.l.b16 %v4039
    %v4132 = vunpack.c.l.b16 %v4040
    %v4133 = vunpack.c.h.b16 %v4040
    %v4134 = vunpack.c.l.b16 %v4041
    %v4135 = vunpack.c.l.b16 %v4042
    %v4136 = vunpack.c.h.b16 %v4042
    %v4137 = vunpack.c.l.b16 %v4043
    %v4138 = vunpack.c.l.b16 %v4044
    %v4139 = vunpack.c.h.b16 %v4044
    %v4140 = vunpack.c.l.b16 %v4045
    %v4141 = vunpack.c.l.b16 %v4046
    %v4142 = vunpack.c.h.b16 %v4046
    %v4143 = vunpack.c.l.b16 %v4047
    %v4144 = vunpack.c.l.b16 %v4048
    %v4145 = vunpack.c.h.b16 %v4048
    %v4146 = vunpack.c.l.b16 %v4049
    %v4147 = vunpack.c.l.b16 %v4050
    %v4148 = vunpack.c.h.b16 %v4050
    %v4149 = vunpack.c.l.b16 %v4051
    %v4150 = vpack.c.b16 %v4105, %v4102
    %v4151 = vpack.c.b16 %v4106, %v4103
    %v4152 = vpack.c.b16 %v4107, %v4104
    %v4153 = vpack.c.b16 %v4111, %v4108
    %v4154 = vpack.c.b16 %v4112, %v4109
    %v4155 = vpack.c.b16 %v4113, %v4110
    %v4156 = vpack.c.b16 %v4117, %v4114
    %v4157 = vpack.c.b16 %v4118, %v4115
    %v4158 = vpack.c.b16 %v4119, %v4116
    %v4159 = vpack.c.b16 %v4123, %v4120
    %v4160 = vpack.c.b16 %v4124, %v4121
    %v4161 = vpack.c.b16 %v4125, %v4122
    %v4162 = vpack.c.b16 %v4129, %v4126
    %v4163 = vpack.c.b16 %v4130, %v4127
    %v4164 = vpack.c.b16 %v4131, %v4128
    %v4165 = vpack.c.b16 %v4135, %v4132
    %v4166 = vpack.c.b16 %v4136, %v4133
    %v4167 = vpack.c.b16 %v4137, %v4134
    %v4168 = vpack.c.b16 %v4141, %v4138
    %v4169 = vpack.c.b16 %v4142, %v4139
    %v4170 = vpack.c.b16 %v4143, %v4140
    %v4171 = vpack.c.b16 %v4147, %v4144
    %v4172 = vpack.c.b16 %v4148, %v4145
    %v4173 = vpack.c.b16 %v4149, %v4146
    %4198 = vmatprep.subr.bf16.mxu0 %v4151
    %4199 = vmatpush1.bf16.msra.mxu0 %v4150
    %4200 = vmatprep.subr.bf16.mxu0 %v4154
    %4201 = vmatpush1.bf16.msra.mxu0 %v4153
    %4202 = vmatprep.subr.bf16.mxu0 %v4157
    %4203 = vmatpush1.bf16.msra.mxu0 %v4156
    %4204 = vmatprep.subr.bf16.mxu0 %v4160
    %4205 = vmatpush1.bf16.msra.mxu0 %v4159
    %4206 = vmatprep.subr.bf16.mxu0 %v4163
    %4207 = vmatpush1.bf16.msra.mxu0 %v4162
    %4208 = vmatprep.subr.bf16.mxu0 %v4166
    %4209 = vmatpush1.bf16.msra.mxu0 %v4165
    %4210 = vmatprep.subr.bf16.mxu0 %v4169
    %4211 = vmatpush1.bf16.msra.mxu0 %v4168
    %4212 = vmatprep.subr.bf16.mxu0 %v4172
    %4213 = vmatpush1.bf16.msra.mxu0 %v4171
    %4214 = vmatprep.subr.bf16.mxu0 0
    %4215 = vmatpush1.bf16.msra.mxu0 0
    %4216 = vmatprep.subr.bf16.mxu0 0
    %4217 = vmatpush1.bf16.msra.mxu0 0
    %4218 = vmatprep.subr.bf16.mxu0 0
    %4219 = vmatpush1.bf16.msra.mxu0 0
    %4220 = vmatprep.subr.bf16.mxu0 0
    %4221 = vmatpush1.bf16.msra.mxu0 0
    %4222 = vmatprep.subr.bf16.mxu0 0
    %4223 = vmatpush1.bf16.msra.mxu0 0
    %4224 = vmatprep.subr.bf16.mxu0 0
    %4225 = vmatpush1.bf16.msra.mxu0 0
    %4226 = vmatprep.subr.bf16.mxu0 0
    %4227 = vmatpush1.bf16.msra.mxu0 0
    %4228 = vmatprep.subr.bf16.mxu0 0
    %4229 = vmatpush1.bf16.msra.mxu0 0
    %4230 = vmatprep.mubr.bf16.mxu0 0
    %4231 = vmatmul.mubr.bf16.gmra.mrb[0].mxu0 %v4012
    %v4232 = vpop.f32.mrb[0].mxu0
    %v4233 = vadd.f32 %v4058, %v4232
    %v4234 = vpop.f32.mrb[0].mxu0
    %v4235 = vadd.f32 %v4062, %v4234
    %v4236 = vpop.f32.mrb[0].mxu0
    %v4237 = vadd.f32 %v4058, %v4236
    %v4238 = vpop.f32.mrb[0].mxu0
    %v4239 = vadd.f32 %v4062, %v4238
    %4240 = vmatprep.mubr.bf16.mxu0 0
    %4241 = vmatmul.mubr.bf16.gmra.mrb[0].mxu0 %v4013
    %v4242 = vpop.f32.mrb[0].mxu0
    %v4243 = vadd.f32 %v4058, %v4242
    %v4244 = vpop.f32.mrb[0].mxu0
    %v4245 = vadd.f32 %v4062, %v4244
    %v4246 = vpop.f32.mrb[0].mxu0
    %v4247 = vadd.f32 %v4058, %v4246
    %v4248 = vpop.f32.mrb[0].mxu0
    %v4249 = vadd.f32 %v4062, %v4248
    %4250 = vmatprep.mubr.bf16.mxu0 0
    %4251 = vmatmul.mubr.bf16.gmra.mrb[0].mxu0 %v4014
    %v4252 = vpop.f32.mrb[0].mxu0
    %v4253 = vadd.f32 %v4058, %v4252
    %v4254 = vpop.f32.mrb[0].mxu0
    %v4255 = vadd.f32 %v4062, %v4254
    %v4256 = vpop.f32.mrb[0].mxu0
    %v4257 = vadd.f32 %v4058, %v4256
    %v4258 = vpop.f32.mrb[0].mxu0
    %v4259 = vadd.f32 %v4062, %v4258
    %4260 = vmatprep.mubr.bf16.mxu0 0
    %4261 = vmatmul.mubr.bf16.gmra.mrb[0].mxu0 %v4015
    %v4262 = vpop.f32.mrb[0].mxu0
    %v4263 = vadd.f32 %v4058, %v4262
    %v4264 = vpop.f32.mrb[0].mxu0
    %v4265 = vadd.f32 %v4062, %v4264
    %v4266 = vpop.f32.mrb[0].mxu0
    %v4267 = vadd.f32 %v4058, %v4266
    %v4268 = vpop.f32.mrb[0].mxu0
    %v4269 = vadd.f32 %v4062, %v4268
    %4270 = vmatprep.mubr.bf16.mxu0 0
    %4271 = vmatmul.mubr.bf16.gmra.mrb[0].mxu0 %v4016
    %v4272 = vpop.f32.mrb[0].mxu0
    %v4273 = vadd.f32 %v4058, %v4272
    %v4274 = vpop.f32.mrb[0].mxu0
    %v4275 = vadd.f32 %v4062, %v4274
    %v4276 = vpop.f32.mrb[0].mxu0
    %v4277 = vadd.f32 %v4058, %v4276
    %v4278 = vpop.f32.mrb[0].mxu0
    %v4279 = vadd.f32 %v4062, %v4278
    %4280 = vmatprep.mubr.bf16.mxu0 0
    %4281 = vmatmul.mubr.bf16.gmra.mrb[0].mxu0 %v4017
    %v4282 = vpop.f32.mrb[0].mxu0
    %v4283 = vadd.f32 %v4058, %v4282
    %v4284 = vpop.f32.mrb[0].mxu0
    %v4285 = vadd.f32 %v4062, %v4284
    %v4286 = vpop.f32.mrb[0].mxu0
    %v4287 = vadd.f32 %v4058, %v4286
    %v4288 = vpop.f32.mrb[0].mxu0
    %v4289 = vadd.f32 %v4062, %v4288
    %4290 = vmatprep.mubr.bf16.mxu0 0
    %4291 = vmatmul.mubr.bf16.gmra.mrb[0].mxu0 %v4018
    %v4292 = vpop.f32.mrb[0].mxu0
    %v4293 = vadd.f32 %v4058, %v4292
    %v4294 = vpop.f32.mrb[0].mxu0
    %v4295 = vadd.f32 %v4062, %v4294
    %v4296 = vpop.f32.mrb[0].mxu0
    %v4297 = vadd.f32 %v4058, %v4296
    %v4298 = vpop.f32.mrb[0].mxu0
    %v4299 = vadd.f32 %v4062, %v4298
    %4300 = vmatprep.mubr.bf16.mxu0 0
    %4301 = vmatmul.mubr.bf16.gmra.mrb[0].mxu0 %v4019
    %v4302 = vpop.f32.mrb[0].mxu0
    %v4303 = vadd.f32 %v4058, %v4302
    %v4304 = vpop.f32.mrb[0].mxu0
    %v4305 = vadd.f32 %v4062, %v4304
    %v4306 = vpop.f32.mrb[0].mxu0
    %v4307 = vadd.f32 %v4058, %v4306
    %v4308 = vpop.f32.mrb[0].mxu0
    %v4309 = vadd.f32 %v4062, %v4308
    %4310 = vdwg.mxu0
    %4311 = vmatprep.subr.bf16.mxu0 0
    %4312 = vmatpush1.bf16.msra.mxu0 %v4152
    %4313 = vmatprep.subr.bf16.mxu0 0
    %4314 = vmatpush1.bf16.msra.mxu0 %v4155
    %4315 = vmatprep.subr.bf16.mxu0 0
    %4316 = vmatpush1.bf16.msra.mxu0 %v4158
    %4317 = vmatprep.subr.bf16.mxu0 0
    %4318 = vmatpush1.bf16.msra.mxu0 %v4161
    %4319 = vmatprep.subr.bf16.mxu0 0
    %4320 = vmatpush1.bf16.msra.mxu0 %v4164
    %4321 = vmatprep.subr.bf16.mxu0 0
    %4322 = vmatpush1.bf16.msra.mxu0 %v4167
    %4323 = vmatprep.subr.bf16.mxu0 0
    %4324 = vmatpush1.bf16.msra.mxu0 %v4170
    %4325 = vmatprep.subr.bf16.mxu0 0
    %4326 = vmatpush1.bf16.msra.mxu0 %v4173
    %4327 = vmatprep.subr.bf16.mxu0 0
    %4328 = vmatpush1.bf16.msra.mxu0 0
    %4329 = vmatprep.subr.bf16.mxu0 0
    %4330 = vmatpush1.bf16.msra.mxu0 0
    %4331 = vmatprep.subr.bf16.mxu0 0
    %4332 = vmatpush1.bf16.msra.mxu0 0
    %4333 = vmatprep.subr.bf16.mxu0 0
    %4334 = vmatpush1.bf16.msra.mxu0 0
    %4335 = vmatprep.subr.bf16.mxu0 0
    %4336 = vmatpush1.bf16.msra.mxu0 0
    %4337 = vmatprep.subr.bf16.mxu0 0
    %4338 = vmatpush1.bf16.msra.mxu0 0
    %4339 = vmatprep.subr.bf16.mxu0 0
    %4340 = vmatpush1.bf16.msra.mxu0 0
    %4341 = vmatprep.subr.bf16.mxu0 0
    %4342 = vmatpush1.bf16.msra.mxu0 0
    %4343 = vmatprep.mubr.bf16.mxu0 0
    %4344 = vmatmul.mubr.bf16.gmra.mrb[0].mxu0 %v4012
    %v4345 = vpop.f32.mrb[0].mxu0
    %v4346 = vadd.f32 %v4066, %v4345
    %v4347 = vpop.f32.mrb[0].mxu0
    %v4348 = vpop.f32.mrb[0].mxu0
    %v4349 = vadd.f32 %v4066, %v4348
    %v4350 = vpop.f32.mrb[0].mxu0
    %4351 = vmatprep.mubr.bf16.mxu0 0
    %4352 = vmatmul.mubr.bf16.gmra.mrb[0].mxu0 %v4013
    %v4353 = vpop.f32.mrb[0].mxu0
    %v4354 = vadd.f32 %v4066, %v4353
    %v4355 = vpop.f32.mrb[0].mxu0
    %v4356 = vpop.f32.mrb[0].mxu0
    %v4357 = vadd.f32 %v4066, %v4356
    %v4358 = vpop.f32.mrb[0].mxu0
    %4359 = vmatprep.mubr.bf16.mxu0 0
    %4360 = vmatmul.mubr.bf16.gmra.mrb[0].mxu0 %v4014
    %v4361 = vpop.f32.mrb[0].mxu0
    %v4362 = vadd.f32 %v4066, %v4361
    %v4363 = vpop.f32.mrb[0].mxu0
    %v4364 = vpop.f32.mrb[0].mxu0
    %v4365 = vadd.f32 %v4066, %v4364
    %v4366 = vpop.f32.mrb[0].mxu0
    %4367 = vmatprep.mubr.bf16.mxu0 0
    %4368 = vmatmul.mubr.bf16.gmra.mrb[0].mxu0 %v4015
    %v4369 = vpop.f32.mrb[0].mxu0
    %v4370 = vadd.f32 %v4066, %v4369
    %v4371 = vpop.f32.mrb[0].mxu0
    %v4372 = vpop.f32.mrb[0].mxu0
    %v4373 = vadd.f32 %v4066, %v4372
    %v4374 = vpop.f32.mrb[0].mxu0
    %4375 = vmatprep.mubr.bf16.mxu0 0
    %4376 = vmatmul.mubr.bf16.gmra.mrb[0].mxu0 %v4016
    %v4377 = vpop.f32.mrb[0].mxu0
    %v4378 = vadd.f32 %v4066, %v4377
    %v4379 = vpop.f32.mrb[0].mxu0
    %v4380 = vpop.f32.mrb[0].mxu0
    %v4381 = vadd.f32 %v4066, %v4380
    %v4382 = vpop.f32.mrb[0].mxu0
    %4383 = vmatprep.mubr.bf16.mxu0 0
    %4384 = vmatmul.mubr.bf16.gmra.mrb[0].mxu0 %v4017
    %v4385 = vpop.f32.mrb[0].mxu0
    %v4386 = vadd.f32 %v4066, %v4385
    %v4387 = vpop.f32.mrb[0].mxu0
    %v4388 = vpop.f32.mrb[0].mxu0
    %v4389 = vadd.f32 %v4066, %v4388
    %v4390 = vpop.f32.mrb[0].mxu0
    %4391 = vmatprep.mubr.bf16.mxu0 0
    %4392 = vmatmul.mubr.bf16.gmra.mrb[0].mxu0 %v4018
    %v4393 = vpop.f32.mrb[0].mxu0
    %v4394 = vadd.f32 %v4066, %v4393
    %v4395 = vpop.f32.mrb[0].mxu0
    %v4396 = vpop.f32.mrb[0].mxu0
    %v4397 = vadd.f32 %v4066, %v4396
    %v4398 = vpop.f32.mrb[0].mxu0
    %4399 = vmatprep.mubr.bf16.mxu0 0
    %4400 = vmatmul.mubr.bf16.gmra.mrb[0].mxu0 %v4019
    %v4401 = vpop.f32.mrb[0].mxu0
    %v4402 = vadd.f32 %v4066, %v4401
    %v4403 = vpop.f32.mrb[0].mxu0
    %v4404 = vpop.f32.mrb[0].mxu0
    %v4405 = vadd.f32 %v4066, %v4404
    %v4406 = vpop.f32.mrb[0].mxu0
    %4407 = vdwg.mxu0
    %v4408 = vpack.c.bf16 %v4237, %v4233
    %v4409 = vpack.c.bf16 %v4239, %v4235
    %v4410 = vpack.c.bf16 %v4349, %v4346
    %v4411 = vpack.c.bf16 %v4247, %v4243
    %v4412 = vpack.c.bf16 %v4249, %v4245
    %v4413 = vpack.c.bf16 %v4357, %v4354
    %v4414 = vpack.c.bf16 %v4257, %v4253
    %v4415 = vpack.c.bf16 %v4259, %v4255
    %v4416 = vpack.c.bf16 %v4365, %v4362
    %v4417 = vpack.c.bf16 %v4267, %v4263
    %v4418 = vpack.c.bf16 %v4269, %v4265
    %v4419 = vpack.c.bf16 %v4373, %v4370
    %v4420 = vpack.c.bf16 %v4277, %v4273
    %v4421 = vpack.c.bf16 %v4279, %v4275
    %v4422 = vpack.c.bf16 %v4381, %v4378
    %v4423 = vpack.c.bf16 %v4287, %v4283
    %v4424 = vpack.c.bf16 %v4289, %v4285
    %v4425 = vpack.c.bf16 %v4389, %v4386
    %v4426 = vpack.c.bf16 %v4297, %v4293
    %v4427 = vpack.c.bf16 %v4299, %v4295
    %v4428 = vpack.c.bf16 %v4397, %v4394
    %v4429 = vpack.c.bf16 %v4307, %v4303
    %v4430 = vpack.c.bf16 %v4309, %v4305
    %v4431 = vpack.c.bf16 %v4405, %v4402
    %v4433 = vsel %vm970, %v4408, 0
    %v4436 = vsel %vm970, %v4411, 0
    %v4439 = vsel %vm970, %v4414, 0
    %v4442 = vsel %vm970, %v4417, 0
    %v4445 = vsel %vm970, %v4409, 0
    %v4448 = vsel %vm970, %v4412, 0
    %v4451 = vsel %vm970, %v4415, 0
    %v4454 = vsel %vm970, %v4418, 0
    %4456 = vmatprep.subr.bf16.mxu0 0
    %4457 = vmatpush1.bf16.xpose.msra.mxu0 %v4445
    %4458 = vmatprep.subr.bf16.mxu0 0
    %4459 = vmatpush1.bf16.xpose.msra.mxu0 %v4448
    %4460 = vmatprep.subr.bf16.mxu0 0
    %4461 = vmatpush1.bf16.xpose.msra.mxu0 %v4451
    %4462 = vmatprep.subr.bf16.mxu0 0
    %4463 = vmatpush1.bf16.xpose.msra.mxu0 %v4454
    %4464 = vmatprep.subr.bf16.mxu0 0
    %4465 = vmatpush1.bf16.xpose.msra.mxu0 0
    %4466 = vmatprep.subr.bf16.mxu0 0
    %4467 = vmatpush1.bf16.xpose.msra.mxu0 0
    %4468 = vmatprep.subr.bf16.mxu0 0
    %4469 = vmatpush1.bf16.xpose.msra.mxu0 0
    %4470 = vmatprep.subr.bf16.mxu0 0
    %4471 = vmatpush1.bf16.xpose.msra.mxu0 0
    %4472 = vmatprep.subr.bf16.mxu0 0
    %4473 = vmatpush1.bf16.xpose.msra.mxu0 0
    %4474 = vmatprep.subr.bf16.mxu0 0
    %4475 = vmatpush1.bf16.xpose.msra.mxu0 0
    %4476 = vmatprep.subr.bf16.mxu0 0
    %4477 = vmatpush1.bf16.xpose.msra.mxu0 0
    %4478 = vmatprep.subr.bf16.mxu0 0
    %4479 = vmatpush1.bf16.xpose.msra.mxu0 0
    %4480 = vmatprep.subr.bf16.mxu0 0
    %4481 = vmatpush1.bf16.xpose.msra.mxu0 0
    %4482 = vmatprep.subr.bf16.mxu0 0
    %4483 = vmatpush1.bf16.xpose.msra.mxu0 0
    %4484 = vmatprep.subr.bf16.mxu0 0
    %4485 = vmatpush1.bf16.xpose.msra.mxu0 0
    %4486 = vmatprep.subr.bf16.mxu0 0
    %4487 = vmatpush1.bf16.xpose.msra.mxu0 0
    %4488 = vmatprep.mubr.bf16.mxu0 0
    %4489 = vmatmul.mubr.bf16.gmra.mrb[0].mxu0 %v4433
    %v4490 = vpop.f32.mrb[0].mxu0
    %v4491 = vadd.f32 0.0, %v4490
    %v4492 = vpop.f32.mrb[0].mxu0
    %v4493 = vpop.f32.mrb[0].mxu0
    %v4494 = vadd.f32 0.0, %v4493
    %v4495 = vpop.f32.mrb[0].mxu0
    %4496 = vmatprep.mubr.bf16.mxu0 0
    %4497 = vmatmul.mubr.bf16.gmra.mrb[0].mxu0 %v4436
    %v4498 = vpop.f32.mrb[0].mxu0
    %v4499 = vadd.f32 0.0, %v4498
    %v4500 = vpop.f32.mrb[0].mxu0
    %v4501 = vpop.f32.mrb[0].mxu0
    %v4502 = vadd.f32 0.0, %v4501
    %v4503 = vpop.f32.mrb[0].mxu0
    %4504 = vmatprep.mubr.bf16.mxu0 0
    %4505 = vmatmul.mubr.bf16.gmra.mrb[0].mxu0 %v4439
    %v4506 = vpop.f32.mrb[0].mxu0
    %v4507 = vadd.f32 0.0, %v4506
    %v4508 = vpop.f32.mrb[0].mxu0
    %v4509 = vpop.f32.mrb[0].mxu0
    %v4510 = vadd.f32 0.0, %v4509
    %v4511 = vpop.f32.mrb[0].mxu0
    %4512 = vmatprep.mubr.bf16.mxu0 0
    %4513 = vmatmul.mubr.bf16.gmra.mrb[0].mxu0 %v4442
    %v4514 = vpop.f32.mrb[0].mxu0
    %v4515 = vadd.f32 0.0, %v4514
    %v4516 = vpop.f32.mrb[0].mxu0
    %v4517 = vpop.f32.mrb[0].mxu0
    %v4518 = vadd.f32 0.0, %v4517
    %v4519 = vpop.f32.mrb[0].mxu0
    %4520 = vdwg.mxu0
    %v4521 = vmul.f32 %v4491, 0.17677669
    %v4522 = vmul.f32 %v4494, 0.17677669
    %v4523 = vmul.f32 %v4499, 0.17677669
    %v4524 = vmul.f32 %v4502, 0.17677669
    %v4525 = vmul.f32 %v4507, 0.17677669
    %v4526 = vmul.f32 %v4510, 0.17677669
    %v4527 = vmul.f32 %v4515, 0.17677669
    %v4528 = vmul.f32 %v4518, 0.17677669
    %v4529 = vsel %vm143, %v4521, -inf
    %4530 = vmax.xlane.f32.xlu0 %v4529
    %v4531 = vpop.xlane.xlu0 %4530
    %v4532 = vsel %vm143, %v4522, -inf
    %4533 = vmax.xlane.f32.xlu0 %v4532
    %v4534 = vpop.xlane.xlu0 %4533
    %v4535 = vsel %vm143, %v4523, -inf
    %4536 = vmax.xlane.f32.xlu0 %v4535
    %v4537 = vpop.xlane.xlu0 %4536
    %v4538 = vsel %vm143, %v4524, -inf
    %4539 = vmax.xlane.f32.xlu0 %v4538
    %v4540 = vpop.xlane.xlu0 %4539
    %v4541 = vsel %vm143, %v4525, -inf
    %4542 = vmax.xlane.f32.xlu0 %v4541
    %v4543 = vpop.xlane.xlu0 %4542
    %v4544 = vsel %vm143, %v4526, -inf
    %4545 = vmax.xlane.f32.xlu0 %v4544
    %v4546 = vpop.xlane.xlu0 %4545
    %v4547 = vsel %vm143, %v4527, -inf
    %4548 = vmax.xlane.f32.xlu0 %v4547
    %v4549 = vpop.xlane.xlu0 %4548
    %v4550 = vsel %vm143, %v4528, -inf
    %4551 = vmax.xlane.f32.xlu0 %v4550
    %v4552 = vpop.xlane.xlu0 %4551
    %v4553 = vsub.f32 %v4521, %v4531
    %v4554 = vsub.f32 %v4522, %v4534
    %v4555 = vsub.f32 %v4523, %v4537
    %v4556 = vsub.f32 %v4524, %v4540
    %v4557 = vsub.f32 %v4525, %v4543
    %v4558 = vsub.f32 %v4526, %v4546
    %v4559 = vsub.f32 %v4527, %v4549
    %v4560 = vsub.f32 %v4528, %v4552
    %v4561 = vmul.f32 %v4553, 1.442695
    %v4562 = vpow.pop %v4561
    %v4563 = vmul.f32 %v4554, 1.442695
    %v4564 = vpow.pop %v4563
    %v4565 = vmul.f32 %v4555, 1.442695
    %v4566 = vpow.pop %v4565
    %v4567 = vmul.f32 %v4556, 1.442695
    %v4568 = vpow.pop %v4567
    %v4569 = vmul.f32 %v4557, 1.442695
    %v4570 = vpow.pop %v4569
    %v4571 = vmul.f32 %v4558, 1.442695
    %v4572 = vpow.pop %v4571
    %v4573 = vmul.f32 %v4559, 1.442695
    %v4574 = vpow.pop %v4573
    %v4575 = vmul.f32 %v4560, 1.442695
    %v4576 = vpow.pop %v4575
    %v4577 = vsel %vm143, %v4562, 0.0
    %4578 = vadd.xlane.f32.xlu0 %v4577
    %v4579 = vpop.xlane.xlu0 %4578
    %v4580 = vsel %vm143, %v4564, 0.0
    %4581 = vadd.xlane.f32.xlu0 %v4580
    %v4582 = vpop.xlane.xlu0 %4581
    %v4583 = vsel %vm143, %v4566, 0.0
    %4584 = vadd.xlane.f32.xlu0 %v4583
    %v4585 = vpop.xlane.xlu0 %4584
    %v4586 = vsel %vm143, %v4568, 0.0
    %4587 = vadd.xlane.f32.xlu0 %v4586
    %v4588 = vpop.xlane.xlu0 %4587
    %v4589 = vsel %vm143, %v4570, 0.0
    %4590 = vadd.xlane.f32.xlu0 %v4589
    %v4591 = vpop.xlane.xlu0 %4590
    %v4592 = vsel %vm143, %v4572, 0.0
    %4593 = vadd.xlane.f32.xlu0 %v4592
    %v4594 = vpop.xlane.xlu0 %4593
    %v4595 = vsel %vm143, %v4574, 0.0
    %4596 = vadd.xlane.f32.xlu0 %v4595
    %v4597 = vpop.xlane.xlu0 %4596
    %v4598 = vsel %vm143, %v4576, 0.0
    %4599 = vadd.xlane.f32.xlu0 %v4598
    %v4600 = vpop.xlane.xlu0 %4599
    %v4601 = vrcp.pop %v4579
    %v4602 = vrcp.pop %v4582
    %v4603 = vrcp.pop %v4585
    %v4604 = vrcp.pop %v4588
    %v4605 = vrcp.pop %v4591
    %v4606 = vrcp.pop %v4594
    %v4607 = vrcp.pop %v4597
    %v4608 = vrcp.pop %v4600
    %v4609 = vmul.f32 %v4562, %v4601
    %v4610 = vmul.f32 %v4564, %v4602
    %v4611 = vmul.f32 %v4566, %v4603
    %v4612 = vmul.f32 %v4568, %v4604
    %v4613 = vmul.f32 %v4570, %v4605
    %v4614 = vmul.f32 %v4572, %v4606
    %v4615 = vmul.f32 %v4574, %v4607
    %v4616 = vmul.f32 %v4576, %v4608
    %v4617 = vpack.c.bf16 %v4610, %v4609
    %v4618 = vpack.c.bf16 %v4612, %v4611
    %v4619 = vpack.c.bf16 %v4614, %v4613
    %v4620 = vpack.c.bf16 %v4616, %v4615
    %v4622 = vsel %vm143, %v4617, 0
    %v4625 = vsel %vm143, %v4618, 0
    %v4628 = vsel %vm143, %v4619, 0
    %v4631 = vsel %vm143, %v4620, 0
    %4633 = vmatprep.subr.bf16.mxu0 0
    %4634 = vmatpush1.bf16.msra.mxu0 %v4410
    %4635 = vmatprep.subr.bf16.mxu0 0
    %4636 = vmatpush1.bf16.msra.mxu0 %v4413
    %4637 = vmatprep.subr.bf16.mxu0 0
    %4638 = vmatpush1.bf16.msra.mxu0 %v4416
    %4639 = vmatprep.subr.bf16.mxu0 0
    %4640 = vmatpush1.bf16.msra.mxu0 %v4419
    %4641 = vmatprep.subr.bf16.mxu0 0
    %4642 = vmatpush1.bf16.msra.mxu0 0
    %4643 = vmatprep.subr.bf16.mxu0 0
    %4644 = vmatpush1.bf16.msra.mxu0 0
    %4645 = vmatprep.subr.bf16.mxu0 0
    %4646 = vmatpush1.bf16.msra.mxu0 0
    %4647 = vmatprep.subr.bf16.mxu0 0
    %4648 = vmatpush1.bf16.msra.mxu0 0
    %4649 = vmatprep.subr.bf16.mxu0 0
    %4650 = vmatpush1.bf16.msra.mxu0 0
    %4651 = vmatprep.subr.bf16.mxu0 0
    %4652 = vmatpush1.bf16.msra.mxu0 0
    %4653 = vmatprep.subr.bf16.mxu0 0
    %4654 = vmatpush1.bf16.msra.mxu0 0
    %4655 = vmatprep.subr.bf16.mxu0 0
    %4656 = vmatpush1.bf16.msra.mxu0 0
    %4657 = vmatprep.subr.bf16.mxu0 0
    %4658 = vmatpush1.bf16.msra.mxu0 0
    %4659 = vmatprep.subr.bf16.mxu0 0
    %4660 = vmatpush1.bf16.msra.mxu0 0
    %4661 = vmatprep.subr.bf16.mxu0 0
    %4662 = vmatpush1.bf16.msra.mxu0 0
    %4663 = vmatprep.subr.bf16.mxu0 0
    %4664 = vmatpush1.bf16.msra.mxu0 0
    %4665 = vmatprep.mubr.bf16.mxu0 0
    %4666 = vmatmul.mubr.bf16.gmra.mrb[0].mxu0 %v4622
    %v4667 = vpop.f32.mrb[0].mxu0
    %v4668 = vadd.f32 0.0, %v4667
    %v4669 = vpop.f32.mrb[0].mxu0
    %v4670 = vpop.f32.mrb[0].mxu0
    %v4671 = vadd.f32 0.0, %v4670
    %v4672 = vpop.f32.mrb[0].mxu0
    %4673 = vmatprep.mubr.bf16.mxu0 0
    %4674 = vmatmul.mubr.bf16.gmra.mrb[0].mxu0 %v4625
    %v4675 = vpop.f32.mrb[0].mxu0
    %v4676 = vadd.f32 0.0, %v4675
    %v4677 = vpop.f32.mrb[0].mxu0
    %v4678 = vpop.f32.mrb[0].mxu0
    %v4679 = vadd.f32 0.0, %v4678
    %v4680 = vpop.f32.mrb[0].mxu0
    %4681 = vmatprep.mubr.bf16.mxu0 0
    %4682 = vmatmul.mubr.bf16.gmra.mrb[0].mxu0 %v4628
    %v4683 = vpop.f32.mrb[0].mxu0
    %v4684 = vadd.f32 0.0, %v4683
    %v4685 = vpop.f32.mrb[0].mxu0
    %v4686 = vpop.f32.mrb[0].mxu0
    %v4687 = vadd.f32 0.0, %v4686
    %v4688 = vpop.f32.mrb[0].mxu0
    %4689 = vmatprep.mubr.bf16.mxu0 0
    %4690 = vmatmul.mubr.bf16.gmra.mrb[0].mxu0 %v4631
    %v4691 = vpop.f32.mrb[0].mxu0
    %v4692 = vadd.f32 0.0, %v4691
    %v4693 = vpop.f32.mrb[0].mxu0
    %v4694 = vpop.f32.mrb[0].mxu0
    %v4695 = vadd.f32 0.0, %v4694
    %v4696 = vpop.f32.mrb[0].mxu0
    %4697 = vdwg.mxu0
    %v4698 = vpack.c.bf16 %v4671, %v4668
    %v4699 = vpack.c.bf16 %v4679, %v4676
    %v4700 = vpack.c.bf16 %v4687, %v4684
    %v4701 = vpack.c.bf16 %v4695, %v4692
    %4706 = vrot.lane.b32.xlu0 %v4408, 96
    %v4707 = vpop.permute.xlu0 %4706
    %4708 = vrot.lane.b32.xlu0 %v4411, 96
    %v4709 = vpop.permute.xlu0 %4708
    %4710 = vrot.lane.b32.xlu0 %v4414, 96
    %v4711 = vpop.permute.xlu0 %4710
    %4712 = vrot.lane.b32.xlu0 %v4417, 96
    %v4713 = vpop.permute.xlu0 %4712
    %4718 = vrot.lane.b32.xlu0 %v4409, 96
    %v4719 = vpop.permute.xlu0 %4718
    %4720 = vrot.lane.b32.xlu0 %v4412, 96
    %v4721 = vpop.permute.xlu0 %4720
    %4722 = vrot.lane.b32.xlu0 %v4415, 96
    %v4723 = vpop.permute.xlu0 %4722
    %4724 = vrot.lane.b32.xlu0 %v4418, 96
    %v4725 = vpop.permute.xlu0 %4724
    %v4727 = vsel %vm970, %v4707, 0
    %v4730 = vsel %vm970, %v4709, 0
    %v4733 = vsel %vm970, %v4711, 0
    %v4736 = vsel %vm970, %v4713, 0
    %v4739 = vsel %vm970, %v4719, 0
    %v4742 = vsel %vm970, %v4721, 0
    %v4745 = vsel %vm970, %v4723, 0
    %v4748 = vsel %vm970, %v4725, 0
    %4750 = vmatprep.subr.bf16.mxu0 0
    %4751 = vmatpush1.bf16.xpose.msra.mxu0 %v4739
    %4752 = vmatprep.subr.bf16.mxu0 0
    %4753 = vmatpush1.bf16.xpose.msra.mxu0 %v4742
    %4754 = vmatprep.subr.bf16.mxu0 0
    %4755 = vmatpush1.bf16.xpose.msra.mxu0 %v4745
    %4756 = vmatprep.subr.bf16.mxu0 0
    %4757 = vmatpush1.bf16.xpose.msra.mxu0 %v4748
    %4758 = vmatprep.subr.bf16.mxu0 0
    %4759 = vmatpush1.bf16.xpose.msra.mxu0 0
    %4760 = vmatprep.subr.bf16.mxu0 0
    %4761 = vmatpush1.bf16.xpose.msra.mxu0 0
    %4762 = vmatprep.subr.bf16.mxu0 0
    %4763 = vmatpush1.bf16.xpose.msra.mxu0 0
    %4764 = vmatprep.subr.bf16.mxu0 0
    %4765 = vmatpush1.bf16.xpose.msra.mxu0 0
    %4766 = vmatprep.subr.bf16.mxu0 0
    %4767 = vmatpush1.bf16.xpose.msra.mxu0 0
    %4768 = vmatprep.subr.bf16.mxu0 0
    %4769 = vmatpush1.bf16.xpose.msra.mxu0 0
    %4770 = vmatprep.subr.bf16.mxu0 0
    %4771 = vmatpush1.bf16.xpose.msra.mxu0 0
    %4772 = vmatprep.subr.bf16.mxu0 0
    %4773 = vmatpush1.bf16.xpose.msra.mxu0 0
    %4774 = vmatprep.subr.bf16.mxu0 0
    %4775 = vmatpush1.bf16.xpose.msra.mxu0 0
    %4776 = vmatprep.subr.bf16.mxu0 0
    %4777 = vmatpush1.bf16.xpose.msra.mxu0 0
    %4778 = vmatprep.subr.bf16.mxu0 0
    %4779 = vmatpush1.bf16.xpose.msra.mxu0 0
    %4780 = vmatprep.subr.bf16.mxu0 0
    %4781 = vmatpush1.bf16.xpose.msra.mxu0 0
    %4782 = vmatprep.mubr.bf16.mxu0 0
    %4783 = vmatmul.mubr.bf16.gmra.mrb[0].mxu0 %v4727
    %v4784 = vpop.f32.mrb[0].mxu0
    %v4785 = vadd.f32 0.0, %v4784
    %v4786 = vpop.f32.mrb[0].mxu0
    %v4787 = vpop.f32.mrb[0].mxu0
    %v4788 = vadd.f32 0.0, %v4787
    %v4789 = vpop.f32.mrb[0].mxu0
    %4790 = vmatprep.mubr.bf16.mxu0 0
    %4791 = vmatmul.mubr.bf16.gmra.mrb[0].mxu0 %v4730
    %v4792 = vpop.f32.mrb[0].mxu0
    %v4793 = vadd.f32 0.0, %v4792
    %v4794 = vpop.f32.mrb[0].mxu0
    %v4795 = vpop.f32.mrb[0].mxu0
    %v4796 = vadd.f32 0.0, %v4795
    %v4797 = vpop.f32.mrb[0].mxu0
    %4798 = vmatprep.mubr.bf16.mxu0 0
    %4799 = vmatmul.mubr.bf16.gmra.mrb[0].mxu0 %v4733
    %v4800 = vpop.f32.mrb[0].mxu0
    %v4801 = vadd.f32 0.0, %v4800
    %v4802 = vpop.f32.mrb[0].mxu0
    %v4803 = vpop.f32.mrb[0].mxu0
    %v4804 = vadd.f32 0.0, %v4803
    %v4805 = vpop.f32.mrb[0].mxu0
    %4806 = vmatprep.mubr.bf16.mxu0 0
    %4807 = vmatmul.mubr.bf16.gmra.mrb[0].mxu0 %v4736
    %v4808 = vpop.f32.mrb[0].mxu0
    %v4809 = vadd.f32 0.0, %v4808
    %v4810 = vpop.f32.mrb[0].mxu0
    %v4811 = vpop.f32.mrb[0].mxu0
    %v4812 = vadd.f32 0.0, %v4811
    %v4813 = vpop.f32.mrb[0].mxu0
    %4814 = vdwg.mxu0
    %v4815 = vmul.f32 %v4785, 0.17677669
    %v4816 = vmul.f32 %v4788, 0.17677669
    %v4817 = vmul.f32 %v4793, 0.17677669
    %v4818 = vmul.f32 %v4796, 0.17677669
    %v4819 = vmul.f32 %v4801, 0.17677669
    %v4820 = vmul.f32 %v4804, 0.17677669
    %v4821 = vmul.f32 %v4809, 0.17677669
    %v4822 = vmul.f32 %v4812, 0.17677669
    %v4823 = vsel %vm143, %v4815, -inf
    %4824 = vmax.xlane.f32.xlu0 %v4823
    %v4825 = vpop.xlane.xlu0 %4824
    %v4826 = vsel %vm143, %v4816, -inf
    %4827 = vmax.xlane.f32.xlu0 %v4826
    %v4828 = vpop.xlane.xlu0 %4827
    %v4829 = vsel %vm143, %v4817, -inf
    %4830 = vmax.xlane.f32.xlu0 %v4829
    %v4831 = vpop.xlane.xlu0 %4830
    %v4832 = vsel %vm143, %v4818, -inf
    %4833 = vmax.xlane.f32.xlu0 %v4832
    %v4834 = vpop.xlane.xlu0 %4833
    %v4835 = vsel %vm143, %v4819, -inf
    %4836 = vmax.xlane.f32.xlu0 %v4835
    %v4837 = vpop.xlane.xlu0 %4836
    %v4838 = vsel %vm143, %v4820, -inf
    %4839 = vmax.xlane.f32.xlu0 %v4838
    %v4840 = vpop.xlane.xlu0 %4839
    %v4841 = vsel %vm143, %v4821, -inf
    %4842 = vmax.xlane.f32.xlu0 %v4841
    %v4843 = vpop.xlane.xlu0 %4842
    %v4844 = vsel %vm143, %v4822, -inf
    %4845 = vmax.xlane.f32.xlu0 %v4844
    %v4846 = vpop.xlane.xlu0 %4845
    %v4847 = vsub.f32 %v4815, %v4825
    %v4848 = vsub.f32 %v4816, %v4828
    %v4849 = vsub.f32 %v4817, %v4831
    %v4850 = vsub.f32 %v4818, %v4834
    %v4851 = vsub.f32 %v4819, %v4837
    %v4852 = vsub.f32 %v4820, %v4840
    %v4853 = vsub.f32 %v4821, %v4843
    %v4854 = vsub.f32 %v4822, %v4846
    %v4855 = vmul.f32 %v4847, 1.442695
    %v4856 = vpow.pop %v4855
    %v4857 = vmul.f32 %v4848, 1.442695
    %v4858 = vpow.pop %v4857
    %v4859 = vmul.f32 %v4849, 1.442695
    %v4860 = vpow.pop %v4859
    %v4861 = vmul.f32 %v4850, 1.442695
    %v4862 = vpow.pop %v4861
    %v4863 = vmul.f32 %v4851, 1.442695
    %v4864 = vpow.pop %v4863
    %v4865 = vmul.f32 %v4852, 1.442695
    %v4866 = vpow.pop %v4865
    %v4867 = vmul.f32 %v4853, 1.442695
    %v4868 = vpow.pop %v4867
    %v4869 = vmul.f32 %v4854, 1.442695
    %v4870 = vpow.pop %v4869
    %v4871 = vsel %vm143, %v4856, 0.0
    %4872 = vadd.xlane.f32.xlu0 %v4871
    %v4873 = vpop.xlane.xlu0 %4872
    %v4874 = vsel %vm143, %v4858, 0.0
    %4875 = vadd.xlane.f32.xlu0 %v4874
    %v4876 = vpop.xlane.xlu0 %4875
    %v4877 = vsel %vm143, %v4860, 0.0
    %4878 = vadd.xlane.f32.xlu0 %v4877
    %v4879 = vpop.xlane.xlu0 %4878
    %v4880 = vsel %vm143, %v4862, 0.0
    %4881 = vadd.xlane.f32.xlu0 %v4880
    %v4882 = vpop.xlane.xlu0 %4881
    %v4883 = vsel %vm143, %v4864, 0.0
    %4884 = vadd.xlane.f32.xlu0 %v4883
    %v4885 = vpop.xlane.xlu0 %4884
    %v4886 = vsel %vm143, %v4866, 0.0
    %4887 = vadd.xlane.f32.xlu0 %v4886
    %v4888 = vpop.xlane.xlu0 %4887
    %v4889 = vsel %vm143, %v4868, 0.0
    %4890 = vadd.xlane.f32.xlu0 %v4889
    %v4891 = vpop.xlane.xlu0 %4890
    %v4892 = vsel %vm143, %v4870, 0.0
    %4893 = vadd.xlane.f32.xlu0 %v4892
    %v4894 = vpop.xlane.xlu0 %4893
    %v4895 = vrcp.pop %v4873
    %v4896 = vrcp.pop %v4876
    %v4897 = vrcp.pop %v4879
    %v4898 = vrcp.pop %v4882
    %v4899 = vrcp.pop %v4885
    %v4900 = vrcp.pop %v4888
    %v4901 = vrcp.pop %v4891
    %v4902 = vrcp.pop %v4894
    %v4903 = vmul.f32 %v4856, %v4895
    %v4904 = vmul.f32 %v4858, %v4896
    %v4905 = vmul.f32 %v4860, %v4897
    %v4906 = vmul.f32 %v4862, %v4898
    %v4907 = vmul.f32 %v4864, %v4899
    %v4908 = vmul.f32 %v4866, %v4900
    %v4909 = vmul.f32 %v4868, %v4901
    %v4910 = vmul.f32 %v4870, %v4902
    %v4911 = vpack.c.bf16 %v4904, %v4903
    %v4912 = vpack.c.bf16 %v4906, %v4905
    %v4913 = vpack.c.bf16 %v4908, %v4907
    %v4914 = vpack.c.bf16 %v4910, %v4909
    %4919 = vrot.lane.b32.xlu0 %v4410, 96
    %v4920 = vpop.permute.xlu0 %4919
    %4921 = vrot.lane.b32.xlu0 %v4413, 96
    %v4922 = vpop.permute.xlu0 %4921
    %4923 = vrot.lane.b32.xlu0 %v4416, 96
    %v4924 = vpop.permute.xlu0 %4923
    %4925 = vrot.lane.b32.xlu0 %v4419, 96
    %v4926 = vpop.permute.xlu0 %4925
    %v4932 = vsel %vm143, %v4911, 0
    %v4935 = vsel %vm143, %v4912, 0
    %v4938 = vsel %vm143, %v4913, 0
    %v4941 = vsel %vm143, %v4914, 0
    %4943 = vmatprep.subr.bf16.mxu0 0
    %4944 = vmatpush1.bf16.msra.mxu0 %v4920
    %4945 = vmatprep.subr.bf16.mxu0 0
    %4946 = vmatpush1.bf16.msra.mxu0 %v4922
    %4947 = vmatprep.subr.bf16.mxu0 0
    %4948 = vmatpush1.bf16.msra.mxu0 %v4924
    %4949 = vmatprep.subr.bf16.mxu0 0
    %4950 = vmatpush1.bf16.msra.mxu0 %v4926
    %4951 = vmatprep.subr.bf16.mxu0 0
    %4952 = vmatpush1.bf16.msra.mxu0 0
    %4953 = vmatprep.subr.bf16.mxu0 0
    %4954 = vmatpush1.bf16.msra.mxu0 0
    %4955 = vmatprep.subr.bf16.mxu0 0
    %4956 = vmatpush1.bf16.msra.mxu0 0
    %4957 = vmatprep.subr.bf16.mxu0 0
    %4958 = vmatpush1.bf16.msra.mxu0 0
    %4959 = vmatprep.subr.bf16.mxu0 0
    %4960 = vmatpush1.bf16.msra.mxu0 0
    %4961 = vmatprep.subr.bf16.mxu0 0
    %4962 = vmatpush1.bf16.msra.mxu0 0
    %4963 = vmatprep.subr.bf16.mxu0 0
    %4964 = vmatpush1.bf16.msra.mxu0 0
    %4965 = vmatprep.subr.bf16.mxu0 0
    %4966 = vmatpush1.bf16.msra.mxu0 0
    %4967 = vmatprep.subr.bf16.mxu0 0
    %4968 = vmatpush1.bf16.msra.mxu0 0
    %4969 = vmatprep.subr.bf16.mxu0 0
    %4970 = vmatpush1.bf16.msra.mxu0 0
    %4971 = vmatprep.subr.bf16.mxu0 0
    %4972 = vmatpush1.bf16.msra.mxu0 0
    %4973 = vmatprep.subr.bf16.mxu0 0
    %4974 = vmatpush1.bf16.msra.mxu0 0
    %4975 = vmatprep.mubr.bf16.mxu0 0
    %4976 = vmatmul.mubr.bf16.gmra.mrb[0].mxu0 %v4932
    %v4977 = vpop.f32.mrb[0].mxu0
    %v4978 = vadd.f32 0.0, %v4977
    %v4979 = vpop.f32.mrb[0].mxu0
    %v4980 = vpop.f32.mrb[0].mxu0
    %v4981 = vadd.f32 0.0, %v4980
    %v4982 = vpop.f32.mrb[0].mxu0
    %4983 = vmatprep.mubr.bf16.mxu0 0
    %4984 = vmatmul.mubr.bf16.gmra.mrb[0].mxu0 %v4935
    %v4985 = vpop.f32.mrb[0].mxu0
    %v4986 = vadd.f32 0.0, %v4985
    %v4987 = vpop.f32.mrb[0].mxu0
    %v4988 = vpop.f32.mrb[0].mxu0
    %v4989 = vadd.f32 0.0, %v4988
    %v4990 = vpop.f32.mrb[0].mxu0
    %4991 = vmatprep.mubr.bf16.mxu0 0
    %4992 = vmatmul.mubr.bf16.gmra.mrb[0].mxu0 %v4938
    %v4993 = vpop.f32.mrb[0].mxu0
    %v4994 = vadd.f32 0.0, %v4993
    %v4995 = vpop.f32.mrb[0].mxu0
    %v4996 = vpop.f32.mrb[0].mxu0
    %v4997 = vadd.f32 0.0, %v4996
    %v4998 = vpop.f32.mrb[0].mxu0
    %4999 = vmatprep.mubr.bf16.mxu0 0
    %5000 = vmatmul.mubr.bf16.gmra.mrb[0].mxu0 %v4941
    %v5001 = vpop.f32.mrb[0].mxu0
    %v5002 = vadd.f32 0.0, %v5001
    %v5003 = vpop.f32.mrb[0].mxu0
    %v5004 = vpop.f32.mrb[0].mxu0
    %v5005 = vadd.f32 0.0, %v5004
    %v5006 = vpop.f32.mrb[0].mxu0
    %5007 = vdwg.mxu0
    %v5008 = vpack.c.bf16 %v4981, %v4978
    %v5009 = vpack.c.bf16 %v4989, %v4986
    %v5010 = vpack.c.bf16 %v4997, %v4994
    %v5011 = vpack.c.bf16 %v5005, %v5002
    %5012 = vrot.lane.b32.xlu0 %v4408, 64
    %v5013 = vpop.permute.xlu0 %5012
    %5014 = vrot.lane.b32.xlu0 %v4411, 64
    %v5015 = vpop.permute.xlu0 %5014
    %5016 = vrot.lane.b32.xlu0 %v4414, 64
    %v5017 = vpop.permute.xlu0 %5016
    %5018 = vrot.lane.b32.xlu0 %v4417, 64
    %v5019 = vpop.permute.xlu0 %5018
    %5020 = vrot.lane.b32.xlu0 %v4409, 64
    %v5021 = vpop.permute.xlu0 %5020
    %5022 = vrot.lane.b32.xlu0 %v4412, 64
    %v5023 = vpop.permute.xlu0 %5022
    %5024 = vrot.lane.b32.xlu0 %v4415, 64
    %v5025 = vpop.permute.xlu0 %5024
    %5026 = vrot.lane.b32.xlu0 %v4418, 64
    %v5027 = vpop.permute.xlu0 %5026
    %v5029 = vsel %vm970, %v5013, 0
    %v5032 = vsel %vm970, %v5015, 0
    %v5035 = vsel %vm970, %v5017, 0
    %v5038 = vsel %vm970, %v5019, 0
    %v5041 = vsel %vm970, %v5021, 0
    %v5044 = vsel %vm970, %v5023, 0
    %v5047 = vsel %vm970, %v5025, 0
    %v5050 = vsel %vm970, %v5027, 0
    %5052 = vmatprep.subr.bf16.mxu0 0
    %5053 = vmatpush1.bf16.xpose.msra.mxu0 %v5041
    %5054 = vmatprep.subr.bf16.mxu0 0
    %5055 = vmatpush1.bf16.xpose.msra.mxu0 %v5044
    %5056 = vmatprep.subr.bf16.mxu0 0
    %5057 = vmatpush1.bf16.xpose.msra.mxu0 %v5047
    %5058 = vmatprep.subr.bf16.mxu0 0
    %5059 = vmatpush1.bf16.xpose.msra.mxu0 %v5050
    %5060 = vmatprep.subr.bf16.mxu0 0
    %5061 = vmatpush1.bf16.xpose.msra.mxu0 0
    %5062 = vmatprep.subr.bf16.mxu0 0
    %5063 = vmatpush1.bf16.xpose.msra.mxu0 0
    %5064 = vmatprep.subr.bf16.mxu0 0
    %5065 = vmatpush1.bf16.xpose.msra.mxu0 0
    %5066 = vmatprep.subr.bf16.mxu0 0
    %5067 = vmatpush1.bf16.xpose.msra.mxu0 0
    %5068 = vmatprep.subr.bf16.mxu0 0
    %5069 = vmatpush1.bf16.xpose.msra.mxu0 0
    %5070 = vmatprep.subr.bf16.mxu0 0
    %5071 = vmatpush1.bf16.xpose.msra.mxu0 0
    %5072 = vmatprep.subr.bf16.mxu0 0
    %5073 = vmatpush1.bf16.xpose.msra.mxu0 0
    %5074 = vmatprep.subr.bf16.mxu0 0
    %5075 = vmatpush1.bf16.xpose.msra.mxu0 0
    %5076 = vmatprep.subr.bf16.mxu0 0
    %5077 = vmatpush1.bf16.xpose.msra.mxu0 0
    %5078 = vmatprep.subr.bf16.mxu0 0
    %5079 = vmatpush1.bf16.xpose.msra.mxu0 0
    %5080 = vmatprep.subr.bf16.mxu0 0
    %5081 = vmatpush1.bf16.xpose.msra.mxu0 0
    %5082 = vmatprep.subr.bf16.mxu0 0
    %5083 = vmatpush1.bf16.xpose.msra.mxu0 0
    %5084 = vmatprep.mubr.bf16.mxu0 0
    %5085 = vmatmul.mubr.bf16.gmra.mrb[0].mxu0 %v5029
    %v5086 = vpop.f32.mrb[0].mxu0
    %v5087 = vadd.f32 0.0, %v5086
    %v5088 = vpop.f32.mrb[0].mxu0
    %v5089 = vpop.f32.mrb[0].mxu0
    %v5090 = vadd.f32 0.0, %v5089
    %v5091 = vpop.f32.mrb[0].mxu0
    %5092 = vmatprep.mubr.bf16.mxu0 0
    %5093 = vmatmul.mubr.bf16.gmra.mrb[0].mxu0 %v5032
    %v5094 = vpop.f32.mrb[0].mxu0
    %v5095 = vadd.f32 0.0, %v5094
    %v5096 = vpop.f32.mrb[0].mxu0
    %v5097 = vpop.f32.mrb[0].mxu0
    %v5098 = vadd.f32 0.0, %v5097
    %v5099 = vpop.f32.mrb[0].mxu0
    %5100 = vmatprep.mubr.bf16.mxu0 0
    %5101 = vmatmul.mubr.bf16.gmra.mrb[0].mxu0 %v5035
    %v5102 = vpop.f32.mrb[0].mxu0
    %v5103 = vadd.f32 0.0, %v5102
    %v5104 = vpop.f32.mrb[0].mxu0
    %v5105 = vpop.f32.mrb[0].mxu0
    %v5106 = vadd.f32 0.0, %v5105
    %v5107 = vpop.f32.mrb[0].mxu0
    %5108 = vmatprep.mubr.bf16.mxu0 0
    %5109 = vmatmul.mubr.bf16.gmra.mrb[0].mxu0 %v5038
    %v5110 = vpop.f32.mrb[0].mxu0
    %v5111 = vadd.f32 0.0, %v5110
    %v5112 = vpop.f32.mrb[0].mxu0
    %v5113 = vpop.f32.mrb[0].mxu0
    %v5114 = vadd.f32 0.0, %v5113
    %v5115 = vpop.f32.mrb[0].mxu0
    %5116 = vdwg.mxu0
    %v5117 = vmul.f32 %v5087, 0.17677669
    %v5118 = vmul.f32 %v5090, 0.17677669
    %v5119 = vmul.f32 %v5095, 0.17677669
    %v5120 = vmul.f32 %v5098, 0.17677669
    %v5121 = vmul.f32 %v5103, 0.17677669
    %v5122 = vmul.f32 %v5106, 0.17677669
    %v5123 = vmul.f32 %v5111, 0.17677669
    %v5124 = vmul.f32 %v5114, 0.17677669
    %v5125 = vsel %vm143, %v5117, -inf
    %5126 = vmax.xlane.f32.xlu0 %v5125
    %v5127 = vpop.xlane.xlu0 %5126
    %v5128 = vsel %vm143, %v5118, -inf
    %5129 = vmax.xlane.f32.xlu0 %v5128
    %v5130 = vpop.xlane.xlu0 %5129
    %v5131 = vsel %vm143, %v5119, -inf
    %5132 = vmax.xlane.f32.xlu0 %v5131
    %v5133 = vpop.xlane.xlu0 %5132
    %v5134 = vsel %vm143, %v5120, -inf
    %5135 = vmax.xlane.f32.xlu0 %v5134
    %v5136 = vpop.xlane.xlu0 %5135
    %v5137 = vsel %vm143, %v5121, -inf
    %5138 = vmax.xlane.f32.xlu0 %v5137
    %v5139 = vpop.xlane.xlu0 %5138
    %v5140 = vsel %vm143, %v5122, -inf
    %5141 = vmax.xlane.f32.xlu0 %v5140
    %v5142 = vpop.xlane.xlu0 %5141
    %v5143 = vsel %vm143, %v5123, -inf
    %5144 = vmax.xlane.f32.xlu0 %v5143
    %v5145 = vpop.xlane.xlu0 %5144
    %v5146 = vsel %vm143, %v5124, -inf
    %5147 = vmax.xlane.f32.xlu0 %v5146
    %v5148 = vpop.xlane.xlu0 %5147
    %v5149 = vsub.f32 %v5117, %v5127
    %v5150 = vsub.f32 %v5118, %v5130
    %v5151 = vsub.f32 %v5119, %v5133
    %v5152 = vsub.f32 %v5120, %v5136
    %v5153 = vsub.f32 %v5121, %v5139
    %v5154 = vsub.f32 %v5122, %v5142
    %v5155 = vsub.f32 %v5123, %v5145
    %v5156 = vsub.f32 %v5124, %v5148
    %v5157 = vmul.f32 %v5149, 1.442695
    %v5158 = vpow.pop %v5157
    %v5159 = vmul.f32 %v5150, 1.442695
    %v5160 = vpow.pop %v5159
    %v5161 = vmul.f32 %v5151, 1.442695
    %v5162 = vpow.pop %v5161
    %v5163 = vmul.f32 %v5152, 1.442695
    %v5164 = vpow.pop %v5163
    %v5165 = vmul.f32 %v5153, 1.442695
    %v5166 = vpow.pop %v5165
    %v5167 = vmul.f32 %v5154, 1.442695
    %v5168 = vpow.pop %v5167
    %v5169 = vmul.f32 %v5155, 1.442695
    %v5170 = vpow.pop %v5169
    %v5171 = vmul.f32 %v5156, 1.442695
    %v5172 = vpow.pop %v5171
    %v5173 = vsel %vm143, %v5158, 0.0
    %5174 = vadd.xlane.f32.xlu0 %v5173
    %v5175 = vpop.xlane.xlu0 %5174
    %v5176 = vsel %vm143, %v5160, 0.0
    %5177 = vadd.xlane.f32.xlu0 %v5176
    %v5178 = vpop.xlane.xlu0 %5177
    %v5179 = vsel %vm143, %v5162, 0.0
    %5180 = vadd.xlane.f32.xlu0 %v5179
    %v5181 = vpop.xlane.xlu0 %5180
    %v5182 = vsel %vm143, %v5164, 0.0
    %5183 = vadd.xlane.f32.xlu0 %v5182
    %v5184 = vpop.xlane.xlu0 %5183
    %v5185 = vsel %vm143, %v5166, 0.0
    %5186 = vadd.xlane.f32.xlu0 %v5185
    %v5187 = vpop.xlane.xlu0 %5186
    %v5188 = vsel %vm143, %v5168, 0.0
    %5189 = vadd.xlane.f32.xlu0 %v5188
    %v5190 = vpop.xlane.xlu0 %5189
    %v5191 = vsel %vm143, %v5170, 0.0
    %5192 = vadd.xlane.f32.xlu0 %v5191
    %v5193 = vpop.xlane.xlu0 %5192
    %v5194 = vsel %vm143, %v5172, 0.0
    %5195 = vadd.xlane.f32.xlu0 %v5194
    %v5196 = vpop.xlane.xlu0 %5195
    %v5197 = vrcp.pop %v5175
    %v5198 = vrcp.pop %v5178
    %v5199 = vrcp.pop %v5181
    %v5200 = vrcp.pop %v5184
    %v5201 = vrcp.pop %v5187
    %v5202 = vrcp.pop %v5190
    %v5203 = vrcp.pop %v5193
    %v5204 = vrcp.pop %v5196
    %v5205 = vmul.f32 %v5158, %v5197
    %v5206 = vmul.f32 %v5160, %v5198
    %v5207 = vmul.f32 %v5162, %v5199
    %v5208 = vmul.f32 %v5164, %v5200
    %v5209 = vmul.f32 %v5166, %v5201
    %v5210 = vmul.f32 %v5168, %v5202
    %v5211 = vmul.f32 %v5170, %v5203
    %v5212 = vmul.f32 %v5172, %v5204
    %v5213 = vpack.c.bf16 %v5206, %v5205
    %v5214 = vpack.c.bf16 %v5208, %v5207
    %v5215 = vpack.c.bf16 %v5210, %v5209
    %v5216 = vpack.c.bf16 %v5212, %v5211
    %5217 = vrot.lane.b32.xlu0 %v4410, 64
    %v5218 = vpop.permute.xlu0 %5217
    %5219 = vrot.lane.b32.xlu0 %v4413, 64
    %v5220 = vpop.permute.xlu0 %5219
    %5221 = vrot.lane.b32.xlu0 %v4416, 64
    %v5222 = vpop.permute.xlu0 %5221
    %5223 = vrot.lane.b32.xlu0 %v4419, 64
    %v5224 = vpop.permute.xlu0 %5223
    %v5230 = vsel %vm143, %v5213, 0
    %v5233 = vsel %vm143, %v5214, 0
    %v5236 = vsel %vm143, %v5215, 0
    %v5239 = vsel %vm143, %v5216, 0
    %5241 = vmatprep.subr.bf16.mxu0 0
    %5242 = vmatpush1.bf16.msra.mxu0 %v5218
    %5243 = vmatprep.subr.bf16.mxu0 0
    %5244 = vmatpush1.bf16.msra.mxu0 %v5220
    %5245 = vmatprep.subr.bf16.mxu0 0
    %5246 = vmatpush1.bf16.msra.mxu0 %v5222
    %5247 = vmatprep.subr.bf16.mxu0 0
    %5248 = vmatpush1.bf16.msra.mxu0 %v5224
    %5249 = vmatprep.subr.bf16.mxu0 0
    %5250 = vmatpush1.bf16.msra.mxu0 0
    %5251 = vmatprep.subr.bf16.mxu0 0
    %5252 = vmatpush1.bf16.msra.mxu0 0
    %5253 = vmatprep.subr.bf16.mxu0 0
    %5254 = vmatpush1.bf16.msra.mxu0 0
    %5255 = vmatprep.subr.bf16.mxu0 0
    %5256 = vmatpush1.bf16.msra.mxu0 0
    %5257 = vmatprep.subr.bf16.mxu0 0
    %5258 = vmatpush1.bf16.msra.mxu0 0
    %5259 = vmatprep.subr.bf16.mxu0 0
    %5260 = vmatpush1.bf16.msra.mxu0 0
    %5261 = vmatprep.subr.bf16.mxu0 0
    %5262 = vmatpush1.bf16.msra.mxu0 0
    %5263 = vmatprep.subr.bf16.mxu0 0
    %5264 = vmatpush1.bf16.msra.mxu0 0
    %5265 = vmatprep.subr.bf16.mxu0 0
    %5266 = vmatpush1.bf16.msra.mxu0 0
    %5267 = vmatprep.subr.bf16.mxu0 0
    %5268 = vmatpush1.bf16.msra.mxu0 0
    %5269 = vmatprep.subr.bf16.mxu0 0
    %5270 = vmatpush1.bf16.msra.mxu0 0
    %5271 = vmatprep.subr.bf16.mxu0 0
    %5272 = vmatpush1.bf16.msra.mxu0 0
    %5273 = vmatprep.mubr.bf16.mxu0 0
    %5274 = vmatmul.mubr.bf16.gmra.mrb[0].mxu0 %v5230
    %v5275 = vpop.f32.mrb[0].mxu0
    %v5276 = vadd.f32 0.0, %v5275
    %v5277 = vpop.f32.mrb[0].mxu0
    %v5278 = vpop.f32.mrb[0].mxu0
    %v5279 = vadd.f32 0.0, %v5278
    %v5280 = vpop.f32.mrb[0].mxu0
    %5281 = vmatprep.mubr.bf16.mxu0 0
    %5282 = vmatmul.mubr.bf16.gmra.mrb[0].mxu0 %v5233
    %v5283 = vpop.f32.mrb[0].mxu0
    %v5284 = vadd.f32 0.0, %v5283
    %v5285 = vpop.f32.mrb[0].mxu0
    %v5286 = vpop.f32.mrb[0].mxu0
    %v5287 = vadd.f32 0.0, %v5286
    %v5288 = vpop.f32.mrb[0].mxu0
    %5289 = vmatprep.mubr.bf16.mxu0 0
    %5290 = vmatmul.mubr.bf16.gmra.mrb[0].mxu0 %v5236
    %v5291 = vpop.f32.mrb[0].mxu0
    %v5292 = vadd.f32 0.0, %v5291
    %v5293 = vpop.f32.mrb[0].mxu0
    %v5294 = vpop.f32.mrb[0].mxu0
    %v5295 = vadd.f32 0.0, %v5294
    %v5296 = vpop.f32.mrb[0].mxu0
    %5297 = vmatprep.mubr.bf16.mxu0 0
    %5298 = vmatmul.mubr.bf16.gmra.mrb[0].mxu0 %v5239
    %v5299 = vpop.f32.mrb[0].mxu0
    %v5300 = vadd.f32 0.0, %v5299
    %v5301 = vpop.f32.mrb[0].mxu0
    %v5302 = vpop.f32.mrb[0].mxu0
    %v5303 = vadd.f32 0.0, %v5302
    %v5304 = vpop.f32.mrb[0].mxu0
    %5305 = vdwg.mxu0
    %v5306 = vpack.c.bf16 %v5279, %v5276
    %v5307 = vpack.c.bf16 %v5287, %v5284
    %v5308 = vpack.c.bf16 %v5295, %v5292
    %v5309 = vpack.c.bf16 %v5303, %v5300
    %5310 = vrot.lane.b32.xlu0 %v4408, 32
    %v5311 = vpop.permute.xlu0 %5310
    %5312 = vrot.lane.b32.xlu0 %v4411, 32
    %v5313 = vpop.permute.xlu0 %5312
    %5314 = vrot.lane.b32.xlu0 %v4414, 32
    %v5315 = vpop.permute.xlu0 %5314
    %5316 = vrot.lane.b32.xlu0 %v4417, 32
    %v5317 = vpop.permute.xlu0 %5316
    %5318 = vrot.lane.b32.xlu0 %v4409, 32
    %v5319 = vpop.permute.xlu0 %5318
    %5320 = vrot.lane.b32.xlu0 %v4412, 32
    %v5321 = vpop.permute.xlu0 %5320
    %5322 = vrot.lane.b32.xlu0 %v4415, 32
    %v5323 = vpop.permute.xlu0 %5322
    %5324 = vrot.lane.b32.xlu0 %v4418, 32
    %v5325 = vpop.permute.xlu0 %5324
    %v5327 = vsel %vm970, %v5311, 0
    %v5330 = vsel %vm970, %v5313, 0
    %v5333 = vsel %vm970, %v5315, 0
    %v5336 = vsel %vm970, %v5317, 0
    %v5339 = vsel %vm970, %v5319, 0
    %v5342 = vsel %vm970, %v5321, 0
    %v5345 = vsel %vm970, %v5323, 0
    %v5348 = vsel %vm970, %v5325, 0
    %5350 = vmatprep.subr.bf16.mxu0 0
    %5351 = vmatpush1.bf16.xpose.msra.mxu0 %v5339
    %5352 = vmatprep.subr.bf16.mxu0 0
    %5353 = vmatpush1.bf16.xpose.msra.mxu0 %v5342
    %5354 = vmatprep.subr.bf16.mxu0 0
    %5355 = vmatpush1.bf16.xpose.msra.mxu0 %v5345
    %5356 = vmatprep.subr.bf16.mxu0 0
    %5357 = vmatpush1.bf16.xpose.msra.mxu0 %v5348
    %5358 = vmatprep.subr.bf16.mxu0 0
    %5359 = vmatpush1.bf16.xpose.msra.mxu0 0
    %5360 = vmatprep.subr.bf16.mxu0 0
    %5361 = vmatpush1.bf16.xpose.msra.mxu0 0
    %5362 = vmatprep.subr.bf16.mxu0 0
    %5363 = vmatpush1.bf16.xpose.msra.mxu0 0
    %5364 = vmatprep.subr.bf16.mxu0 0
    %5365 = vmatpush1.bf16.xpose.msra.mxu0 0
    %5366 = vmatprep.subr.bf16.mxu0 0
    %5367 = vmatpush1.bf16.xpose.msra.mxu0 0
    %5368 = vmatprep.subr.bf16.mxu0 0
    %5369 = vmatpush1.bf16.xpose.msra.mxu0 0
    %5370 = vmatprep.subr.bf16.mxu0 0
    %5371 = vmatpush1.bf16.xpose.msra.mxu0 0
    %5372 = vmatprep.subr.bf16.mxu0 0
    %5373 = vmatpush1.bf16.xpose.msra.mxu0 0
    %5374 = vmatprep.subr.bf16.mxu0 0
    %5375 = vmatpush1.bf16.xpose.msra.mxu0 0
    %5376 = vmatprep.subr.bf16.mxu0 0
    %5377 = vmatpush1.bf16.xpose.msra.mxu0 0
    %5378 = vmatprep.subr.bf16.mxu0 0
    %5379 = vmatpush1.bf16.xpose.msra.mxu0 0
    %5380 = vmatprep.subr.bf16.mxu0 0
    %5381 = vmatpush1.bf16.xpose.msra.mxu0 0
    %5382 = vmatprep.mubr.bf16.mxu0 0
    %5383 = vmatmul.mubr.bf16.gmra.mrb[0].mxu0 %v5327
    %v5384 = vpop.f32.mrb[0].mxu0
    %v5385 = vadd.f32 0.0, %v5384
    %v5386 = vpop.f32.mrb[0].mxu0
    %v5387 = vpop.f32.mrb[0].mxu0
    %v5388 = vadd.f32 0.0, %v5387
    %v5389 = vpop.f32.mrb[0].mxu0
    %5390 = vmatprep.mubr.bf16.mxu0 0
    %5391 = vmatmul.mubr.bf16.gmra.mrb[0].mxu0 %v5330
    %v5392 = vpop.f32.mrb[0].mxu0
    %v5393 = vadd.f32 0.0, %v5392
    %v5394 = vpop.f32.mrb[0].mxu0
    %v5395 = vpop.f32.mrb[0].mxu0
    %v5396 = vadd.f32 0.0, %v5395
    %v5397 = vpop.f32.mrb[0].mxu0
    %5398 = vmatprep.mubr.bf16.mxu0 0
    %5399 = vmatmul.mubr.bf16.gmra.mrb[0].mxu0 %v5333
    %v5400 = vpop.f32.mrb[0].mxu0
    %v5401 = vadd.f32 0.0, %v5400
    %v5402 = vpop.f32.mrb[0].mxu0
    %v5403 = vpop.f32.mrb[0].mxu0
    %v5404 = vadd.f32 0.0, %v5403
    %v5405 = vpop.f32.mrb[0].mxu0
    %5406 = vmatprep.mubr.bf16.mxu0 0
    %5407 = vmatmul.mubr.bf16.gmra.mrb[0].mxu0 %v5336
    %v5408 = vpop.f32.mrb[0].mxu0
    %v5409 = vadd.f32 0.0, %v5408
    %v5410 = vpop.f32.mrb[0].mxu0
    %v5411 = vpop.f32.mrb[0].mxu0
    %v5412 = vadd.f32 0.0, %v5411
    %v5413 = vpop.f32.mrb[0].mxu0
    %5414 = vdwg.mxu0
    %v5415 = vmul.f32 %v5385, 0.17677669
    %v5416 = vmul.f32 %v5388, 0.17677669
    %v5417 = vmul.f32 %v5393, 0.17677669
    %v5418 = vmul.f32 %v5396, 0.17677669
    %v5419 = vmul.f32 %v5401, 0.17677669
    %v5420 = vmul.f32 %v5404, 0.17677669
    %v5421 = vmul.f32 %v5409, 0.17677669
    %v5422 = vmul.f32 %v5412, 0.17677669
    %v5423 = vsel %vm143, %v5415, -inf
    %5424 = vmax.xlane.f32.xlu0 %v5423
    %v5425 = vpop.xlane.xlu0 %5424
    %v5426 = vsel %vm143, %v5416, -inf
    %5427 = vmax.xlane.f32.xlu0 %v5426
    %v5428 = vpop.xlane.xlu0 %5427
    %v5429 = vsel %vm143, %v5417, -inf
    %5430 = vmax.xlane.f32.xlu0 %v5429
    %v5431 = vpop.xlane.xlu0 %5430
    %v5432 = vsel %vm143, %v5418, -inf
    %5433 = vmax.xlane.f32.xlu0 %v5432
    %v5434 = vpop.xlane.xlu0 %5433
    %v5435 = vsel %vm143, %v5419, -inf
    %5436 = vmax.xlane.f32.xlu0 %v5435
    %v5437 = vpop.xlane.xlu0 %5436
    %v5438 = vsel %vm143, %v5420, -inf
    %5439 = vmax.xlane.f32.xlu0 %v5438
    %v5440 = vpop.xlane.xlu0 %5439
    %v5441 = vsel %vm143, %v5421, -inf
    %5442 = vmax.xlane.f32.xlu0 %v5441
    %v5443 = vpop.xlane.xlu0 %5442
    %v5444 = vsel %vm143, %v5422, -inf
    %5445 = vmax.xlane.f32.xlu0 %v5444
    %v5446 = vpop.xlane.xlu0 %5445
    %v5447 = vsub.f32 %v5415, %v5425
    %v5448 = vsub.f32 %v5416, %v5428
    %v5449 = vsub.f32 %v5417, %v5431
    %v5450 = vsub.f32 %v5418, %v5434
    %v5451 = vsub.f32 %v5419, %v5437
    %v5452 = vsub.f32 %v5420, %v5440
    %v5453 = vsub.f32 %v5421, %v5443
    %v5454 = vsub.f32 %v5422, %v5446
    %v5455 = vmul.f32 %v5447, 1.442695
    %v5456 = vpow.pop %v5455
    %v5457 = vmul.f32 %v5448, 1.442695
    %v5458 = vpow.pop %v5457
    %v5459 = vmul.f32 %v5449, 1.442695
    %v5460 = vpow.pop %v5459
    %v5461 = vmul.f32 %v5450, 1.442695
    %v5462 = vpow.pop %v5461
    %v5463 = vmul.f32 %v5451, 1.442695
    %v5464 = vpow.pop %v5463
    %v5465 = vmul.f32 %v5452, 1.442695
    %v5466 = vpow.pop %v5465
    %v5467 = vmul.f32 %v5453, 1.442695
    %v5468 = vpow.pop %v5467
    %v5469 = vmul.f32 %v5454, 1.442695
    %v5470 = vpow.pop %v5469
    %v5471 = vsel %vm143, %v5456, 0.0
    %5472 = vadd.xlane.f32.xlu0 %v5471
    %v5473 = vpop.xlane.xlu0 %5472
    %v5474 = vsel %vm143, %v5458, 0.0
    %5475 = vadd.xlane.f32.xlu0 %v5474
    %v5476 = vpop.xlane.xlu0 %5475
    %v5477 = vsel %vm143, %v5460, 0.0
    %5478 = vadd.xlane.f32.xlu0 %v5477
    %v5479 = vpop.xlane.xlu0 %5478
    %v5480 = vsel %vm143, %v5462, 0.0
    %5481 = vadd.xlane.f32.xlu0 %v5480
    %v5482 = vpop.xlane.xlu0 %5481
    %v5483 = vsel %vm143, %v5464, 0.0
    %5484 = vadd.xlane.f32.xlu0 %v5483
    %v5485 = vpop.xlane.xlu0 %5484
    %v5486 = vsel %vm143, %v5466, 0.0
    %5487 = vadd.xlane.f32.xlu0 %v5486
    %v5488 = vpop.xlane.xlu0 %5487
    %v5489 = vsel %vm143, %v5468, 0.0
    %5490 = vadd.xlane.f32.xlu0 %v5489
    %v5491 = vpop.xlane.xlu0 %5490
    %v5492 = vsel %vm143, %v5470, 0.0
    %5493 = vadd.xlane.f32.xlu0 %v5492
    %v5494 = vpop.xlane.xlu0 %5493
    %v5495 = vrcp.pop %v5473
    %v5496 = vrcp.pop %v5476
    %v5497 = vrcp.pop %v5479
    %v5498 = vrcp.pop %v5482
    %v5499 = vrcp.pop %v5485
    %v5500 = vrcp.pop %v5488
    %v5501 = vrcp.pop %v5491
    %v5502 = vrcp.pop %v5494
    %v5503 = vmul.f32 %v5456, %v5495
    %v5504 = vmul.f32 %v5458, %v5496
    %v5505 = vmul.f32 %v5460, %v5497
    %v5506 = vmul.f32 %v5462, %v5498
    %v5507 = vmul.f32 %v5464, %v5499
    %v5508 = vmul.f32 %v5466, %v5500
    %v5509 = vmul.f32 %v5468, %v5501
    %v5510 = vmul.f32 %v5470, %v5502
    %v5511 = vpack.c.bf16 %v5504, %v5503
    %v5512 = vpack.c.bf16 %v5506, %v5505
    %v5513 = vpack.c.bf16 %v5508, %v5507
    %v5514 = vpack.c.bf16 %v5510, %v5509
    %5515 = vrot.lane.b32.xlu0 %v4410, 32
    %v5516 = vpop.permute.xlu0 %5515
    %5517 = vrot.lane.b32.xlu0 %v4413, 32
    %v5518 = vpop.permute.xlu0 %5517
    %5519 = vrot.lane.b32.xlu0 %v4416, 32
    %v5520 = vpop.permute.xlu0 %5519
    %5521 = vrot.lane.b32.xlu0 %v4419, 32
    %v5522 = vpop.permute.xlu0 %5521
    %v5528 = vsel %vm143, %v5511, 0
    %v5531 = vsel %vm143, %v5512, 0
    %v5534 = vsel %vm143, %v5513, 0
    %v5537 = vsel %vm143, %v5514, 0
    %5539 = vmatprep.subr.bf16.mxu0 0
    %5540 = vmatpush1.bf16.msra.mxu0 %v5516
    %5541 = vmatprep.subr.bf16.mxu0 0
    %5542 = vmatpush1.bf16.msra.mxu0 %v5518
    %5543 = vmatprep.subr.bf16.mxu0 0
    %5544 = vmatpush1.bf16.msra.mxu0 %v5520
    %5545 = vmatprep.subr.bf16.mxu0 0
    %5546 = vmatpush1.bf16.msra.mxu0 %v5522
    %5547 = vmatprep.subr.bf16.mxu0 0
    %5548 = vmatpush1.bf16.msra.mxu0 0
    %5549 = vmatprep.subr.bf16.mxu0 0
    %5550 = vmatpush1.bf16.msra.mxu0 0
    %5551 = vmatprep.subr.bf16.mxu0 0
    %5552 = vmatpush1.bf16.msra.mxu0 0
    %5553 = vmatprep.subr.bf16.mxu0 0
    %5554 = vmatpush1.bf16.msra.mxu0 0
    %5555 = vmatprep.subr.bf16.mxu0 0
    %5556 = vmatpush1.bf16.msra.mxu0 0
    %5557 = vmatprep.subr.bf16.mxu0 0
    %5558 = vmatpush1.bf16.msra.mxu0 0
    %5559 = vmatprep.subr.bf16.mxu0 0
    %5560 = vmatpush1.bf16.msra.mxu0 0
    %5561 = vmatprep.subr.bf16.mxu0 0
    %5562 = vmatpush1.bf16.msra.mxu0 0
    %5563 = vmatprep.subr.bf16.mxu0 0
    %5564 = vmatpush1.bf16.msra.mxu0 0
    %5565 = vmatprep.subr.bf16.mxu0 0
    %5566 = vmatpush1.bf16.msra.mxu0 0
    %5567 = vmatprep.subr.bf16.mxu0 0
    %5568 = vmatpush1.bf16.msra.mxu0 0
    %5569 = vmatprep.subr.bf16.mxu0 0
    %5570 = vmatpush1.bf16.msra.mxu0 0
    %5571 = vmatprep.mubr.bf16.mxu0 0
    %5572 = vmatmul.mubr.bf16.gmra.mrb[0].mxu0 %v5528
    %v5573 = vpop.f32.mrb[0].mxu0
    %v5574 = vadd.f32 0.0, %v5573
    %v5575 = vpop.f32.mrb[0].mxu0
    %v5576 = vpop.f32.mrb[0].mxu0
    %v5577 = vadd.f32 0.0, %v5576
    %v5578 = vpop.f32.mrb[0].mxu0
    %5579 = vmatprep.mubr.bf16.mxu0 0
    %5580 = vmatmul.mubr.bf16.gmra.mrb[0].mxu0 %v5531
    %v5581 = vpop.f32.mrb[0].mxu0
    %v5582 = vadd.f32 0.0, %v5581
    %v5583 = vpop.f32.mrb[0].mxu0
    %v5584 = vpop.f32.mrb[0].mxu0
    %v5585 = vadd.f32 0.0, %v5584
    %v5586 = vpop.f32.mrb[0].mxu0
    %5587 = vmatprep.mubr.bf16.mxu0 0
    %5588 = vmatmul.mubr.bf16.gmra.mrb[0].mxu0 %v5534
    %v5589 = vpop.f32.mrb[0].mxu0
    %v5590 = vadd.f32 0.0, %v5589
    %v5591 = vpop.f32.mrb[0].mxu0
    %v5592 = vpop.f32.mrb[0].mxu0
    %v5593 = vadd.f32 0.0, %v5592
    %v5594 = vpop.f32.mrb[0].mxu0
    %5595 = vmatprep.mubr.bf16.mxu0 0
    %5596 = vmatmul.mubr.bf16.gmra.mrb[0].mxu0 %v5537
    %v5597 = vpop.f32.mrb[0].mxu0
    %v5598 = vadd.f32 0.0, %v5597
    %v5599 = vpop.f32.mrb[0].mxu0
    %v5600 = vpop.f32.mrb[0].mxu0
    %v5601 = vadd.f32 0.0, %v5600
    %v5602 = vpop.f32.mrb[0].mxu0
    %5603 = vdwg.mxu0
    %v5604 = vpack.c.bf16 %v5577, %v5574
    %v5605 = vpack.c.bf16 %v5585, %v5582
    %v5606 = vpack.c.bf16 %v5593, %v5590
    %v5607 = vpack.c.bf16 %v5601, %v5598
    %5612 = vrot.lane.b32.xlu0 %v5008, 32
    %v5613 = vpop.permute.xlu0 %5612
    %5614 = vrot.lane.b32.xlu0 %v5009, 32
    %v5615 = vpop.permute.xlu0 %5614
    %5616 = vrot.lane.b32.xlu0 %v5010, 32
    %v5617 = vpop.permute.xlu0 %5616
    %5618 = vrot.lane.b32.xlu0 %v5011, 32
    %v5619 = vpop.permute.xlu0 %5618
    %5624 = vrot.lane.b32.xlu0 %v5306, 64
    %v5625 = vpop.permute.xlu0 %5624
    %5626 = vrot.lane.b32.xlu0 %v5307, 64
    %v5627 = vpop.permute.xlu0 %5626
    %5628 = vrot.lane.b32.xlu0 %v5308, 64
    %v5629 = vpop.permute.xlu0 %5628
    %5630 = vrot.lane.b32.xlu0 %v5309, 64
    %v5631 = vpop.permute.xlu0 %5630
    %5636 = vrot.lane.b32.xlu0 %v5604, 96
    %v5637 = vpop.permute.xlu0 %5636
    %5638 = vrot.lane.b32.xlu0 %v5605, 96
    %v5639 = vpop.permute.xlu0 %5638
    %5640 = vrot.lane.b32.xlu0 %v5606, 96
    %v5641 = vpop.permute.xlu0 %5640
    %5642 = vrot.lane.b32.xlu0 %v5607, 96
    %v5643 = vpop.permute.xlu0 %5642
    %v5646 = vsel %vm970, %v4698, %v5613
    %v5649 = vsel %vm970, %v4699, %v5615
    %v5652 = vsel %vm970, %v4700, %v5617
    %v5655 = vsel %vm970, %v4701, %v5619
    %v5657 = vsel %vm143, %v5646, %v5625
    %v5659 = vsel %vm143, %v5649, %v5627
    %v5661 = vsel %vm143, %v5652, %v5629
    %v5663 = vsel %vm143, %v5655, %v5631
    %v5665 = vsel %vm2203, %v5657, %v5637
    %v5668 = vsel %vm2203, %v5659, %v5639
    %v5671 = vsel %vm2203, %v5661, %v5641
    %v5674 = vsel %vm2203, %v5663, %v5643
    %v5677 = vsel %vm970, %v4420, 0
    %v5680 = vsel %vm970, %v4423, 0
    %v5683 = vsel %vm970, %v4426, 0
    %v5686 = vsel %vm970, %v4429, 0
    %v5689 = vsel %vm970, %v4421, 0
    %v5692 = vsel %vm970, %v4424, 0
    %v5695 = vsel %vm970, %v4427, 0
    %v5698 = vsel %vm970, %v4430, 0
    %5700 = vmatprep.subr.bf16.mxu0 0
    %5701 = vmatpush1.bf16.xpose.msra.mxu0 %v5689
    %5702 = vmatprep.subr.bf16.mxu0 0
    %5703 = vmatpush1.bf16.xpose.msra.mxu0 %v5692
    %5704 = vmatprep.subr.bf16.mxu0 0
    %5705 = vmatpush1.bf16.xpose.msra.mxu0 %v5695
    %5706 = vmatprep.subr.bf16.mxu0 0
    %5707 = vmatpush1.bf16.xpose.msra.mxu0 %v5698
    %5708 = vmatprep.subr.bf16.mxu0 0
    %5709 = vmatpush1.bf16.xpose.msra.mxu0 0
    %5710 = vmatprep.subr.bf16.mxu0 0
    %5711 = vmatpush1.bf16.xpose.msra.mxu0 0
    %5712 = vmatprep.subr.bf16.mxu0 0
    %5713 = vmatpush1.bf16.xpose.msra.mxu0 0
    %5714 = vmatprep.subr.bf16.mxu0 0
    %5715 = vmatpush1.bf16.xpose.msra.mxu0 0
    %5716 = vmatprep.subr.bf16.mxu0 0
    %5717 = vmatpush1.bf16.xpose.msra.mxu0 0
    %5718 = vmatprep.subr.bf16.mxu0 0
    %5719 = vmatpush1.bf16.xpose.msra.mxu0 0
    %5720 = vmatprep.subr.bf16.mxu0 0
    %5721 = vmatpush1.bf16.xpose.msra.mxu0 0
    %5722 = vmatprep.subr.bf16.mxu0 0
    %5723 = vmatpush1.bf16.xpose.msra.mxu0 0
    %5724 = vmatprep.subr.bf16.mxu0 0
    %5725 = vmatpush1.bf16.xpose.msra.mxu0 0
    %5726 = vmatprep.subr.bf16.mxu0 0
    %5727 = vmatpush1.bf16.xpose.msra.mxu0 0
    %5728 = vmatprep.subr.bf16.mxu0 0
    %5729 = vmatpush1.bf16.xpose.msra.mxu0 0
    %5730 = vmatprep.subr.bf16.mxu0 0
    %5731 = vmatpush1.bf16.xpose.msra.mxu0 0
    %5732 = vmatprep.mubr.bf16.mxu0 0
    %5733 = vmatmul.mubr.bf16.gmra.mrb[0].mxu0 %v5677
    %v5734 = vpop.f32.mrb[0].mxu0
    %v5735 = vadd.f32 0.0, %v5734
    %v5736 = vpop.f32.mrb[0].mxu0
    %v5737 = vpop.f32.mrb[0].mxu0
    %v5738 = vadd.f32 0.0, %v5737
    %v5739 = vpop.f32.mrb[0].mxu0
    %5740 = vmatprep.mubr.bf16.mxu0 0
    %5741 = vmatmul.mubr.bf16.gmra.mrb[0].mxu0 %v5680
    %v5742 = vpop.f32.mrb[0].mxu0
    %v5743 = vadd.f32 0.0, %v5742
    %v5744 = vpop.f32.mrb[0].mxu0
    %v5745 = vpop.f32.mrb[0].mxu0
    %v5746 = vadd.f32 0.0, %v5745
    %v5747 = vpop.f32.mrb[0].mxu0
    %5748 = vmatprep.mubr.bf16.mxu0 0
    %5749 = vmatmul.mubr.bf16.gmra.mrb[0].mxu0 %v5683
    %v5750 = vpop.f32.mrb[0].mxu0
    %v5751 = vadd.f32 0.0, %v5750
    %v5752 = vpop.f32.mrb[0].mxu0
    %v5753 = vpop.f32.mrb[0].mxu0
    %v5754 = vadd.f32 0.0, %v5753
    %v5755 = vpop.f32.mrb[0].mxu0
    %5756 = vmatprep.mubr.bf16.mxu0 0
    %5757 = vmatmul.mubr.bf16.gmra.mrb[0].mxu0 %v5686
    %v5758 = vpop.f32.mrb[0].mxu0
    %v5759 = vadd.f32 0.0, %v5758
    %v5760 = vpop.f32.mrb[0].mxu0
    %v5761 = vpop.f32.mrb[0].mxu0
    %v5762 = vadd.f32 0.0, %v5761
    %v5763 = vpop.f32.mrb[0].mxu0
    %5764 = vdwg.mxu0
    %v5765 = vmul.f32 %v5735, 0.17677669
    %v5766 = vmul.f32 %v5738, 0.17677669
    %v5767 = vmul.f32 %v5743, 0.17677669
    %v5768 = vmul.f32 %v5746, 0.17677669
    %v5769 = vmul.f32 %v5751, 0.17677669
    %v5770 = vmul.f32 %v5754, 0.17677669
    %v5771 = vmul.f32 %v5759, 0.17677669
    %v5772 = vmul.f32 %v5762, 0.17677669
    %v5773 = vsel %vm143, %v5765, -inf
    %5774 = vmax.xlane.f32.xlu0 %v5773
    %v5775 = vpop.xlane.xlu0 %5774
    %v5776 = vsel %vm143, %v5766, -inf
    %5777 = vmax.xlane.f32.xlu0 %v5776
    %v5778 = vpop.xlane.xlu0 %5777
    %v5779 = vsel %vm143, %v5767, -inf
    %5780 = vmax.xlane.f32.xlu0 %v5779
    %v5781 = vpop.xlane.xlu0 %5780
    %v5782 = vsel %vm143, %v5768, -inf
    %5783 = vmax.xlane.f32.xlu0 %v5782
    %v5784 = vpop.xlane.xlu0 %5783
    %v5785 = vsel %vm143, %v5769, -inf
    %5786 = vmax.xlane.f32.xlu0 %v5785
    %v5787 = vpop.xlane.xlu0 %5786
    %v5788 = vsel %vm143, %v5770, -inf
    %5789 = vmax.xlane.f32.xlu0 %v5788
    %v5790 = vpop.xlane.xlu0 %5789
    %v5791 = vsel %vm143, %v5771, -inf
    %5792 = vmax.xlane.f32.xlu0 %v5791
    %v5793 = vpop.xlane.xlu0 %5792
    %v5794 = vsel %vm143, %v5772, -inf
    %5795 = vmax.xlane.f32.xlu0 %v5794
    %v5796 = vpop.xlane.xlu0 %5795
    %v5797 = vsub.f32 %v5765, %v5775
    %v5798 = vsub.f32 %v5766, %v5778
    %v5799 = vsub.f32 %v5767, %v5781
    %v5800 = vsub.f32 %v5768, %v5784
    %v5801 = vsub.f32 %v5769, %v5787
    %v5802 = vsub.f32 %v5770, %v5790
    %v5803 = vsub.f32 %v5771, %v5793
    %v5804 = vsub.f32 %v5772, %v5796
    %v5805 = vmul.f32 %v5797, 1.442695
    %v5806 = vpow.pop %v5805
    %v5807 = vmul.f32 %v5798, 1.442695
    %v5808 = vpow.pop %v5807
    %v5809 = vmul.f32 %v5799, 1.442695
    %v5810 = vpow.pop %v5809
    %v5811 = vmul.f32 %v5800, 1.442695
    %v5812 = vpow.pop %v5811
    %v5813 = vmul.f32 %v5801, 1.442695
    %v5814 = vpow.pop %v5813
    %v5815 = vmul.f32 %v5802, 1.442695
    %v5816 = vpow.pop %v5815
    %v5817 = vmul.f32 %v5803, 1.442695
    %v5818 = vpow.pop %v5817
    %v5819 = vmul.f32 %v5804, 1.442695
    %v5820 = vpow.pop %v5819
    %v5821 = vsel %vm143, %v5806, 0.0
    %5822 = vadd.xlane.f32.xlu0 %v5821
    %v5823 = vpop.xlane.xlu0 %5822
    %v5824 = vsel %vm143, %v5808, 0.0
    %5825 = vadd.xlane.f32.xlu0 %v5824
    %v5826 = vpop.xlane.xlu0 %5825
    %v5827 = vsel %vm143, %v5810, 0.0
    %5828 = vadd.xlane.f32.xlu0 %v5827
    %v5829 = vpop.xlane.xlu0 %5828
    %v5830 = vsel %vm143, %v5812, 0.0
    %5831 = vadd.xlane.f32.xlu0 %v5830
    %v5832 = vpop.xlane.xlu0 %5831
    %v5833 = vsel %vm143, %v5814, 0.0
    %5834 = vadd.xlane.f32.xlu0 %v5833
    %v5835 = vpop.xlane.xlu0 %5834
    %v5836 = vsel %vm143, %v5816, 0.0
    %5837 = vadd.xlane.f32.xlu0 %v5836
    %v5838 = vpop.xlane.xlu0 %5837
    %v5839 = vsel %vm143, %v5818, 0.0
    %5840 = vadd.xlane.f32.xlu0 %v5839
    %v5841 = vpop.xlane.xlu0 %5840
    %v5842 = vsel %vm143, %v5820, 0.0
    %5843 = vadd.xlane.f32.xlu0 %v5842
    %v5844 = vpop.xlane.xlu0 %5843
    %v5845 = vrcp.pop %v5823
    %v5846 = vrcp.pop %v5826
    %v5847 = vrcp.pop %v5829
    %v5848 = vrcp.pop %v5832
    %v5849 = vrcp.pop %v5835
    %v5850 = vrcp.pop %v5838
    %v5851 = vrcp.pop %v5841
    %v5852 = vrcp.pop %v5844
    %v5853 = vmul.f32 %v5806, %v5845
    %v5854 = vmul.f32 %v5808, %v5846
    %v5855 = vmul.f32 %v5810, %v5847
    %v5856 = vmul.f32 %v5812, %v5848
    %v5857 = vmul.f32 %v5814, %v5849
    %v5858 = vmul.f32 %v5816, %v5850
    %v5859 = vmul.f32 %v5818, %v5851
    %v5860 = vmul.f32 %v5820, %v5852
    %v5861 = vpack.c.bf16 %v5854, %v5853
    %v5862 = vpack.c.bf16 %v5856, %v5855
    %v5863 = vpack.c.bf16 %v5858, %v5857
    %v5864 = vpack.c.bf16 %v5860, %v5859
    %v5866 = vsel %vm143, %v5861, 0
    %v5869 = vsel %vm143, %v5862, 0
    %v5872 = vsel %vm143, %v5863, 0
    %v5875 = vsel %vm143, %v5864, 0
    %5877 = vmatprep.subr.bf16.mxu0 0
    %5878 = vmatpush1.bf16.msra.mxu0 %v4422
    %5879 = vmatprep.subr.bf16.mxu0 0
    %5880 = vmatpush1.bf16.msra.mxu0 %v4425
    %5881 = vmatprep.subr.bf16.mxu0 0
    %5882 = vmatpush1.bf16.msra.mxu0 %v4428
    %5883 = vmatprep.subr.bf16.mxu0 0
    %5884 = vmatpush1.bf16.msra.mxu0 %v4431
    %5885 = vmatprep.subr.bf16.mxu0 0
    %5886 = vmatpush1.bf16.msra.mxu0 0
    %5887 = vmatprep.subr.bf16.mxu0 0
    %5888 = vmatpush1.bf16.msra.mxu0 0
    %5889 = vmatprep.subr.bf16.mxu0 0
    %5890 = vmatpush1.bf16.msra.mxu0 0
    %5891 = vmatprep.subr.bf16.mxu0 0
    %5892 = vmatpush1.bf16.msra.mxu0 0
    %5893 = vmatprep.subr.bf16.mxu0 0
    %5894 = vmatpush1.bf16.msra.mxu0 0
    %5895 = vmatprep.subr.bf16.mxu0 0
    %5896 = vmatpush1.bf16.msra.mxu0 0
    %5897 = vmatprep.subr.bf16.mxu0 0
    %5898 = vmatpush1.bf16.msra.mxu0 0
    %5899 = vmatprep.subr.bf16.mxu0 0
    %5900 = vmatpush1.bf16.msra.mxu0 0
    %5901 = vmatprep.subr.bf16.mxu0 0
    %5902 = vmatpush1.bf16.msra.mxu0 0
    %5903 = vmatprep.subr.bf16.mxu0 0
    %5904 = vmatpush1.bf16.msra.mxu0 0
    %5905 = vmatprep.subr.bf16.mxu0 0
    %5906 = vmatpush1.bf16.msra.mxu0 0
    %5907 = vmatprep.subr.bf16.mxu0 0
    %5908 = vmatpush1.bf16.msra.mxu0 0
    %5909 = vmatprep.mubr.bf16.mxu0 0
    %5910 = vmatmul.mubr.bf16.gmra.mrb[0].mxu0 %v5866
    %v5911 = vpop.f32.mrb[0].mxu0
    %v5912 = vadd.f32 0.0, %v5911
    %v5913 = vpop.f32.mrb[0].mxu0
    %v5914 = vpop.f32.mrb[0].mxu0
    %v5915 = vadd.f32 0.0, %v5914
    %v5916 = vpop.f32.mrb[0].mxu0
    %5917 = vmatprep.mubr.bf16.mxu0 0
    %5918 = vmatmul.mubr.bf16.gmra.mrb[0].mxu0 %v5869
    %v5919 = vpop.f32.mrb[0].mxu0
    %v5920 = vadd.f32 0.0, %v5919
    %v5921 = vpop.f32.mrb[0].mxu0
    %v5922 = vpop.f32.mrb[0].mxu0
    %v5923 = vadd.f32 0.0, %v5922
    %v5924 = vpop.f32.mrb[0].mxu0
    %5925 = vmatprep.mubr.bf16.mxu0 0
    %5926 = vmatmul.mubr.bf16.gmra.mrb[0].mxu0 %v5872
    %v5927 = vpop.f32.mrb[0].mxu0
    %v5928 = vadd.f32 0.0, %v5927
    %v5929 = vpop.f32.mrb[0].mxu0
    %v5930 = vpop.f32.mrb[0].mxu0
    %v5931 = vadd.f32 0.0, %v5930
    %v5932 = vpop.f32.mrb[0].mxu0
    %5933 = vmatprep.mubr.bf16.mxu0 0
    %5934 = vmatmul.mubr.bf16.gmra.mrb[0].mxu0 %v5875
    %v5935 = vpop.f32.mrb[0].mxu0
    %v5936 = vadd.f32 0.0, %v5935
    %v5937 = vpop.f32.mrb[0].mxu0
    %v5938 = vpop.f32.mrb[0].mxu0
    %v5939 = vadd.f32 0.0, %v5938
    %v5940 = vpop.f32.mrb[0].mxu0
    %5941 = vdwg.mxu0
    %v5942 = vpack.c.bf16 %v5915, %v5912
    %v5943 = vpack.c.bf16 %v5923, %v5920
    %v5944 = vpack.c.bf16 %v5931, %v5928
    %v5945 = vpack.c.bf16 %v5939, %v5936
    %5950 = vrot.lane.b32.xlu0 %v4420, 96
    %v5951 = vpop.permute.xlu0 %5950
    %5952 = vrot.lane.b32.xlu0 %v4423, 96
    %v5953 = vpop.permute.xlu0 %5952
    %5954 = vrot.lane.b32.xlu0 %v4426, 96
    %v5955 = vpop.permute.xlu0 %5954
    %5956 = vrot.lane.b32.xlu0 %v4429, 96
    %v5957 = vpop.permute.xlu0 %5956
    %5962 = vrot.lane.b32.xlu0 %v4421, 96
    %v5963 = vpop.permute.xlu0 %5962
    %5964 = vrot.lane.b32.xlu0 %v4424, 96
    %v5965 = vpop.permute.xlu0 %5964
    %5966 = vrot.lane.b32.xlu0 %v4427, 96
    %v5967 = vpop.permute.xlu0 %5966
    %5968 = vrot.lane.b32.xlu0 %v4430, 96
    %v5969 = vpop.permute.xlu0 %5968
    %v5971 = vsel %vm970, %v5951, 0
    %v5974 = vsel %vm970, %v5953, 0
    %v5977 = vsel %vm970, %v5955, 0
    %v5980 = vsel %vm970, %v5957, 0
    %v5983 = vsel %vm970, %v5963, 0
    %v5986 = vsel %vm970, %v5965, 0
    %v5989 = vsel %vm970, %v5967, 0
    %v5992 = vsel %vm970, %v5969, 0
    %5994 = vmatprep.subr.bf16.mxu0 0
    %5995 = vmatpush1.bf16.xpose.msra.mxu0 %v5983
    %5996 = vmatprep.subr.bf16.mxu0 0
    %5997 = vmatpush1.bf16.xpose.msra.mxu0 %v5986
    %5998 = vmatprep.subr.bf16.mxu0 0
    %5999 = vmatpush1.bf16.xpose.msra.mxu0 %v5989
    %6000 = vmatprep.subr.bf16.mxu0 0
    %6001 = vmatpush1.bf16.xpose.msra.mxu0 %v5992
    %6002 = vmatprep.subr.bf16.mxu0 0
    %6003 = vmatpush1.bf16.xpose.msra.mxu0 0
    %6004 = vmatprep.subr.bf16.mxu0 0
    %6005 = vmatpush1.bf16.xpose.msra.mxu0 0
    %6006 = vmatprep.subr.bf16.mxu0 0
    %6007 = vmatpush1.bf16.xpose.msra.mxu0 0
    %6008 = vmatprep.subr.bf16.mxu0 0
    %6009 = vmatpush1.bf16.xpose.msra.mxu0 0
    %6010 = vmatprep.subr.bf16.mxu0 0
    %6011 = vmatpush1.bf16.xpose.msra.mxu0 0
    %6012 = vmatprep.subr.bf16.mxu0 0
    %6013 = vmatpush1.bf16.xpose.msra.mxu0 0
    %6014 = vmatprep.subr.bf16.mxu0 0
    %6015 = vmatpush1.bf16.xpose.msra.mxu0 0
    %6016 = vmatprep.subr.bf16.mxu0 0
    %6017 = vmatpush1.bf16.xpose.msra.mxu0 0
    %6018 = vmatprep.subr.bf16.mxu0 0
    %6019 = vmatpush1.bf16.xpose.msra.mxu0 0
    %6020 = vmatprep.subr.bf16.mxu0 0
    %6021 = vmatpush1.bf16.xpose.msra.mxu0 0
    %6022 = vmatprep.subr.bf16.mxu0 0
    %6023 = vmatpush1.bf16.xpose.msra.mxu0 0
    %6024 = vmatprep.subr.bf16.mxu0 0
    %6025 = vmatpush1.bf16.xpose.msra.mxu0 0
    %6026 = vmatprep.mubr.bf16.mxu0 0
    %6027 = vmatmul.mubr.bf16.gmra.mrb[0].mxu0 %v5971
    %v6028 = vpop.f32.mrb[0].mxu0
    %v6029 = vadd.f32 0.0, %v6028
    %v6030 = vpop.f32.mrb[0].mxu0
    %v6031 = vpop.f32.mrb[0].mxu0
    %v6032 = vadd.f32 0.0, %v6031
    %v6033 = vpop.f32.mrb[0].mxu0
    %6034 = vmatprep.mubr.bf16.mxu0 0
    %6035 = vmatmul.mubr.bf16.gmra.mrb[0].mxu0 %v5974
    %v6036 = vpop.f32.mrb[0].mxu0
    %v6037 = vadd.f32 0.0, %v6036
    %v6038 = vpop.f32.mrb[0].mxu0
    %v6039 = vpop.f32.mrb[0].mxu0
    %v6040 = vadd.f32 0.0, %v6039
    %v6041 = vpop.f32.mrb[0].mxu0
    %6042 = vmatprep.mubr.bf16.mxu0 0
    %6043 = vmatmul.mubr.bf16.gmra.mrb[0].mxu0 %v5977
    %v6044 = vpop.f32.mrb[0].mxu0
    %v6045 = vadd.f32 0.0, %v6044
    %v6046 = vpop.f32.mrb[0].mxu0
    %v6047 = vpop.f32.mrb[0].mxu0
    %v6048 = vadd.f32 0.0, %v6047
    %v6049 = vpop.f32.mrb[0].mxu0
    %6050 = vmatprep.mubr.bf16.mxu0 0
    %6051 = vmatmul.mubr.bf16.gmra.mrb[0].mxu0 %v5980
    %v6052 = vpop.f32.mrb[0].mxu0
    %v6053 = vadd.f32 0.0, %v6052
    %v6054 = vpop.f32.mrb[0].mxu0
    %v6055 = vpop.f32.mrb[0].mxu0
    %v6056 = vadd.f32 0.0, %v6055
    %v6057 = vpop.f32.mrb[0].mxu0
    %6058 = vdwg.mxu0
    %v6059 = vmul.f32 %v6029, 0.17677669
    %v6060 = vmul.f32 %v6032, 0.17677669
    %v6061 = vmul.f32 %v6037, 0.17677669
    %v6062 = vmul.f32 %v6040, 0.17677669
    %v6063 = vmul.f32 %v6045, 0.17677669
    %v6064 = vmul.f32 %v6048, 0.17677669
    %v6065 = vmul.f32 %v6053, 0.17677669
    %v6066 = vmul.f32 %v6056, 0.17677669
    %v6067 = vsel %vm143, %v6059, -inf
    %6068 = vmax.xlane.f32.xlu0 %v6067
    %v6069 = vpop.xlane.xlu0 %6068
    %v6070 = vsel %vm143, %v6060, -inf
    %6071 = vmax.xlane.f32.xlu0 %v6070
    %v6072 = vpop.xlane.xlu0 %6071
    %v6073 = vsel %vm143, %v6061, -inf
    %6074 = vmax.xlane.f32.xlu0 %v6073
    %v6075 = vpop.xlane.xlu0 %6074
    %v6076 = vsel %vm143, %v6062, -inf
    %6077 = vmax.xlane.f32.xlu0 %v6076
    %v6078 = vpop.xlane.xlu0 %6077
    %v6079 = vsel %vm143, %v6063, -inf
    %6080 = vmax.xlane.f32.xlu0 %v6079
    %v6081 = vpop.xlane.xlu0 %6080
    %v6082 = vsel %vm143, %v6064, -inf
    %6083 = vmax.xlane.f32.xlu0 %v6082
    %v6084 = vpop.xlane.xlu0 %6083
    %v6085 = vsel %vm143, %v6065, -inf
    %6086 = vmax.xlane.f32.xlu0 %v6085
    %v6087 = vpop.xlane.xlu0 %6086
    %v6088 = vsel %vm143, %v6066, -inf
    %6089 = vmax.xlane.f32.xlu0 %v6088
    %v6090 = vpop.xlane.xlu0 %6089
    %v6091 = vsub.f32 %v6059, %v6069
    %v6092 = vsub.f32 %v6060, %v6072
    %v6093 = vsub.f32 %v6061, %v6075
    %v6094 = vsub.f32 %v6062, %v6078
    %v6095 = vsub.f32 %v6063, %v6081
    %v6096 = vsub.f32 %v6064, %v6084
    %v6097 = vsub.f32 %v6065, %v6087
    %v6098 = vsub.f32 %v6066, %v6090
    %v6099 = vmul.f32 %v6091, 1.442695
    %v6100 = vpow.pop %v6099
    %v6101 = vmul.f32 %v6092, 1.442695
    %v6102 = vpow.pop %v6101
    %v6103 = vmul.f32 %v6093, 1.442695
    %v6104 = vpow.pop %v6103
    %v6105 = vmul.f32 %v6094, 1.442695
    %v6106 = vpow.pop %v6105
    %v6107 = vmul.f32 %v6095, 1.442695
    %v6108 = vpow.pop %v6107
    %v6109 = vmul.f32 %v6096, 1.442695
    %v6110 = vpow.pop %v6109
    %v6111 = vmul.f32 %v6097, 1.442695
    %v6112 = vpow.pop %v6111
    %v6113 = vmul.f32 %v6098, 1.442695
    %v6114 = vpow.pop %v6113
    %v6115 = vsel %vm143, %v6100, 0.0
    %6116 = vadd.xlane.f32.xlu0 %v6115
    %v6117 = vpop.xlane.xlu0 %6116
    %v6118 = vsel %vm143, %v6102, 0.0
    %6119 = vadd.xlane.f32.xlu0 %v6118
    %v6120 = vpop.xlane.xlu0 %6119
    %v6121 = vsel %vm143, %v6104, 0.0
    %6122 = vadd.xlane.f32.xlu0 %v6121
    %v6123 = vpop.xlane.xlu0 %6122
    %v6124 = vsel %vm143, %v6106, 0.0
    %6125 = vadd.xlane.f32.xlu0 %v6124
    %v6126 = vpop.xlane.xlu0 %6125
    %v6127 = vsel %vm143, %v6108, 0.0
    %6128 = vadd.xlane.f32.xlu0 %v6127
    %v6129 = vpop.xlane.xlu0 %6128
    %v6130 = vsel %vm143, %v6110, 0.0
    %6131 = vadd.xlane.f32.xlu0 %v6130
    %v6132 = vpop.xlane.xlu0 %6131
    %v6133 = vsel %vm143, %v6112, 0.0
    %6134 = vadd.xlane.f32.xlu0 %v6133
    %v6135 = vpop.xlane.xlu0 %6134
    %v6136 = vsel %vm143, %v6114, 0.0
    %6137 = vadd.xlane.f32.xlu0 %v6136
    %v6138 = vpop.xlane.xlu0 %6137
    %v6139 = vrcp.pop %v6117
    %v6140 = vrcp.pop %v6120
    %v6141 = vrcp.pop %v6123
    %v6142 = vrcp.pop %v6126
    %v6143 = vrcp.pop %v6129
    %v6144 = vrcp.pop %v6132
    %v6145 = vrcp.pop %v6135
    %v6146 = vrcp.pop %v6138
    %v6147 = vmul.f32 %v6100, %v6139
    %v6148 = vmul.f32 %v6102, %v6140
    %v6149 = vmul.f32 %v6104, %v6141
    %v6150 = vmul.f32 %v6106, %v6142
    %v6151 = vmul.f32 %v6108, %v6143
    %v6152 = vmul.f32 %v6110, %v6144
    %v6153 = vmul.f32 %v6112, %v6145
    %v6154 = vmul.f32 %v6114, %v6146
    %v6155 = vpack.c.bf16 %v6148, %v6147
    %v6156 = vpack.c.bf16 %v6150, %v6149
    %v6157 = vpack.c.bf16 %v6152, %v6151
    %v6158 = vpack.c.bf16 %v6154, %v6153
    %6163 = vrot.lane.b32.xlu0 %v4422, 96
    %v6164 = vpop.permute.xlu0 %6163
    %6165 = vrot.lane.b32.xlu0 %v4425, 96
    %v6166 = vpop.permute.xlu0 %6165
    %6167 = vrot.lane.b32.xlu0 %v4428, 96
    %v6168 = vpop.permute.xlu0 %6167
    %6169 = vrot.lane.b32.xlu0 %v4431, 96
    %v6170 = vpop.permute.xlu0 %6169
    %v6176 = vsel %vm143, %v6155, 0
    %v6179 = vsel %vm143, %v6156, 0
    %v6182 = vsel %vm143, %v6157, 0
    %v6185 = vsel %vm143, %v6158, 0
    %6187 = vmatprep.subr.bf16.mxu0 0
    %6188 = vmatpush1.bf16.msra.mxu0 %v6164
    %6189 = vmatprep.subr.bf16.mxu0 0
    %6190 = vmatpush1.bf16.msra.mxu0 %v6166
    %6191 = vmatprep.subr.bf16.mxu0 0
    %6192 = vmatpush1.bf16.msra.mxu0 %v6168
    %6193 = vmatprep.subr.bf16.mxu0 0
    %6194 = vmatpush1.bf16.msra.mxu0 %v6170
    %6195 = vmatprep.subr.bf16.mxu0 0
    %6196 = vmatpush1.bf16.msra.mxu0 0
    %6197 = vmatprep.subr.bf16.mxu0 0
    %6198 = vmatpush1.bf16.msra.mxu0 0
    %6199 = vmatprep.subr.bf16.mxu0 0
    %6200 = vmatpush1.bf16.msra.mxu0 0
    %6201 = vmatprep.subr.bf16.mxu0 0
    %6202 = vmatpush1.bf16.msra.mxu0 0
    %6203 = vmatprep.subr.bf16.mxu0 0
    %6204 = vmatpush1.bf16.msra.mxu0 0
    %6205 = vmatprep.subr.bf16.mxu0 0
    %6206 = vmatpush1.bf16.msra.mxu0 0
    %6207 = vmatprep.subr.bf16.mxu0 0
    %6208 = vmatpush1.bf16.msra.mxu0 0
    %6209 = vmatprep.subr.bf16.mxu0 0
    %6210 = vmatpush1.bf16.msra.mxu0 0
    %6211 = vmatprep.subr.bf16.mxu0 0
    %6212 = vmatpush1.bf16.msra.mxu0 0
    %6213 = vmatprep.subr.bf16.mxu0 0
    %6214 = vmatpush1.bf16.msra.mxu0 0
    %6215 = vmatprep.subr.bf16.mxu0 0
    %6216 = vmatpush1.bf16.msra.mxu0 0
    %6217 = vmatprep.subr.bf16.mxu0 0
    %6218 = vmatpush1.bf16.msra.mxu0 0
    %6219 = vmatprep.mubr.bf16.mxu0 0
    %6220 = vmatmul.mubr.bf16.gmra.mrb[0].mxu0 %v6176
    %v6221 = vpop.f32.mrb[0].mxu0
    %v6222 = vadd.f32 0.0, %v6221
    %v6223 = vpop.f32.mrb[0].mxu0
    %v6224 = vpop.f32.mrb[0].mxu0
    %v6225 = vadd.f32 0.0, %v6224
    %v6226 = vpop.f32.mrb[0].mxu0
    %6227 = vmatprep.mubr.bf16.mxu0 0
    %6228 = vmatmul.mubr.bf16.gmra.mrb[0].mxu0 %v6179
    %v6229 = vpop.f32.mrb[0].mxu0
    %v6230 = vadd.f32 0.0, %v6229
    %v6231 = vpop.f32.mrb[0].mxu0
    %v6232 = vpop.f32.mrb[0].mxu0
    %v6233 = vadd.f32 0.0, %v6232
    %v6234 = vpop.f32.mrb[0].mxu0
    %6235 = vmatprep.mubr.bf16.mxu0 0
    %6236 = vmatmul.mubr.bf16.gmra.mrb[0].mxu0 %v6182
    %v6237 = vpop.f32.mrb[0].mxu0
    %v6238 = vadd.f32 0.0, %v6237
    %v6239 = vpop.f32.mrb[0].mxu0
    %v6240 = vpop.f32.mrb[0].mxu0
    %v6241 = vadd.f32 0.0, %v6240
    %v6242 = vpop.f32.mrb[0].mxu0
    %6243 = vmatprep.mubr.bf16.mxu0 0
    %6244 = vmatmul.mubr.bf16.gmra.mrb[0].mxu0 %v6185
    %v6245 = vpop.f32.mrb[0].mxu0
    %v6246 = vadd.f32 0.0, %v6245
    %v6247 = vpop.f32.mrb[0].mxu0
    %v6248 = vpop.f32.mrb[0].mxu0
    %v6249 = vadd.f32 0.0, %v6248
    %v6250 = vpop.f32.mrb[0].mxu0
    %6251 = vdwg.mxu0
    %v6252 = vpack.c.bf16 %v6225, %v6222
    %v6253 = vpack.c.bf16 %v6233, %v6230
    %v6254 = vpack.c.bf16 %v6241, %v6238
    %v6255 = vpack.c.bf16 %v6249, %v6246
    %6256 = vrot.lane.b32.xlu0 %v4420, 64
    %v6257 = vpop.permute.xlu0 %6256
    %6258 = vrot.lane.b32.xlu0 %v4423, 64
    %v6259 = vpop.permute.xlu0 %6258
    %6260 = vrot.lane.b32.xlu0 %v4426, 64
    %v6261 = vpop.permute.xlu0 %6260
    %6262 = vrot.lane.b32.xlu0 %v4429, 64
    %v6263 = vpop.permute.xlu0 %6262
    %6264 = vrot.lane.b32.xlu0 %v4421, 64
    %v6265 = vpop.permute.xlu0 %6264
    %6266 = vrot.lane.b32.xlu0 %v4424, 64
    %v6267 = vpop.permute.xlu0 %6266
    %6268 = vrot.lane.b32.xlu0 %v4427, 64
    %v6269 = vpop.permute.xlu0 %6268
    %6270 = vrot.lane.b32.xlu0 %v4430, 64
    %v6271 = vpop.permute.xlu0 %6270
    %v6273 = vsel %vm970, %v6257, 0
    %v6276 = vsel %vm970, %v6259, 0
    %v6279 = vsel %vm970, %v6261, 0
    %v6282 = vsel %vm970, %v6263, 0
    %v6285 = vsel %vm970, %v6265, 0
    %v6288 = vsel %vm970, %v6267, 0
    %v6291 = vsel %vm970, %v6269, 0
    %v6294 = vsel %vm970, %v6271, 0
    %6296 = vmatprep.subr.bf16.mxu0 0
    %6297 = vmatpush1.bf16.xpose.msra.mxu0 %v6285
    %6298 = vmatprep.subr.bf16.mxu0 0
    %6299 = vmatpush1.bf16.xpose.msra.mxu0 %v6288
    %6300 = vmatprep.subr.bf16.mxu0 0
    %6301 = vmatpush1.bf16.xpose.msra.mxu0 %v6291
    %6302 = vmatprep.subr.bf16.mxu0 0
    %6303 = vmatpush1.bf16.xpose.msra.mxu0 %v6294
    %6304 = vmatprep.subr.bf16.mxu0 0
    %6305 = vmatpush1.bf16.xpose.msra.mxu0 0
    %6306 = vmatprep.subr.bf16.mxu0 0
    %6307 = vmatpush1.bf16.xpose.msra.mxu0 0
    %6308 = vmatprep.subr.bf16.mxu0 0
    %6309 = vmatpush1.bf16.xpose.msra.mxu0 0
    %6310 = vmatprep.subr.bf16.mxu0 0
    %6311 = vmatpush1.bf16.xpose.msra.mxu0 0
    %6312 = vmatprep.subr.bf16.mxu0 0
    %6313 = vmatpush1.bf16.xpose.msra.mxu0 0
    %6314 = vmatprep.subr.bf16.mxu0 0
    %6315 = vmatpush1.bf16.xpose.msra.mxu0 0
    %6316 = vmatprep.subr.bf16.mxu0 0
    %6317 = vmatpush1.bf16.xpose.msra.mxu0 0
    %6318 = vmatprep.subr.bf16.mxu0 0
    %6319 = vmatpush1.bf16.xpose.msra.mxu0 0
    %6320 = vmatprep.subr.bf16.mxu0 0
    %6321 = vmatpush1.bf16.xpose.msra.mxu0 0
    %6322 = vmatprep.subr.bf16.mxu0 0
    %6323 = vmatpush1.bf16.xpose.msra.mxu0 0
    %6324 = vmatprep.subr.bf16.mxu0 0
    %6325 = vmatpush1.bf16.xpose.msra.mxu0 0
    %6326 = vmatprep.subr.bf16.mxu0 0
    %6327 = vmatpush1.bf16.xpose.msra.mxu0 0
    %6328 = vmatprep.mubr.bf16.mxu0 0
    %6329 = vmatmul.mubr.bf16.gmra.mrb[0].mxu0 %v6273
    %v6330 = vpop.f32.mrb[0].mxu0
    %v6331 = vadd.f32 0.0, %v6330
    %v6332 = vpop.f32.mrb[0].mxu0
    %v6333 = vpop.f32.mrb[0].mxu0
    %v6334 = vadd.f32 0.0, %v6333
    %v6335 = vpop.f32.mrb[0].mxu0
    %6336 = vmatprep.mubr.bf16.mxu0 0
    %6337 = vmatmul.mubr.bf16.gmra.mrb[0].mxu0 %v6276
    %v6338 = vpop.f32.mrb[0].mxu0
    %v6339 = vadd.f32 0.0, %v6338
    %v6340 = vpop.f32.mrb[0].mxu0
    %v6341 = vpop.f32.mrb[0].mxu0
    %v6342 = vadd.f32 0.0, %v6341
    %v6343 = vpop.f32.mrb[0].mxu0
    %6344 = vmatprep.mubr.bf16.mxu0 0
    %6345 = vmatmul.mubr.bf16.gmra.mrb[0].mxu0 %v6279
    %v6346 = vpop.f32.mrb[0].mxu0
    %v6347 = vadd.f32 0.0, %v6346
    %v6348 = vpop.f32.mrb[0].mxu0
    %v6349 = vpop.f32.mrb[0].mxu0
    %v6350 = vadd.f32 0.0, %v6349
    %v6351 = vpop.f32.mrb[0].mxu0
    %6352 = vmatprep.mubr.bf16.mxu0 0
    %6353 = vmatmul.mubr.bf16.gmra.mrb[0].mxu0 %v6282
    %v6354 = vpop.f32.mrb[0].mxu0
    %v6355 = vadd.f32 0.0, %v6354
    %v6356 = vpop.f32.mrb[0].mxu0
    %v6357 = vpop.f32.mrb[0].mxu0
    %v6358 = vadd.f32 0.0, %v6357
    %v6359 = vpop.f32.mrb[0].mxu0
    %6360 = vdwg.mxu0
    %v6361 = vmul.f32 %v6331, 0.17677669
    %v6362 = vmul.f32 %v6334, 0.17677669
    %v6363 = vmul.f32 %v6339, 0.17677669
    %v6364 = vmul.f32 %v6342, 0.17677669
    %v6365 = vmul.f32 %v6347, 0.17677669
    %v6366 = vmul.f32 %v6350, 0.17677669
    %v6367 = vmul.f32 %v6355, 0.17677669
    %v6368 = vmul.f32 %v6358, 0.17677669
    %v6369 = vsel %vm143, %v6361, -inf
    %6370 = vmax.xlane.f32.xlu0 %v6369
    %v6371 = vpop.xlane.xlu0 %6370
    %v6372 = vsel %vm143, %v6362, -inf
    %6373 = vmax.xlane.f32.xlu0 %v6372
    %v6374 = vpop.xlane.xlu0 %6373
    %v6375 = vsel %vm143, %v6363, -inf
    %6376 = vmax.xlane.f32.xlu0 %v6375
    %v6377 = vpop.xlane.xlu0 %6376
    %v6378 = vsel %vm143, %v6364, -inf
    %6379 = vmax.xlane.f32.xlu0 %v6378
    %v6380 = vpop.xlane.xlu0 %6379
    %v6381 = vsel %vm143, %v6365, -inf
    %6382 = vmax.xlane.f32.xlu0 %v6381
    %v6383 = vpop.xlane.xlu0 %6382
    %v6384 = vsel %vm143, %v6366, -inf
    %6385 = vmax.xlane.f32.xlu0 %v6384
    %v6386 = vpop.xlane.xlu0 %6385
    %v6387 = vsel %vm143, %v6367, -inf
    %6388 = vmax.xlane.f32.xlu0 %v6387
    %v6389 = vpop.xlane.xlu0 %6388
    %v6390 = vsel %vm143, %v6368, -inf
    %6391 = vmax.xlane.f32.xlu0 %v6390
    %v6392 = vpop.xlane.xlu0 %6391
    %v6393 = vsub.f32 %v6361, %v6371
    %v6394 = vsub.f32 %v6362, %v6374
    %v6395 = vsub.f32 %v6363, %v6377
    %v6396 = vsub.f32 %v6364, %v6380
    %v6397 = vsub.f32 %v6365, %v6383
    %v6398 = vsub.f32 %v6366, %v6386
    %v6399 = vsub.f32 %v6367, %v6389
    %v6400 = vsub.f32 %v6368, %v6392
    %v6401 = vmul.f32 %v6393, 1.442695
    %v6402 = vpow.pop %v6401
    %v6403 = vmul.f32 %v6394, 1.442695
    %v6404 = vpow.pop %v6403
    %v6405 = vmul.f32 %v6395, 1.442695
    %v6406 = vpow.pop %v6405
    %v6407 = vmul.f32 %v6396, 1.442695
    %v6408 = vpow.pop %v6407
    %v6409 = vmul.f32 %v6397, 1.442695
    %v6410 = vpow.pop %v6409
    %v6411 = vmul.f32 %v6398, 1.442695
    %v6412 = vpow.pop %v6411
    %v6413 = vmul.f32 %v6399, 1.442695
    %v6414 = vpow.pop %v6413
    %v6415 = vmul.f32 %v6400, 1.442695
    %v6416 = vpow.pop %v6415
    %v6417 = vsel %vm143, %v6402, 0.0
    %6418 = vadd.xlane.f32.xlu0 %v6417
    %v6419 = vpop.xlane.xlu0 %6418
    %v6420 = vsel %vm143, %v6404, 0.0
    %6421 = vadd.xlane.f32.xlu0 %v6420
    %v6422 = vpop.xlane.xlu0 %6421
    %v6423 = vsel %vm143, %v6406, 0.0
    %6424 = vadd.xlane.f32.xlu0 %v6423
    %v6425 = vpop.xlane.xlu0 %6424
    %v6426 = vsel %vm143, %v6408, 0.0
    %6427 = vadd.xlane.f32.xlu0 %v6426
    %v6428 = vpop.xlane.xlu0 %6427
    %v6429 = vsel %vm143, %v6410, 0.0
    %6430 = vadd.xlane.f32.xlu0 %v6429
    %v6431 = vpop.xlane.xlu0 %6430
    %v6432 = vsel %vm143, %v6412, 0.0
    %6433 = vadd.xlane.f32.xlu0 %v6432
    %v6434 = vpop.xlane.xlu0 %6433
    %v6435 = vsel %vm143, %v6414, 0.0
    %6436 = vadd.xlane.f32.xlu0 %v6435
    %v6437 = vpop.xlane.xlu0 %6436
    %v6438 = vsel %vm143, %v6416, 0.0
    %6439 = vadd.xlane.f32.xlu0 %v6438
    %v6440 = vpop.xlane.xlu0 %6439
    %v6441 = vrcp.pop %v6419
    %v6442 = vrcp.pop %v6422
    %v6443 = vrcp.pop %v6425
    %v6444 = vrcp.pop %v6428
    %v6445 = vrcp.pop %v6431
    %v6446 = vrcp.pop %v6434
    %v6447 = vrcp.pop %v6437
    %v6448 = vrcp.pop %v6440
    %v6449 = vmul.f32 %v6402, %v6441
    %v6450 = vmul.f32 %v6404, %v6442
    %v6451 = vmul.f32 %v6406, %v6443
    %v6452 = vmul.f32 %v6408, %v6444
    %v6453 = vmul.f32 %v6410, %v6445
    %v6454 = vmul.f32 %v6412, %v6446
    %v6455 = vmul.f32 %v6414, %v6447
    %v6456 = vmul.f32 %v6416, %v6448
    %v6457 = vpack.c.bf16 %v6450, %v6449
    %v6458 = vpack.c.bf16 %v6452, %v6451
    %v6459 = vpack.c.bf16 %v6454, %v6453
    %v6460 = vpack.c.bf16 %v6456, %v6455
    %6461 = vrot.lane.b32.xlu0 %v4422, 64
    %v6462 = vpop.permute.xlu0 %6461
    %6463 = vrot.lane.b32.xlu0 %v4425, 64
    %v6464 = vpop.permute.xlu0 %6463
    %6465 = vrot.lane.b32.xlu0 %v4428, 64
    %v6466 = vpop.permute.xlu0 %6465
    %6467 = vrot.lane.b32.xlu0 %v4431, 64
    %v6468 = vpop.permute.xlu0 %6467
    %v6474 = vsel %vm143, %v6457, 0
    %v6477 = vsel %vm143, %v6458, 0
    %v6480 = vsel %vm143, %v6459, 0
    %v6483 = vsel %vm143, %v6460, 0
    %6485 = vmatprep.subr.bf16.mxu0 0
    %6486 = vmatpush1.bf16.msra.mxu0 %v6462
    %6487 = vmatprep.subr.bf16.mxu0 0
    %6488 = vmatpush1.bf16.msra.mxu0 %v6464
    %6489 = vmatprep.subr.bf16.mxu0 0
    %6490 = vmatpush1.bf16.msra.mxu0 %v6466
    %6491 = vmatprep.subr.bf16.mxu0 0
    %6492 = vmatpush1.bf16.msra.mxu0 %v6468
    %6493 = vmatprep.subr.bf16.mxu0 0
    %6494 = vmatpush1.bf16.msra.mxu0 0
    %6495 = vmatprep.subr.bf16.mxu0 0
    %6496 = vmatpush1.bf16.msra.mxu0 0
    %6497 = vmatprep.subr.bf16.mxu0 0
    %6498 = vmatpush1.bf16.msra.mxu0 0
    %6499 = vmatprep.subr.bf16.mxu0 0
    %6500 = vmatpush1.bf16.msra.mxu0 0
    %6501 = vmatprep.subr.bf16.mxu0 0
    %6502 = vmatpush1.bf16.msra.mxu0 0
    %6503 = vmatprep.subr.bf16.mxu0 0
    %6504 = vmatpush1.bf16.msra.mxu0 0
    %6505 = vmatprep.subr.bf16.mxu0 0
    %6506 = vmatpush1.bf16.msra.mxu0 0
    %6507 = vmatprep.subr.bf16.mxu0 0
    %6508 = vmatpush1.bf16.msra.mxu0 0
    %6509 = vmatprep.subr.bf16.mxu0 0
    %6510 = vmatpush1.bf16.msra.mxu0 0
    %6511 = vmatprep.subr.bf16.mxu0 0
    %6512 = vmatpush1.bf16.msra.mxu0 0
    %6513 = vmatprep.subr.bf16.mxu0 0
    %6514 = vmatpush1.bf16.msra.mxu0 0
    %6515 = vmatprep.subr.bf16.mxu0 0
    %6516 = vmatpush1.bf16.msra.mxu0 0
    %6517 = vmatprep.mubr.bf16.mxu0 0
    %6518 = vmatmul.mubr.bf16.gmra.mrb[0].mxu0 %v6474
    %v6519 = vpop.f32.mrb[0].mxu0
    %v6520 = vadd.f32 0.0, %v6519
    %v6521 = vpop.f32.mrb[0].mxu0
    %v6522 = vpop.f32.mrb[0].mxu0
    %v6523 = vadd.f32 0.0, %v6522
    %v6524 = vpop.f32.mrb[0].mxu0
    %6525 = vmatprep.mubr.bf16.mxu0 0
    %6526 = vmatmul.mubr.bf16.gmra.mrb[0].mxu0 %v6477
    %v6527 = vpop.f32.mrb[0].mxu0
    %v6528 = vadd.f32 0.0, %v6527
    %v6529 = vpop.f32.mrb[0].mxu0
    %v6530 = vpop.f32.mrb[0].mxu0
    %v6531 = vadd.f32 0.0, %v6530
    %v6532 = vpop.f32.mrb[0].mxu0
    %6533 = vmatprep.mubr.bf16.mxu0 0
    %6534 = vmatmul.mubr.bf16.gmra.mrb[0].mxu0 %v6480
    %v6535 = vpop.f32.mrb[0].mxu0
    %v6536 = vadd.f32 0.0, %v6535
    %v6537 = vpop.f32.mrb[0].mxu0
    %v6538 = vpop.f32.mrb[0].mxu0
    %v6539 = vadd.f32 0.0, %v6538
    %v6540 = vpop.f32.mrb[0].mxu0
    %6541 = vmatprep.mubr.bf16.mxu0 0
    %6542 = vmatmul.mubr.bf16.gmra.mrb[0].mxu0 %v6483
    %v6543 = vpop.f32.mrb[0].mxu0
    %v6544 = vadd.f32 0.0, %v6543
    %v6545 = vpop.f32.mrb[0].mxu0
    %v6546 = vpop.f32.mrb[0].mxu0
    %v6547 = vadd.f32 0.0, %v6546
    %v6548 = vpop.f32.mrb[0].mxu0
    %6549 = vdwg.mxu0
    %v6550 = vpack.c.bf16 %v6523, %v6520
    %v6551 = vpack.c.bf16 %v6531, %v6528
    %v6552 = vpack.c.bf16 %v6539, %v6536
    %v6553 = vpack.c.bf16 %v6547, %v6544
    %6554 = vrot.lane.b32.xlu0 %v4420, 32
    %v6555 = vpop.permute.xlu0 %6554
    %6556 = vrot.lane.b32.xlu0 %v4423, 32
    %v6557 = vpop.permute.xlu0 %6556
    %6558 = vrot.lane.b32.xlu0 %v4426, 32
    %v6559 = vpop.permute.xlu0 %6558
    %6560 = vrot.lane.b32.xlu0 %v4429, 32
    %v6561 = vpop.permute.xlu0 %6560
    %6562 = vrot.lane.b32.xlu0 %v4421, 32
    %v6563 = vpop.permute.xlu0 %6562
    %6564 = vrot.lane.b32.xlu0 %v4424, 32
    %v6565 = vpop.permute.xlu0 %6564
    %6566 = vrot.lane.b32.xlu0 %v4427, 32
    %v6567 = vpop.permute.xlu0 %6566
    %6568 = vrot.lane.b32.xlu0 %v4430, 32
    %v6569 = vpop.permute.xlu0 %6568
    %v6571 = vsel %vm970, %v6555, 0
    %v6574 = vsel %vm970, %v6557, 0
    %v6577 = vsel %vm970, %v6559, 0
    %v6580 = vsel %vm970, %v6561, 0
    %v6583 = vsel %vm970, %v6563, 0
    %v6586 = vsel %vm970, %v6565, 0
    %v6589 = vsel %vm970, %v6567, 0
    %v6592 = vsel %vm970, %v6569, 0
    %6594 = vmatprep.subr.bf16.mxu0 0
    %6595 = vmatpush1.bf16.xpose.msra.mxu0 %v6583
    %6596 = vmatprep.subr.bf16.mxu0 0
    %6597 = vmatpush1.bf16.xpose.msra.mxu0 %v6586
    %6598 = vmatprep.subr.bf16.mxu0 0
    %6599 = vmatpush1.bf16.xpose.msra.mxu0 %v6589
    %6600 = vmatprep.subr.bf16.mxu0 0
    %6601 = vmatpush1.bf16.xpose.msra.mxu0 %v6592
    %6602 = vmatprep.subr.bf16.mxu0 0
    %6603 = vmatpush1.bf16.xpose.msra.mxu0 0
    %6604 = vmatprep.subr.bf16.mxu0 0
    %6605 = vmatpush1.bf16.xpose.msra.mxu0 0
    %6606 = vmatprep.subr.bf16.mxu0 0
    %6607 = vmatpush1.bf16.xpose.msra.mxu0 0
    %6608 = vmatprep.subr.bf16.mxu0 0
    %6609 = vmatpush1.bf16.xpose.msra.mxu0 0
    %6610 = vmatprep.subr.bf16.mxu0 0
    %6611 = vmatpush1.bf16.xpose.msra.mxu0 0
    %6612 = vmatprep.subr.bf16.mxu0 0
    %6613 = vmatpush1.bf16.xpose.msra.mxu0 0
    %6614 = vmatprep.subr.bf16.mxu0 0
    %6615 = vmatpush1.bf16.xpose.msra.mxu0 0
    %6616 = vmatprep.subr.bf16.mxu0 0
    %6617 = vmatpush1.bf16.xpose.msra.mxu0 0
    %6618 = vmatprep.subr.bf16.mxu0 0
    %6619 = vmatpush1.bf16.xpose.msra.mxu0 0
    %6620 = vmatprep.subr.bf16.mxu0 0
    %6621 = vmatpush1.bf16.xpose.msra.mxu0 0
    %6622 = vmatprep.subr.bf16.mxu0 0
    %6623 = vmatpush1.bf16.xpose.msra.mxu0 0
    %6624 = vmatprep.subr.bf16.mxu0 0
    %6625 = vmatpush1.bf16.xpose.msra.mxu0 0
    %6626 = vmatprep.mubr.bf16.mxu0 0
    %6627 = vmatmul.mubr.bf16.gmra.mrb[0].mxu0 %v6571
    %v6628 = vpop.f32.mrb[0].mxu0
    %v6629 = vadd.f32 0.0, %v6628
    %v6630 = vpop.f32.mrb[0].mxu0
    %v6631 = vpop.f32.mrb[0].mxu0
    %v6632 = vadd.f32 0.0, %v6631
    %v6633 = vpop.f32.mrb[0].mxu0
    %6634 = vmatprep.mubr.bf16.mxu0 0
    %6635 = vmatmul.mubr.bf16.gmra.mrb[0].mxu0 %v6574
    %v6636 = vpop.f32.mrb[0].mxu0
    %v6637 = vadd.f32 0.0, %v6636
    %v6638 = vpop.f32.mrb[0].mxu0
    %v6639 = vpop.f32.mrb[0].mxu0
    %v6640 = vadd.f32 0.0, %v6639
    %v6641 = vpop.f32.mrb[0].mxu0
    %6642 = vmatprep.mubr.bf16.mxu0 0
    %6643 = vmatmul.mubr.bf16.gmra.mrb[0].mxu0 %v6577
    %v6644 = vpop.f32.mrb[0].mxu0
    %v6645 = vadd.f32 0.0, %v6644
    %v6646 = vpop.f32.mrb[0].mxu0
    %v6647 = vpop.f32.mrb[0].mxu0
    %v6648 = vadd.f32 0.0, %v6647
    %v6649 = vpop.f32.mrb[0].mxu0
    %6650 = vmatprep.mubr.bf16.mxu0 0
    %6651 = vmatmul.mubr.bf16.gmra.mrb[0].mxu0 %v6580
    %v6652 = vpop.f32.mrb[0].mxu0
    %v6653 = vadd.f32 0.0, %v6652
    %v6654 = vpop.f32.mrb[0].mxu0
    %v6655 = vpop.f32.mrb[0].mxu0
    %v6656 = vadd.f32 0.0, %v6655
    %v6657 = vpop.f32.mrb[0].mxu0
    %6658 = vdwg.mxu0
    %v6659 = vmul.f32 %v6629, 0.17677669
    %v6660 = vmul.f32 %v6632, 0.17677669
    %v6661 = vmul.f32 %v6637, 0.17677669
    %v6662 = vmul.f32 %v6640, 0.17677669
    %v6663 = vmul.f32 %v6645, 0.17677669
    %v6664 = vmul.f32 %v6648, 0.17677669
    %v6665 = vmul.f32 %v6653, 0.17677669
    %v6666 = vmul.f32 %v6656, 0.17677669
    %v6667 = vsel %vm143, %v6659, -inf
    %6668 = vmax.xlane.f32.xlu0 %v6667
    %v6669 = vpop.xlane.xlu0 %6668
    %v6670 = vsel %vm143, %v6660, -inf
    %6671 = vmax.xlane.f32.xlu0 %v6670
    %v6672 = vpop.xlane.xlu0 %6671
    %v6673 = vsel %vm143, %v6661, -inf
    %6674 = vmax.xlane.f32.xlu0 %v6673
    %v6675 = vpop.xlane.xlu0 %6674
    %v6676 = vsel %vm143, %v6662, -inf
    %6677 = vmax.xlane.f32.xlu0 %v6676
    %v6678 = vpop.xlane.xlu0 %6677
    %v6679 = vsel %vm143, %v6663, -inf
    %6680 = vmax.xlane.f32.xlu0 %v6679
    %v6681 = vpop.xlane.xlu0 %6680
    %v6682 = vsel %vm143, %v6664, -inf
    %6683 = vmax.xlane.f32.xlu0 %v6682
    %v6684 = vpop.xlane.xlu0 %6683
    %v6685 = vsel %vm143, %v6665, -inf
    %6686 = vmax.xlane.f32.xlu0 %v6685
    %v6687 = vpop.xlane.xlu0 %6686
    %v6688 = vsel %vm143, %v6666, -inf
    %6689 = vmax.xlane.f32.xlu0 %v6688
    %v6690 = vpop.xlane.xlu0 %6689
    %v6691 = vsub.f32 %v6659, %v6669
    %v6692 = vsub.f32 %v6660, %v6672
    %v6693 = vsub.f32 %v6661, %v6675
    %v6694 = vsub.f32 %v6662, %v6678
    %v6695 = vsub.f32 %v6663, %v6681
    %v6696 = vsub.f32 %v6664, %v6684
    %v6697 = vsub.f32 %v6665, %v6687
    %v6698 = vsub.f32 %v6666, %v6690
    %v6699 = vmul.f32 %v6691, 1.442695
    %v6700 = vpow.pop %v6699
    %v6701 = vmul.f32 %v6692, 1.442695
    %v6702 = vpow.pop %v6701
    %v6703 = vmul.f32 %v6693, 1.442695
    %v6704 = vpow.pop %v6703
    %v6705 = vmul.f32 %v6694, 1.442695
    %v6706 = vpow.pop %v6705
    %v6707 = vmul.f32 %v6695, 1.442695
    %v6708 = vpow.pop %v6707
    %v6709 = vmul.f32 %v6696, 1.442695
    %v6710 = vpow.pop %v6709
    %v6711 = vmul.f32 %v6697, 1.442695
    %v6712 = vpow.pop %v6711
    %v6713 = vmul.f32 %v6698, 1.442695
    %v6714 = vpow.pop %v6713
    %v6715 = vsel %vm143, %v6700, 0.0
    %6716 = vadd.xlane.f32.xlu0 %v6715
    %v6717 = vpop.xlane.xlu0 %6716
    %v6718 = vsel %vm143, %v6702, 0.0
    %6719 = vadd.xlane.f32.xlu0 %v6718
    %v6720 = vpop.xlane.xlu0 %6719
    %v6721 = vsel %vm143, %v6704, 0.0
    %6722 = vadd.xlane.f32.xlu0 %v6721
    %v6723 = vpop.xlane.xlu0 %6722
    %v6724 = vsel %vm143, %v6706, 0.0
    %6725 = vadd.xlane.f32.xlu0 %v6724
    %v6726 = vpop.xlane.xlu0 %6725
    %v6727 = vsel %vm143, %v6708, 0.0
    %6728 = vadd.xlane.f32.xlu0 %v6727
    %v6729 = vpop.xlane.xlu0 %6728
    %v6730 = vsel %vm143, %v6710, 0.0
    %6731 = vadd.xlane.f32.xlu0 %v6730
    %v6732 = vpop.xlane.xlu0 %6731
    %v6733 = vsel %vm143, %v6712, 0.0
    %6734 = vadd.xlane.f32.xlu0 %v6733
    %v6735 = vpop.xlane.xlu0 %6734
    %v6736 = vsel %vm143, %v6714, 0.0
    %6737 = vadd.xlane.f32.xlu0 %v6736
    %v6738 = vpop.xlane.xlu0 %6737
    %v6739 = vrcp.pop %v6717
    %v6740 = vrcp.pop %v6720
    %v6741 = vrcp.pop %v6723
    %v6742 = vrcp.pop %v6726
    %v6743 = vrcp.pop %v6729
    %v6744 = vrcp.pop %v6732
    %v6745 = vrcp.pop %v6735
    %v6746 = vrcp.pop %v6738
    %v6747 = vmul.f32 %v6700, %v6739
    %v6748 = vmul.f32 %v6702, %v6740
    %v6749 = vmul.f32 %v6704, %v6741
    %v6750 = vmul.f32 %v6706, %v6742
    %v6751 = vmul.f32 %v6708, %v6743
    %v6752 = vmul.f32 %v6710, %v6744
    %v6753 = vmul.f32 %v6712, %v6745
    %v6754 = vmul.f32 %v6714, %v6746
    %v6755 = vpack.c.bf16 %v6748, %v6747
    %v6756 = vpack.c.bf16 %v6750, %v6749
    %v6757 = vpack.c.bf16 %v6752, %v6751
    %v6758 = vpack.c.bf16 %v6754, %v6753
    %6759 = vrot.lane.b32.xlu0 %v4422, 32
    %v6760 = vpop.permute.xlu0 %6759
    %6761 = vrot.lane.b32.xlu0 %v4425, 32
    %v6762 = vpop.permute.xlu0 %6761
    %6763 = vrot.lane.b32.xlu0 %v4428, 32
    %v6764 = vpop.permute.xlu0 %6763
    %6765 = vrot.lane.b32.xlu0 %v4431, 32
    %v6766 = vpop.permute.xlu0 %6765
    %v6772 = vsel %vm143, %v6755, 0
    %v6775 = vsel %vm143, %v6756, 0
    %v6778 = vsel %vm143, %v6757, 0
    %v6781 = vsel %vm143, %v6758, 0
    %6783 = vmatprep.subr.bf16.mxu0 0
    %6784 = vmatpush1.bf16.msra.mxu0 %v6760
    %6785 = vmatprep.subr.bf16.mxu0 0
    %6786 = vmatpush1.bf16.msra.mxu0 %v6762
    %6787 = vmatprep.subr.bf16.mxu0 0
    %6788 = vmatpush1.bf16.msra.mxu0 %v6764
    %6789 = vmatprep.subr.bf16.mxu0 0
    %6790 = vmatpush1.bf16.msra.mxu0 %v6766
    %6791 = vmatprep.subr.bf16.mxu0 0
    %6792 = vmatpush1.bf16.msra.mxu0 0
    %6793 = vmatprep.subr.bf16.mxu0 0
    %6794 = vmatpush1.bf16.msra.mxu0 0
    %6795 = vmatprep.subr.bf16.mxu0 0
    %6796 = vmatpush1.bf16.msra.mxu0 0
    %6797 = vmatprep.subr.bf16.mxu0 0
    %6798 = vmatpush1.bf16.msra.mxu0 0
    %6799 = vmatprep.subr.bf16.mxu0 0
    %6800 = vmatpush1.bf16.msra.mxu0 0
    %6801 = vmatprep.subr.bf16.mxu0 0
    %6802 = vmatpush1.bf16.msra.mxu0 0
    %6803 = vmatprep.subr.bf16.mxu0 0
    %6804 = vmatpush1.bf16.msra.mxu0 0
    %6805 = vmatprep.subr.bf16.mxu0 0
    %6806 = vmatpush1.bf16.msra.mxu0 0
    %6807 = vmatprep.subr.bf16.mxu0 0
    %6808 = vmatpush1.bf16.msra.mxu0 0
    %6809 = vmatprep.subr.bf16.mxu0 0
    %6810 = vmatpush1.bf16.msra.mxu0 0
    %6811 = vmatprep.subr.bf16.mxu0 0
    %6812 = vmatpush1.bf16.msra.mxu0 0
    %6813 = vmatprep.subr.bf16.mxu0 0
    %6814 = vmatpush1.bf16.msra.mxu0 0
    %6815 = vmatprep.mubr.bf16.mxu0 0
    %6816 = vmatmul.mubr.bf16.gmra.mrb[0].mxu0 %v6772
    %v6817 = vpop.f32.mrb[0].mxu0
    %v6818 = vadd.f32 0.0, %v6817
    %v6819 = vpop.f32.mrb[0].mxu0
    %v6820 = vpop.f32.mrb[0].mxu0
    %v6821 = vadd.f32 0.0, %v6820
    %v6822 = vpop.f32.mrb[0].mxu0
    %6823 = vmatprep.mubr.bf16.mxu0 0
    %6824 = vmatmul.mubr.bf16.gmra.mrb[0].mxu0 %v6775
    %v6825 = vpop.f32.mrb[0].mxu0
    %v6826 = vadd.f32 0.0, %v6825
    %v6827 = vpop.f32.mrb[0].mxu0
    %v6828 = vpop.f32.mrb[0].mxu0
    %v6829 = vadd.f32 0.0, %v6828
    %v6830 = vpop.f32.mrb[0].mxu0
    %6831 = vmatprep.mubr.bf16.mxu0 0
    %6832 = vmatmul.mubr.bf16.gmra.mrb[0].mxu0 %v6778
    %v6833 = vpop.f32.mrb[0].mxu0
    %v6834 = vadd.f32 0.0, %v6833
    %v6835 = vpop.f32.mrb[0].mxu0
    %v6836 = vpop.f32.mrb[0].mxu0
    %v6837 = vadd.f32 0.0, %v6836
    %v6838 = vpop.f32.mrb[0].mxu0
    %6839 = vmatprep.mubr.bf16.mxu0 0
    %6840 = vmatmul.mubr.bf16.gmra.mrb[0].mxu0 %v6781
    %v6841 = vpop.f32.mrb[0].mxu0
    %v6842 = vadd.f32 0.0, %v6841
    %v6843 = vpop.f32.mrb[0].mxu0
    %v6844 = vpop.f32.mrb[0].mxu0
    %v6845 = vadd.f32 0.0, %v6844
    %v6846 = vpop.f32.mrb[0].mxu0
    %6847 = vdwg.mxu0
    %v6848 = vpack.c.bf16 %v6821, %v6818
    %v6849 = vpack.c.bf16 %v6829, %v6826
    %v6850 = vpack.c.bf16 %v6837, %v6834
    %v6851 = vpack.c.bf16 %v6845, %v6842
    %6856 = vrot.lane.b32.xlu0 %v6252, 32
    %v6857 = vpop.permute.xlu0 %6856
    %6858 = vrot.lane.b32.xlu0 %v6253, 32
    %v6859 = vpop.permute.xlu0 %6858
    %6860 = vrot.lane.b32.xlu0 %v6254, 32
    %v6861 = vpop.permute.xlu0 %6860
    %6862 = vrot.lane.b32.xlu0 %v6255, 32
    %v6863 = vpop.permute.xlu0 %6862
    %6868 = vrot.lane.b32.xlu0 %v6550, 64
    %v6869 = vpop.permute.xlu0 %6868
    %6870 = vrot.lane.b32.xlu0 %v6551, 64
    %v6871 = vpop.permute.xlu0 %6870
    %6872 = vrot.lane.b32.xlu0 %v6552, 64
    %v6873 = vpop.permute.xlu0 %6872
    %6874 = vrot.lane.b32.xlu0 %v6553, 64
    %v6875 = vpop.permute.xlu0 %6874
    %6880 = vrot.lane.b32.xlu0 %v6848, 96
    %v6881 = vpop.permute.xlu0 %6880
    %6882 = vrot.lane.b32.xlu0 %v6849, 96
    %v6883 = vpop.permute.xlu0 %6882
    %6884 = vrot.lane.b32.xlu0 %v6850, 96
    %v6885 = vpop.permute.xlu0 %6884
    %6886 = vrot.lane.b32.xlu0 %v6851, 96
    %v6887 = vpop.permute.xlu0 %6886
    %v6890 = vsel %vm970, %v5942, %v6857
    %v6893 = vsel %vm970, %v5943, %v6859
    %v6896 = vsel %vm970, %v5944, %v6861
    %v6899 = vsel %vm970, %v5945, %v6863
    %v6901 = vsel %vm143, %v6890, %v6869
    %v6903 = vsel %vm143, %v6893, %v6871
    %v6905 = vsel %vm143, %v6896, %v6873
    %v6907 = vsel %vm143, %v6899, %v6875
    %v6909 = vsel %vm2203, %v6901, %v6881
    %v6912 = vsel %vm2203, %v6903, %v6883
    %v6915 = vsel %vm2203, %v6905, %v6885
    %v6918 = vsel %vm2203, %v6907, %v6887
    %v6920 = vld [vmem:[#allocation2 + $0x120] sm:$0xf]
    %v6921 = vld [vmem:[#allocation2 + $0x124] sm:$0xf]
    %v6922 = vld [vmem:[#allocation2 + $0x128] sm:$0xf]
    %v6923 = vld [vmem:[#allocation2 + $0x12c] sm:$0xf]
    %v6924 = vld [vmem:[#allocation2 + $0x130] sm:$0xf]
    %v6925 = vld [vmem:[#allocation2 + $0x134] sm:$0xf]
    %v6926 = vld [vmem:[#allocation2 + $0x138] sm:$0xf]
    %v6927 = vld [vmem:[#allocation2 + $0x13c] sm:$0xf]
    %v6928 = vld [vmem:[#allocation2 + $0x140] sm:$0xf]
    %v6929 = vld [vmem:[#allocation2 + $0x144] sm:$0xf]
    %v6930 = vld [vmem:[#allocation2 + $0x148] sm:$0xf]
    %v6931 = vld [vmem:[#allocation2 + $0x14c] sm:$0xf]
    %v6932 = vld [vmem:[#allocation2 + $0x150] sm:$0xf]
    %v6933 = vld [vmem:[#allocation2 + $0x154] sm:$0xf]
    %v6934 = vld [vmem:[#allocation2 + $0x158] sm:$0xf]
    %v6935 = vld [vmem:[#allocation2 + $0x15c] sm:$0xf]
    %v6952 = vunpack.c.l.b16 %v6920
    %v6953 = vunpack.c.l.b16 %v6921
    %v6954 = vunpack.c.l.b16 %v6922
    %v6955 = vunpack.c.l.b16 %v6923
    %v6956 = vunpack.c.l.b16 %v6924
    %v6957 = vunpack.c.l.b16 %v6925
    %v6958 = vunpack.c.l.b16 %v6926
    %v6959 = vunpack.c.l.b16 %v6927
    %v6960 = vunpack.c.l.b16 %v6928
    %v6961 = vunpack.c.l.b16 %v6929
    %v6962 = vunpack.c.l.b16 %v6930
    %v6963 = vunpack.c.l.b16 %v6931
    %v6964 = vunpack.c.l.b16 %v6932
    %v6965 = vunpack.c.l.b16 %v6933
    %v6966 = vunpack.c.l.b16 %v6934
    %v6967 = vunpack.c.l.b16 %v6935
    %v6968 = vpack.c.b16 %v6953, %v6952
    %v6969 = vpack.c.b16 %v6955, %v6954
    %v6970 = vpack.c.b16 %v6957, %v6956
    %v6971 = vpack.c.b16 %v6959, %v6958
    %v6972 = vpack.c.b16 %v6961, %v6960
    %v6973 = vpack.c.b16 %v6963, %v6962
    %v6974 = vpack.c.b16 %v6965, %v6964
    %v6975 = vpack.c.b16 %v6967, %v6966
    %6984 = vmatprep.subr.bf16.mxu0 0
    %6985 = vmatpush1.bf16.msra.mxu0 %v6968
    %6986 = vmatprep.subr.bf16.mxu0 0
    %6987 = vmatpush1.bf16.msra.mxu0 %v6969
    %6988 = vmatprep.subr.bf16.mxu0 0
    %6989 = vmatpush1.bf16.msra.mxu0 %v6970
    %6990 = vmatprep.subr.bf16.mxu0 0
    %6991 = vmatpush1.bf16.msra.mxu0 %v6971
    %6992 = vmatprep.subr.bf16.mxu0 0
    %6993 = vmatpush1.bf16.msra.mxu0 %v6972
    %6994 = vmatprep.subr.bf16.mxu0 0
    %6995 = vmatpush1.bf16.msra.mxu0 %v6973
    %6996 = vmatprep.subr.bf16.mxu0 0
    %6997 = vmatpush1.bf16.msra.mxu0 %v6974
    %6998 = vmatprep.subr.bf16.mxu0 0
    %6999 = vmatpush1.bf16.msra.mxu0 %v6975
    %7000 = vmatprep.subr.bf16.mxu0 0
    %7001 = vmatpush1.bf16.msra.mxu0 0
    %7002 = vmatprep.subr.bf16.mxu0 0
    %7003 = vmatpush1.bf16.msra.mxu0 0
    %7004 = vmatprep.subr.bf16.mxu0 0
    %7005 = vmatpush1.bf16.msra.mxu0 0
    %7006 = vmatprep.subr.bf16.mxu0 0
    %7007 = vmatpush1.bf16.msra.mxu0 0
    %7008 = vmatprep.subr.bf16.mxu0 0
    %7009 = vmatpush1.bf16.msra.mxu0 0
    %7010 = vmatprep.subr.bf16.mxu0 0
    %7011 = vmatpush1.bf16.msra.mxu0 0
    %7012 = vmatprep.subr.bf16.mxu0 0
    %7013 = vmatpush1.bf16.msra.mxu0 0
    %7014 = vmatprep.subr.bf16.mxu0 0
    %7015 = vmatpush1.bf16.msra.mxu0 0
    %7016 = vmatprep.mubr.bf16.mxu0 0
    %7017 = vmatmul.mubr.bf16.gmra.mrb[0].mxu0 %v5665
    %v7018 = vpop.f32.mrb[0].mxu0
    %v7019 = vadd.f32 0.0, %v7018
    %v7020 = vpop.f32.mrb[0].mxu0
    %v7021 = vpop.f32.mrb[0].mxu0
    %v7022 = vadd.f32 0.0, %v7021
    %v7023 = vpop.f32.mrb[0].mxu0
    %7024 = vmatprep.mubr.bf16.mxu0 0
    %7025 = vmatmul.mubr.bf16.gmra.mrb[0].mxu0 %v5668
    %v7026 = vpop.f32.mrb[0].mxu0
    %v7027 = vadd.f32 0.0, %v7026
    %v7028 = vpop.f32.mrb[0].mxu0
    %v7029 = vpop.f32.mrb[0].mxu0
    %v7030 = vadd.f32 0.0, %v7029
    %v7031 = vpop.f32.mrb[0].mxu0
    %7032 = vmatprep.mubr.bf16.mxu0 0
    %7033 = vmatmul.mubr.bf16.gmra.mrb[0].mxu0 %v5671
    %v7034 = vpop.f32.mrb[0].mxu0
    %v7035 = vadd.f32 0.0, %v7034
    %v7036 = vpop.f32.mrb[0].mxu0
    %v7037 = vpop.f32.mrb[0].mxu0
    %v7038 = vadd.f32 0.0, %v7037
    %v7039 = vpop.f32.mrb[0].mxu0
    %7040 = vmatprep.mubr.bf16.mxu0 0
    %7041 = vmatmul.mubr.bf16.gmra.mrb[0].mxu0 %v5674
    %v7042 = vpop.f32.mrb[0].mxu0
    %v7043 = vadd.f32 0.0, %v7042
    %v7044 = vpop.f32.mrb[0].mxu0
    %v7045 = vpop.f32.mrb[0].mxu0
    %v7046 = vadd.f32 0.0, %v7045
    %v7047 = vpop.f32.mrb[0].mxu0
    %7048 = vmatprep.mubr.bf16.mxu0 0
    %7049 = vmatmul.mubr.bf16.gmra.mrb[0].mxu0 %v6909
    %v7050 = vpop.f32.mrb[0].mxu0
    %v7051 = vadd.f32 0.0, %v7050
    %v7052 = vpop.f32.mrb[0].mxu0
    %v7053 = vpop.f32.mrb[0].mxu0
    %v7054 = vadd.f32 0.0, %v7053
    %v7055 = vpop.f32.mrb[0].mxu0
    %7056 = vmatprep.mubr.bf16.mxu0 0
    %7057 = vmatmul.mubr.bf16.gmra.mrb[0].mxu0 %v6912
    %v7058 = vpop.f32.mrb[0].mxu0
    %v7059 = vadd.f32 0.0, %v7058
    %v7060 = vpop.f32.mrb[0].mxu0
    %v7061 = vpop.f32.mrb[0].mxu0
    %v7062 = vadd.f32 0.0, %v7061
    %v7063 = vpop.f32.mrb[0].mxu0
    %7064 = vmatprep.mubr.bf16.mxu0 0
    %7065 = vmatmul.mubr.bf16.gmra.mrb[0].mxu0 %v6915
    %v7066 = vpop.f32.mrb[0].mxu0
    %v7067 = vadd.f32 0.0, %v7066
    %v7068 = vpop.f32.mrb[0].mxu0
    %v7069 = vpop.f32.mrb[0].mxu0
    %v7070 = vadd.f32 0.0, %v7069
    %v7071 = vpop.f32.mrb[0].mxu0
    %7072 = vmatprep.mubr.bf16.mxu0 0
    %7073 = vmatmul.mubr.bf16.gmra.mrb[0].mxu0 %v6918
    %v7074 = vpop.f32.mrb[0].mxu0
    %v7075 = vadd.f32 0.0, %v7074
    %v7076 = vpop.f32.mrb[0].mxu0
    %v7077 = vpop.f32.mrb[0].mxu0
    %v7078 = vadd.f32 0.0, %v7077
    %v7079 = vpop.f32.mrb[0].mxu0
    %7080 = vdwg.mxu0
    %v7081 = vadd.f32 %v3996, %v7019
    %v7082 = vadd.f32 %v3997, %v7022
    %v7083 = vadd.f32 %v3998, %v7027
    %v7084 = vadd.f32 %v3999, %v7030
    %v7085 = vadd.f32 %v4000, %v7035
    %v7086 = vadd.f32 %v4001, %v7038
    %v7087 = vadd.f32 %v4002, %v7043
    %v7088 = vadd.f32 %v4003, %v7046
    %v7089 = vadd.f32 %v4004, %v7051
    %v7090 = vadd.f32 %v4005, %v7054
    %v7091 = vadd.f32 %v4006, %v7059
    %v7092 = vadd.f32 %v4007, %v7062
    %v7093 = vadd.f32 %v4008, %v7067
    %v7094 = vadd.f32 %v4009, %v7070
    %v7095 = vadd.f32 %v4010, %v7075
    %v7096 = vadd.f32 %v4011, %v7078
    %v7097 = vld [vmem:[%s3 + $0x3] sm:$0x1]
    %v7098 = vlaneseq
    %v7099 = vshrl.u32 %v7098, 7
    %v7100 = vsub.s32 0, %v7099
    %v7101 = vrot.slane %v7097, %v7100
    %v7102 = vadd.f32 %v7081, %v7101
    %v7103 = vadd.f32 %v7082, %v7101
    %v7104 = vadd.f32 %v7083, %v7101
    %v7105 = vadd.f32 %v7084, %v7101
    %v7106 = vadd.f32 %v7085, %v7101
    %v7107 = vadd.f32 %v7086, %v7101
    %v7108 = vadd.f32 %v7087, %v7101
    %v7109 = vadd.f32 %v7088, %v7101
    %v7110 = vadd.f32 %v7089, %v7101
    %v7111 = vadd.f32 %v7090, %v7101
    %v7112 = vadd.f32 %v7091, %v7101
    %v7113 = vadd.f32 %v7092, %v7101
    %v7114 = vadd.f32 %v7093, %v7101
    %v7115 = vadd.f32 %v7094, %v7101
    %v7116 = vadd.f32 %v7095, %v7101
    %v7117 = vadd.f32 %v7096, %v7101
    %v7118 = vpack.c.bf16 %v7103, %v7102
    %v7119 = vpack.c.bf16 %v7105, %v7104
    %v7120 = vpack.c.bf16 %v7107, %v7106
    %v7121 = vpack.c.bf16 %v7109, %v7108
    %v7122 = vpack.c.bf16 %v7111, %v7110
    %v7123 = vpack.c.bf16 %v7113, %v7112
    %v7124 = vpack.c.bf16 %v7115, %v7114
    %v7125 = vpack.c.bf16 %v7117, %v7116
    %v7126 = vld [vmem:[#allocation2 + $0x160] sm:$0xf]
    %v7127 = vld [vmem:[#allocation2 + $0x164] sm:$0xf]
    %v7128 = vld [vmem:[#allocation2 + $0x168] sm:$0xf]
    %v7129 = vld [vmem:[#allocation2 + $0x16c] sm:$0xf]
    %v7130 = vld [vmem:[#allocation2 + $0x170] sm:$0xf]
    %v7131 = vld [vmem:[#allocation2 + $0x174] sm:$0xf]
    %v7132 = vld [vmem:[#allocation2 + $0x178] sm:$0xf]
    %v7133 = vld [vmem:[#allocation2 + $0x17c] sm:$0xf]
    %v7134 = vld [vmem:[#allocation2 + $0x180] sm:$0xf]
    %v7135 = vld [vmem:[#allocation2 + $0x184] sm:$0xf]
    %v7136 = vld [vmem:[#allocation2 + $0x188] sm:$0xf]
    %v7137 = vld [vmem:[#allocation2 + $0x18c] sm:$0xf]
    %v7138 = vld [vmem:[#allocation2 + $0x190] sm:$0xf]
    %v7139 = vld [vmem:[#allocation2 + $0x194] sm:$0xf]
    %v7140 = vld [vmem:[#allocation2 + $0x198] sm:$0xf]
    %v7141 = vld [vmem:[#allocation2 + $0x19c] sm:$0xf]
    %v7158 = vunpack.c.l.b16 %v7126
    %v7159 = vunpack.c.l.b16 %v7127
    %v7160 = vunpack.c.l.b16 %v7128
    %v7161 = vunpack.c.l.b16 %v7129
    %v7162 = vunpack.c.l.b16 %v7130
    %v7163 = vunpack.c.l.b16 %v7131
    %v7164 = vunpack.c.l.b16 %v7132
    %v7165 = vunpack.c.l.b16 %v7133
    %v7166 = vunpack.c.l.b16 %v7134
    %v7167 = vunpack.c.l.b16 %v7135
    %v7168 = vunpack.c.l.b16 %v7136
    %v7169 = vunpack.c.l.b16 %v7137
    %v7170 = vunpack.c.l.b16 %v7138
    %v7171 = vunpack.c.l.b16 %v7139
    %v7172 = vunpack.c.l.b16 %v7140
    %v7173 = vunpack.c.l.b16 %v7141
    %v7174 = vpack.c.b16 %v7159, %v7158
    %v7175 = vpack.c.b16 %v7161, %v7160
    %v7176 = vpack.c.b16 %v7163, %v7162
    %v7177 = vpack.c.b16 %v7165, %v7164
    %v7178 = vpack.c.b16 %v7167, %v7166
    %v7179 = vpack.c.b16 %v7169, %v7168
    %v7180 = vpack.c.b16 %v7171, %v7170
    %v7181 = vpack.c.b16 %v7173, %v7172
    %7190 = vmatprep.subr.bf16.mxu0 0
    %7191 = vmatpush1.bf16.msra.mxu0 %v7174
    %7192 = vmatprep.subr.bf16.mxu0 0
    %7193 = vmatpush1.bf16.msra.mxu0 %v7175
    %7194 = vmatprep.subr.bf16.mxu0 0
    %7195 = vmatpush1.bf16.msra.mxu0 %v7176
    %7196 = vmatprep.subr.bf16.mxu0 0
    %7197 = vmatpush1.bf16.msra.mxu0 %v7177
    %7198 = vmatprep.subr.bf16.mxu0 0
    %7199 = vmatpush1.bf16.msra.mxu0 %v7178
    %7200 = vmatprep.subr.bf16.mxu0 0
    %7201 = vmatpush1.bf16.msra.mxu0 %v7179
    %7202 = vmatprep.subr.bf16.mxu0 0
    %7203 = vmatpush1.bf16.msra.mxu0 %v7180
    %7204 = vmatprep.subr.bf16.mxu0 0
    %7205 = vmatpush1.bf16.msra.mxu0 %v7181
    %7206 = vmatprep.subr.bf16.mxu0 0
    %7207 = vmatpush1.bf16.msra.mxu0 0
    %7208 = vmatprep.subr.bf16.mxu0 0
    %7209 = vmatpush1.bf16.msra.mxu0 0
    %7210 = vmatprep.subr.bf16.mxu0 0
    %7211 = vmatpush1.bf16.msra.mxu0 0
    %7212 = vmatprep.subr.bf16.mxu0 0
    %7213 = vmatpush1.bf16.msra.mxu0 0
    %7214 = vmatprep.subr.bf16.mxu0 0
    %7215 = vmatpush1.bf16.msra.mxu0 0
    %7216 = vmatprep.subr.bf16.mxu0 0
    %7217 = vmatpush1.bf16.msra.mxu0 0
    %7218 = vmatprep.subr.bf16.mxu0 0
    %7219 = vmatpush1.bf16.msra.mxu0 0
    %7220 = vmatprep.subr.bf16.mxu0 0
    %7221 = vmatpush1.bf16.msra.mxu0 0
    %7222 = vmatprep.mubr.bf16.mxu0 0
    %7223 = vmatmul.mubr.bf16.gmra.mrb[0].mxu0 %v7118
    %v7224 = vpop.f32.mrb[0].mxu0
    %v7225 = vadd.f32 0.0, %v7224
    %v7226 = vpop.f32.mrb[0].mxu0
    %v7227 = vpop.f32.mrb[0].mxu0
    %v7228 = vadd.f32 0.0, %v7227
    %v7229 = vpop.f32.mrb[0].mxu0
    %7230 = vmatprep.mubr.bf16.mxu0 0
    %7231 = vmatmul.mubr.bf16.gmra.mrb[0].mxu0 %v7119
    %v7232 = vpop.f32.mrb[0].mxu0
    %v7233 = vadd.f32 0.0, %v7232
    %v7234 = vpop.f32.mrb[0].mxu0
    %v7235 = vpop.f32.mrb[0].mxu0
    %v7236 = vadd.f32 0.0, %v7235
    %v7237 = vpop.f32.mrb[0].mxu0
    %7238 = vmatprep.mubr.bf16.mxu0 0
    %7239 = vmatmul.mubr.bf16.gmra.mrb[0].mxu0 %v7120
    %v7240 = vpop.f32.mrb[0].mxu0
    %v7241 = vadd.f32 0.0, %v7240
    %v7242 = vpop.f32.mrb[0].mxu0
    %v7243 = vpop.f32.mrb[0].mxu0
    %v7244 = vadd.f32 0.0, %v7243
    %v7245 = vpop.f32.mrb[0].mxu0
    %7246 = vmatprep.mubr.bf16.mxu0 0
    %7247 = vmatmul.mubr.bf16.gmra.mrb[0].mxu0 %v7121
    %v7248 = vpop.f32.mrb[0].mxu0
    %v7249 = vadd.f32 0.0, %v7248
    %v7250 = vpop.f32.mrb[0].mxu0
    %v7251 = vpop.f32.mrb[0].mxu0
    %v7252 = vadd.f32 0.0, %v7251
    %v7253 = vpop.f32.mrb[0].mxu0
    %7254 = vmatprep.mubr.bf16.mxu0 0
    %7255 = vmatmul.mubr.bf16.gmra.mrb[0].mxu0 %v7122
    %v7256 = vpop.f32.mrb[0].mxu0
    %v7257 = vadd.f32 0.0, %v7256
    %v7258 = vpop.f32.mrb[0].mxu0
    %v7259 = vpop.f32.mrb[0].mxu0
    %v7260 = vadd.f32 0.0, %v7259
    %v7261 = vpop.f32.mrb[0].mxu0
    %7262 = vmatprep.mubr.bf16.mxu0 0
    %7263 = vmatmul.mubr.bf16.gmra.mrb[0].mxu0 %v7123
    %v7264 = vpop.f32.mrb[0].mxu0
    %v7265 = vadd.f32 0.0, %v7264
    %v7266 = vpop.f32.mrb[0].mxu0
    %v7267 = vpop.f32.mrb[0].mxu0
    %v7268 = vadd.f32 0.0, %v7267
    %v7269 = vpop.f32.mrb[0].mxu0
    %7270 = vmatprep.mubr.bf16.mxu0 0
    %7271 = vmatmul.mubr.bf16.gmra.mrb[0].mxu0 %v7124
    %v7272 = vpop.f32.mrb[0].mxu0
    %v7273 = vadd.f32 0.0, %v7272
    %v7274 = vpop.f32.mrb[0].mxu0
    %v7275 = vpop.f32.mrb[0].mxu0
    %v7276 = vadd.f32 0.0, %v7275
    %v7277 = vpop.f32.mrb[0].mxu0
    %7278 = vmatprep.mubr.bf16.mxu0 0
    %7279 = vmatmul.mubr.bf16.gmra.mrb[0].mxu0 %v7125
    %v7280 = vpop.f32.mrb[0].mxu0
    %v7281 = vadd.f32 0.0, %v7280
    %v7282 = vpop.f32.mrb[0].mxu0
    %v7283 = vpop.f32.mrb[0].mxu0
    %v7284 = vadd.f32 0.0, %v7283
    %v7285 = vpop.f32.mrb[0].mxu0
    %7286 = vdwg.mxu0
    %v7287 = vpack.c.bf16 %v7228, %v7225
    %v7288 = vpack.c.bf16 %v7236, %v7233
    %v7289 = vpack.c.bf16 %v7244, %v7241
    %v7290 = vpack.c.bf16 %v7252, %v7249
    %v7291 = vpack.c.bf16 %v7260, %v7257
    %v7292 = vpack.c.bf16 %v7268, %v7265
    %v7293 = vpack.c.bf16 %v7276, %v7273
    %v7294 = vpack.c.bf16 %v7284, %v7281
    %v7295 = vld [vmem:[#allocation2 + $0x1a0] sm:$0xf]
    %v7296 = vld [vmem:[#allocation2 + $0x1a4] sm:$0xf]
    %v7297 = vld [vmem:[#allocation2 + $0x1a8] sm:$0xf]
    %v7298 = vld [vmem:[#allocation2 + $0x1ac] sm:$0xf]
    %v7299 = vld [vmem:[#allocation2 + $0x1b0] sm:$0xf]
    %v7300 = vld [vmem:[#allocation2 + $0x1b4] sm:$0xf]
    %v7301 = vld [vmem:[#allocation2 + $0x1b8] sm:$0xf]
    %v7302 = vld [vmem:[#allocation2 + $0x1bc] sm:$0xf]
    %v7303 = vld [vmem:[#allocation2 + $0x1c0] sm:$0xf]
    %v7304 = vld [vmem:[#allocation2 + $0x1c4] sm:$0xf]
    %v7305 = vld [vmem:[#allocation2 + $0x1c8] sm:$0xf]
    %v7306 = vld [vmem:[#allocation2 + $0x1cc] sm:$0xf]
    %v7307 = vld [vmem:[#allocation2 + $0x1d0] sm:$0xf]
    %v7308 = vld [vmem:[#allocation2 + $0x1d4] sm:$0xf]
    %v7309 = vld [vmem:[#allocation2 + $0x1d8] sm:$0xf]
    %v7310 = vld [vmem:[#allocation2 + $0x1dc] sm:$0xf]
    %v7327 = vunpack.c.l.b16 %v7295
    %v7328 = vunpack.c.l.b16 %v7296
    %v7329 = vunpack.c.l.b16 %v7297
    %v7330 = vunpack.c.l.b16 %v7298
    %v7331 = vunpack.c.l.b16 %v7299
    %v7332 = vunpack.c.l.b16 %v7300
    %v7333 = vunpack.c.l.b16 %v7301
    %v7334 = vunpack.c.l.b16 %v7302
    %v7335 = vunpack.c.l.b16 %v7303
    %v7336 = vunpack.c.l.b16 %v7304
    %v7337 = vunpack.c.l.b16 %v7305
    %v7338 = vunpack.c.l.b16 %v7306
    %v7339 = vunpack.c.l.b16 %v7307
    %v7340 = vunpack.c.l.b16 %v7308
    %v7341 = vunpack.c.l.b16 %v7309
    %v7342 = vunpack.c.l.b16 %v7310
    %v7343 = vpack.c.b16 %v7328, %v7327
    %v7344 = vpack.c.b16 %v7330, %v7329
    %v7345 = vpack.c.b16 %v7332, %v7331
    %v7346 = vpack.c.b16 %v7334, %v7333
    %v7347 = vpack.c.b16 %v7336, %v7335
    %v7348 = vpack.c.b16 %v7338, %v7337
    %v7349 = vpack.c.b16 %v7340, %v7339
    %v7350 = vpack.c.b16 %v7342, %v7341
    %7359 = vmatprep.subr.bf16.mxu0 0
    %7360 = vmatpush1.bf16.msra.mxu0 %v7343
    %7361 = vmatprep.subr.bf16.mxu0 0
    %7362 = vmatpush1.bf16.msra.mxu0 %v7344
    %7363 = vmatprep.subr.bf16.mxu0 0
    %7364 = vmatpush1.bf16.msra.mxu0 %v7345
    %7365 = vmatprep.subr.bf16.mxu0 0
    %7366 = vmatpush1.bf16.msra.mxu0 %v7346
    %7367 = vmatprep.subr.bf16.mxu0 0
    %7368 = vmatpush1.bf16.msra.mxu0 %v7347
    %7369 = vmatprep.subr.bf16.mxu0 0
    %7370 = vmatpush1.bf16.msra.mxu0 %v7348
    %7371 = vmatprep.subr.bf16.mxu0 0
    %7372 = vmatpush1.bf16.msra.mxu0 %v7349
    %7373 = vmatprep.subr.bf16.mxu0 0
    %7374 = vmatpush1.bf16.msra.mxu0 %v7350
    %7375 = vmatprep.subr.bf16.mxu0 0
    %7376 = vmatpush1.bf16.msra.mxu0 0
    %7377 = vmatprep.subr.bf16.mxu0 0
    %7378 = vmatpush1.bf16.msra.mxu0 0
    %7379 = vmatprep.subr.bf16.mxu0 0
    %7380 = vmatpush1.bf16.msra.mxu0 0
    %7381 = vmatprep.subr.bf16.mxu0 0
    %7382 = vmatpush1.bf16.msra.mxu0 0
    %7383 = vmatprep.subr.bf16.mxu0 0
    %7384 = vmatpush1.bf16.msra.mxu0 0
    %7385 = vmatprep.subr.bf16.mxu0 0
    %7386 = vmatpush1.bf16.msra.mxu0 0
    %7387 = vmatprep.subr.bf16.mxu0 0
    %7388 = vmatpush1.bf16.msra.mxu0 0
    %7389 = vmatprep.subr.bf16.mxu0 0
    %7390 = vmatpush1.bf16.msra.mxu0 0
    %7391 = vmatprep.mubr.bf16.mxu0 0
    %7392 = vmatmul.mubr.bf16.gmra.mrb[0].mxu0 %v7287
    %v7393 = vpop.f32.mrb[0].mxu0
    %v7394 = vadd.f32 0.0, %v7393
    %v7395 = vpop.f32.mrb[0].mxu0
    %v7396 = vpop.f32.mrb[0].mxu0
    %v7397 = vadd.f32 0.0, %v7396
    %v7398 = vpop.f32.mrb[0].mxu0
    %7399 = vmatprep.mubr.bf16.mxu0 0
    %7400 = vmatmul.mubr.bf16.gmra.mrb[0].mxu0 %v7288
    %v7401 = vpop.f32.mrb[0].mxu0
    %v7402 = vadd.f32 0.0, %v7401
    %v7403 = vpop.f32.mrb[0].mxu0
    %v7404 = vpop.f32.mrb[0].mxu0
    %v7405 = vadd.f32 0.0, %v7404
    %v7406 = vpop.f32.mrb[0].mxu0
    %7407 = vmatprep.mubr.bf16.mxu0 0
    %7408 = vmatmul.mubr.bf16.gmra.mrb[0].mxu0 %v7289
    %v7409 = vpop.f32.mrb[0].mxu0
    %v7410 = vadd.f32 0.0, %v7409
    %v7411 = vpop.f32.mrb[0].mxu0
    %v7412 = vpop.f32.mrb[0].mxu0
    %v7413 = vadd.f32 0.0, %v7412
    %v7414 = vpop.f32.mrb[0].mxu0
    %7415 = vmatprep.mubr.bf16.mxu0 0
    %7416 = vmatmul.mubr.bf16.gmra.mrb[0].mxu0 %v7290
    %v7417 = vpop.f32.mrb[0].mxu0
    %v7418 = vadd.f32 0.0, %v7417
    %v7419 = vpop.f32.mrb[0].mxu0
    %v7420 = vpop.f32.mrb[0].mxu0
    %v7421 = vadd.f32 0.0, %v7420
    %v7422 = vpop.f32.mrb[0].mxu0
    %7423 = vmatprep.mubr.bf16.mxu0 0
    %7424 = vmatmul.mubr.bf16.gmra.mrb[0].mxu0 %v7291
    %v7425 = vpop.f32.mrb[0].mxu0
    %v7426 = vadd.f32 0.0, %v7425
    %v7427 = vpop.f32.mrb[0].mxu0
    %v7428 = vpop.f32.mrb[0].mxu0
    %v7429 = vadd.f32 0.0, %v7428
    %v7430 = vpop.f32.mrb[0].mxu0
    %7431 = vmatprep.mubr.bf16.mxu0 0
    %7432 = vmatmul.mubr.bf16.gmra.mrb[0].mxu0 %v7292
    %v7433 = vpop.f32.mrb[0].mxu0
    %v7434 = vadd.f32 0.0, %v7433
    %v7435 = vpop.f32.mrb[0].mxu0
    %v7436 = vpop.f32.mrb[0].mxu0
    %v7437 = vadd.f32 0.0, %v7436
    %v7438 = vpop.f32.mrb[0].mxu0
    %7439 = vmatprep.mubr.bf16.mxu0 0
    %7440 = vmatmul.mubr.bf16.gmra.mrb[0].mxu0 %v7293
    %v7441 = vpop.f32.mrb[0].mxu0
    %v7442 = vadd.f32 0.0, %v7441
    %v7443 = vpop.f32.mrb[0].mxu0
    %v7444 = vpop.f32.mrb[0].mxu0
    %v7445 = vadd.f32 0.0, %v7444
    %v7446 = vpop.f32.mrb[0].mxu0
    %7447 = vmatprep.mubr.bf16.mxu0 0
    %7448 = vmatmul.mubr.bf16.gmra.mrb[0].mxu0 %v7294
    %v7449 = vpop.f32.mrb[0].mxu0
    %v7450 = vadd.f32 0.0, %v7449
    %v7451 = vpop.f32.mrb[0].mxu0
    %v7452 = vpop.f32.mrb[0].mxu0
    %v7453 = vadd.f32 0.0, %v7452
    %v7454 = vpop.f32.mrb[0].mxu0
    %7455 = vdwg.mxu0
    %v7456 = vadd.f32 %v7102, %v7394
    %v7457 = vadd.f32 %v7103, %v7397
    %v7458 = vadd.f32 %v7104, %v7402
    %v7459 = vadd.f32 %v7105, %v7405
    %v7460 = vadd.f32 %v7106, %v7410
    %v7461 = vadd.f32 %v7107, %v7413
    %v7462 = vadd.f32 %v7108, %v7418
    %v7463 = vadd.f32 %v7109, %v7421
    %v7464 = vadd.f32 %v7110, %v7426
    %v7465 = vadd.f32 %v7111, %v7429
    %v7466 = vadd.f32 %v7112, %v7434
    %v7467 = vadd.f32 %v7113, %v7437
    %v7468 = vadd.f32 %v7114, %v7442
    %v7469 = vadd.f32 %v7115, %v7445
    %v7470 = vadd.f32 %v7116, %v7450
    %v7471 = vadd.f32 %v7117, %v7453
    %7472 = vst [vmem:[#allocation7] sm:$0xff] %v7456
    %7473 = vst [vmem:[#allocation7 + $0x8] sm:$0xff] %v7457
    %7474 = vst [vmem:[#allocation7 + $0x10] sm:$0xff] %v7458
    %7475 = vst [vmem:[#allocation7 + $0x18] sm:$0xff] %v7459
    %7476 = vst [vmem:[#allocation7 + $0x20] sm:$0xff] %v7460
    %7477 = vst [vmem:[#allocation7 + $0x28] sm:$0xff] %v7461
    %7478 = vst [vmem:[#allocation7 + $0x30] sm:$0xff] %v7462
    %7479 = vst [vmem:[#allocation7 + $0x38] sm:$0xff] %v7463
    %7480 = vst [vmem:[#allocation7 + $0x40] sm:$0xff] %v7464
    %7481 = vst [vmem:[#allocation7 + $0x48] sm:$0xff] %v7465
    %7482 = vst [vmem:[#allocation7 + $0x50] sm:$0xff] %v7466
    %7483 = vst [vmem:[#allocation7 + $0x58] sm:$0xff] %v7467
    %7484 = vst [vmem:[#allocation7 + $0x60] sm:$0xff] %v7468
    %7485 = vst [vmem:[#allocation7 + $0x68] sm:$0xff] %v7469
    %7486 = vst [vmem:[#allocation7 + $0x70] sm:$0xff] %v7470
    %7487 = vst [vmem:[#allocation7 + $0x78] sm:$0xff] %v7471
    // Predicated region
    $region30: #{transformer_block_forward.1} parent=1 // pred_check
      _
    $region31: #{transformer_block_forward.1} parent=1 // pred_check_branch
      %7489 = sbr.rel (0) target = $region33
    $region32: #{transformer_block_forward.1} parent=1 // pred_region
      %s7491 = ssub.s32 2048, 2048
      %7492 = vsyncadd [#allocation4], %s7491
      %s7493 = sshll.u32 [#allocation7], 4
      %s7494 = int_to_ptr.vmem [resolvable:$true] %s7493
      %7499 = dma.vmem_to_hbm [thread:$0]  %s7494, 2048, %s5, [#allocation4], 128, 128, 8
    $region33: #{transformer_block_forward.1} parent=1 // pred_fallthru
      _
    // Predicated region
    $region34: #{transformer_block_forward.1} parent=1 // pred_check
      _
    $region35: #{transformer_block_forward.1} parent=1 // pred_check_branch
      %7501 = sbr.rel (0) target = $region37
    $region36: #{transformer_block_forward.1} parent=1 // pred_region
      %7502 = dma.done [#allocation4], 2048
    $region37: #{transformer_block_forward.1} parent=1 // pred_fallthru
      _
    %7503 = vsyncpa [#allocation3], 1
    %7504 = vsyncpa [#allocation6], 1
    %7505 = vsyncpa [#allocation4], 1

</llo_original>
